<compile_context>
chip_gen: v6e
topology: v6e:2x2x1
jax: 0.10.0
libtpu: 0.0.40
codegen_flags: <defaults>
</compile_context>

<pallas_src>
import functools
import math

import numpy as np
import jax
import jax.numpy as jnp
from jax.experimental import pallas as pl
from jax.experimental.pallas import tpu as pltpu

# ---- torchaudio.transforms.MFCC(sample_rate=16000, n_mfcc=13) defaults ----
SAMPLE_RATE = 16000
N_MFCC = 13
N_FFT = 400
WIN_LENGTH = 400
HOP_LENGTH = 200
N_MELS = 128
N_FREQ = N_FFT // 2 + 1          # 201 (onesided)
TOP_DB = 80.0
N_FREQ_PAD = 256                 # pad 201 -> 256 (lane-aligned; zero rows contribute 0)

# ---- nn.LSTM(13, 13, 4, batch_first=True, bidirectional=True) ----
HIDDEN = 13
NUM_LAYERS = 4
GATES = 4 * HIDDEN               # 52, PyTorch gate order [i | f | g | o]


# --------------------------------------------------------------------------
# MFCC constants (deterministic, built once in numpy)
# --------------------------------------------------------------------------
def _hann_window_periodic(win_length):
    n = np.arange(win_length, dtype=np.float64)
    return 0.5 - 0.5 * np.cos(2.0 * np.pi * n / win_length)


def _dft_matrices(n_fft, n_freq):
    n = np.arange(n_fft, dtype=np.float64)[:, None]
    k = np.arange(n_freq, dtype=np.float64)[None, :]
    ang = 2.0 * np.pi * n * k / n_fft
    return np.cos(ang), np.sin(ang)          # sign of sin irrelevant for |X|^2


def _mel_fbanks(n_freqs, f_min, f_max, n_mels, sample_rate):
    # torchaudio.functional.melscale_fbanks, mel_scale="htk", norm=None
    all_freqs = np.linspace(0.0, sample_rate / 2.0, n_freqs)
    m_min = 2595.0 * np.log10(1.0 + f_min / 700.0)
    m_max = 2595.0 * np.log10(1.0 + f_max / 700.0)
    m_pts = np.linspace(m_min, m_max, n_mels + 2)
    f_pts = 700.0 * (10.0 ** (m_pts / 2595.0) - 1.0)
    f_diff = f_pts[1:] - f_pts[:-1]
    slopes = f_pts[None, :] - all_freqs[:, None]             # (n_freqs, n_mels+2)
    down = -slopes[:, :-2] / f_diff[:-1]
    up = slopes[:, 2:] / f_diff[1:]
    return np.maximum(0.0, np.minimum(down, up))             # (n_freqs, n_mels)


def _create_dct(n_mfcc, n_mels):
    # torchaudio.functional.create_dct, norm="ortho"
    n = np.arange(n_mels, dtype=np.float64)
    k = np.arange(n_mfcc, dtype=np.float64)[:, None]
    dct = np.cos(np.pi / n_mels * (n + 0.5) * k)             # (n_mfcc, n_mels)
    dct[0] *= 1.0 / math.sqrt(2.0)
    dct *= math.sqrt(2.0 / n_mels)
    return dct.T                                             # (n_mels, n_mfcc)


def make_mfcc_consts(lstm_params):
    window = _hann_window_periodic(WIN_LENGTH).reshape(1, N_FFT)

    cos_m, sin_m = _dft_matrices(N_FFT, N_FREQ)              # (400, 201) each
    cossin = np.zeros((N_FFT, 2 * N_FREQ_PAD), np.float64)   # fused cos|sin, padded
    cossin[:, :N_FREQ] = cos_m
    cossin[:, N_FREQ_PAD:N_FREQ_PAD + N_FREQ] = sin_m

    mel = np.zeros((N_FREQ_PAD, N_MELS), np.float64)         # zero-padded freq rows
    mel[:N_FREQ, :] = _mel_fbanks(N_FREQ, 0.0, SAMPLE_RATE / 2.0, N_MELS, SAMPLE_RATE)

    dct = _create_dct(N_MFCC, N_MELS)                        # (n_mels, n_mfcc)
    # Fold the layer-0 input-to-hidden projection (both directions) into the DCT:
    # mfcc @ W_ih0.T == db @ (dct @ W_ih0.T). Columns: [fwd gates | bwd gates].
    w0f = np.asarray(lstm_params[(0, 0)][0], dtype=np.float64)   # (4H, n_mfcc)
    w0b = np.asarray(lstm_params[(0, 1)][0], dtype=np.float64)
    dctw = np.concatenate([dct @ w0f.T, dct @ w0b.T], axis=1)    # (n_mels, 8H)

    as32 = lambda a: jnp.asarray(a, dtype=jnp.float32)
    return as32(window), as32(cossin), as32(mel), as32(dctw)


# --------------------------------------------------------------------------
# LSTM parameters (deterministic init, PyTorch-style uniform(-1/sqrt(H), 1/sqrt(H)))
# --------------------------------------------------------------------------
def init_lstm_params(key):
    params = {}
    k = 1.0 / math.sqrt(HIDDEN)
    for layer in range(NUM_LAYERS):
        in_size = N_MFCC if layer == 0 else 2 * HIDDEN
        for direction in range(2):
            key, k1, k2, k3, k4 = jax.random.split(key, 5)
            params[(layer, direction)] = (
                jax.random.uniform(k1, (4 * HIDDEN, in_size), jnp.float32, -k, k),
                jax.random.uniform(k2, (4 * HIDDEN, HIDDEN), jnp.float32, -k, k),
                jax.random.uniform(k3, (4 * HIDDEN,), jnp.float32, -k, k),
                jax.random.uniform(k4, (4 * HIDDEN,), jnp.float32, -k, k),
            )
    return params


def pack_lstm_params(params):
    """Repack PyTorch-layout LSTM weights into gate-fused matrices.

      wI   : (L-1, 2, 2, H, 4H)  input weights for layers 1..3, [dir, input-half]
      wR   : (L,   2,    H, 4H)  recurrent weights, gates fused along lanes
      bias : (L,   2,    1, 4H)  b_ih + b_hh
    (Layer-0 input weights are folded into the MFCC DCT matrix.)
    """
    wI, wR, bias = [], [], []
    for layer in range(NUM_LAYERS):
        wI_d, wR_d, b_d = [], [], []
        for d in range(2):
            w_ih, w_hh, b_ih, b_hh = params[(layer, d)]
            wR_d.append(w_hh.T)                                   # (H, 4H)
            b_d.append((b_ih + b_hh).reshape(1, GATES))
            if layer > 0:
                wI_d.append(jnp.stack([w_ih[:, :HIDDEN].T,        # fwd-half -> gates
                                       w_ih[:, HIDDEN:].T]))      # bwd-half -> gates
        wR.append(jnp.stack(wR_d))
        bias.append(jnp.stack(b_d))
        if layer > 0:
            wI.append(jnp.stack(wI_d))
    return jnp.stack(wI), jnp.stack(wR), jnp.stack(bias)


# --------------------------------------------------------------------------
# The fused Pallas kernel: windowed DFT -> power -> mel -> dB(top_db) -> DCT(+W_ih0)
# -> 4-layer bidirectional LSTM (gate-fused, batched recurrence).
# Rows of `frames`/intermediates are TIME-MAJOR: row = t*B + b.
# --------------------------------------------------------------------------
def audio_lstm_kernel(frames_ref, win_ref, cossin_ref, mel_ref, dctw_ref,
                      wI_ref, wR_ref, bias_ref, out_ref, *, batch, n_frames):
    B, T, H, G = batch, n_frames, HIDDEN, GATES
    f32 = jnp.float32

    # ---------------- MFCC -> layer-0 gate pre-activations ----------------
    xw = frames_ref[...] * win_ref[...]                                   # (T*B, 400)
    spec = jnp.dot(xw, cossin_ref[...], preferred_element_type=f32)       # (T*B, 512)
    re = spec[:, :N_FREQ_PAD]                                             # lane-aligned
    im = spec[:, N_FREQ_PAD:]
    power = re * re + im * im                                             # (T*B, 256)
    melspec = jnp.dot(power, mel_ref[...], preferred_element_type=f32)    # (T*B, 128)
    db = 10.0 * jnp.log10(jnp.maximum(melspec, 1e-10))
    # top_db clamp is per batch element (torchaudio amax over (mel, time)).
    bid = jax.lax.broadcasted_iota(jnp.int32, (T, B, N_MELS), 1).reshape(T * B, N_MELS)
    for b in range(B):
        is_b = bid == b
        m_b = jnp.max(jnp.where(is_b, db, -jnp.inf))
        db = jnp.where(is_b, jnp.maximum(db, m_b - TOP_DB), db)
    # DCT fused with the layer-0 input projection of BOTH directions.
    gx0 = jnp.dot(db, dctw_ref[...], preferred_element_type=f32)          # (T*B, 2*G)

    # ---------------- 4-layer bidirectional LSTM ----------------
    lane = jax.lax.broadcasted_iota(jnp.int32, (B, G), 1)
    g_lane = (lane >= 2 * H) & (lane < 3 * H)          # cell-gate lanes -> tanh

    seq_f = None      # (T*B, H) forward hidden sequence, natural time order
    seq_b = None      # (T*B, H) backward hidden sequence, natural time order
    for layer in range(NUM_LAYERS):
        # Input-to-hidden pre-activations for the WHOLE sequence & batch
        # (one fused-gates matmul per (layer, dir, half); off the serial chain).
        if layer == 0:
            gx_dir = [gx0[:, :G] + bias_ref[0, 0],
                      gx0[:, G:2 * G] + bias_ref[0, 1]]
        else:
            gx_dir = [
                jnp.dot(seq_f, wI_ref[layer - 1, d, 0], preferred_element_type=f32)
                + jnp.dot(seq_b, wI_ref[layer - 1, d, 1], preferred_element_type=f32)
                + bias_ref[layer, d]
                for d in range(2)
            ]

        new_seq = []
        for d in range(2):
            wr = wR_ref[layer, d]                                        # (H, 4H)
            gx = gx_dir[d]                                               # (T*B, 4H)
            # Pre-split gx into per-time (B, 4H) chunks, off the serial chain.
            gx_t = [gx[t * B:(t + 1) * B, :] for t in range(T)]
            h = jnp.zeros((B, H), f32)
            c = jnp.zeros((B, H), f32)
            hs = [None] * T
            for s in range(T):
                t = s if d == 0 else T - 1 - s
                # ONE recurrent matmul per step, gates fused along lanes.
                pre = gx_t[t] + jnp.dot(h, wr, preferred_element_type=f32)   # (B, 4H)
                act = jnp.where(g_lane, jnp.tanh(pre), jax.nn.sigmoid(pre))
                i_g = act[:, 0:H]
                f_g = act[:, H:2 * H]
                g_g = act[:, 2 * H:3 * H]
                o_g = act[:, 3 * H:4 * H]
                c = f_g * c + i_g * g_g
                h = o_g * jnp.tanh(c)
                hs[t] = h                         # stored at the real time index
            new_seq.append(jnp.concatenate(hs, axis=0))                  # (T*B, H)
        seq_f, seq_b = new_seq

    # Two lane-contiguous stores; wrapper relayouts to (B, T, 2H).
    out_ref[0] = seq_f
    out_ref[1] = seq_b


def audio_lstm_pallas(frames, mfcc_consts, lstm_packed, *, batch, n_frames):
    window, cossin, mel_fb, dctw = mfcc_consts
    wI, wR, bias = lstm_packed
    kernel = functools.partial(audio_lstm_kernel, batch=batch, n_frames=n_frames)
    vmem = pl.BlockSpec(memory_space=pltpu.MemorySpace.VMEM)
    return pl.pallas_call(
        kernel,
        out_shape=jax.ShapeDtypeStruct((2, n_frames * batch, HIDDEN), jnp.float32),
        in_specs=[vmem] * 8,
        out_specs=vmem,
    )(frames, window, cossin, mel_fb, dctw, wI, wR, bias)


# --------------------------------------------------------------------------
# Full forward: reflect-pad + framing (XLA gather) -> fused MFCC+LSTM kernel
# --------------------------------------------------------------------------
def audio_lstm_forward(x, lstm_packed, mfcc_consts):
    # x: (B, 1, L) waveform
    wav = x[:, 0, :]                                                 # (B, L)
    B, L = wav.shape
    pad = N_FFT // 2
    padded = jnp.pad(wav, ((0, 0), (pad, pad)), mode="reflect")      # center=True
    length_padded = L + 2 * pad
    T = 1 + L // HOP_LENGTH
    # Time-major framing (row = t*B + b) with a single constant-index gather.
    # TODO(synk): overlapping STFT framing stays as one XLA gather in the wrapper.
    idx = (np.arange(T, dtype=np.int32)[:, None, None] * HOP_LENGTH
           + np.arange(B, dtype=np.int32)[None, :, None] * length_padded
           + np.arange(N_FFT, dtype=np.int32)[None, None, :]).reshape(T * B, N_FFT)
    frames = padded.reshape(-1)[idx]                                 # (T*B, n_fft)

    out = audio_lstm_pallas(frames, mfcc_consts, lstm_packed, batch=B, n_frames=T)
    # (2, T*B, H) -> (B, T, 2H): the only wrapper-side relayout (tiny).
    return out.reshape(2, T, B, HIDDEN).transpose(2, 1, 0, 3).reshape(B, T, 2 * HIDDEN)


if __name__ == "__main__":
    key = jax.random.PRNGKey(0)
    k_x, k_p = jax.random.split(key)

    B, T_SAMPLES = 2, 1600                       # 0.1 s of 16 kHz audio
    x = jax.random.normal(k_x, (B, 1, T_SAMPLES), dtype=jnp.float32)

    lstm_params = init_lstm_params(k_p)
    lstm_packed = pack_lstm_params(lstm_params)
    mfcc_consts = make_mfcc_consts(lstm_params)

    fwd = jax.jit(audio_lstm_forward)
    out = jax.block_until_ready(fwd(x, lstm_packed, mfcc_consts))

    expected_frames = 1 + T_SAMPLES // HOP_LENGTH  # 9
    assert out.shape == (B, expected_frames, 2 * HIDDEN), out.shape
    assert out.dtype == jnp.float32
    assert bool(jnp.all(jnp.isfinite(out)))
    print("KERNEL_OK")
</pallas_src>

<mosaic_0001>
module attributes {stable_mosaic.version = 11 : i64} {
  func.func @audio_lstm_kernel(%arg0: memref<18x400xf32, #tpu.memory_space<vmem>>, %arg1: memref<1x400xf32, #tpu.memory_space<vmem>>, %arg2: memref<400x512xf32, #tpu.memory_space<vmem>>, %arg3: memref<256x128xf32, #tpu.memory_space<vmem>>, %arg4: memref<128x104xf32, #tpu.memory_space<vmem>>, %arg5: memref<3x2x2x13x52xf32, #tpu.memory_space<vmem>>, %arg6: memref<4x2x13x52xf32, #tpu.memory_space<vmem>>, %arg7: memref<4x2x1x52xf32, #tpu.memory_space<vmem>>, %arg8: memref<2x18x13xf32, #tpu.memory_space<vmem>>) attributes {dimension_semantics = [], scalar_prefetch = 0 : i64, scratch_operands = 0 : i64, tpu.core_type = #tpu.core_type<tc>} {
    %c0 = arith.constant 0 : index
    %c0_0 = arith.constant 0 : index
    %0 = vector.load %arg0[%c0, %c0_0] : memref<18x400xf32, #tpu.memory_space<vmem>>, vector<18x400xf32>
    %c0_1 = arith.constant 0 : index
    %c0_2 = arith.constant 0 : index
    %1 = vector.load %arg1[%c0_1, %c0_2] : memref<1x400xf32, #tpu.memory_space<vmem>>, vector<1x400xf32>
    %2 = vector.broadcast %1 : vector<1x400xf32> to vector<18x400xf32>
    %3 = arith.mulf %0, %2 : vector<18x400xf32>
    %c0_3 = arith.constant 0 : index
    %c0_4 = arith.constant 0 : index
    %4 = vector.load %arg2[%c0_3, %c0_4] : memref<400x512xf32, #tpu.memory_space<vmem>>, vector<400x512xf32>
    %cst = arith.constant dense<0.000000e+00> : vector<18x512xf32>
    %5 = tpu.matmul %3, %4, %cst {dimension_numbers = #tpu.dot_dimension_numbers<[1], [0], [0], [1], [0, 0, 1, 1], [], []>} : vector<18x400xf32>, vector<400x512xf32>, vector<18x512xf32> -> vector<18x512xf32>
    %6 = vector.extract_strided_slice %5 {offsets = [0, 0], sizes = [18, 256], strides = [1, 1]} : vector<18x512xf32> to vector<18x256xf32>
    %7 = vector.extract_strided_slice %5 {offsets = [0, 256], sizes = [18, 256], strides = [1, 1]} : vector<18x512xf32> to vector<18x256xf32>
    %8 = arith.mulf %6, %6 : vector<18x256xf32>
    %9 = arith.mulf %7, %7 : vector<18x256xf32>
    %10 = arith.addf %8, %9 : vector<18x256xf32>
    %c0_5 = arith.constant 0 : index
    %c0_6 = arith.constant 0 : index
    %11 = vector.load %arg3[%c0_5, %c0_6] : memref<256x128xf32, #tpu.memory_space<vmem>>, vector<256x128xf32>
    %cst_7 = arith.constant dense<0.000000e+00> : vector<18x128xf32>
    %12 = tpu.matmul %10, %11, %cst_7 {dimension_numbers = #tpu.dot_dimension_numbers<[1], [0], [0], [1], [0, 0, 1, 1], [], []>} : vector<18x256xf32>, vector<256x128xf32>, vector<18x128xf32> -> vector<18x128xf32>
    %cst_8 = arith.constant 1.000000e-10 : f32
    %13 = vector.broadcast %cst_8 : f32 to vector<18x128xf32>
    %14 = arith.maximumf %12, %13 : vector<18x128xf32>
    %15 = math.log %14 : vector<18x128xf32>
    %cst_9 = arith.constant 0.434294492 : f32
    %16 = vector.broadcast %cst_9 : f32 to vector<18x128xf32>
    %17 = arith.mulf %15, %16 : vector<18x128xf32>
    %cst_10 = arith.constant 1.000000e+01 : f32
    %18 = vector.broadcast %cst_10 : f32 to vector<18x128xf32>
    %19 = arith.mulf %18, %17 : vector<18x128xf32>
    %20 = tpu.iota {dimensions = array<i32: 1>} : vector<9x2x128xi32>
    %21 = vector.shape_cast %20 : vector<9x2x128xi32> to vector<18x128xi32>
    %c0_i32 = arith.constant 0 : i32
    %22 = vector.broadcast %c0_i32 : i32 to vector<18x128xi32>
    %23 = arith.cmpi eq, %21, %22 : vector<18x128xi32>
    %cst_11 = arith.constant 0xFF800000 : f32
    %24 = vector.broadcast %cst_11 : f32 to vector<18x128xf32>
    %25 = arith.select %23, %19, %24 : vector<18x128xi1>, vector<18x128xf32>
    %26 = vector.shape_cast %25 : vector<18x128xf32> to vector<1x18x128xf32>
    %cst_12 = arith.constant dense<0xFF800000> : vector<1xf32>
    %27 = vector.multi_reduction <maximumf>, %26, %cst_12 [1, 2] : vector<1x18x128xf32> to vector<1xf32>
    %28 = vector.shape_cast %27 : vector<1xf32> to vector<1x1x1xf32>
    %29 = vector.extract %28[0, 0, 0] : f32 from vector<1x1x1xf32>
    %cst_13 = arith.constant 8.000000e+01 : f32
    %30 = arith.subf %29, %cst_13 : f32
    %31 = vector.broadcast %30 : f32 to vector<18x128xf32>
    %32 = arith.maximumf %19, %31 : vector<18x128xf32>
    %33 = arith.select %23, %32, %19 : vector<18x128xi1>, vector<18x128xf32>
    %c1_i32 = arith.constant 1 : i32
    %34 = vector.broadcast %c1_i32 : i32 to vector<18x128xi32>
    %35 = arith.cmpi eq, %21, %34 : vector<18x128xi32>
    %cst_14 = arith.constant 0xFF800000 : f32
    %36 = vector.broadcast %cst_14 : f32 to vector<18x128xf32>
    %37 = arith.select %35, %33, %36 : vector<18x128xi1>, vector<18x128xf32>
    %38 = vector.shape_cast %37 : vector<18x128xf32> to vector<1x18x128xf32>
    %cst_15 = arith.constant dense<0xFF800000> : vector<1xf32>
    %39 = vector.multi_reduction <maximumf>, %38, %cst_15 [1, 2] : vector<1x18x128xf32> to vector<1xf32>
    %40 = vector.shape_cast %39 : vector<1xf32> to vector<1x1x1xf32>
    %41 = vector.extract %40[0, 0, 0] : f32 from vector<1x1x1xf32>
    %cst_16 = arith.constant 8.000000e+01 : f32
    %42 = arith.subf %41, %cst_16 : f32
    %43 = vector.broadcast %42 : f32 to vector<18x128xf32>
    %44 = arith.maximumf %33, %43 : vector<18x128xf32>
    %45 = arith.select %35, %44, %33 : vector<18x128xi1>, vector<18x128xf32>
    %c0_17 = arith.constant 0 : index
    %c0_18 = arith.constant 0 : index
    %46 = vector.load %arg4[%c0_17, %c0_18] : memref<128x104xf32, #tpu.memory_space<vmem>>, vector<128x104xf32>
    %cst_19 = arith.constant dense<0.000000e+00> : vector<18x104xf32>
    %47 = tpu.matmul %45, %46, %cst_19 {dimension_numbers = #tpu.dot_dimension_numbers<[1], [0], [0], [1], [0, 0, 1, 1], [], []>} : vector<18x128xf32>, vector<128x104xf32>, vector<18x104xf32> -> vector<18x104xf32>
    %48 = tpu.iota {dimensions = array<i32: 1>} : vector<2x52xi32>
    %c26_i32 = arith.constant 26 : i32
    %49 = vector.broadcast %c26_i32 : i32 to vector<2x52xi32>
    %50 = arith.cmpi sge, %48, %49 : vector<2x52xi32>
    %c39_i32 = arith.constant 39 : i32
    %51 = vector.broadcast %c39_i32 : i32 to vector<2x52xi32>
    %52 = arith.cmpi slt, %48, %51 : vector<2x52xi32>
    %53 = arith.andi %50, %52 : vector<2x52xi1>
    %54 = vector.extract_strided_slice %47 {offsets = [0, 0], sizes = [18, 52], strides = [1, 1]} : vector<18x104xf32> to vector<18x52xf32>
    %c0_20 = arith.constant 0 : index
    %c0_21 = arith.constant 0 : index
    %c0_22 = arith.constant 0 : index
    %c0_23 = arith.constant 0 : index
    %55 = vector.load %arg7[%c0_20, %c0_21, %c0_22, %c0_23] : memref<4x2x1x52xf32, #tpu.memory_space<vmem>>, vector<1x1x1x52xf32>
    %56 = vector.shape_cast %55 : vector<1x1x1x52xf32> to vector<1x52xf32>
    %57 = vector.broadcast %56 : vector<1x52xf32> to vector<18x52xf32>
    %58 = arith.addf %54, %57 : vector<18x52xf32>
    %59 = vector.extract_strided_slice %47 {offsets = [0, 52], sizes = [18, 52], strides = [1, 1]} : vector<18x104xf32> to vector<18x52xf32>
    %c0_24 = arith.constant 0 : index
    %c1 = arith.constant 1 : index
    %c0_25 = arith.constant 0 : index
    %c0_26 = arith.constant 0 : index
    %60 = vector.load %arg7[%c0_24, %c1, %c0_25, %c0_26] : memref<4x2x1x52xf32, #tpu.memory_space<vmem>>, vector<1x1x1x52xf32>
    %61 = vector.shape_cast %60 : vector<1x1x1x52xf32> to vector<1x52xf32>
    %62 = vector.broadcast %61 : vector<1x52xf32> to vector<18x52xf32>
    %63 = arith.addf %59, %62 : vector<18x52xf32>
    %c0_27 = arith.constant 0 : index
    %c0_28 = arith.constant 0 : index
    %c0_29 = arith.constant 0 : index
    %c0_30 = arith.constant 0 : index
    %64 = vector.load %arg6[%c0_27, %c0_28, %c0_29, %c0_30] : memref<4x2x13x52xf32, #tpu.memory_space<vmem>>, vector<1x1x13x52xf32>
    %65 = vector.shape_cast %64 : vector<1x1x13x52xf32> to vector<13x52xf32>
    %66 = vector.extract_strided_slice %58 {offsets = [0, 0], sizes = [2, 52], strides = [1, 1]} : vector<18x52xf32> to vector<2x52xf32>
    %67 = vector.extract_strided_slice %58 {offsets = [2, 0], sizes = [2, 52], strides = [1, 1]} : vector<18x52xf32> to vector<2x52xf32>
    %68 = vector.extract_strided_slice %58 {offsets = [4, 0], sizes = [2, 52], strides = [1, 1]} : vector<18x52xf32> to vector<2x52xf32>
    %69 = vector.extract_strided_slice %58 {offsets = [6, 0], sizes = [2, 52], strides = [1, 1]} : vector<18x52xf32> to vector<2x52xf32>
    %70 = vector.extract_strided_slice %58 {offsets = [8, 0], sizes = [2, 52], strides = [1, 1]} : vector<18x52xf32> to vector<2x52xf32>
    %71 = vector.extract_strided_slice %58 {offsets = [10, 0], sizes = [2, 52], strides = [1, 1]} : vector<18x52xf32> to vector<2x52xf32>
    %72 = vector.extract_strided_slice %58 {offsets = [12, 0], sizes = [2, 52], strides = [1, 1]} : vector<18x52xf32> to vector<2x52xf32>
    %73 = vector.extract_strided_slice %58 {offsets = [14, 0], sizes = [2, 52], strides = [1, 1]} : vector<18x52xf32> to vector<2x52xf32>
    %74 = vector.extract_strided_slice %58 {offsets = [16, 0], sizes = [2, 52], strides = [1, 1]} : vector<18x52xf32> to vector<2x52xf32>
    %cst_31 = arith.constant 0.000000e+00 : f32
    %75 = vector.broadcast %cst_31 : f32 to vector<2x13xf32>
    %cst_32 = arith.constant 0.000000e+00 : f32
    %76 = vector.broadcast %cst_32 : f32 to vector<2x13xf32>
    %cst_33 = arith.constant dense<0.000000e+00> : vector<2x52xf32>
    %77 = tpu.matmul %75, %65, %cst_33 {dimension_numbers = #tpu.dot_dimension_numbers<[1], [0], [0], [1], [0, 0, 1, 1], [], []>} : vector<2x13xf32>, vector<13x52xf32>, vector<2x52xf32> -> vector<2x52xf32>
    %78 = arith.addf %66, %77 : vector<2x52xf32>
    %79 = math.tanh %78 : vector<2x52xf32>
    %80 = arith.negf %78 : vector<2x52xf32>
    %81 = math.exp %80 : vector<2x52xf32>
    %cst_34 = arith.constant 1.000000e+00 : f32
    %82 = vector.broadcast %cst_34 : f32 to vector<2x52xf32>
    %83 = arith.addf %82, %81 : vector<2x52xf32>
    %84 = arith.divf %82, %83 : vector<2x52xf32>
    %85 = arith.select %53, %79, %84 : vector<2x52xi1>, vector<2x52xf32>
    %86 = vector.extract_strided_slice %85 {offsets = [0, 0], sizes = [2, 13], strides = [1, 1]} : vector<2x52xf32> to vector<2x13xf32>
    %87 = vector.extract_strided_slice %85 {offsets = [0, 13], sizes = [2, 13], strides = [1, 1]} : vector<2x52xf32> to vector<2x13xf32>
    %88 = vector.extract_strided_slice %85 {offsets = [0, 26], sizes = [2, 13], strides = [1, 1]} : vector<2x52xf32> to vector<2x13xf32>
    %89 = vector.extract_strided_slice %85 {offsets = [0, 39], sizes = [2, 13], strides = [1, 1]} : vector<2x52xf32> to vector<2x13xf32>
    %90 = arith.mulf %87, %76 : vector<2x13xf32>
    %91 = arith.mulf %86, %88 : vector<2x13xf32>
    %92 = arith.addf %90, %91 : vector<2x13xf32>
    %93 = math.tanh %92 : vector<2x13xf32>
    %94 = arith.mulf %89, %93 : vector<2x13xf32>
    %cst_35 = arith.constant dense<0.000000e+00> : vector<2x52xf32>
    %95 = tpu.matmul %94, %65, %cst_35 {dimension_numbers = #tpu.dot_dimension_numbers<[1], [0], [0], [1], [0, 0, 1, 1], [], []>} : vector<2x13xf32>, vector<13x52xf32>, vector<2x52xf32> -> vector<2x52xf32>
    %96 = arith.addf %67, %95 : vector<2x52xf32>
    %97 = math.tanh %96 : vector<2x52xf32>
    %98 = arith.negf %96 : vector<2x52xf32>
    %99 = math.exp %98 : vector<2x52xf32>
    %cst_36 = arith.constant 1.000000e+00 : f32
    %100 = vector.broadcast %cst_36 : f32 to vector<2x52xf32>
    %101 = arith.addf %100, %99 : vector<2x52xf32>
    %102 = arith.divf %100, %101 : vector<2x52xf32>
    %103 = arith.select %53, %97, %102 : vector<2x52xi1>, vector<2x52xf32>
    %104 = vector.extract_strided_slice %103 {offsets = [0, 0], sizes = [2, 13], strides = [1, 1]} : vector<2x52xf32> to vector<2x13xf32>
    %105 = vector.extract_strided_slice %103 {offsets = [0, 13], sizes = [2, 13], strides = [1, 1]} : vector<2x52xf32> to vector<2x13xf32>
    %106 = vector.extract_strided_slice %103 {offsets = [0, 26], sizes = [2, 13], strides = [1, 1]} : vector<2x52xf32> to vector<2x13xf32>
    %107 = vector.extract_strided_slice %103 {offsets = [0, 39], sizes = [2, 13], strides = [1, 1]} : vector<2x52xf32> to vector<2x13xf32>
    %108 = arith.mulf %105, %92 : vector<2x13xf32>
    %109 = arith.mulf %104, %106 : vector<2x13xf32>
    %110 = arith.addf %108, %109 : vector<2x13xf32>
    %111 = math.tanh %110 : vector<2x13xf32>
    %112 = arith.mulf %107, %111 : vector<2x13xf32>
    %cst_37 = arith.constant dense<0.000000e+00> : vector<2x52xf32>
    %113 = tpu.matmul %112, %65, %cst_37 {dimension_numbers = #tpu.dot_dimension_numbers<[1], [0], [0], [1], [0, 0, 1, 1], [], []>} : vector<2x13xf32>, vector<13x52xf32>, vector<2x52xf32> -> vector<2x52xf32>
    %114 = arith.addf %68, %113 : vector<2x52xf32>
    %115 = math.tanh %114 : vector<2x52xf32>
    %116 = arith.negf %114 : vector<2x52xf32>
    %117 = math.exp %116 : vector<2x52xf32>
    %cst_38 = arith.constant 1.000000e+00 : f32
    %118 = vector.broadcast %cst_38 : f32 to vector<2x52xf32>
    %119 = arith.addf %118, %117 : vector<2x52xf32>
    %120 = arith.divf %118, %119 : vector<2x52xf32>
    %121 = arith.select %53, %115, %120 : vector<2x52xi1>, vector<2x52xf32>
    %122 = vector.extract_strided_slice %121 {offsets = [0, 0], sizes = [2, 13], strides = [1, 1]} : vector<2x52xf32> to vector<2x13xf32>
    %123 = vector.extract_strided_slice %121 {offsets = [0, 13], sizes = [2, 13], strides = [1, 1]} : vector<2x52xf32> to vector<2x13xf32>
    %124 = vector.extract_strided_slice %121 {offsets = [0, 26], sizes = [2, 13], strides = [1, 1]} : vector<2x52xf32> to vector<2x13xf32>
    %125 = vector.extract_strided_slice %121 {offsets = [0, 39], sizes = [2, 13], strides = [1, 1]} : vector<2x52xf32> to vector<2x13xf32>
    %126 = arith.mulf %123, %110 : vector<2x13xf32>
    %127 = arith.mulf %122, %124 : vector<2x13xf32>
    %128 = arith.addf %126, %127 : vector<2x13xf32>
    %129 = math.tanh %128 : vector<2x13xf32>
    %130 = arith.mulf %125, %129 : vector<2x13xf32>
    %cst_39 = arith.constant dense<0.000000e+00> : vector<2x52xf32>
    %131 = tpu.matmul %130, %65, %cst_39 {dimension_numbers = #tpu.dot_dimension_numbers<[1], [0], [0], [1], [0, 0, 1, 1], [], []>} : vector<2x13xf32>, vector<13x52xf32>, vector<2x52xf32> -> vector<2x52xf32>
    %132 = arith.addf %69, %131 : vector<2x52xf32>
    %133 = math.tanh %132 : vector<2x52xf32>
    %134 = arith.negf %132 : vector<2x52xf32>
    %135 = math.exp %134 : vector<2x52xf32>
    %cst_40 = arith.constant 1.000000e+00 : f32
    %136 = vector.broadcast %cst_40 : f32 to vector<2x52xf32>
    %137 = arith.addf %136, %135 : vector<2x52xf32>
    %138 = arith.divf %136, %137 : vector<2x52xf32>
    %139 = arith.select %53, %133, %138 : vector<2x52xi1>, vector<2x52xf32>
    %140 = vector.extract_strided_slice %139 {offsets = [0, 0], sizes = [2, 13], strides = [1, 1]} : vector<2x52xf32> to vector<2x13xf32>
    %141 = vector.extract_strided_slice %139 {offsets = [0, 13], sizes = [2, 13], strides = [1, 1]} : vector<2x52xf32> to vector<2x13xf32>
    %142 = vector.extract_strided_slice %139 {offsets = [0, 26], sizes = [2, 13], strides = [1, 1]} : vector<2x52xf32> to vector<2x13xf32>
    %143 = vector.extract_strided_slice %139 {offsets = [0, 39], sizes = [2, 13], strides = [1, 1]} : vector<2x52xf32> to vector<2x13xf32>
    %144 = arith.mulf %141, %128 : vector<2x13xf32>
    %145 = arith.mulf %140, %142 : vector<2x13xf32>
    %146 = arith.addf %144, %145 : vector<2x13xf32>
    %147 = math.tanh %146 : vector<2x13xf32>
    %148 = arith.mulf %143, %147 : vector<2x13xf32>
    %cst_41 = arith.constant dense<0.000000e+00> : vector<2x52xf32>
    %149 = tpu.matmul %148, %65, %cst_41 {dimension_numbers = #tpu.dot_dimension_numbers<[1], [0], [0], [1], [0, 0, 1, 1], [], []>} : vector<2x13xf32>, vector<13x52xf32>, vector<2x52xf32> -> vector<2x52xf32>
    %150 = arith.addf %70, %149 : vector<2x52xf32>
    %151 = math.tanh %150 : vector<2x52xf32>
    %152 = arith.negf %150 : vector<2x52xf32>
    %153 = math.exp %152 : vector<2x52xf32>
    %cst_42 = arith.constant 1.000000e+00 : f32
    %154 = vector.broadcast %cst_42 : f32 to vector<2x52xf32>
    %155 = arith.addf %154, %153 : vector<2x52xf32>
    %156 = arith.divf %154, %155 : vector<2x52xf32>
    %157 = arith.select %53, %151, %156 : vector<2x52xi1>, vector<2x52xf32>
    %158 = vector.extract_strided_slice %157 {offsets = [0, 0], sizes = [2, 13], strides = [1, 1]} : vector<2x52xf32> to vector<2x13xf32>
    %159 = vector.extract_strided_slice %157 {offsets = [0, 13], sizes = [2, 13], strides = [1, 1]} : vector<2x52xf32> to vector<2x13xf32>
    %160 = vector.extract_strided_slice %157 {offsets = [0, 26], sizes = [2, 13], strides = [1, 1]} : vector<2x52xf32> to vector<2x13xf32>
    %161 = vector.extract_strided_slice %157 {offsets = [0, 39], sizes = [2, 13], strides = [1, 1]} : vector<2x52xf32> to vector<2x13xf32>
    %162 = arith.mulf %159, %146 : vector<2x13xf32>
    %163 = arith.mulf %158, %160 : vector<2x13xf32>
    %164 = arith.addf %162, %163 : vector<2x13xf32>
    %165 = math.tanh %164 : vector<2x13xf32>
    %166 = arith.mulf %161, %165 : vector<2x13xf32>
    %cst_43 = arith.constant dense<0.000000e+00> : vector<2x52xf32>
    %167 = tpu.matmul %166, %65, %cst_43 {dimension_numbers = #tpu.dot_dimension_numbers<[1], [0], [0], [1], [0, 0, 1, 1], [], []>} : vector<2x13xf32>, vector<13x52xf32>, vector<2x52xf32> -> vector<2x52xf32>
    %168 = arith.addf %71, %167 : vector<2x52xf32>
    %169 = math.tanh %168 : vector<2x52xf32>
    %170 = arith.negf %168 : vector<2x52xf32>
    %171 = math.exp %170 : vector<2x52xf32>
    %cst_44 = arith.constant 1.000000e+00 : f32
    %172 = vector.broadcast %cst_44 : f32 to vector<2x52xf32>
    %173 = arith.addf %172, %171 : vector<2x52xf32>
    %174 = arith.divf %172, %173 : vector<2x52xf32>
    %175 = arith.select %53, %169, %174 : vector<2x52xi1>, vector<2x52xf32>
    %176 = vector.extract_strided_slice %175 {offsets = [0, 0], sizes = [2, 13], strides = [1, 1]} : vector<2x52xf32> to vector<2x13xf32>
    %177 = vector.extract_strided_slice %175 {offsets = [0, 13], sizes = [2, 13], strides = [1, 1]} : vector<2x52xf32> to vector<2x13xf32>
    %178 = vector.extract_strided_slice %175 {offsets = [0, 26], sizes = [2, 13], strides = [1, 1]} : vector<2x52xf32> to vector<2x13xf32>
    %179 = vector.extract_strided_slice %175 {offsets = [0, 39], sizes = [2, 13], strides = [1, 1]} : vector<2x52xf32> to vector<2x13xf32>
    %180 = arith.mulf %177, %164 : vector<2x13xf32>
    %181 = arith.mulf %176, %178 : vector<2x13xf32>
    %182 = arith.addf %180, %181 : vector<2x13xf32>
    %183 = math.tanh %182 : vector<2x13xf32>
    %184 = arith.mulf %179, %183 : vector<2x13xf32>
    %cst_45 = arith.constant dense<0.000000e+00> : vector<2x52xf32>
    %185 = tpu.matmul %184, %65, %cst_45 {dimension_numbers = #tpu.dot_dimension_numbers<[1], [0], [0], [1], [0, 0, 1, 1], [], []>} : vector<2x13xf32>, vector<13x52xf32>, vector<2x52xf32> -> vector<2x52xf32>
    %186 = arith.addf %72, %185 : vector<2x52xf32>
    %187 = math.tanh %186 : vector<2x52xf32>
    %188 = arith.negf %186 : vector<2x52xf32>
    %189 = math.exp %188 : vector<2x52xf32>
    %cst_46 = arith.constant 1.000000e+00 : f32
    %190 = vector.broadcast %cst_46 : f32 to vector<2x52xf32>
    %191 = arith.addf %190, %189 : vector<2x52xf32>
    %192 = arith.divf %190, %191 : vector<2x52xf32>
    %193 = arith.select %53, %187, %192 : vector<2x52xi1>, vector<2x52xf32>
    %194 = vector.extract_strided_slice %193 {offsets = [0, 0], sizes = [2, 13], strides = [1, 1]} : vector<2x52xf32> to vector<2x13xf32>
    %195 = vector.extract_strided_slice %193 {offsets = [0, 13], sizes = [2, 13], strides = [1, 1]} : vector<2x52xf32> to vector<2x13xf32>
    %196 = vector.extract_strided_slice %193 {offsets = [0, 26], sizes = [2, 13], strides = [1, 1]} : vector<2x52xf32> to vector<2x13xf32>
    %197 = vector.extract_strided_slice %193 {offsets = [0, 39], sizes = [2, 13], strides = [1, 1]} : vector<2x52xf32> to vector<2x13xf32>
    %198 = arith.mulf %195, %182 : vector<2x13xf32>
    %199 = arith.mulf %194, %196 : vector<2x13xf32>
    %200 = arith.addf %198, %199 : vector<2x13xf32>
    %201 = math.tanh %200 : vector<2x13xf32>
    %202 = arith.mulf %197, %201 : vector<2x13xf32>
    %cst_47 = arith.constant dense<0.000000e+00> : vector<2x52xf32>
    %203 = tpu.matmul %202, %65, %cst_47 {dimension_numbers = #tpu.dot_dimension_numbers<[1], [0], [0], [1], [0, 0, 1, 1], [], []>} : vector<2x13xf32>, vector<13x52xf32>, vector<2x52xf32> -> vector<2x52xf32>
    %204 = arith.addf %73, %203 : vector<2x52xf32>
    %205 = math.tanh %204 : vector<2x52xf32>
    %206 = arith.negf %204 : vector<2x52xf32>
    %207 = math.exp %206 : vector<2x52xf32>
    %cst_48 = arith.constant 1.000000e+00 : f32
    %208 = vector.broadcast %cst_48 : f32 to vector<2x52xf32>
    %209 = arith.addf %208, %207 : vector<2x52xf32>
    %210 = arith.divf %208, %209 : vector<2x52xf32>
    %211 = arith.select %53, %205, %210 : vector<2x52xi1>, vector<2x52xf32>
    %212 = vector.extract_strided_slice %211 {offsets = [0, 0], sizes = [2, 13], strides = [1, 1]} : vector<2x52xf32> to vector<2x13xf32>
    %213 = vector.extract_strided_slice %211 {offsets = [0, 13], sizes = [2, 13], strides = [1, 1]} : vector<2x52xf32> to vector<2x13xf32>
    %214 = vector.extract_strided_slice %211 {offsets = [0, 26], sizes = [2, 13], strides = [1, 1]} : vector<2x52xf32> to vector<2x13xf32>
    %215 = vector.extract_strided_slice %211 {offsets = [0, 39], sizes = [2, 13], strides = [1, 1]} : vector<2x52xf32> to vector<2x13xf32>
    %216 = arith.mulf %213, %200 : vector<2x13xf32>
    %217 = arith.mulf %212, %214 : vector<2x13xf32>
    %218 = arith.addf %216, %217 : vector<2x13xf32>
    %219 = math.tanh %218 : vector<2x13xf32>
    %220 = arith.mulf %215, %219 : vector<2x13xf32>
    %cst_49 = arith.constant dense<0.000000e+00> : vector<2x52xf32>
    %221 = tpu.matmul %220, %65, %cst_49 {dimension_numbers = #tpu.dot_dimension_numbers<[1], [0], [0], [1], [0, 0, 1, 1], [], []>} : vector<2x13xf32>, vector<13x52xf32>, vector<2x52xf32> -> vector<2x52xf32>
    %222 = arith.addf %74, %221 : vector<2x52xf32>
    %223 = math.tanh %222 : vector<2x52xf32>
    %224 = arith.negf %222 : vector<2x52xf32>
    %225 = math.exp %224 : vector<2x52xf32>
    %cst_50 = arith.constant 1.000000e+00 : f32
    %226 = vector.broadcast %cst_50 : f32 to vector<2x52xf32>
    %227 = arith.addf %226, %225 : vector<2x52xf32>
    %228 = arith.divf %226, %227 : vector<2x52xf32>
    %229 = arith.select %53, %223, %228 : vector<2x52xi1>, vector<2x52xf32>
    %230 = vector.extract_strided_slice %229 {offsets = [0, 0], sizes = [2, 13], strides = [1, 1]} : vector<2x52xf32> to vector<2x13xf32>
    %231 = vector.extract_strided_slice %229 {offsets = [0, 13], sizes = [2, 13], strides = [1, 1]} : vector<2x52xf32> to vector<2x13xf32>
    %232 = vector.extract_strided_slice %229 {offsets = [0, 26], sizes = [2, 13], strides = [1, 1]} : vector<2x52xf32> to vector<2x13xf32>
    %233 = vector.extract_strided_slice %229 {offsets = [0, 39], sizes = [2, 13], strides = [1, 1]} : vector<2x52xf32> to vector<2x13xf32>
    %234 = arith.mulf %231, %218 : vector<2x13xf32>
    %235 = arith.mulf %230, %232 : vector<2x13xf32>
    %236 = arith.addf %234, %235 : vector<2x13xf32>
    %237 = math.tanh %236 : vector<2x13xf32>
    %238 = arith.mulf %233, %237 : vector<2x13xf32>
    %239 = tpu.concatenate %94, %112, %130, %148, %166, %184, %202, %220, %238 in 0 : vector<2x13xf32>, vector<2x13xf32>, vector<2x13xf32>, vector<2x13xf32>, vector<2x13xf32>, vector<2x13xf32>, vector<2x13xf32>, vector<2x13xf32>, vector<2x13xf32> -> vector<18x13xf32>
    %c0_51 = arith.constant 0 : index
    %c1_52 = arith.constant 1 : index
    %c0_53 = arith.constant 0 : index
    %c0_54 = arith.constant 0 : index
    %240 = vector.load %arg6[%c0_51, %c1_52, %c0_53, %c0_54] : memref<4x2x13x52xf32, #tpu.memory_space<vmem>>, vector<1x1x13x52xf32>
    %241 = vector.shape_cast %240 : vector<1x1x13x52xf32> to vector<13x52xf32>
    %242 = vector.extract_strided_slice %63 {offsets = [0, 0], sizes = [2, 52], strides = [1, 1]} : vector<18x52xf32> to vector<2x52xf32>
    %243 = vector.extract_strided_slice %63 {offsets = [2, 0], sizes = [2, 52], strides = [1, 1]} : vector<18x52xf32> to vector<2x52xf32>
    %244 = vector.extract_strided_slice %63 {offsets = [4, 0], sizes = [2, 52], strides = [1, 1]} : vector<18x52xf32> to vector<2x52xf32>
    %245 = vector.extract_strided_slice %63 {offsets = [6, 0], sizes = [2, 52], strides = [1, 1]} : vector<18x52xf32> to vector<2x52xf32>
    %246 = vector.extract_strided_slice %63 {offsets = [8, 0], sizes = [2, 52], strides = [1, 1]} : vector<18x52xf32> to vector<2x52xf32>
    %247 = vector.extract_strided_slice %63 {offsets = [10, 0], sizes = [2, 52], strides = [1, 1]} : vector<18x52xf32> to vector<2x52xf32>
    %248 = vector.extract_strided_slice %63 {offsets = [12, 0], sizes = [2, 52], strides = [1, 1]} : vector<18x52xf32> to vector<2x52xf32>
    %249 = vector.extract_strided_slice %63 {offsets = [14, 0], sizes = [2, 52], strides = [1, 1]} : vector<18x52xf32> to vector<2x52xf32>
    %250 = vector.extract_strided_slice %63 {offsets = [16, 0], sizes = [2, 52], strides = [1, 1]} : vector<18x52xf32> to vector<2x52xf32>
    %cst_55 = arith.constant 0.000000e+00 : f32
    %251 = vector.broadcast %cst_55 : f32 to vector<2x13xf32>
    %cst_56 = arith.constant 0.000000e+00 : f32
    %252 = vector.broadcast %cst_56 : f32 to vector<2x13xf32>
    %cst_57 = arith.constant dense<0.000000e+00> : vector<2x52xf32>
    %253 = tpu.matmul %251, %241, %cst_57 {dimension_numbers = #tpu.dot_dimension_numbers<[1], [0], [0], [1], [0, 0, 1, 1], [], []>} : vector<2x13xf32>, vector<13x52xf32>, vector<2x52xf32> -> vector<2x52xf32>
    %254 = arith.addf %250, %253 : vector<2x52xf32>
    %255 = math.tanh %254 : vector<2x52xf32>
    %256 = arith.negf %254 : vector<2x52xf32>
    %257 = math.exp %256 : vector<2x52xf32>
    %cst_58 = arith.constant 1.000000e+00 : f32
    %258 = vector.broadcast %cst_58 : f32 to vector<2x52xf32>
    %259 = arith.addf %258, %257 : vector<2x52xf32>
    %260 = arith.divf %258, %259 : vector<2x52xf32>
    %261 = arith.select %53, %255, %260 : vector<2x52xi1>, vector<2x52xf32>
    %262 = vector.extract_strided_slice %261 {offsets = [0, 0], sizes = [2, 13], strides = [1, 1]} : vector<2x52xf32> to vector<2x13xf32>
    %263 = vector.extract_strided_slice %261 {offsets = [0, 13], sizes = [2, 13], strides = [1, 1]} : vector<2x52xf32> to vector<2x13xf32>
    %264 = vector.extract_strided_slice %261 {offsets = [0, 26], sizes = [2, 13], strides = [1, 1]} : vector<2x52xf32> to vector<2x13xf32>
    %265 = vector.extract_strided_slice %261 {offsets = [0, 39], sizes = [2, 13], strides = [1, 1]} : vector<2x52xf32> to vector<2x13xf32>
    %266 = arith.mulf %263, %252 : vector<2x13xf32>
    %267 = arith.mulf %262, %264 : vector<2x13xf32>
    %268 = arith.addf %266, %267 : vector<2x13xf32>
    %269 = math.tanh %268 : vector<2x13xf32>
    %270 = arith.mulf %265, %269 : vector<2x13xf32>
    %cst_59 = arith.constant dense<0.000000e+00> : vector<2x52xf32>
    %271 = tpu.matmul %270, %241, %cst_59 {dimension_numbers = #tpu.dot_dimension_numbers<[1], [0], [0], [1], [0, 0, 1, 1], [], []>} : vector<2x13xf32>, vector<13x52xf32>, vector<2x52xf32> -> vector<2x52xf32>
    %272 = arith.addf %249, %271 : vector<2x52xf32>
    %273 = math.tanh %272 : vector<2x52xf32>
    %274 = arith.negf %272 : vector<2x52xf32>
    %275 = math.exp %274 : vector<2x52xf32>
    %cst_60 = arith.constant 1.000000e+00 : f32
    %276 = vector.broadcast %cst_60 : f32 to vector<2x52xf32>
    %277 = arith.addf %276, %275 : vector<2x52xf32>
    %278 = arith.divf %276, %277 : vector<2x52xf32>
    %279 = arith.select %53, %273, %278 : vector<2x52xi1>, vector<2x52xf32>
    %280 = vector.extract_strided_slice %279 {offsets = [0, 0], sizes = [2, 13], strides = [1, 1]} : vector<2x52xf32> to vector<2x13xf32>
    %281 = vector.extract_strided_slice %279 {offsets = [0, 13], sizes = [2, 13], strides = [1, 1]} : vector<2x52xf32> to vector<2x13xf32>
    %282 = vector.extract_strided_slice %279 {offsets = [0, 26], sizes = [2, 13], strides = [1, 1]} : vector<2x52xf32> to vector<2x13xf32>
    %283 = vector.extract_strided_slice %279 {offsets = [0, 39], sizes = [2, 13], strides = [1, 1]} : vector<2x52xf32> to vector<2x13xf32>
    %284 = arith.mulf %281, %268 : vector<2x13xf32>
    %285 = arith.mulf %280, %282 : vector<2x13xf32>
    %286 = arith.addf %284, %285 : vector<2x13xf32>
    %287 = math.tanh %286 : vector<2x13xf32>
    %288 = arith.mulf %283, %287 : vector<2x13xf32>
    %cst_61 = arith.constant dense<0.000000e+00> : vector<2x52xf32>
    %289 = tpu.matmul %288, %241, %cst_61 {dimension_numbers = #tpu.dot_dimension_numbers<[1], [0], [0], [1], [0, 0, 1, 1], [], []>} : vector<2x13xf32>, vector<13x52xf32>, vector<2x52xf32> -> vector<2x52xf32>
    %290 = arith.addf %248, %289 : vector<2x52xf32>
    %291 = math.tanh %290 : vector<2x52xf32>
    %292 = arith.negf %290 : vector<2x52xf32>
    %293 = math.exp %292 : vector<2x52xf32>
    %cst_62 = arith.constant 1.000000e+00 : f32
    %294 = vector.broadcast %cst_62 : f32 to vector<2x52xf32>
    %295 = arith.addf %294, %293 : vector<2x52xf32>
    %296 = arith.divf %294, %295 : vector<2x52xf32>
    %297 = arith.select %53, %291, %296 : vector<2x52xi1>, vector<2x52xf32>
    %298 = vector.extract_strided_slice %297 {offsets = [0, 0], sizes = [2, 13], strides = [1, 1]} : vector<2x52xf32> to vector<2x13xf32>
    %299 = vector.extract_strided_slice %297 {offsets = [0, 13], sizes = [2, 13], strides = [1, 1]} : vector<2x52xf32> to vector<2x13xf32>
    %300 = vector.extract_strided_slice %297 {offsets = [0, 26], sizes = [2, 13], strides = [1, 1]} : vector<2x52xf32> to vector<2x13xf32>
    %301 = vector.extract_strided_slice %297 {offsets = [0, 39], sizes = [2, 13], strides = [1, 1]} : vector<2x52xf32> to vector<2x13xf32>
    %302 = arith.mulf %299, %286 : vector<2x13xf32>
    %303 = arith.mulf %298, %300 : vector<2x13xf32>
    %304 = arith.addf %302, %303 : vector<2x13xf32>
    %305 = math.tanh %304 : vector<2x13xf32>
    %306 = arith.mulf %301, %305 : vector<2x13xf32>
    %cst_63 = arith.constant dense<0.000000e+00> : vector<2x52xf32>
    %307 = tpu.matmul %306, %241, %cst_63 {dimension_numbers = #tpu.dot_dimension_numbers<[1], [0], [0], [1], [0, 0, 1, 1], [], []>} : vector<2x13xf32>, vector<13x52xf32>, vector<2x52xf32> -> vector<2x52xf32>
    %308 = arith.addf %247, %307 : vector<2x52xf32>
    %309 = math.tanh %308 : vector<2x52xf32>
    %310 = arith.negf %308 : vector<2x52xf32>
    %311 = math.exp %310 : vector<2x52xf32>
    %cst_64 = arith.constant 1.000000e+00 : f32
    %312 = vector.broadcast %cst_64 : f32 to vector<2x52xf32>
    %313 = arith.addf %312, %311 : vector<2x52xf32>
    %314 = arith.divf %312, %313 : vector<2x52xf32>
    %315 = arith.select %53, %309, %314 : vector<2x52xi1>, vector<2x52xf32>
    %316 = vector.extract_strided_slice %315 {offsets = [0, 0], sizes = [2, 13], strides = [1, 1]} : vector<2x52xf32> to vector<2x13xf32>
    %317 = vector.extract_strided_slice %315 {offsets = [0, 13], sizes = [2, 13], strides = [1, 1]} : vector<2x52xf32> to vector<2x13xf32>
    %318 = vector.extract_strided_slice %315 {offsets = [0, 26], sizes = [2, 13], strides = [1, 1]} : vector<2x52xf32> to vector<2x13xf32>
    %319 = vector.extract_strided_slice %315 {offsets = [0, 39], sizes = [2, 13], strides = [1, 1]} : vector<2x52xf32> to vector<2x13xf32>
    %320 = arith.mulf %317, %304 : vector<2x13xf32>
    %321 = arith.mulf %316, %318 : vector<2x13xf32>
    %322 = arith.addf %320, %321 : vector<2x13xf32>
    %323 = math.tanh %322 : vector<2x13xf32>
    %324 = arith.mulf %319, %323 : vector<2x13xf32>
    %cst_65 = arith.constant dense<0.000000e+00> : vector<2x52xf32>
    %325 = tpu.matmul %324, %241, %cst_65 {dimension_numbers = #tpu.dot_dimension_numbers<[1], [0], [0], [1], [0, 0, 1, 1], [], []>} : vector<2x13xf32>, vector<13x52xf32>, vector<2x52xf32> -> vector<2x52xf32>
    %326 = arith.addf %246, %325 : vector<2x52xf32>
    %327 = math.tanh %326 : vector<2x52xf32>
    %328 = arith.negf %326 : vector<2x52xf32>
    %329 = math.exp %328 : vector<2x52xf32>
    %cst_66 = arith.constant 1.000000e+00 : f32
    %330 = vector.broadcast %cst_66 : f32 to vector<2x52xf32>
    %331 = arith.addf %330, %329 : vector<2x52xf32>
    %332 = arith.divf %330, %331 : vector<2x52xf32>
    %333 = arith.select %53, %327, %332 : vector<2x52xi1>, vector<2x52xf32>
    %334 = vector.extract_strided_slice %333 {offsets = [0, 0], sizes = [2, 13], strides = [1, 1]} : vector<2x52xf32> to vector<2x13xf32>
    %335 = vector.extract_strided_slice %333 {offsets = [0, 13], sizes = [2, 13], strides = [1, 1]} : vector<2x52xf32> to vector<2x13xf32>
    %336 = vector.extract_strided_slice %333 {offsets = [0, 26], sizes = [2, 13], strides = [1, 1]} : vector<2x52xf32> to vector<2x13xf32>
    %337 = vector.extract_strided_slice %333 {offsets = [0, 39], sizes = [2, 13], strides = [1, 1]} : vector<2x52xf32> to vector<2x13xf32>
    %338 = arith.mulf %335, %322 : vector<2x13xf32>
    %339 = arith.mulf %334, %336 : vector<2x13xf32>
    %340 = arith.addf %338, %339 : vector<2x13xf32>
    %341 = math.tanh %340 : vector<2x13xf32>
    %342 = arith.mulf %337, %341 : vector<2x13xf32>
    %cst_67 = arith.constant dense<0.000000e+00> : vector<2x52xf32>
    %343 = tpu.matmul %342, %241, %cst_67 {dimension_numbers = #tpu.dot_dimension_numbers<[1], [0], [0], [1], [0, 0, 1, 1], [], []>} : vector<2x13xf32>, vector<13x52xf32>, vector<2x52xf32> -> vector<2x52xf32>
    %344 = arith.addf %245, %343 : vector<2x52xf32>
    %345 = math.tanh %344 : vector<2x52xf32>
    %346 = arith.negf %344 : vector<2x52xf32>
    %347 = math.exp %346 : vector<2x52xf32>
    %cst_68 = arith.constant 1.000000e+00 : f32
    %348 = vector.broadcast %cst_68 : f32 to vector<2x52xf32>
    %349 = arith.addf %348, %347 : vector<2x52xf32>
    %350 = arith.divf %348, %349 : vector<2x52xf32>
    %351 = arith.select %53, %345, %350 : vector<2x52xi1>, vector<2x52xf32>
    %352 = vector.extract_strided_slice %351 {offsets = [0, 0], sizes = [2, 13], strides = [1, 1]} : vector<2x52xf32> to vector<2x13xf32>
    %353 = vector.extract_strided_slice %351 {offsets = [0, 13], sizes = [2, 13], strides = [1, 1]} : vector<2x52xf32> to vector<2x13xf32>
    %354 = vector.extract_strided_slice %351 {offsets = [0, 26], sizes = [2, 13], strides = [1, 1]} : vector<2x52xf32> to vector<2x13xf32>
    %355 = vector.extract_strided_slice %351 {offsets = [0, 39], sizes = [2, 13], strides = [1, 1]} : vector<2x52xf32> to vector<2x13xf32>
    %356 = arith.mulf %353, %340 : vector<2x13xf32>
    %357 = arith.mulf %352, %354 : vector<2x13xf32>
    %358 = arith.addf %356, %357 : vector<2x13xf32>
    %359 = math.tanh %358 : vector<2x13xf32>
    %360 = arith.mulf %355, %359 : vector<2x13xf32>
    %cst_69 = arith.constant dense<0.000000e+00> : vector<2x52xf32>
    %361 = tpu.matmul %360, %241, %cst_69 {dimension_numbers = #tpu.dot_dimension_numbers<[1], [0], [0], [1], [0, 0, 1, 1], [], []>} : vector<2x13xf32>, vector<13x52xf32>, vector<2x52xf32> -> vector<2x52xf32>
    %362 = arith.addf %244, %361 : vector<2x52xf32>
    %363 = math.tanh %362 : vector<2x52xf32>
    %364 = arith.negf %362 : vector<2x52xf32>
    %365 = math.exp %364 : vector<2x52xf32>
    %cst_70 = arith.constant 1.000000e+00 : f32
    %366 = vector.broadcast %cst_70 : f32 to vector<2x52xf32>
    %367 = arith.addf %366, %365 : vector<2x52xf32>
    %368 = arith.divf %366, %367 : vector<2x52xf32>
    %369 = arith.select %53, %363, %368 : vector<2x52xi1>, vector<2x52xf32>
    %370 = vector.extract_strided_slice %369 {offsets = [0, 0], sizes = [2, 13], strides = [1, 1]} : vector<2x52xf32> to vector<2x13xf32>
    %371 = vector.extract_strided_slice %369 {offsets = [0, 13], sizes = [2, 13], strides = [1, 1]} : vector<2x52xf32> to vector<2x13xf32>
    %372 = vector.extract_strided_slice %369 {offsets = [0, 26], sizes = [2, 13], strides = [1, 1]} : vector<2x52xf32> to vector<2x13xf32>
    %373 = vector.extract_strided_slice %369 {offsets = [0, 39], sizes = [2, 13], strides = [1, 1]} : vector<2x52xf32> to vector<2x13xf32>
    %374 = arith.mulf %371, %358 : vector<2x13xf32>
    %375 = arith.mulf %370, %372 : vector<2x13xf32>
    %376 = arith.addf %374, %375 : vector<2x13xf32>
    %377 = math.tanh %376 : vector<2x13xf32>
    %378 = arith.mulf %373, %377 : vector<2x13xf32>
    %cst_71 = arith.constant dense<0.000000e+00> : vector<2x52xf32>
    %379 = tpu.matmul %378, %241, %cst_71 {dimension_numbers = #tpu.dot_dimension_numbers<[1], [0], [0], [1], [0, 0, 1, 1], [], []>} : vector<2x13xf32>, vector<13x52xf32>, vector<2x52xf32> -> vector<2x52xf32>
    %380 = arith.addf %243, %379 : vector<2x52xf32>
    %381 = math.tanh %380 : vector<2x52xf32>
    %382 = arith.negf %380 : vector<2x52xf32>
    %383 = math.exp %382 : vector<2x52xf32>
    %cst_72 = arith.constant 1.000000e+00 : f32
    %384 = vector.broadcast %cst_72 : f32 to vector<2x52xf32>
    %385 = arith.addf %384, %383 : vector<2x52xf32>
    %386 = arith.divf %384, %385 : vector<2x52xf32>
    %387 = arith.select %53, %381, %386 : vector<2x52xi1>, vector<2x52xf32>
    %388 = vector.extract_strided_slice %387 {offsets = [0, 0], sizes = [2, 13], strides = [1, 1]} : vector<2x52xf32> to vector<2x13xf32>
    %389 = vector.extract_strided_slice %387 {offsets = [0, 13], sizes = [2, 13], strides = [1, 1]} : vector<2x52xf32> to vector<2x13xf32>
    %390 = vector.extract_strided_slice %387 {offsets = [0, 26], sizes = [2, 13], strides = [1, 1]} : vector<2x52xf32> to vector<2x13xf32>
    %391 = vector.extract_strided_slice %387 {offsets = [0, 39], sizes = [2, 13], strides = [1, 1]} : vector<2x52xf32> to vector<2x13xf32>
    %392 = arith.mulf %389, %376 : vector<2x13xf32>
    %393 = arith.mulf %388, %390 : vector<2x13xf32>
    %394 = arith.addf %392, %393 : vector<2x13xf32>
    %395 = math.tanh %394 : vector<2x13xf32>
    %396 = arith.mulf %391, %395 : vector<2x13xf32>
    %cst_73 = arith.constant dense<0.000000e+00> : vector<2x52xf32>
    %397 = tpu.matmul %396, %241, %cst_73 {dimension_numbers = #tpu.dot_dimension_numbers<[1], [0], [0], [1], [0, 0, 1, 1], [], []>} : vector<2x13xf32>, vector<13x52xf32>, vector<2x52xf32> -> vector<2x52xf32>
    %398 = arith.addf %242, %397 : vector<2x52xf32>
    %399 = math.tanh %398 : vector<2x52xf32>
    %400 = arith.negf %398 : vector<2x52xf32>
    %401 = math.exp %400 : vector<2x52xf32>
    %cst_74 = arith.constant 1.000000e+00 : f32
    %402 = vector.broadcast %cst_74 : f32 to vector<2x52xf32>
    %403 = arith.addf %402, %401 : vector<2x52xf32>
    %404 = arith.divf %402, %403 : vector<2x52xf32>
    %405 = arith.select %53, %399, %404 : vector<2x52xi1>, vector<2x52xf32>
    %406 = vector.extract_strided_slice %405 {offsets = [0, 0], sizes = [2, 13], strides = [1, 1]} : vector<2x52xf32> to vector<2x13xf32>
    %407 = vector.extract_strided_slice %405 {offsets = [0, 13], sizes = [2, 13], strides = [1, 1]} : vector<2x52xf32> to vector<2x13xf32>
    %408 = vector.extract_strided_slice %405 {offsets = [0, 26], sizes = [2, 13], strides = [1, 1]} : vector<2x52xf32> to vector<2x13xf32>
    %409 = vector.extract_strided_slice %405 {offsets = [0, 39], sizes = [2, 13], strides = [1, 1]} : vector<2x52xf32> to vector<2x13xf32>
    %410 = arith.mulf %407, %394 : vector<2x13xf32>
    %411 = arith.mulf %406, %408 : vector<2x13xf32>
    %412 = arith.addf %410, %411 : vector<2x13xf32>
    %413 = math.tanh %412 : vector<2x13xf32>
    %414 = arith.mulf %409, %413 : vector<2x13xf32>
    %415 = tpu.concatenate %414, %396, %378, %360, %342, %324, %306, %288, %270 in 0 : vector<2x13xf32>, vector<2x13xf32>, vector<2x13xf32>, vector<2x13xf32>, vector<2x13xf32>, vector<2x13xf32>, vector<2x13xf32>, vector<2x13xf32>, vector<2x13xf32> -> vector<18x13xf32>
    %c0_75 = arith.constant 0 : index
    %c0_76 = arith.constant 0 : index
    %c0_77 = arith.constant 0 : index
    %c0_78 = arith.constant 0 : index
    %c0_79 = arith.constant 0 : index
    %416 = vector.load %arg5[%c0_75, %c0_76, %c0_77, %c0_78, %c0_79] : memref<3x2x2x13x52xf32, #tpu.memory_space<vmem>>, vector<1x1x1x13x52xf32>
    %417 = vector.shape_cast %416 : vector<1x1x1x13x52xf32> to vector<13x52xf32>
    %cst_80 = arith.constant dense<0.000000e+00> : vector<18x52xf32>
    %418 = tpu.matmul %239, %417, %cst_80 {dimension_numbers = #tpu.dot_dimension_numbers<[1], [0], [0], [1], [0, 0, 1, 1], [], []>} : vector<18x13xf32>, vector<13x52xf32>, vector<18x52xf32> -> vector<18x52xf32>
    %c0_81 = arith.constant 0 : index
    %c0_82 = arith.constant 0 : index
    %c1_83 = arith.constant 1 : index
    %c0_84 = arith.constant 0 : index
    %c0_85 = arith.constant 0 : index
    %419 = vector.load %arg5[%c0_81, %c0_82, %c1_83, %c0_84, %c0_85] : memref<3x2x2x13x52xf32, #tpu.memory_space<vmem>>, vector<1x1x1x13x52xf32>
    %420 = vector.shape_cast %419 : vector<1x1x1x13x52xf32> to vector<13x52xf32>
    %cst_86 = arith.constant dense<0.000000e+00> : vector<18x52xf32>
    %421 = tpu.matmul %415, %420, %cst_86 {dimension_numbers = #tpu.dot_dimension_numbers<[1], [0], [0], [1], [0, 0, 1, 1], [], []>} : vector<18x13xf32>, vector<13x52xf32>, vector<18x52xf32> -> vector<18x52xf32>
    %422 = arith.addf %418, %421 : vector<18x52xf32>
    %c1_87 = arith.constant 1 : index
    %c0_88 = arith.constant 0 : index
    %c0_89 = arith.constant 0 : index
    %c0_90 = arith.constant 0 : index
    %423 = vector.load %arg7[%c1_87, %c0_88, %c0_89, %c0_90] : memref<4x2x1x52xf32, #tpu.memory_space<vmem>>, vector<1x1x1x52xf32>
    %424 = vector.shape_cast %423 : vector<1x1x1x52xf32> to vector<1x52xf32>
    %425 = vector.broadcast %424 : vector<1x52xf32> to vector<18x52xf32>
    %426 = arith.addf %422, %425 : vector<18x52xf32>
    %c0_91 = arith.constant 0 : index
    %c1_92 = arith.constant 1 : index
    %c0_93 = arith.constant 0 : index
    %c0_94 = arith.constant 0 : index
    %c0_95 = arith.constant 0 : index
    %427 = vector.load %arg5[%c0_91, %c1_92, %c0_93, %c0_94, %c0_95] : memref<3x2x2x13x52xf32, #tpu.memory_space<vmem>>, vector<1x1x1x13x52xf32>
    %428 = vector.shape_cast %427 : vector<1x1x1x13x52xf32> to vector<13x52xf32>
    %cst_96 = arith.constant dense<0.000000e+00> : vector<18x52xf32>
    %429 = tpu.matmul %239, %428, %cst_96 {dimension_numbers = #tpu.dot_dimension_numbers<[1], [0], [0], [1], [0, 0, 1, 1], [], []>} : vector<18x13xf32>, vector<13x52xf32>, vector<18x52xf32> -> vector<18x52xf32>
    %c0_97 = arith.constant 0 : index
    %c1_98 = arith.constant 1 : index
    %c1_99 = arith.constant 1 : index
    %c0_100 = arith.constant 0 : index
    %c0_101 = arith.constant 0 : index
    %430 = vector.load %arg5[%c0_97, %c1_98, %c1_99, %c0_100, %c0_101] : memref<3x2x2x13x52xf32, #tpu.memory_space<vmem>>, vector<1x1x1x13x52xf32>
    %431 = vector.shape_cast %430 : vector<1x1x1x13x52xf32> to vector<13x52xf32>
    %cst_102 = arith.constant dense<0.000000e+00> : vector<18x52xf32>
    %432 = tpu.matmul %415, %431, %cst_102 {dimension_numbers = #tpu.dot_dimension_numbers<[1], [0], [0], [1], [0, 0, 1, 1], [], []>} : vector<18x13xf32>, vector<13x52xf32>, vector<18x52xf32> -> vector<18x52xf32>
    %433 = arith.addf %429, %432 : vector<18x52xf32>
    %c1_103 = arith.constant 1 : index
    %c1_104 = arith.constant 1 : index
    %c0_105 = arith.constant 0 : index
    %c0_106 = arith.constant 0 : index
    %434 = vector.load %arg7[%c1_103, %c1_104, %c0_105, %c0_106] : memref<4x2x1x52xf32, #tpu.memory_space<vmem>>, vector<1x1x1x52xf32>
    %435 = vector.shape_cast %434 : vector<1x1x1x52xf32> to vector<1x52xf32>
    %436 = vector.broadcast %435 : vector<1x52xf32> to vector<18x52xf32>
    %437 = arith.addf %433, %436 : vector<18x52xf32>
    %c1_107 = arith.constant 1 : index
    %c0_108 = arith.constant 0 : index
    %c0_109 = arith.constant 0 : index
    %c0_110 = arith.constant 0 : index
    %438 = vector.load %arg6[%c1_107, %c0_108, %c0_109, %c0_110] : memref<4x2x13x52xf32, #tpu.memory_space<vmem>>, vector<1x1x13x52xf32>
    %439 = vector.shape_cast %438 : vector<1x1x13x52xf32> to vector<13x52xf32>
    %440 = vector.extract_strided_slice %426 {offsets = [0, 0], sizes = [2, 52], strides = [1, 1]} : vector<18x52xf32> to vector<2x52xf32>
    %441 = vector.extract_strided_slice %426 {offsets = [2, 0], sizes = [2, 52], strides = [1, 1]} : vector<18x52xf32> to vector<2x52xf32>
    %442 = vector.extract_strided_slice %426 {offsets = [4, 0], sizes = [2, 52], strides = [1, 1]} : vector<18x52xf32> to vector<2x52xf32>
    %443 = vector.extract_strided_slice %426 {offsets = [6, 0], sizes = [2, 52], strides = [1, 1]} : vector<18x52xf32> to vector<2x52xf32>
    %444 = vector.extract_strided_slice %426 {offsets = [8, 0], sizes = [2, 52], strides = [1, 1]} : vector<18x52xf32> to vector<2x52xf32>
    %445 = vector.extract_strided_slice %426 {offsets = [10, 0], sizes = [2, 52], strides = [1, 1]} : vector<18x52xf32> to vector<2x52xf32>
    %446 = vector.extract_strided_slice %426 {offsets = [12, 0], sizes = [2, 52], strides = [1, 1]} : vector<18x52xf32> to vector<2x52xf32>
    %447 = vector.extract_strided_slice %426 {offsets = [14, 0], sizes = [2, 52], strides = [1, 1]} : vector<18x52xf32> to vector<2x52xf32>
    %448 = vector.extract_strided_slice %426 {offsets = [16, 0], sizes = [2, 52], strides = [1, 1]} : vector<18x52xf32> to vector<2x52xf32>
    %cst_111 = arith.constant 0.000000e+00 : f32
    %449 = vector.broadcast %cst_111 : f32 to vector<2x13xf32>
    %cst_112 = arith.constant 0.000000e+00 : f32
    %450 = vector.broadcast %cst_112 : f32 to vector<2x13xf32>
    %cst_113 = arith.constant dense<0.000000e+00> : vector<2x52xf32>
    %451 = tpu.matmul %449, %439, %cst_113 {dimension_numbers = #tpu.dot_dimension_numbers<[1], [0], [0], [1], [0, 0, 1, 1], [], []>} : vector<2x13xf32>, vector<13x52xf32>, vector<2x52xf32> -> vector<2x52xf32>
    %452 = arith.addf %440, %451 : vector<2x52xf32>
    %453 = math.tanh %452 : vector<2x52xf32>
    %454 = arith.negf %452 : vector<2x52xf32>
    %455 = math.exp %454 : vector<2x52xf32>
    %cst_114 = arith.constant 1.000000e+00 : f32
    %456 = vector.broadcast %cst_114 : f32 to vector<2x52xf32>
    %457 = arith.addf %456, %455 : vector<2x52xf32>
    %458 = arith.divf %456, %457 : vector<2x52xf32>
    %459 = arith.select %53, %453, %458 : vector<2x52xi1>, vector<2x52xf32>
    %460 = vector.extract_strided_slice %459 {offsets = [0, 0], sizes = [2, 13], strides = [1, 1]} : vector<2x52xf32> to vector<2x13xf32>
    %461 = vector.extract_strided_slice %459 {offsets = [0, 13], sizes = [2, 13], strides = [1, 1]} : vector<2x52xf32> to vector<2x13xf32>
    %462 = vector.extract_strided_slice %459 {offsets = [0, 26], sizes = [2, 13], strides = [1, 1]} : vector<2x52xf32> to vector<2x13xf32>
    %463 = vector.extract_strided_slice %459 {offsets = [0, 39], sizes = [2, 13], strides = [1, 1]} : vector<2x52xf32> to vector<2x13xf32>
    %464 = arith.mulf %461, %450 : vector<2x13xf32>
    %465 = arith.mulf %460, %462 : vector<2x13xf32>
    %466 = arith.addf %464, %465 : vector<2x13xf32>
    %467 = math.tanh %466 : vector<2x13xf32>
    %468 = arith.mulf %463, %467 : vector<2x13xf32>
    %cst_115 = arith.constant dense<0.000000e+00> : vector<2x52xf32>
    %469 = tpu.matmul %468, %439, %cst_115 {dimension_numbers = #tpu.dot_dimension_numbers<[1], [0], [0], [1], [0, 0, 1, 1], [], []>} : vector<2x13xf32>, vector<13x52xf32>, vector<2x52xf32> -> vector<2x52xf32>
    %470 = arith.addf %441, %469 : vector<2x52xf32>
    %471 = math.tanh %470 : vector<2x52xf32>
    %472 = arith.negf %470 : vector<2x52xf32>
    %473 = math.exp %472 : vector<2x52xf32>
    %cst_116 = arith.constant 1.000000e+00 : f32
    %474 = vector.broadcast %cst_116 : f32 to vector<2x52xf32>
    %475 = arith.addf %474, %473 : vector<2x52xf32>
    %476 = arith.divf %474, %475 : vector<2x52xf32>
    %477 = arith.select %53, %471, %476 : vector<2x52xi1>, vector<2x52xf32>
    %478 = vector.extract_strided_slice %477 {offsets = [0, 0], sizes = [2, 13], strides = [1, 1]} : vector<2x52xf32> to vector<2x13xf32>
    %479 = vector.extract_strided_slice %477 {offsets = [0, 13], sizes = [2, 13], strides = [1, 1]} : vector<2x52xf32> to vector<2x13xf32>
    %480 = vector.extract_strided_slice %477 {offsets = [0, 26], sizes = [2, 13], strides = [1, 1]} : vector<2x52xf32> to vector<2x13xf32>
    %481 = vector.extract_strided_slice %477 {offsets = [0, 39], sizes = [2, 13], strides = [1, 1]} : vector<2x52xf32> to vector<2x13xf32>
    %482 = arith.mulf %479, %466 : vector<2x13xf32>
    %483 = arith.mulf %478, %480 : vector<2x13xf32>
    %484 = arith.addf %482, %483 : vector<2x13xf32>
    %485 = math.tanh %484 : vector<2x13xf32>
    %486 = arith.mulf %481, %485 : vector<2x13xf32>
    %cst_117 = arith.constant dense<0.000000e+00> : vector<2x52xf32>
    %487 = tpu.matmul %486, %439, %cst_117 {dimension_numbers = #tpu.dot_dimension_numbers<[1], [0], [0], [1], [0, 0, 1, 1], [], []>} : vector<2x13xf32>, vector<13x52xf32>, vector<2x52xf32> -> vector<2x52xf32>
    %488 = arith.addf %442, %487 : vector<2x52xf32>
    %489 = math.tanh %488 : vector<2x52xf32>
    %490 = arith.negf %488 : vector<2x52xf32>
    %491 = math.exp %490 : vector<2x52xf32>
    %cst_118 = arith.constant 1.000000e+00 : f32
    %492 = vector.broadcast %cst_118 : f32 to vector<2x52xf32>
    %493 = arith.addf %492, %491 : vector<2x52xf32>
    %494 = arith.divf %492, %493 : vector<2x52xf32>
    %495 = arith.select %53, %489, %494 : vector<2x52xi1>, vector<2x52xf32>
    %496 = vector.extract_strided_slice %495 {offsets = [0, 0], sizes = [2, 13], strides = [1, 1]} : vector<2x52xf32> to vector<2x13xf32>
    %497 = vector.extract_strided_slice %495 {offsets = [0, 13], sizes = [2, 13], strides = [1, 1]} : vector<2x52xf32> to vector<2x13xf32>
    %498 = vector.extract_strided_slice %495 {offsets = [0, 26], sizes = [2, 13], strides = [1, 1]} : vector<2x52xf32> to vector<2x13xf32>
    %499 = vector.extract_strided_slice %495 {offsets = [0, 39], sizes = [2, 13], strides = [1, 1]} : vector<2x52xf32> to vector<2x13xf32>
    %500 = arith.mulf %497, %484 : vector<2x13xf32>
    %501 = arith.mulf %496, %498 : vector<2x13xf32>
    %502 = arith.addf %500, %501 : vector<2x13xf32>
    %503 = math.tanh %502 : vector<2x13xf32>
    %504 = arith.mulf %499, %503 : vector<2x13xf32>
    %cst_119 = arith.constant dense<0.000000e+00> : vector<2x52xf32>
    %505 = tpu.matmul %504, %439, %cst_119 {dimension_numbers = #tpu.dot_dimension_numbers<[1], [0], [0], [1], [0, 0, 1, 1], [], []>} : vector<2x13xf32>, vector<13x52xf32>, vector<2x52xf32> -> vector<2x52xf32>
    %506 = arith.addf %443, %505 : vector<2x52xf32>
    %507 = math.tanh %506 : vector<2x52xf32>
    %508 = arith.negf %506 : vector<2x52xf32>
    %509 = math.exp %508 : vector<2x52xf32>
    %cst_120 = arith.constant 1.000000e+00 : f32
    %510 = vector.broadcast %cst_120 : f32 to vector<2x52xf32>
    %511 = arith.addf %510, %509 : vector<2x52xf32>
    %512 = arith.divf %510, %511 : vector<2x52xf32>
    %513 = arith.select %53, %507, %512 : vector<2x52xi1>, vector<2x52xf32>
    %514 = vector.extract_strided_slice %513 {offsets = [0, 0], sizes = [2, 13], strides = [1, 1]} : vector<2x52xf32> to vector<2x13xf32>
    %515 = vector.extract_strided_slice %513 {offsets = [0, 13], sizes = [2, 13], strides = [1, 1]} : vector<2x52xf32> to vector<2x13xf32>
    %516 = vector.extract_strided_slice %513 {offsets = [0, 26], sizes = [2, 13], strides = [1, 1]} : vector<2x52xf32> to vector<2x13xf32>
    %517 = vector.extract_strided_slice %513 {offsets = [0, 39], sizes = [2, 13], strides = [1, 1]} : vector<2x52xf32> to vector<2x13xf32>
    %518 = arith.mulf %515, %502 : vector<2x13xf32>
    %519 = arith.mulf %514, %516 : vector<2x13xf32>
    %520 = arith.addf %518, %519 : vector<2x13xf32>
    %521 = math.tanh %520 : vector<2x13xf32>
    %522 = arith.mulf %517, %521 : vector<2x13xf32>
    %cst_121 = arith.constant dense<0.000000e+00> : vector<2x52xf32>
    %523 = tpu.matmul %522, %439, %cst_121 {dimension_numbers = #tpu.dot_dimension_numbers<[1], [0], [0], [1], [0, 0, 1, 1], [], []>} : vector<2x13xf32>, vector<13x52xf32>, vector<2x52xf32> -> vector<2x52xf32>
    %524 = arith.addf %444, %523 : vector<2x52xf32>
    %525 = math.tanh %524 : vector<2x52xf32>
    %526 = arith.negf %524 : vector<2x52xf32>
    %527 = math.exp %526 : vector<2x52xf32>
    %cst_122 = arith.constant 1.000000e+00 : f32
    %528 = vector.broadcast %cst_122 : f32 to vector<2x52xf32>
    %529 = arith.addf %528, %527 : vector<2x52xf32>
    %530 = arith.divf %528, %529 : vector<2x52xf32>
    %531 = arith.select %53, %525, %530 : vector<2x52xi1>, vector<2x52xf32>
    %532 = vector.extract_strided_slice %531 {offsets = [0, 0], sizes = [2, 13], strides = [1, 1]} : vector<2x52xf32> to vector<2x13xf32>
    %533 = vector.extract_strided_slice %531 {offsets = [0, 13], sizes = [2, 13], strides = [1, 1]} : vector<2x52xf32> to vector<2x13xf32>
    %534 = vector.extract_strided_slice %531 {offsets = [0, 26], sizes = [2, 13], strides = [1, 1]} : vector<2x52xf32> to vector<2x13xf32>
    %535 = vector.extract_strided_slice %531 {offsets = [0, 39], sizes = [2, 13], strides = [1, 1]} : vector<2x52xf32> to vector<2x13xf32>
    %536 = arith.mulf %533, %520 : vector<2x13xf32>
    %537 = arith.mulf %532, %534 : vector<2x13xf32>
    %538 = arith.addf %536, %537 : vector<2x13xf32>
    %539 = math.tanh %538 : vector<2x13xf32>
    %540 = arith.mulf %535, %539 : vector<2x13xf32>
    %cst_123 = arith.constant dense<0.000000e+00> : vector<2x52xf32>
    %541 = tpu.matmul %540, %439, %cst_123 {dimension_numbers = #tpu.dot_dimension_numbers<[1], [0], [0], [1], [0, 0, 1, 1], [], []>} : vector<2x13xf32>, vector<13x52xf32>, vector<2x52xf32> -> vector<2x52xf32>
    %542 = arith.addf %445, %541 : vector<2x52xf32>
    %543 = math.tanh %542 : vector<2x52xf32>
    %544 = arith.negf %542 : vector<2x52xf32>
    %545 = math.exp %544 : vector<2x52xf32>
    %cst_124 = arith.constant 1.000000e+00 : f32
    %546 = vector.broadcast %cst_124 : f32 to vector<2x52xf32>
    %547 = arith.addf %546, %545 : vector<2x52xf32>
    %548 = arith.divf %546, %547 : vector<2x52xf32>
    %549 = arith.select %53, %543, %548 : vector<2x52xi1>, vector<2x52xf32>
    %550 = vector.extract_strided_slice %549 {offsets = [0, 0], sizes = [2, 13], strides = [1, 1]} : vector<2x52xf32> to vector<2x13xf32>
    %551 = vector.extract_strided_slice %549 {offsets = [0, 13], sizes = [2, 13], strides = [1, 1]} : vector<2x52xf32> to vector<2x13xf32>
    %552 = vector.extract_strided_slice %549 {offsets = [0, 26], sizes = [2, 13], strides = [1, 1]} : vector<2x52xf32> to vector<2x13xf32>
    %553 = vector.extract_strided_slice %549 {offsets = [0, 39], sizes = [2, 13], strides = [1, 1]} : vector<2x52xf32> to vector<2x13xf32>
    %554 = arith.mulf %551, %538 : vector<2x13xf32>
    %555 = arith.mulf %550, %552 : vector<2x13xf32>
    %556 = arith.addf %554, %555 : vector<2x13xf32>
    %557 = math.tanh %556 : vector<2x13xf32>
    %558 = arith.mulf %553, %557 : vector<2x13xf32>
    %cst_125 = arith.constant dense<0.000000e+00> : vector<2x52xf32>
    %559 = tpu.matmul %558, %439, %cst_125 {dimension_numbers = #tpu.dot_dimension_numbers<[1], [0], [0], [1], [0, 0, 1, 1], [], []>} : vector<2x13xf32>, vector<13x52xf32>, vector<2x52xf32> -> vector<2x52xf32>
    %560 = arith.addf %446, %559 : vector<2x52xf32>
    %561 = math.tanh %560 : vector<2x52xf32>
    %562 = arith.negf %560 : vector<2x52xf32>
    %563 = math.exp %562 : vector<2x52xf32>
    %cst_126 = arith.constant 1.000000e+00 : f32
    %564 = vector.broadcast %cst_126 : f32 to vector<2x52xf32>
    %565 = arith.addf %564, %563 : vector<2x52xf32>
    %566 = arith.divf %564, %565 : vector<2x52xf32>
    %567 = arith.select %53, %561, %566 : vector<2x52xi1>, vector<2x52xf32>
    %568 = vector.extract_strided_slice %567 {offsets = [0, 0], sizes = [2, 13], strides = [1, 1]} : vector<2x52xf32> to vector<2x13xf32>
    %569 = vector.extract_strided_slice %567 {offsets = [0, 13], sizes = [2, 13], strides = [1, 1]} : vector<2x52xf32> to vector<2x13xf32>
    %570 = vector.extract_strided_slice %567 {offsets = [0, 26], sizes = [2, 13], strides = [1, 1]} : vector<2x52xf32> to vector<2x13xf32>
    %571 = vector.extract_strided_slice %567 {offsets = [0, 39], sizes = [2, 13], strides = [1, 1]} : vector<2x52xf32> to vector<2x13xf32>
    %572 = arith.mulf %569, %556 : vector<2x13xf32>
    %573 = arith.mulf %568, %570 : vector<2x13xf32>
    %574 = arith.addf %572, %573 : vector<2x13xf32>
    %575 = math.tanh %574 : vector<2x13xf32>
    %576 = arith.mulf %571, %575 : vector<2x13xf32>
    %cst_127 = arith.constant dense<0.000000e+00> : vector<2x52xf32>
    %577 = tpu.matmul %576, %439, %cst_127 {dimension_numbers = #tpu.dot_dimension_numbers<[1], [0], [0], [1], [0, 0, 1, 1], [], []>} : vector<2x13xf32>, vector<13x52xf32>, vector<2x52xf32> -> vector<2x52xf32>
    %578 = arith.addf %447, %577 : vector<2x52xf32>
    %579 = math.tanh %578 : vector<2x52xf32>
    %580 = arith.negf %578 : vector<2x52xf32>
    %581 = math.exp %580 : vector<2x52xf32>
    %cst_128 = arith.constant 1.000000e+00 : f32
    %582 = vector.broadcast %cst_128 : f32 to vector<2x52xf32>
    %583 = arith.addf %582, %581 : vector<2x52xf32>
    %584 = arith.divf %582, %583 : vector<2x52xf32>
    %585 = arith.select %53, %579, %584 : vector<2x52xi1>, vector<2x52xf32>
    %586 = vector.extract_strided_slice %585 {offsets = [0, 0], sizes = [2, 13], strides = [1, 1]} : vector<2x52xf32> to vector<2x13xf32>
    %587 = vector.extract_strided_slice %585 {offsets = [0, 13], sizes = [2, 13], strides = [1, 1]} : vector<2x52xf32> to vector<2x13xf32>
    %588 = vector.extract_strided_slice %585 {offsets = [0, 26], sizes = [2, 13], strides = [1, 1]} : vector<2x52xf32> to vector<2x13xf32>
    %589 = vector.extract_strided_slice %585 {offsets = [0, 39], sizes = [2, 13], strides = [1, 1]} : vector<2x52xf32> to vector<2x13xf32>
    %590 = arith.mulf %587, %574 : vector<2x13xf32>
    %591 = arith.mulf %586, %588 : vector<2x13xf32>
    %592 = arith.addf %590, %591 : vector<2x13xf32>
    %593 = math.tanh %592 : vector<2x13xf32>
    %594 = arith.mulf %589, %593 : vector<2x13xf32>
    %cst_129 = arith.constant dense<0.000000e+00> : vector<2x52xf32>
    %595 = tpu.matmul %594, %439, %cst_129 {dimension_numbers = #tpu.dot_dimension_numbers<[1], [0], [0], [1], [0, 0, 1, 1], [], []>} : vector<2x13xf32>, vector<13x52xf32>, vector<2x52xf32> -> vector<2x52xf32>
    %596 = arith.addf %448, %595 : vector<2x52xf32>
    %597 = math.tanh %596 : vector<2x52xf32>
    %598 = arith.negf %596 : vector<2x52xf32>
    %599 = math.exp %598 : vector<2x52xf32>
    %cst_130 = arith.constant 1.000000e+00 : f32
    %600 = vector.broadcast %cst_130 : f32 to vector<2x52xf32>
    %601 = arith.addf %600, %599 : vector<2x52xf32>
    %602 = arith.divf %600, %601 : vector<2x52xf32>
    %603 = arith.select %53, %597, %602 : vector<2x52xi1>, vector<2x52xf32>
    %604 = vector.extract_strided_slice %603 {offsets = [0, 0], sizes = [2, 13], strides = [1, 1]} : vector<2x52xf32> to vector<2x13xf32>
    %605 = vector.extract_strided_slice %603 {offsets = [0, 13], sizes = [2, 13], strides = [1, 1]} : vector<2x52xf32> to vector<2x13xf32>
    %606 = vector.extract_strided_slice %603 {offsets = [0, 26], sizes = [2, 13], strides = [1, 1]} : vector<2x52xf32> to vector<2x13xf32>
    %607 = vector.extract_strided_slice %603 {offsets = [0, 39], sizes = [2, 13], strides = [1, 1]} : vector<2x52xf32> to vector<2x13xf32>
    %608 = arith.mulf %605, %592 : vector<2x13xf32>
    %609 = arith.mulf %604, %606 : vector<2x13xf32>
    %610 = arith.addf %608, %609 : vector<2x13xf32>
    %611 = math.tanh %610 : vector<2x13xf32>
    %612 = arith.mulf %607, %611 : vector<2x13xf32>
    %613 = tpu.concatenate %468, %486, %504, %522, %540, %558, %576, %594, %612 in 0 : vector<2x13xf32>, vector<2x13xf32>, vector<2x13xf32>, vector<2x13xf32>, vector<2x13xf32>, vector<2x13xf32>, vector<2x13xf32>, vector<2x13xf32>, vector<2x13xf32> -> vector<18x13xf32>
    %c1_131 = arith.constant 1 : index
    %c1_132 = arith.constant 1 : index
    %c0_133 = arith.constant 0 : index
    %c0_134 = arith.constant 0 : index
    %614 = vector.load %arg6[%c1_131, %c1_132, %c0_133, %c0_134] : memref<4x2x13x52xf32, #tpu.memory_space<vmem>>, vector<1x1x13x52xf32>
    %615 = vector.shape_cast %614 : vector<1x1x13x52xf32> to vector<13x52xf32>
    %616 = vector.extract_strided_slice %437 {offsets = [0, 0], sizes = [2, 52], strides = [1, 1]} : vector<18x52xf32> to vector<2x52xf32>
    %617 = vector.extract_strided_slice %437 {offsets = [2, 0], sizes = [2, 52], strides = [1, 1]} : vector<18x52xf32> to vector<2x52xf32>
    %618 = vector.extract_strided_slice %437 {offsets = [4, 0], sizes = [2, 52], strides = [1, 1]} : vector<18x52xf32> to vector<2x52xf32>
    %619 = vector.extract_strided_slice %437 {offsets = [6, 0], sizes = [2, 52], strides = [1, 1]} : vector<18x52xf32> to vector<2x52xf32>
    %620 = vector.extract_strided_slice %437 {offsets = [8, 0], sizes = [2, 52], strides = [1, 1]} : vector<18x52xf32> to vector<2x52xf32>
    %621 = vector.extract_strided_slice %437 {offsets = [10, 0], sizes = [2, 52], strides = [1, 1]} : vector<18x52xf32> to vector<2x52xf32>
    %622 = vector.extract_strided_slice %437 {offsets = [12, 0], sizes = [2, 52], strides = [1, 1]} : vector<18x52xf32> to vector<2x52xf32>
    %623 = vector.extract_strided_slice %437 {offsets = [14, 0], sizes = [2, 52], strides = [1, 1]} : vector<18x52xf32> to vector<2x52xf32>
    %624 = vector.extract_strided_slice %437 {offsets = [16, 0], sizes = [2, 52], strides = [1, 1]} : vector<18x52xf32> to vector<2x52xf32>
    %cst_135 = arith.constant 0.000000e+00 : f32
    %625 = vector.broadcast %cst_135 : f32 to vector<2x13xf32>
    %cst_136 = arith.constant 0.000000e+00 : f32
    %626 = vector.broadcast %cst_136 : f32 to vector<2x13xf32>
    %cst_137 = arith.constant dense<0.000000e+00> : vector<2x52xf32>
    %627 = tpu.matmul %625, %615, %cst_137 {dimension_numbers = #tpu.dot_dimension_numbers<[1], [0], [0], [1], [0, 0, 1, 1], [], []>} : vector<2x13xf32>, vector<13x52xf32>, vector<2x52xf32> -> vector<2x52xf32>
    %628 = arith.addf %624, %627 : vector<2x52xf32>
    %629 = math.tanh %628 : vector<2x52xf32>
    %630 = arith.negf %628 : vector<2x52xf32>
    %631 = math.exp %630 : vector<2x52xf32>
    %cst_138 = arith.constant 1.000000e+00 : f32
    %632 = vector.broadcast %cst_138 : f32 to vector<2x52xf32>
    %633 = arith.addf %632, %631 : vector<2x52xf32>
    %634 = arith.divf %632, %633 : vector<2x52xf32>
    %635 = arith.select %53, %629, %634 : vector<2x52xi1>, vector<2x52xf32>
    %636 = vector.extract_strided_slice %635 {offsets = [0, 0], sizes = [2, 13], strides = [1, 1]} : vector<2x52xf32> to vector<2x13xf32>
    %637 = vector.extract_strided_slice %635 {offsets = [0, 13], sizes = [2, 13], strides = [1, 1]} : vector<2x52xf32> to vector<2x13xf32>
    %638 = vector.extract_strided_slice %635 {offsets = [0, 26], sizes = [2, 13], strides = [1, 1]} : vector<2x52xf32> to vector<2x13xf32>
    %639 = vector.extract_strided_slice %635 {offsets = [0, 39], sizes = [2, 13], strides = [1, 1]} : vector<2x52xf32> to vector<2x13xf32>
    %640 = arith.mulf %637, %626 : vector<2x13xf32>
    %641 = arith.mulf %636, %638 : vector<2x13xf32>
    %642 = arith.addf %640, %641 : vector<2x13xf32>
    %643 = math.tanh %642 : vector<2x13xf32>
    %644 = arith.mulf %639, %643 : vector<2x13xf32>
    %cst_139 = arith.constant dense<0.000000e+00> : vector<2x52xf32>
    %645 = tpu.matmul %644, %615, %cst_139 {dimension_numbers = #tpu.dot_dimension_numbers<[1], [0], [0], [1], [0, 0, 1, 1], [], []>} : vector<2x13xf32>, vector<13x52xf32>, vector<2x52xf32> -> vector<2x52xf32>
    %646 = arith.addf %623, %645 : vector<2x52xf32>
    %647 = math.tanh %646 : vector<2x52xf32>
    %648 = arith.negf %646 : vector<2x52xf32>
    %649 = math.exp %648 : vector<2x52xf32>
    %cst_140 = arith.constant 1.000000e+00 : f32
    %650 = vector.broadcast %cst_140 : f32 to vector<2x52xf32>
    %651 = arith.addf %650, %649 : vector<2x52xf32>
    %652 = arith.divf %650, %651 : vector<2x52xf32>
    %653 = arith.select %53, %647, %652 : vector<2x52xi1>, vector<2x52xf32>
    %654 = vector.extract_strided_slice %653 {offsets = [0, 0], sizes = [2, 13], strides = [1, 1]} : vector<2x52xf32> to vector<2x13xf32>
    %655 = vector.extract_strided_slice %653 {offsets = [0, 13], sizes = [2, 13], strides = [1, 1]} : vector<2x52xf32> to vector<2x13xf32>
    %656 = vector.extract_strided_slice %653 {offsets = [0, 26], sizes = [2, 13], strides = [1, 1]} : vector<2x52xf32> to vector<2x13xf32>
    %657 = vector.extract_strided_slice %653 {offsets = [0, 39], sizes = [2, 13], strides = [1, 1]} : vector<2x52xf32> to vector<2x13xf32>
    %658 = arith.mulf %655, %642 : vector<2x13xf32>
    %659 = arith.mulf %654, %656 : vector<2x13xf32>
    %660 = arith.addf %658, %659 : vector<2x13xf32>
    %661 = math.tanh %660 : vector<2x13xf32>
    %662 = arith.mulf %657, %661 : vector<2x13xf32>
    %cst_141 = arith.constant dense<0.000000e+00> : vector<2x52xf32>
    %663 = tpu.matmul %662, %615, %cst_141 {dimension_numbers = #tpu.dot_dimension_numbers<[1], [0], [0], [1], [0, 0, 1, 1], [], []>} : vector<2x13xf32>, vector<13x52xf32>, vector<2x52xf32> -> vector<2x52xf32>
    %664 = arith.addf %622, %663 : vector<2x52xf32>
    %665 = math.tanh %664 : vector<2x52xf32>
    %666 = arith.negf %664 : vector<2x52xf32>
    %667 = math.exp %666 : vector<2x52xf32>
    %cst_142 = arith.constant 1.000000e+00 : f32
    %668 = vector.broadcast %cst_142 : f32 to vector<2x52xf32>
    %669 = arith.addf %668, %667 : vector<2x52xf32>
    %670 = arith.divf %668, %669 : vector<2x52xf32>
    %671 = arith.select %53, %665, %670 : vector<2x52xi1>, vector<2x52xf32>
    %672 = vector.extract_strided_slice %671 {offsets = [0, 0], sizes = [2, 13], strides = [1, 1]} : vector<2x52xf32> to vector<2x13xf32>
    %673 = vector.extract_strided_slice %671 {offsets = [0, 13], sizes = [2, 13], strides = [1, 1]} : vector<2x52xf32> to vector<2x13xf32>
    %674 = vector.extract_strided_slice %671 {offsets = [0, 26], sizes = [2, 13], strides = [1, 1]} : vector<2x52xf32> to vector<2x13xf32>
    %675 = vector.extract_strided_slice %671 {offsets = [0, 39], sizes = [2, 13], strides = [1, 1]} : vector<2x52xf32> to vector<2x13xf32>
    %676 = arith.mulf %673, %660 : vector<2x13xf32>
    %677 = arith.mulf %672, %674 : vector<2x13xf32>
    %678 = arith.addf %676, %677 : vector<2x13xf32>
    %679 = math.tanh %678 : vector<2x13xf32>
    %680 = arith.mulf %675, %679 : vector<2x13xf32>
    %cst_143 = arith.constant dense<0.000000e+00> : vector<2x52xf32>
    %681 = tpu.matmul %680, %615, %cst_143 {dimension_numbers = #tpu.dot_dimension_numbers<[1], [0], [0], [1], [0, 0, 1, 1], [], []>} : vector<2x13xf32>, vector<13x52xf32>, vector<2x52xf32> -> vector<2x52xf32>
    %682 = arith.addf %621, %681 : vector<2x52xf32>
    %683 = math.tanh %682 : vector<2x52xf32>
    %684 = arith.negf %682 : vector<2x52xf32>
    %685 = math.exp %684 : vector<2x52xf32>
    %cst_144 = arith.constant 1.000000e+00 : f32
    %686 = vector.broadcast %cst_144 : f32 to vector<2x52xf32>
    %687 = arith.addf %686, %685 : vector<2x52xf32>
    %688 = arith.divf %686, %687 : vector<2x52xf32>
    %689 = arith.select %53, %683, %688 : vector<2x52xi1>, vector<2x52xf32>
    %690 = vector.extract_strided_slice %689 {offsets = [0, 0], sizes = [2, 13], strides = [1, 1]} : vector<2x52xf32> to vector<2x13xf32>
    %691 = vector.extract_strided_slice %689 {offsets = [0, 13], sizes = [2, 13], strides = [1, 1]} : vector<2x52xf32> to vector<2x13xf32>
    %692 = vector.extract_strided_slice %689 {offsets = [0, 26], sizes = [2, 13], strides = [1, 1]} : vector<2x52xf32> to vector<2x13xf32>
    %693 = vector.extract_strided_slice %689 {offsets = [0, 39], sizes = [2, 13], strides = [1, 1]} : vector<2x52xf32> to vector<2x13xf32>
    %694 = arith.mulf %691, %678 : vector<2x13xf32>
    %695 = arith.mulf %690, %692 : vector<2x13xf32>
    %696 = arith.addf %694, %695 : vector<2x13xf32>
    %697 = math.tanh %696 : vector<2x13xf32>
    %698 = arith.mulf %693, %697 : vector<2x13xf32>
    %cst_145 = arith.constant dense<0.000000e+00> : vector<2x52xf32>
    %699 = tpu.matmul %698, %615, %cst_145 {dimension_numbers = #tpu.dot_dimension_numbers<[1], [0], [0], [1], [0, 0, 1, 1], [], []>} : vector<2x13xf32>, vector<13x52xf32>, vector<2x52xf32> -> vector<2x52xf32>
    %700 = arith.addf %620, %699 : vector<2x52xf32>
    %701 = math.tanh %700 : vector<2x52xf32>
    %702 = arith.negf %700 : vector<2x52xf32>
    %703 = math.exp %702 : vector<2x52xf32>
    %cst_146 = arith.constant 1.000000e+00 : f32
    %704 = vector.broadcast %cst_146 : f32 to vector<2x52xf32>
    %705 = arith.addf %704, %703 : vector<2x52xf32>
    %706 = arith.divf %704, %705 : vector<2x52xf32>
    %707 = arith.select %53, %701, %706 : vector<2x52xi1>, vector<2x52xf32>
    %708 = vector.extract_strided_slice %707 {offsets = [0, 0], sizes = [2, 13], strides = [1, 1]} : vector<2x52xf32> to vector<2x13xf32>
    %709 = vector.extract_strided_slice %707 {offsets = [0, 13], sizes = [2, 13], strides = [1, 1]} : vector<2x52xf32> to vector<2x13xf32>
    %710 = vector.extract_strided_slice %707 {offsets = [0, 26], sizes = [2, 13], strides = [1, 1]} : vector<2x52xf32> to vector<2x13xf32>
    %711 = vector.extract_strided_slice %707 {offsets = [0, 39], sizes = [2, 13], strides = [1, 1]} : vector<2x52xf32> to vector<2x13xf32>
    %712 = arith.mulf %709, %696 : vector<2x13xf32>
    %713 = arith.mulf %708, %710 : vector<2x13xf32>
    %714 = arith.addf %712, %713 : vector<2x13xf32>
    %715 = math.tanh %714 : vector<2x13xf32>
    %716 = arith.mulf %711, %715 : vector<2x13xf32>
    %cst_147 = arith.constant dense<0.000000e+00> : vector<2x52xf32>
    %717 = tpu.matmul %716, %615, %cst_147 {dimension_numbers = #tpu.dot_dimension_numbers<[1], [0], [0], [1], [0, 0, 1, 1], [], []>} : vector<2x13xf32>, vector<13x52xf32>, vector<2x52xf32> -> vector<2x52xf32>
    %718 = arith.addf %619, %717 : vector<2x52xf32>
    %719 = math.tanh %718 : vector<2x52xf32>
    %720 = arith.negf %718 : vector<2x52xf32>
    %721 = math.exp %720 : vector<2x52xf32>
    %cst_148 = arith.constant 1.000000e+00 : f32
    %722 = vector.broadcast %cst_148 : f32 to vector<2x52xf32>
    %723 = arith.addf %722, %721 : vector<2x52xf32>
    %724 = arith.divf %722, %723 : vector<2x52xf32>
    %725 = arith.select %53, %719, %724 : vector<2x52xi1>, vector<2x52xf32>
    %726 = vector.extract_strided_slice %725 {offsets = [0, 0], sizes = [2, 13], strides = [1, 1]} : vector<2x52xf32> to vector<2x13xf32>
    %727 = vector.extract_strided_slice %725 {offsets = [0, 13], sizes = [2, 13], strides = [1, 1]} : vector<2x52xf32> to vector<2x13xf32>
    %728 = vector.extract_strided_slice %725 {offsets = [0, 26], sizes = [2, 13], strides = [1, 1]} : vector<2x52xf32> to vector<2x13xf32>
    %729 = vector.extract_strided_slice %725 {offsets = [0, 39], sizes = [2, 13], strides = [1, 1]} : vector<2x52xf32> to vector<2x13xf32>
    %730 = arith.mulf %727, %714 : vector<2x13xf32>
    %731 = arith.mulf %726, %728 : vector<2x13xf32>
    %732 = arith.addf %730, %731 : vector<2x13xf32>
    %733 = math.tanh %732 : vector<2x13xf32>
    %734 = arith.mulf %729, %733 : vector<2x13xf32>
    %cst_149 = arith.constant dense<0.000000e+00> : vector<2x52xf32>
    %735 = tpu.matmul %734, %615, %cst_149 {dimension_numbers = #tpu.dot_dimension_numbers<[1], [0], [0], [1], [0, 0, 1, 1], [], []>} : vector<2x13xf32>, vector<13x52xf32>, vector<2x52xf32> -> vector<2x52xf32>
    %736 = arith.addf %618, %735 : vector<2x52xf32>
    %737 = math.tanh %736 : vector<2x52xf32>
    %738 = arith.negf %736 : vector<2x52xf32>
    %739 = math.exp %738 : vector<2x52xf32>
    %cst_150 = arith.constant 1.000000e+00 : f32
    %740 = vector.broadcast %cst_150 : f32 to vector<2x52xf32>
    %741 = arith.addf %740, %739 : vector<2x52xf32>
    %742 = arith.divf %740, %741 : vector<2x52xf32>
    %743 = arith.select %53, %737, %742 : vector<2x52xi1>, vector<2x52xf32>
    %744 = vector.extract_strided_slice %743 {offsets = [0, 0], sizes = [2, 13], strides = [1, 1]} : vector<2x52xf32> to vector<2x13xf32>
    %745 = vector.extract_strided_slice %743 {offsets = [0, 13], sizes = [2, 13], strides = [1, 1]} : vector<2x52xf32> to vector<2x13xf32>
    %746 = vector.extract_strided_slice %743 {offsets = [0, 26], sizes = [2, 13], strides = [1, 1]} : vector<2x52xf32> to vector<2x13xf32>
    %747 = vector.extract_strided_slice %743 {offsets = [0, 39], sizes = [2, 13], strides = [1, 1]} : vector<2x52xf32> to vector<2x13xf32>
    %748 = arith.mulf %745, %732 : vector<2x13xf32>
    %749 = arith.mulf %744, %746 : vector<2x13xf32>
    %750 = arith.addf %748, %749 : vector<2x13xf32>
    %751 = math.tanh %750 : vector<2x13xf32>
    %752 = arith.mulf %747, %751 : vector<2x13xf32>
    %cst_151 = arith.constant dense<0.000000e+00> : vector<2x52xf32>
    %753 = tpu.matmul %752, %615, %cst_151 {dimension_numbers = #tpu.dot_dimension_numbers<[1], [0], [0], [1], [0, 0, 1, 1], [], []>} : vector<2x13xf32>, vector<13x52xf32>, vector<2x52xf32> -> vector<2x52xf32>
    %754 = arith.addf %617, %753 : vector<2x52xf32>
    %755 = math.tanh %754 : vector<2x52xf32>
    %756 = arith.negf %754 : vector<2x52xf32>
    %757 = math.exp %756 : vector<2x52xf32>
    %cst_152 = arith.constant 1.000000e+00 : f32
    %758 = vector.broadcast %cst_152 : f32 to vector<2x52xf32>
    %759 = arith.addf %758, %757 : vector<2x52xf32>
    %760 = arith.divf %758, %759 : vector<2x52xf32>
    %761 = arith.select %53, %755, %760 : vector<2x52xi1>, vector<2x52xf32>
    %762 = vector.extract_strided_slice %761 {offsets = [0, 0], sizes = [2, 13], strides = [1, 1]} : vector<2x52xf32> to vector<2x13xf32>
    %763 = vector.extract_strided_slice %761 {offsets = [0, 13], sizes = [2, 13], strides = [1, 1]} : vector<2x52xf32> to vector<2x13xf32>
    %764 = vector.extract_strided_slice %761 {offsets = [0, 26], sizes = [2, 13], strides = [1, 1]} : vector<2x52xf32> to vector<2x13xf32>
    %765 = vector.extract_strided_slice %761 {offsets = [0, 39], sizes = [2, 13], strides = [1, 1]} : vector<2x52xf32> to vector<2x13xf32>
    %766 = arith.mulf %763, %750 : vector<2x13xf32>
    %767 = arith.mulf %762, %764 : vector<2x13xf32>
    %768 = arith.addf %766, %767 : vector<2x13xf32>
    %769 = math.tanh %768 : vector<2x13xf32>
    %770 = arith.mulf %765, %769 : vector<2x13xf32>
    %cst_153 = arith.constant dense<0.000000e+00> : vector<2x52xf32>
    %771 = tpu.matmul %770, %615, %cst_153 {dimension_numbers = #tpu.dot_dimension_numbers<[1], [0], [0], [1], [0, 0, 1, 1], [], []>} : vector<2x13xf32>, vector<13x52xf32>, vector<2x52xf32> -> vector<2x52xf32>
    %772 = arith.addf %616, %771 : vector<2x52xf32>
    %773 = math.tanh %772 : vector<2x52xf32>
    %774 = arith.negf %772 : vector<2x52xf32>
    %775 = math.exp %774 : vector<2x52xf32>
    %cst_154 = arith.constant 1.000000e+00 : f32
    %776 = vector.broadcast %cst_154 : f32 to vector<2x52xf32>
    %777 = arith.addf %776, %775 : vector<2x52xf32>
    %778 = arith.divf %776, %777 : vector<2x52xf32>
    %779 = arith.select %53, %773, %778 : vector<2x52xi1>, vector<2x52xf32>
    %780 = vector.extract_strided_slice %779 {offsets = [0, 0], sizes = [2, 13], strides = [1, 1]} : vector<2x52xf32> to vector<2x13xf32>
    %781 = vector.extract_strided_slice %779 {offsets = [0, 13], sizes = [2, 13], strides = [1, 1]} : vector<2x52xf32> to vector<2x13xf32>
    %782 = vector.extract_strided_slice %779 {offsets = [0, 26], sizes = [2, 13], strides = [1, 1]} : vector<2x52xf32> to vector<2x13xf32>
    %783 = vector.extract_strided_slice %779 {offsets = [0, 39], sizes = [2, 13], strides = [1, 1]} : vector<2x52xf32> to vector<2x13xf32>
    %784 = arith.mulf %781, %768 : vector<2x13xf32>
    %785 = arith.mulf %780, %782 : vector<2x13xf32>
    %786 = arith.addf %784, %785 : vector<2x13xf32>
    %787 = math.tanh %786 : vector<2x13xf32>
    %788 = arith.mulf %783, %787 : vector<2x13xf32>
    %789 = tpu.concatenate %788, %770, %752, %734, %716, %698, %680, %662, %644 in 0 : vector<2x13xf32>, vector<2x13xf32>, vector<2x13xf32>, vector<2x13xf32>, vector<2x13xf32>, vector<2x13xf32>, vector<2x13xf32>, vector<2x13xf32>, vector<2x13xf32> -> vector<18x13xf32>
    %c1_155 = arith.constant 1 : index
    %c0_156 = arith.constant 0 : index
    %c0_157 = arith.constant 0 : index
    %c0_158 = arith.constant 0 : index
    %c0_159 = arith.constant 0 : index
    %790 = vector.load %arg5[%c1_155, %c0_156, %c0_157, %c0_158, %c0_159] : memref<3x2x2x13x52xf32, #tpu.memory_space<vmem>>, vector<1x1x1x13x52xf32>
    %791 = vector.shape_cast %790 : vector<1x1x1x13x52xf32> to vector<13x52xf32>
    %cst_160 = arith.constant dense<0.000000e+00> : vector<18x52xf32>
    %792 = tpu.matmul %613, %791, %cst_160 {dimension_numbers = #tpu.dot_dimension_numbers<[1], [0], [0], [1], [0, 0, 1, 1], [], []>} : vector<18x13xf32>, vector<13x52xf32>, vector<18x52xf32> -> vector<18x52xf32>
    %c1_161 = arith.constant 1 : index
    %c0_162 = arith.constant 0 : index
    %c1_163 = arith.constant 1 : index
    %c0_164 = arith.constant 0 : index
    %c0_165 = arith.constant 0 : index
    %793 = vector.load %arg5[%c1_161, %c0_162, %c1_163, %c0_164, %c0_165] : memref<3x2x2x13x52xf32, #tpu.memory_space<vmem>>, vector<1x1x1x13x52xf32>
    %794 = vector.shape_cast %793 : vector<1x1x1x13x52xf32> to vector<13x52xf32>
    %cst_166 = arith.constant dense<0.000000e+00> : vector<18x52xf32>
    %795 = tpu.matmul %789, %794, %cst_166 {dimension_numbers = #tpu.dot_dimension_numbers<[1], [0], [0], [1], [0, 0, 1, 1], [], []>} : vector<18x13xf32>, vector<13x52xf32>, vector<18x52xf32> -> vector<18x52xf32>
    %796 = arith.addf %792, %795 : vector<18x52xf32>
    %c2 = arith.constant 2 : index
    %c0_167 = arith.constant 0 : index
    %c0_168 = arith.constant 0 : index
    %c0_169 = arith.constant 0 : index
    %797 = vector.load %arg7[%c2, %c0_167, %c0_168, %c0_169] : memref<4x2x1x52xf32, #tpu.memory_space<vmem>>, vector<1x1x1x52xf32>
    %798 = vector.shape_cast %797 : vector<1x1x1x52xf32> to vector<1x52xf32>
    %799 = vector.broadcast %798 : vector<1x52xf32> to vector<18x52xf32>
    %800 = arith.addf %796, %799 : vector<18x52xf32>
    %c1_170 = arith.constant 1 : index
    %c1_171 = arith.constant 1 : index
    %c0_172 = arith.constant 0 : index
    %c0_173 = arith.constant 0 : index
    %c0_174 = arith.constant 0 : index
    %801 = vector.load %arg5[%c1_170, %c1_171, %c0_172, %c0_173, %c0_174] : memref<3x2x2x13x52xf32, #tpu.memory_space<vmem>>, vector<1x1x1x13x52xf32>
    %802 = vector.shape_cast %801 : vector<1x1x1x13x52xf32> to vector<13x52xf32>
    %cst_175 = arith.constant dense<0.000000e+00> : vector<18x52xf32>
    %803 = tpu.matmul %613, %802, %cst_175 {dimension_numbers = #tpu.dot_dimension_numbers<[1], [0], [0], [1], [0, 0, 1, 1], [], []>} : vector<18x13xf32>, vector<13x52xf32>, vector<18x52xf32> -> vector<18x52xf32>
    %c1_176 = arith.constant 1 : index
    %c1_177 = arith.constant 1 : index
    %c1_178 = arith.constant 1 : index
    %c0_179 = arith.constant 0 : index
    %c0_180 = arith.constant 0 : index
    %804 = vector.load %arg5[%c1_176, %c1_177, %c1_178, %c0_179, %c0_180] : memref<3x2x2x13x52xf32, #tpu.memory_space<vmem>>, vector<1x1x1x13x52xf32>
    %805 = vector.shape_cast %804 : vector<1x1x1x13x52xf32> to vector<13x52xf32>
    %cst_181 = arith.constant dense<0.000000e+00> : vector<18x52xf32>
    %806 = tpu.matmul %789, %805, %cst_181 {dimension_numbers = #tpu.dot_dimension_numbers<[1], [0], [0], [1], [0, 0, 1, 1], [], []>} : vector<18x13xf32>, vector<13x52xf32>, vector<18x52xf32> -> vector<18x52xf32>
    %807 = arith.addf %803, %806 : vector<18x52xf32>
    %c2_182 = arith.constant 2 : index
    %c1_183 = arith.constant 1 : index
    %c0_184 = arith.constant 0 : index
    %c0_185 = arith.constant 0 : index
    %808 = vector.load %arg7[%c2_182, %c1_183, %c0_184, %c0_185] : memref<4x2x1x52xf32, #tpu.memory_space<vmem>>, vector<1x1x1x52xf32>
    %809 = vector.shape_cast %808 : vector<1x1x1x52xf32> to vector<1x52xf32>
    %810 = vector.broadcast %809 : vector<1x52xf32> to vector<18x52xf32>
    %811 = arith.addf %807, %810 : vector<18x52xf32>
    %c2_186 = arith.constant 2 : index
    %c0_187 = arith.constant 0 : index
    %c0_188 = arith.constant 0 : index
    %c0_189 = arith.constant 0 : index
    %812 = vector.load %arg6[%c2_186, %c0_187, %c0_188, %c0_189] : memref<4x2x13x52xf32, #tpu.memory_space<vmem>>, vector<1x1x13x52xf32>
    %813 = vector.shape_cast %812 : vector<1x1x13x52xf32> to vector<13x52xf32>
    %814 = vector.extract_strided_slice %800 {offsets = [0, 0], sizes = [2, 52], strides = [1, 1]} : vector<18x52xf32> to vector<2x52xf32>
    %815 = vector.extract_strided_slice %800 {offsets = [2, 0], sizes = [2, 52], strides = [1, 1]} : vector<18x52xf32> to vector<2x52xf32>
    %816 = vector.extract_strided_slice %800 {offsets = [4, 0], sizes = [2, 52], strides = [1, 1]} : vector<18x52xf32> to vector<2x52xf32>
    %817 = vector.extract_strided_slice %800 {offsets = [6, 0], sizes = [2, 52], strides = [1, 1]} : vector<18x52xf32> to vector<2x52xf32>
    %818 = vector.extract_strided_slice %800 {offsets = [8, 0], sizes = [2, 52], strides = [1, 1]} : vector<18x52xf32> to vector<2x52xf32>
    %819 = vector.extract_strided_slice %800 {offsets = [10, 0], sizes = [2, 52], strides = [1, 1]} : vector<18x52xf32> to vector<2x52xf32>
    %820 = vector.extract_strided_slice %800 {offsets = [12, 0], sizes = [2, 52], strides = [1, 1]} : vector<18x52xf32> to vector<2x52xf32>
    %821 = vector.extract_strided_slice %800 {offsets = [14, 0], sizes = [2, 52], strides = [1, 1]} : vector<18x52xf32> to vector<2x52xf32>
    %822 = vector.extract_strided_slice %800 {offsets = [16, 0], sizes = [2, 52], strides = [1, 1]} : vector<18x52xf32> to vector<2x52xf32>
    %cst_190 = arith.constant 0.000000e+00 : f32
    %823 = vector.broadcast %cst_190 : f32 to vector<2x13xf32>
    %cst_191 = arith.constant 0.000000e+00 : f32
    %824 = vector.broadcast %cst_191 : f32 to vector<2x13xf32>
    %cst_192 = arith.constant dense<0.000000e+00> : vector<2x52xf32>
    %825 = tpu.matmul %823, %813, %cst_192 {dimension_numbers = #tpu.dot_dimension_numbers<[1], [0], [0], [1], [0, 0, 1, 1], [], []>} : vector<2x13xf32>, vector<13x52xf32>, vector<2x52xf32> -> vector<2x52xf32>
    %826 = arith.addf %814, %825 : vector<2x52xf32>
    %827 = math.tanh %826 : vector<2x52xf32>
    %828 = arith.negf %826 : vector<2x52xf32>
    %829 = math.exp %828 : vector<2x52xf32>
    %cst_193 = arith.constant 1.000000e+00 : f32
    %830 = vector.broadcast %cst_193 : f32 to vector<2x52xf32>
    %831 = arith.addf %830, %829 : vector<2x52xf32>
    %832 = arith.divf %830, %831 : vector<2x52xf32>
    %833 = arith.select %53, %827, %832 : vector<2x52xi1>, vector<2x52xf32>
    %834 = vector.extract_strided_slice %833 {offsets = [0, 0], sizes = [2, 13], strides = [1, 1]} : vector<2x52xf32> to vector<2x13xf32>
    %835 = vector.extract_strided_slice %833 {offsets = [0, 13], sizes = [2, 13], strides = [1, 1]} : vector<2x52xf32> to vector<2x13xf32>
    %836 = vector.extract_strided_slice %833 {offsets = [0, 26], sizes = [2, 13], strides = [1, 1]} : vector<2x52xf32> to vector<2x13xf32>
    %837 = vector.extract_strided_slice %833 {offsets = [0, 39], sizes = [2, 13], strides = [1, 1]} : vector<2x52xf32> to vector<2x13xf32>
    %838 = arith.mulf %835, %824 : vector<2x13xf32>
    %839 = arith.mulf %834, %836 : vector<2x13xf32>
    %840 = arith.addf %838, %839 : vector<2x13xf32>
    %841 = math.tanh %840 : vector<2x13xf32>
    %842 = arith.mulf %837, %841 : vector<2x13xf32>
    %cst_194 = arith.constant dense<0.000000e+00> : vector<2x52xf32>
    %843 = tpu.matmul %842, %813, %cst_194 {dimension_numbers = #tpu.dot_dimension_numbers<[1], [0], [0], [1], [0, 0, 1, 1], [], []>} : vector<2x13xf32>, vector<13x52xf32>, vector<2x52xf32> -> vector<2x52xf32>
    %844 = arith.addf %815, %843 : vector<2x52xf32>
    %845 = math.tanh %844 : vector<2x52xf32>
    %846 = arith.negf %844 : vector<2x52xf32>
    %847 = math.exp %846 : vector<2x52xf32>
    %cst_195 = arith.constant 1.000000e+00 : f32
    %848 = vector.broadcast %cst_195 : f32 to vector<2x52xf32>
    %849 = arith.addf %848, %847 : vector<2x52xf32>
    %850 = arith.divf %848, %849 : vector<2x52xf32>
    %851 = arith.select %53, %845, %850 : vector<2x52xi1>, vector<2x52xf32>
    %852 = vector.extract_strided_slice %851 {offsets = [0, 0], sizes = [2, 13], strides = [1, 1]} : vector<2x52xf32> to vector<2x13xf32>
    %853 = vector.extract_strided_slice %851 {offsets = [0, 13], sizes = [2, 13], strides = [1, 1]} : vector<2x52xf32> to vector<2x13xf32>
    %854 = vector.extract_strided_slice %851 {offsets = [0, 26], sizes = [2, 13], strides = [1, 1]} : vector<2x52xf32> to vector<2x13xf32>
    %855 = vector.extract_strided_slice %851 {offsets = [0, 39], sizes = [2, 13], strides = [1, 1]} : vector<2x52xf32> to vector<2x13xf32>
    %856 = arith.mulf %853, %840 : vector<2x13xf32>
    %857 = arith.mulf %852, %854 : vector<2x13xf32>
    %858 = arith.addf %856, %857 : vector<2x13xf32>
    %859 = math.tanh %858 : vector<2x13xf32>
    %860 = arith.mulf %855, %859 : vector<2x13xf32>
    %cst_196 = arith.constant dense<0.000000e+00> : vector<2x52xf32>
    %861 = tpu.matmul %860, %813, %cst_196 {dimension_numbers = #tpu.dot_dimension_numbers<[1], [0], [0], [1], [0, 0, 1, 1], [], []>} : vector<2x13xf32>, vector<13x52xf32>, vector<2x52xf32> -> vector<2x52xf32>
    %862 = arith.addf %816, %861 : vector<2x52xf32>
    %863 = math.tanh %862 : vector<2x52xf32>
    %864 = arith.negf %862 : vector<2x52xf32>
    %865 = math.exp %864 : vector<2x52xf32>
    %cst_197 = arith.constant 1.000000e+00 : f32
    %866 = vector.broadcast %cst_197 : f32 to vector<2x52xf32>
    %867 = arith.addf %866, %865 : vector<2x52xf32>
    %868 = arith.divf %866, %867 : vector<2x52xf32>
    %869 = arith.select %53, %863, %868 : vector<2x52xi1>, vector<2x52xf32>
    %870 = vector.extract_strided_slice %869 {offsets = [0, 0], sizes = [2, 13], strides = [1, 1]} : vector<2x52xf32> to vector<2x13xf32>
    %871 = vector.extract_strided_slice %869 {offsets = [0, 13], sizes = [2, 13], strides = [1, 1]} : vector<2x52xf32> to vector<2x13xf32>
    %872 = vector.extract_strided_slice %869 {offsets = [0, 26], sizes = [2, 13], strides = [1, 1]} : vector<2x52xf32> to vector<2x13xf32>
    %873 = vector.extract_strided_slice %869 {offsets = [0, 39], sizes = [2, 13], strides = [1, 1]} : vector<2x52xf32> to vector<2x13xf32>
    %874 = arith.mulf %871, %858 : vector<2x13xf32>
    %875 = arith.mulf %870, %872 : vector<2x13xf32>
    %876 = arith.addf %874, %875 : vector<2x13xf32>
    %877 = math.tanh %876 : vector<2x13xf32>
    %878 = arith.mulf %873, %877 : vector<2x13xf32>
    %cst_198 = arith.constant dense<0.000000e+00> : vector<2x52xf32>
    %879 = tpu.matmul %878, %813, %cst_198 {dimension_numbers = #tpu.dot_dimension_numbers<[1], [0], [0], [1], [0, 0, 1, 1], [], []>} : vector<2x13xf32>, vector<13x52xf32>, vector<2x52xf32> -> vector<2x52xf32>
    %880 = arith.addf %817, %879 : vector<2x52xf32>
    %881 = math.tanh %880 : vector<2x52xf32>
    %882 = arith.negf %880 : vector<2x52xf32>
    %883 = math.exp %882 : vector<2x52xf32>
    %cst_199 = arith.constant 1.000000e+00 : f32
    %884 = vector.broadcast %cst_199 : f32 to vector<2x52xf32>
    %885 = arith.addf %884, %883 : vector<2x52xf32>
    %886 = arith.divf %884, %885 : vector<2x52xf32>
    %887 = arith.select %53, %881, %886 : vector<2x52xi1>, vector<2x52xf32>
    %888 = vector.extract_strided_slice %887 {offsets = [0, 0], sizes = [2, 13], strides = [1, 1]} : vector<2x52xf32> to vector<2x13xf32>
    %889 = vector.extract_strided_slice %887 {offsets = [0, 13], sizes = [2, 13], strides = [1, 1]} : vector<2x52xf32> to vector<2x13xf32>
    %890 = vector.extract_strided_slice %887 {offsets = [0, 26], sizes = [2, 13], strides = [1, 1]} : vector<2x52xf32> to vector<2x13xf32>
    %891 = vector.extract_strided_slice %887 {offsets = [0, 39], sizes = [2, 13], strides = [1, 1]} : vector<2x52xf32> to vector<2x13xf32>
    %892 = arith.mulf %889, %876 : vector<2x13xf32>
    %893 = arith.mulf %888, %890 : vector<2x13xf32>
    %894 = arith.addf %892, %893 : vector<2x13xf32>
    %895 = math.tanh %894 : vector<2x13xf32>
    %896 = arith.mulf %891, %895 : vector<2x13xf32>
    %cst_200 = arith.constant dense<0.000000e+00> : vector<2x52xf32>
    %897 = tpu.matmul %896, %813, %cst_200 {dimension_numbers = #tpu.dot_dimension_numbers<[1], [0], [0], [1], [0, 0, 1, 1], [], []>} : vector<2x13xf32>, vector<13x52xf32>, vector<2x52xf32> -> vector<2x52xf32>
    %898 = arith.addf %818, %897 : vector<2x52xf32>
    %899 = math.tanh %898 : vector<2x52xf32>
    %900 = arith.negf %898 : vector<2x52xf32>
    %901 = math.exp %900 : vector<2x52xf32>
    %cst_201 = arith.constant 1.000000e+00 : f32
    %902 = vector.broadcast %cst_201 : f32 to vector<2x52xf32>
    %903 = arith.addf %902, %901 : vector<2x52xf32>
    %904 = arith.divf %902, %903 : vector<2x52xf32>
    %905 = arith.select %53, %899, %904 : vector<2x52xi1>, vector<2x52xf32>
    %906 = vector.extract_strided_slice %905 {offsets = [0, 0], sizes = [2, 13], strides = [1, 1]} : vector<2x52xf32> to vector<2x13xf32>
    %907 = vector.extract_strided_slice %905 {offsets = [0, 13], sizes = [2, 13], strides = [1, 1]} : vector<2x52xf32> to vector<2x13xf32>
    %908 = vector.extract_strided_slice %905 {offsets = [0, 26], sizes = [2, 13], strides = [1, 1]} : vector<2x52xf32> to vector<2x13xf32>
    %909 = vector.extract_strided_slice %905 {offsets = [0, 39], sizes = [2, 13], strides = [1, 1]} : vector<2x52xf32> to vector<2x13xf32>
    %910 = arith.mulf %907, %894 : vector<2x13xf32>
    %911 = arith.mulf %906, %908 : vector<2x13xf32>
    %912 = arith.addf %910, %911 : vector<2x13xf32>
    %913 = math.tanh %912 : vector<2x13xf32>
    %914 = arith.mulf %909, %913 : vector<2x13xf32>
    %cst_202 = arith.constant dense<0.000000e+00> : vector<2x52xf32>
    %915 = tpu.matmul %914, %813, %cst_202 {dimension_numbers = #tpu.dot_dimension_numbers<[1], [0], [0], [1], [0, 0, 1, 1], [], []>} : vector<2x13xf32>, vector<13x52xf32>, vector<2x52xf32> -> vector<2x52xf32>
    %916 = arith.addf %819, %915 : vector<2x52xf32>
    %917 = math.tanh %916 : vector<2x52xf32>
    %918 = arith.negf %916 : vector<2x52xf32>
    %919 = math.exp %918 : vector<2x52xf32>
    %cst_203 = arith.constant 1.000000e+00 : f32
    %920 = vector.broadcast %cst_203 : f32 to vector<2x52xf32>
    %921 = arith.addf %920, %919 : vector<2x52xf32>
    %922 = arith.divf %920, %921 : vector<2x52xf32>
    %923 = arith.select %53, %917, %922 : vector<2x52xi1>, vector<2x52xf32>
    %924 = vector.extract_strided_slice %923 {offsets = [0, 0], sizes = [2, 13], strides = [1, 1]} : vector<2x52xf32> to vector<2x13xf32>
    %925 = vector.extract_strided_slice %923 {offsets = [0, 13], sizes = [2, 13], strides = [1, 1]} : vector<2x52xf32> to vector<2x13xf32>
    %926 = vector.extract_strided_slice %923 {offsets = [0, 26], sizes = [2, 13], strides = [1, 1]} : vector<2x52xf32> to vector<2x13xf32>
    %927 = vector.extract_strided_slice %923 {offsets = [0, 39], sizes = [2, 13], strides = [1, 1]} : vector<2x52xf32> to vector<2x13xf32>
    %928 = arith.mulf %925, %912 : vector<2x13xf32>
    %929 = arith.mulf %924, %926 : vector<2x13xf32>
    %930 = arith.addf %928, %929 : vector<2x13xf32>
    %931 = math.tanh %930 : vector<2x13xf32>
    %932 = arith.mulf %927, %931 : vector<2x13xf32>
    %cst_204 = arith.constant dense<0.000000e+00> : vector<2x52xf32>
    %933 = tpu.matmul %932, %813, %cst_204 {dimension_numbers = #tpu.dot_dimension_numbers<[1], [0], [0], [1], [0, 0, 1, 1], [], []>} : vector<2x13xf32>, vector<13x52xf32>, vector<2x52xf32> -> vector<2x52xf32>
    %934 = arith.addf %820, %933 : vector<2x52xf32>
    %935 = math.tanh %934 : vector<2x52xf32>
    %936 = arith.negf %934 : vector<2x52xf32>
    %937 = math.exp %936 : vector<2x52xf32>
    %cst_205 = arith.constant 1.000000e+00 : f32
    %938 = vector.broadcast %cst_205 : f32 to vector<2x52xf32>
    %939 = arith.addf %938, %937 : vector<2x52xf32>
    %940 = arith.divf %938, %939 : vector<2x52xf32>
    %941 = arith.select %53, %935, %940 : vector<2x52xi1>, vector<2x52xf32>
    %942 = vector.extract_strided_slice %941 {offsets = [0, 0], sizes = [2, 13], strides = [1, 1]} : vector<2x52xf32> to vector<2x13xf32>
    %943 = vector.extract_strided_slice %941 {offsets = [0, 13], sizes = [2, 13], strides = [1, 1]} : vector<2x52xf32> to vector<2x13xf32>
    %944 = vector.extract_strided_slice %941 {offsets = [0, 26], sizes = [2, 13], strides = [1, 1]} : vector<2x52xf32> to vector<2x13xf32>
    %945 = vector.extract_strided_slice %941 {offsets = [0, 39], sizes = [2, 13], strides = [1, 1]} : vector<2x52xf32> to vector<2x13xf32>
    %946 = arith.mulf %943, %930 : vector<2x13xf32>
    %947 = arith.mulf %942, %944 : vector<2x13xf32>
    %948 = arith.addf %946, %947 : vector<2x13xf32>
    %949 = math.tanh %948 : vector<2x13xf32>
    %950 = arith.mulf %945, %949 : vector<2x13xf32>
    %cst_206 = arith.constant dense<0.000000e+00> : vector<2x52xf32>
    %951 = tpu.matmul %950, %813, %cst_206 {dimension_numbers = #tpu.dot_dimension_numbers<[1], [0], [0], [1], [0, 0, 1, 1], [], []>} : vector<2x13xf32>, vector<13x52xf32>, vector<2x52xf32> -> vector<2x52xf32>
    %952 = arith.addf %821, %951 : vector<2x52xf32>
    %953 = math.tanh %952 : vector<2x52xf32>
    %954 = arith.negf %952 : vector<2x52xf32>
    %955 = math.exp %954 : vector<2x52xf32>
    %cst_207 = arith.constant 1.000000e+00 : f32
    %956 = vector.broadcast %cst_207 : f32 to vector<2x52xf32>
    %957 = arith.addf %956, %955 : vector<2x52xf32>
    %958 = arith.divf %956, %957 : vector<2x52xf32>
    %959 = arith.select %53, %953, %958 : vector<2x52xi1>, vector<2x52xf32>
    %960 = vector.extract_strided_slice %959 {offsets = [0, 0], sizes = [2, 13], strides = [1, 1]} : vector<2x52xf32> to vector<2x13xf32>
    %961 = vector.extract_strided_slice %959 {offsets = [0, 13], sizes = [2, 13], strides = [1, 1]} : vector<2x52xf32> to vector<2x13xf32>
    %962 = vector.extract_strided_slice %959 {offsets = [0, 26], sizes = [2, 13], strides = [1, 1]} : vector<2x52xf32> to vector<2x13xf32>
    %963 = vector.extract_strided_slice %959 {offsets = [0, 39], sizes = [2, 13], strides = [1, 1]} : vector<2x52xf32> to vector<2x13xf32>
    %964 = arith.mulf %961, %948 : vector<2x13xf32>
    %965 = arith.mulf %960, %962 : vector<2x13xf32>
    %966 = arith.addf %964, %965 : vector<2x13xf32>
    %967 = math.tanh %966 : vector<2x13xf32>
    %968 = arith.mulf %963, %967 : vector<2x13xf32>
    %cst_208 = arith.constant dense<0.000000e+00> : vector<2x52xf32>
    %969 = tpu.matmul %968, %813, %cst_208 {dimension_numbers = #tpu.dot_dimension_numbers<[1], [0], [0], [1], [0, 0, 1, 1], [], []>} : vector<2x13xf32>, vector<13x52xf32>, vector<2x52xf32> -> vector<2x52xf32>
    %970 = arith.addf %822, %969 : vector<2x52xf32>
    %971 = math.tanh %970 : vector<2x52xf32>
    %972 = arith.negf %970 : vector<2x52xf32>
    %973 = math.exp %972 : vector<2x52xf32>
    %cst_209 = arith.constant 1.000000e+00 : f32
    %974 = vector.broadcast %cst_209 : f32 to vector<2x52xf32>
    %975 = arith.addf %974, %973 : vector<2x52xf32>
    %976 = arith.divf %974, %975 : vector<2x52xf32>
    %977 = arith.select %53, %971, %976 : vector<2x52xi1>, vector<2x52xf32>
    %978 = vector.extract_strided_slice %977 {offsets = [0, 0], sizes = [2, 13], strides = [1, 1]} : vector<2x52xf32> to vector<2x13xf32>
    %979 = vector.extract_strided_slice %977 {offsets = [0, 13], sizes = [2, 13], strides = [1, 1]} : vector<2x52xf32> to vector<2x13xf32>
    %980 = vector.extract_strided_slice %977 {offsets = [0, 26], sizes = [2, 13], strides = [1, 1]} : vector<2x52xf32> to vector<2x13xf32>
    %981 = vector.extract_strided_slice %977 {offsets = [0, 39], sizes = [2, 13], strides = [1, 1]} : vector<2x52xf32> to vector<2x13xf32>
    %982 = arith.mulf %979, %966 : vector<2x13xf32>
    %983 = arith.mulf %978, %980 : vector<2x13xf32>
    %984 = arith.addf %982, %983 : vector<2x13xf32>
    %985 = math.tanh %984 : vector<2x13xf32>
    %986 = arith.mulf %981, %985 : vector<2x13xf32>
    %987 = tpu.concatenate %842, %860, %878, %896, %914, %932, %950, %968, %986 in 0 : vector<2x13xf32>, vector<2x13xf32>, vector<2x13xf32>, vector<2x13xf32>, vector<2x13xf32>, vector<2x13xf32>, vector<2x13xf32>, vector<2x13xf32>, vector<2x13xf32> -> vector<18x13xf32>
    %c2_210 = arith.constant 2 : index
    %c1_211 = arith.constant 1 : index
    %c0_212 = arith.constant 0 : index
    %c0_213 = arith.constant 0 : index
    %988 = vector.load %arg6[%c2_210, %c1_211, %c0_212, %c0_213] : memref<4x2x13x52xf32, #tpu.memory_space<vmem>>, vector<1x1x13x52xf32>
    %989 = vector.shape_cast %988 : vector<1x1x13x52xf32> to vector<13x52xf32>
    %990 = vector.extract_strided_slice %811 {offsets = [0, 0], sizes = [2, 52], strides = [1, 1]} : vector<18x52xf32> to vector<2x52xf32>
    %991 = vector.extract_strided_slice %811 {offsets = [2, 0], sizes = [2, 52], strides = [1, 1]} : vector<18x52xf32> to vector<2x52xf32>
    %992 = vector.extract_strided_slice %811 {offsets = [4, 0], sizes = [2, 52], strides = [1, 1]} : vector<18x52xf32> to vector<2x52xf32>
    %993 = vector.extract_strided_slice %811 {offsets = [6, 0], sizes = [2, 52], strides = [1, 1]} : vector<18x52xf32> to vector<2x52xf32>
    %994 = vector.extract_strided_slice %811 {offsets = [8, 0], sizes = [2, 52], strides = [1, 1]} : vector<18x52xf32> to vector<2x52xf32>
    %995 = vector.extract_strided_slice %811 {offsets = [10, 0], sizes = [2, 52], strides = [1, 1]} : vector<18x52xf32> to vector<2x52xf32>
    %996 = vector.extract_strided_slice %811 {offsets = [12, 0], sizes = [2, 52], strides = [1, 1]} : vector<18x52xf32> to vector<2x52xf32>
    %997 = vector.extract_strided_slice %811 {offsets = [14, 0], sizes = [2, 52], strides = [1, 1]} : vector<18x52xf32> to vector<2x52xf32>
    %998 = vector.extract_strided_slice %811 {offsets = [16, 0], sizes = [2, 52], strides = [1, 1]} : vector<18x52xf32> to vector<2x52xf32>
    %cst_214 = arith.constant 0.000000e+00 : f32
    %999 = vector.broadcast %cst_214 : f32 to vector<2x13xf32>
    %cst_215 = arith.constant 0.000000e+00 : f32
    %1000 = vector.broadcast %cst_215 : f32 to vector<2x13xf32>
    %cst_216 = arith.constant dense<0.000000e+00> : vector<2x52xf32>
    %1001 = tpu.matmul %999, %989, %cst_216 {dimension_numbers = #tpu.dot_dimension_numbers<[1], [0], [0], [1], [0, 0, 1, 1], [], []>} : vector<2x13xf32>, vector<13x52xf32>, vector<2x52xf32> -> vector<2x52xf32>
    %1002 = arith.addf %998, %1001 : vector<2x52xf32>
    %1003 = math.tanh %1002 : vector<2x52xf32>
    %1004 = arith.negf %1002 : vector<2x52xf32>
    %1005 = math.exp %1004 : vector<2x52xf32>
    %cst_217 = arith.constant 1.000000e+00 : f32
    %1006 = vector.broadcast %cst_217 : f32 to vector<2x52xf32>
    %1007 = arith.addf %1006, %1005 : vector<2x52xf32>
    %1008 = arith.divf %1006, %1007 : vector<2x52xf32>
    %1009 = arith.select %53, %1003, %1008 : vector<2x52xi1>, vector<2x52xf32>
    %1010 = vector.extract_strided_slice %1009 {offsets = [0, 0], sizes = [2, 13], strides = [1, 1]} : vector<2x52xf32> to vector<2x13xf32>
    %1011 = vector.extract_strided_slice %1009 {offsets = [0, 13], sizes = [2, 13], strides = [1, 1]} : vector<2x52xf32> to vector<2x13xf32>
    %1012 = vector.extract_strided_slice %1009 {offsets = [0, 26], sizes = [2, 13], strides = [1, 1]} : vector<2x52xf32> to vector<2x13xf32>
    %1013 = vector.extract_strided_slice %1009 {offsets = [0, 39], sizes = [2, 13], strides = [1, 1]} : vector<2x52xf32> to vector<2x13xf32>
    %1014 = arith.mulf %1011, %1000 : vector<2x13xf32>
    %1015 = arith.mulf %1010, %1012 : vector<2x13xf32>
    %1016 = arith.addf %1014, %1015 : vector<2x13xf32>
    %1017 = math.tanh %1016 : vector<2x13xf32>
    %1018 = arith.mulf %1013, %1017 : vector<2x13xf32>
    %cst_218 = arith.constant dense<0.000000e+00> : vector<2x52xf32>
    %1019 = tpu.matmul %1018, %989, %cst_218 {dimension_numbers = #tpu.dot_dimension_numbers<[1], [0], [0], [1], [0, 0, 1, 1], [], []>} : vector<2x13xf32>, vector<13x52xf32>, vector<2x52xf32> -> vector<2x52xf32>
    %1020 = arith.addf %997, %1019 : vector<2x52xf32>
    %1021 = math.tanh %1020 : vector<2x52xf32>
    %1022 = arith.negf %1020 : vector<2x52xf32>
    %1023 = math.exp %1022 : vector<2x52xf32>
    %cst_219 = arith.constant 1.000000e+00 : f32
    %1024 = vector.broadcast %cst_219 : f32 to vector<2x52xf32>
    %1025 = arith.addf %1024, %1023 : vector<2x52xf32>
    %1026 = arith.divf %1024, %1025 : vector<2x52xf32>
    %1027 = arith.select %53, %1021, %1026 : vector<2x52xi1>, vector<2x52xf32>
    %1028 = vector.extract_strided_slice %1027 {offsets = [0, 0], sizes = [2, 13], strides = [1, 1]} : vector<2x52xf32> to vector<2x13xf32>
    %1029 = vector.extract_strided_slice %1027 {offsets = [0, 13], sizes = [2, 13], strides = [1, 1]} : vector<2x52xf32> to vector<2x13xf32>
    %1030 = vector.extract_strided_slice %1027 {offsets = [0, 26], sizes = [2, 13], strides = [1, 1]} : vector<2x52xf32> to vector<2x13xf32>
    %1031 = vector.extract_strided_slice %1027 {offsets = [0, 39], sizes = [2, 13], strides = [1, 1]} : vector<2x52xf32> to vector<2x13xf32>
    %1032 = arith.mulf %1029, %1016 : vector<2x13xf32>
    %1033 = arith.mulf %1028, %1030 : vector<2x13xf32>
    %1034 = arith.addf %1032, %1033 : vector<2x13xf32>
    %1035 = math.tanh %1034 : vector<2x13xf32>
    %1036 = arith.mulf %1031, %1035 : vector<2x13xf32>
    %cst_220 = arith.constant dense<0.000000e+00> : vector<2x52xf32>
    %1037 = tpu.matmul %1036, %989, %cst_220 {dimension_numbers = #tpu.dot_dimension_numbers<[1], [0], [0], [1], [0, 0, 1, 1], [], []>} : vector<2x13xf32>, vector<13x52xf32>, vector<2x52xf32> -> vector<2x52xf32>
    %1038 = arith.addf %996, %1037 : vector<2x52xf32>
    %1039 = math.tanh %1038 : vector<2x52xf32>
    %1040 = arith.negf %1038 : vector<2x52xf32>
    %1041 = math.exp %1040 : vector<2x52xf32>
    %cst_221 = arith.constant 1.000000e+00 : f32
    %1042 = vector.broadcast %cst_221 : f32 to vector<2x52xf32>
    %1043 = arith.addf %1042, %1041 : vector<2x52xf32>
    %1044 = arith.divf %1042, %1043 : vector<2x52xf32>
    %1045 = arith.select %53, %1039, %1044 : vector<2x52xi1>, vector<2x52xf32>
    %1046 = vector.extract_strided_slice %1045 {offsets = [0, 0], sizes = [2, 13], strides = [1, 1]} : vector<2x52xf32> to vector<2x13xf32>
    %1047 = vector.extract_strided_slice %1045 {offsets = [0, 13], sizes = [2, 13], strides = [1, 1]} : vector<2x52xf32> to vector<2x13xf32>
    %1048 = vector.extract_strided_slice %1045 {offsets = [0, 26], sizes = [2, 13], strides = [1, 1]} : vector<2x52xf32> to vector<2x13xf32>
    %1049 = vector.extract_strided_slice %1045 {offsets = [0, 39], sizes = [2, 13], strides = [1, 1]} : vector<2x52xf32> to vector<2x13xf32>
    %1050 = arith.mulf %1047, %1034 : vector<2x13xf32>
    %1051 = arith.mulf %1046, %1048 : vector<2x13xf32>
    %1052 = arith.addf %1050, %1051 : vector<2x13xf32>
    %1053 = math.tanh %1052 : vector<2x13xf32>
    %1054 = arith.mulf %1049, %1053 : vector<2x13xf32>
    %cst_222 = arith.constant dense<0.000000e+00> : vector<2x52xf32>
    %1055 = tpu.matmul %1054, %989, %cst_222 {dimension_numbers = #tpu.dot_dimension_numbers<[1], [0], [0], [1], [0, 0, 1, 1], [], []>} : vector<2x13xf32>, vector<13x52xf32>, vector<2x52xf32> -> vector<2x52xf32>
    %1056 = arith.addf %995, %1055 : vector<2x52xf32>
    %1057 = math.tanh %1056 : vector<2x52xf32>
    %1058 = arith.negf %1056 : vector<2x52xf32>
    %1059 = math.exp %1058 : vector<2x52xf32>
    %cst_223 = arith.constant 1.000000e+00 : f32
    %1060 = vector.broadcast %cst_223 : f32 to vector<2x52xf32>
    %1061 = arith.addf %1060, %1059 : vector<2x52xf32>
    %1062 = arith.divf %1060, %1061 : vector<2x52xf32>
    %1063 = arith.select %53, %1057, %1062 : vector<2x52xi1>, vector<2x52xf32>
    %1064 = vector.extract_strided_slice %1063 {offsets = [0, 0], sizes = [2, 13], strides = [1, 1]} : vector<2x52xf32> to vector<2x13xf32>
    %1065 = vector.extract_strided_slice %1063 {offsets = [0, 13], sizes = [2, 13], strides = [1, 1]} : vector<2x52xf32> to vector<2x13xf32>
    %1066 = vector.extract_strided_slice %1063 {offsets = [0, 26], sizes = [2, 13], strides = [1, 1]} : vector<2x52xf32> to vector<2x13xf32>
    %1067 = vector.extract_strided_slice %1063 {offsets = [0, 39], sizes = [2, 13], strides = [1, 1]} : vector<2x52xf32> to vector<2x13xf32>
    %1068 = arith.mulf %1065, %1052 : vector<2x13xf32>
    %1069 = arith.mulf %1064, %1066 : vector<2x13xf32>
    %1070 = arith.addf %1068, %1069 : vector<2x13xf32>
    %1071 = math.tanh %1070 : vector<2x13xf32>
    %1072 = arith.mulf %1067, %1071 : vector<2x13xf32>
    %cst_224 = arith.constant dense<0.000000e+00> : vector<2x52xf32>
    %1073 = tpu.matmul %1072, %989, %cst_224 {dimension_numbers = #tpu.dot_dimension_numbers<[1], [0], [0], [1], [0, 0, 1, 1], [], []>} : vector<2x13xf32>, vector<13x52xf32>, vector<2x52xf32> -> vector<2x52xf32>
    %1074 = arith.addf %994, %1073 : vector<2x52xf32>
    %1075 = math.tanh %1074 : vector<2x52xf32>
    %1076 = arith.negf %1074 : vector<2x52xf32>
    %1077 = math.exp %1076 : vector<2x52xf32>
    %cst_225 = arith.constant 1.000000e+00 : f32
    %1078 = vector.broadcast %cst_225 : f32 to vector<2x52xf32>
    %1079 = arith.addf %1078, %1077 : vector<2x52xf32>
    %1080 = arith.divf %1078, %1079 : vector<2x52xf32>
    %1081 = arith.select %53, %1075, %1080 : vector<2x52xi1>, vector<2x52xf32>
    %1082 = vector.extract_strided_slice %1081 {offsets = [0, 0], sizes = [2, 13], strides = [1, 1]} : vector<2x52xf32> to vector<2x13xf32>
    %1083 = vector.extract_strided_slice %1081 {offsets = [0, 13], sizes = [2, 13], strides = [1, 1]} : vector<2x52xf32> to vector<2x13xf32>
    %1084 = vector.extract_strided_slice %1081 {offsets = [0, 26], sizes = [2, 13], strides = [1, 1]} : vector<2x52xf32> to vector<2x13xf32>
    %1085 = vector.extract_strided_slice %1081 {offsets = [0, 39], sizes = [2, 13], strides = [1, 1]} : vector<2x52xf32> to vector<2x13xf32>
    %1086 = arith.mulf %1083, %1070 : vector<2x13xf32>
    %1087 = arith.mulf %1082, %1084 : vector<2x13xf32>
    %1088 = arith.addf %1086, %1087 : vector<2x13xf32>
    %1089 = math.tanh %1088 : vector<2x13xf32>
    %1090 = arith.mulf %1085, %1089 : vector<2x13xf32>
    %cst_226 = arith.constant dense<0.000000e+00> : vector<2x52xf32>
    %1091 = tpu.matmul %1090, %989, %cst_226 {dimension_numbers = #tpu.dot_dimension_numbers<[1], [0], [0], [1], [0, 0, 1, 1], [], []>} : vector<2x13xf32>, vector<13x52xf32>, vector<2x52xf32> -> vector<2x52xf32>
    %1092 = arith.addf %993, %1091 : vector<2x52xf32>
    %1093 = math.tanh %1092 : vector<2x52xf32>
    %1094 = arith.negf %1092 : vector<2x52xf32>
    %1095 = math.exp %1094 : vector<2x52xf32>
    %cst_227 = arith.constant 1.000000e+00 : f32
    %1096 = vector.broadcast %cst_227 : f32 to vector<2x52xf32>
    %1097 = arith.addf %1096, %1095 : vector<2x52xf32>
    %1098 = arith.divf %1096, %1097 : vector<2x52xf32>
    %1099 = arith.select %53, %1093, %1098 : vector<2x52xi1>, vector<2x52xf32>
    %1100 = vector.extract_strided_slice %1099 {offsets = [0, 0], sizes = [2, 13], strides = [1, 1]} : vector<2x52xf32> to vector<2x13xf32>
    %1101 = vector.extract_strided_slice %1099 {offsets = [0, 13], sizes = [2, 13], strides = [1, 1]} : vector<2x52xf32> to vector<2x13xf32>
    %1102 = vector.extract_strided_slice %1099 {offsets = [0, 26], sizes = [2, 13], strides = [1, 1]} : vector<2x52xf32> to vector<2x13xf32>
    %1103 = vector.extract_strided_slice %1099 {offsets = [0, 39], sizes = [2, 13], strides = [1, 1]} : vector<2x52xf32> to vector<2x13xf32>
    %1104 = arith.mulf %1101, %1088 : vector<2x13xf32>
    %1105 = arith.mulf %1100, %1102 : vector<2x13xf32>
    %1106 = arith.addf %1104, %1105 : vector<2x13xf32>
    %1107 = math.tanh %1106 : vector<2x13xf32>
    %1108 = arith.mulf %1103, %1107 : vector<2x13xf32>
    %cst_228 = arith.constant dense<0.000000e+00> : vector<2x52xf32>
    %1109 = tpu.matmul %1108, %989, %cst_228 {dimension_numbers = #tpu.dot_dimension_numbers<[1], [0], [0], [1], [0, 0, 1, 1], [], []>} : vector<2x13xf32>, vector<13x52xf32>, vector<2x52xf32> -> vector<2x52xf32>
    %1110 = arith.addf %992, %1109 : vector<2x52xf32>
    %1111 = math.tanh %1110 : vector<2x52xf32>
    %1112 = arith.negf %1110 : vector<2x52xf32>
    %1113 = math.exp %1112 : vector<2x52xf32>
    %cst_229 = arith.constant 1.000000e+00 : f32
    %1114 = vector.broadcast %cst_229 : f32 to vector<2x52xf32>
    %1115 = arith.addf %1114, %1113 : vector<2x52xf32>
    %1116 = arith.divf %1114, %1115 : vector<2x52xf32>
    %1117 = arith.select %53, %1111, %1116 : vector<2x52xi1>, vector<2x52xf32>
    %1118 = vector.extract_strided_slice %1117 {offsets = [0, 0], sizes = [2, 13], strides = [1, 1]} : vector<2x52xf32> to vector<2x13xf32>
    %1119 = vector.extract_strided_slice %1117 {offsets = [0, 13], sizes = [2, 13], strides = [1, 1]} : vector<2x52xf32> to vector<2x13xf32>
    %1120 = vector.extract_strided_slice %1117 {offsets = [0, 26], sizes = [2, 13], strides = [1, 1]} : vector<2x52xf32> to vector<2x13xf32>
    %1121 = vector.extract_strided_slice %1117 {offsets = [0, 39], sizes = [2, 13], strides = [1, 1]} : vector<2x52xf32> to vector<2x13xf32>
    %1122 = arith.mulf %1119, %1106 : vector<2x13xf32>
    %1123 = arith.mulf %1118, %1120 : vector<2x13xf32>
    %1124 = arith.addf %1122, %1123 : vector<2x13xf32>
    %1125 = math.tanh %1124 : vector<2x13xf32>
    %1126 = arith.mulf %1121, %1125 : vector<2x13xf32>
    %cst_230 = arith.constant dense<0.000000e+00> : vector<2x52xf32>
    %1127 = tpu.matmul %1126, %989, %cst_230 {dimension_numbers = #tpu.dot_dimension_numbers<[1], [0], [0], [1], [0, 0, 1, 1], [], []>} : vector<2x13xf32>, vector<13x52xf32>, vector<2x52xf32> -> vector<2x52xf32>
    %1128 = arith.addf %991, %1127 : vector<2x52xf32>
    %1129 = math.tanh %1128 : vector<2x52xf32>
    %1130 = arith.negf %1128 : vector<2x52xf32>
    %1131 = math.exp %1130 : vector<2x52xf32>
    %cst_231 = arith.constant 1.000000e+00 : f32
    %1132 = vector.broadcast %cst_231 : f32 to vector<2x52xf32>
    %1133 = arith.addf %1132, %1131 : vector<2x52xf32>
    %1134 = arith.divf %1132, %1133 : vector<2x52xf32>
    %1135 = arith.select %53, %1129, %1134 : vector<2x52xi1>, vector<2x52xf32>
    %1136 = vector.extract_strided_slice %1135 {offsets = [0, 0], sizes = [2, 13], strides = [1, 1]} : vector<2x52xf32> to vector<2x13xf32>
    %1137 = vector.extract_strided_slice %1135 {offsets = [0, 13], sizes = [2, 13], strides = [1, 1]} : vector<2x52xf32> to vector<2x13xf32>
    %1138 = vector.extract_strided_slice %1135 {offsets = [0, 26], sizes = [2, 13], strides = [1, 1]} : vector<2x52xf32> to vector<2x13xf32>
    %1139 = vector.extract_strided_slice %1135 {offsets = [0, 39], sizes = [2, 13], strides = [1, 1]} : vector<2x52xf32> to vector<2x13xf32>
    %1140 = arith.mulf %1137, %1124 : vector<2x13xf32>
    %1141 = arith.mulf %1136, %1138 : vector<2x13xf32>
    %1142 = arith.addf %1140, %1141 : vector<2x13xf32>
    %1143 = math.tanh %1142 : vector<2x13xf32>
    %1144 = arith.mulf %1139, %1143 : vector<2x13xf32>
    %cst_232 = arith.constant dense<0.000000e+00> : vector<2x52xf32>
    %1145 = tpu.matmul %1144, %989, %cst_232 {dimension_numbers = #tpu.dot_dimension_numbers<[1], [0], [0], [1], [0, 0, 1, 1], [], []>} : vector<2x13xf32>, vector<13x52xf32>, vector<2x52xf32> -> vector<2x52xf32>
    %1146 = arith.addf %990, %1145 : vector<2x52xf32>
    %1147 = math.tanh %1146 : vector<2x52xf32>
    %1148 = arith.negf %1146 : vector<2x52xf32>
    %1149 = math.exp %1148 : vector<2x52xf32>
    %cst_233 = arith.constant 1.000000e+00 : f32
    %1150 = vector.broadcast %cst_233 : f32 to vector<2x52xf32>
    %1151 = arith.addf %1150, %1149 : vector<2x52xf32>
    %1152 = arith.divf %1150, %1151 : vector<2x52xf32>
    %1153 = arith.select %53, %1147, %1152 : vector<2x52xi1>, vector<2x52xf32>
    %1154 = vector.extract_strided_slice %1153 {offsets = [0, 0], sizes = [2, 13], strides = [1, 1]} : vector<2x52xf32> to vector<2x13xf32>
    %1155 = vector.extract_strided_slice %1153 {offsets = [0, 13], sizes = [2, 13], strides = [1, 1]} : vector<2x52xf32> to vector<2x13xf32>
    %1156 = vector.extract_strided_slice %1153 {offsets = [0, 26], sizes = [2, 13], strides = [1, 1]} : vector<2x52xf32> to vector<2x13xf32>
    %1157 = vector.extract_strided_slice %1153 {offsets = [0, 39], sizes = [2, 13], strides = [1, 1]} : vector<2x52xf32> to vector<2x13xf32>
    %1158 = arith.mulf %1155, %1142 : vector<2x13xf32>
    %1159 = arith.mulf %1154, %1156 : vector<2x13xf32>
    %1160 = arith.addf %1158, %1159 : vector<2x13xf32>
    %1161 = math.tanh %1160 : vector<2x13xf32>
    %1162 = arith.mulf %1157, %1161 : vector<2x13xf32>
    %1163 = tpu.concatenate %1162, %1144, %1126, %1108, %1090, %1072, %1054, %1036, %1018 in 0 : vector<2x13xf32>, vector<2x13xf32>, vector<2x13xf32>, vector<2x13xf32>, vector<2x13xf32>, vector<2x13xf32>, vector<2x13xf32>, vector<2x13xf32>, vector<2x13xf32> -> vector<18x13xf32>
    %c2_234 = arith.constant 2 : index
    %c0_235 = arith.constant 0 : index
    %c0_236 = arith.constant 0 : index
    %c0_237 = arith.constant 0 : index
    %c0_238 = arith.constant 0 : index
    %1164 = vector.load %arg5[%c2_234, %c0_235, %c0_236, %c0_237, %c0_238] : memref<3x2x2x13x52xf32, #tpu.memory_space<vmem>>, vector<1x1x1x13x52xf32>
    %1165 = vector.shape_cast %1164 : vector<1x1x1x13x52xf32> to vector<13x52xf32>
    %cst_239 = arith.constant dense<0.000000e+00> : vector<18x52xf32>
    %1166 = tpu.matmul %987, %1165, %cst_239 {dimension_numbers = #tpu.dot_dimension_numbers<[1], [0], [0], [1], [0, 0, 1, 1], [], []>} : vector<18x13xf32>, vector<13x52xf32>, vector<18x52xf32> -> vector<18x52xf32>
    %c2_240 = arith.constant 2 : index
    %c0_241 = arith.constant 0 : index
    %c1_242 = arith.constant 1 : index
    %c0_243 = arith.constant 0 : index
    %c0_244 = arith.constant 0 : index
    %1167 = vector.load %arg5[%c2_240, %c0_241, %c1_242, %c0_243, %c0_244] : memref<3x2x2x13x52xf32, #tpu.memory_space<vmem>>, vector<1x1x1x13x52xf32>
    %1168 = vector.shape_cast %1167 : vector<1x1x1x13x52xf32> to vector<13x52xf32>
    %cst_245 = arith.constant dense<0.000000e+00> : vector<18x52xf32>
    %1169 = tpu.matmul %1163, %1168, %cst_245 {dimension_numbers = #tpu.dot_dimension_numbers<[1], [0], [0], [1], [0, 0, 1, 1], [], []>} : vector<18x13xf32>, vector<13x52xf32>, vector<18x52xf32> -> vector<18x52xf32>
    %1170 = arith.addf %1166, %1169 : vector<18x52xf32>
    %c3 = arith.constant 3 : index
    %c0_246 = arith.constant 0 : index
    %c0_247 = arith.constant 0 : index
    %c0_248 = arith.constant 0 : index
    %1171 = vector.load %arg7[%c3, %c0_246, %c0_247, %c0_248] : memref<4x2x1x52xf32, #tpu.memory_space<vmem>>, vector<1x1x1x52xf32>
    %1172 = vector.shape_cast %1171 : vector<1x1x1x52xf32> to vector<1x52xf32>
    %1173 = vector.broadcast %1172 : vector<1x52xf32> to vector<18x52xf32>
    %1174 = arith.addf %1170, %1173 : vector<18x52xf32>
    %c2_249 = arith.constant 2 : index
    %c1_250 = arith.constant 1 : index
    %c0_251 = arith.constant 0 : index
    %c0_252 = arith.constant 0 : index
    %c0_253 = arith.constant 0 : index
    %1175 = vector.load %arg5[%c2_249, %c1_250, %c0_251, %c0_252, %c0_253] : memref<3x2x2x13x52xf32, #tpu.memory_space<vmem>>, vector<1x1x1x13x52xf32>
    %1176 = vector.shape_cast %1175 : vector<1x1x1x13x52xf32> to vector<13x52xf32>
    %cst_254 = arith.constant dense<0.000000e+00> : vector<18x52xf32>
    %1177 = tpu.matmul %987, %1176, %cst_254 {dimension_numbers = #tpu.dot_dimension_numbers<[1], [0], [0], [1], [0, 0, 1, 1], [], []>} : vector<18x13xf32>, vector<13x52xf32>, vector<18x52xf32> -> vector<18x52xf32>
    %c2_255 = arith.constant 2 : index
    %c1_256 = arith.constant 1 : index
    %c1_257 = arith.constant 1 : index
    %c0_258 = arith.constant 0 : index
    %c0_259 = arith.constant 0 : index
    %1178 = vector.load %arg5[%c2_255, %c1_256, %c1_257, %c0_258, %c0_259] : memref<3x2x2x13x52xf32, #tpu.memory_space<vmem>>, vector<1x1x1x13x52xf32>
    %1179 = vector.shape_cast %1178 : vector<1x1x1x13x52xf32> to vector<13x52xf32>
    %cst_260 = arith.constant dense<0.000000e+00> : vector<18x52xf32>
    %1180 = tpu.matmul %1163, %1179, %cst_260 {dimension_numbers = #tpu.dot_dimension_numbers<[1], [0], [0], [1], [0, 0, 1, 1], [], []>} : vector<18x13xf32>, vector<13x52xf32>, vector<18x52xf32> -> vector<18x52xf32>
    %1181 = arith.addf %1177, %1180 : vector<18x52xf32>
    %c3_261 = arith.constant 3 : index
    %c1_262 = arith.constant 1 : index
    %c0_263 = arith.constant 0 : index
    %c0_264 = arith.constant 0 : index
    %1182 = vector.load %arg7[%c3_261, %c1_262, %c0_263, %c0_264] : memref<4x2x1x52xf32, #tpu.memory_space<vmem>>, vector<1x1x1x52xf32>
    %1183 = vector.shape_cast %1182 : vector<1x1x1x52xf32> to vector<1x52xf32>
    %1184 = vector.broadcast %1183 : vector<1x52xf32> to vector<18x52xf32>
    %1185 = arith.addf %1181, %1184 : vector<18x52xf32>
    %c3_265 = arith.constant 3 : index
    %c0_266 = arith.constant 0 : index
    %c0_267 = arith.constant 0 : index
    %c0_268 = arith.constant 0 : index
    %1186 = vector.load %arg6[%c3_265, %c0_266, %c0_267, %c0_268] : memref<4x2x13x52xf32, #tpu.memory_space<vmem>>, vector<1x1x13x52xf32>
    %1187 = vector.shape_cast %1186 : vector<1x1x13x52xf32> to vector<13x52xf32>
    %1188 = vector.extract_strided_slice %1174 {offsets = [0, 0], sizes = [2, 52], strides = [1, 1]} : vector<18x52xf32> to vector<2x52xf32>
    %1189 = vector.extract_strided_slice %1174 {offsets = [2, 0], sizes = [2, 52], strides = [1, 1]} : vector<18x52xf32> to vector<2x52xf32>
    %1190 = vector.extract_strided_slice %1174 {offsets = [4, 0], sizes = [2, 52], strides = [1, 1]} : vector<18x52xf32> to vector<2x52xf32>
    %1191 = vector.extract_strided_slice %1174 {offsets = [6, 0], sizes = [2, 52], strides = [1, 1]} : vector<18x52xf32> to vector<2x52xf32>
    %1192 = vector.extract_strided_slice %1174 {offsets = [8, 0], sizes = [2, 52], strides = [1, 1]} : vector<18x52xf32> to vector<2x52xf32>
    %1193 = vector.extract_strided_slice %1174 {offsets = [10, 0], sizes = [2, 52], strides = [1, 1]} : vector<18x52xf32> to vector<2x52xf32>
    %1194 = vector.extract_strided_slice %1174 {offsets = [12, 0], sizes = [2, 52], strides = [1, 1]} : vector<18x52xf32> to vector<2x52xf32>
    %1195 = vector.extract_strided_slice %1174 {offsets = [14, 0], sizes = [2, 52], strides = [1, 1]} : vector<18x52xf32> to vector<2x52xf32>
    %1196 = vector.extract_strided_slice %1174 {offsets = [16, 0], sizes = [2, 52], strides = [1, 1]} : vector<18x52xf32> to vector<2x52xf32>
    %cst_269 = arith.constant 0.000000e+00 : f32
    %1197 = vector.broadcast %cst_269 : f32 to vector<2x13xf32>
    %cst_270 = arith.constant 0.000000e+00 : f32
    %1198 = vector.broadcast %cst_270 : f32 to vector<2x13xf32>
    %cst_271 = arith.constant dense<0.000000e+00> : vector<2x52xf32>
    %1199 = tpu.matmul %1197, %1187, %cst_271 {dimension_numbers = #tpu.dot_dimension_numbers<[1], [0], [0], [1], [0, 0, 1, 1], [], []>} : vector<2x13xf32>, vector<13x52xf32>, vector<2x52xf32> -> vector<2x52xf32>
    %1200 = arith.addf %1188, %1199 : vector<2x52xf32>
    %1201 = math.tanh %1200 : vector<2x52xf32>
    %1202 = arith.negf %1200 : vector<2x52xf32>
    %1203 = math.exp %1202 : vector<2x52xf32>
    %cst_272 = arith.constant 1.000000e+00 : f32
    %1204 = vector.broadcast %cst_272 : f32 to vector<2x52xf32>
    %1205 = arith.addf %1204, %1203 : vector<2x52xf32>
    %1206 = arith.divf %1204, %1205 : vector<2x52xf32>
    %1207 = arith.select %53, %1201, %1206 : vector<2x52xi1>, vector<2x52xf32>
    %1208 = vector.extract_strided_slice %1207 {offsets = [0, 0], sizes = [2, 13], strides = [1, 1]} : vector<2x52xf32> to vector<2x13xf32>
    %1209 = vector.extract_strided_slice %1207 {offsets = [0, 13], sizes = [2, 13], strides = [1, 1]} : vector<2x52xf32> to vector<2x13xf32>
    %1210 = vector.extract_strided_slice %1207 {offsets = [0, 26], sizes = [2, 13], strides = [1, 1]} : vector<2x52xf32> to vector<2x13xf32>
    %1211 = vector.extract_strided_slice %1207 {offsets = [0, 39], sizes = [2, 13], strides = [1, 1]} : vector<2x52xf32> to vector<2x13xf32>
    %1212 = arith.mulf %1209, %1198 : vector<2x13xf32>
    %1213 = arith.mulf %1208, %1210 : vector<2x13xf32>
    %1214 = arith.addf %1212, %1213 : vector<2x13xf32>
    %1215 = math.tanh %1214 : vector<2x13xf32>
    %1216 = arith.mulf %1211, %1215 : vector<2x13xf32>
    %cst_273 = arith.constant dense<0.000000e+00> : vector<2x52xf32>
    %1217 = tpu.matmul %1216, %1187, %cst_273 {dimension_numbers = #tpu.dot_dimension_numbers<[1], [0], [0], [1], [0, 0, 1, 1], [], []>} : vector<2x13xf32>, vector<13x52xf32>, vector<2x52xf32> -> vector<2x52xf32>
    %1218 = arith.addf %1189, %1217 : vector<2x52xf32>
    %1219 = math.tanh %1218 : vector<2x52xf32>
    %1220 = arith.negf %1218 : vector<2x52xf32>
    %1221 = math.exp %1220 : vector<2x52xf32>
    %cst_274 = arith.constant 1.000000e+00 : f32
    %1222 = vector.broadcast %cst_274 : f32 to vector<2x52xf32>
    %1223 = arith.addf %1222, %1221 : vector<2x52xf32>
    %1224 = arith.divf %1222, %1223 : vector<2x52xf32>
    %1225 = arith.select %53, %1219, %1224 : vector<2x52xi1>, vector<2x52xf32>
    %1226 = vector.extract_strided_slice %1225 {offsets = [0, 0], sizes = [2, 13], strides = [1, 1]} : vector<2x52xf32> to vector<2x13xf32>
    %1227 = vector.extract_strided_slice %1225 {offsets = [0, 13], sizes = [2, 13], strides = [1, 1]} : vector<2x52xf32> to vector<2x13xf32>
    %1228 = vector.extract_strided_slice %1225 {offsets = [0, 26], sizes = [2, 13], strides = [1, 1]} : vector<2x52xf32> to vector<2x13xf32>
    %1229 = vector.extract_strided_slice %1225 {offsets = [0, 39], sizes = [2, 13], strides = [1, 1]} : vector<2x52xf32> to vector<2x13xf32>
    %1230 = arith.mulf %1227, %1214 : vector<2x13xf32>
    %1231 = arith.mulf %1226, %1228 : vector<2x13xf32>
    %1232 = arith.addf %1230, %1231 : vector<2x13xf32>
    %1233 = math.tanh %1232 : vector<2x13xf32>
    %1234 = arith.mulf %1229, %1233 : vector<2x13xf32>
    %cst_275 = arith.constant dense<0.000000e+00> : vector<2x52xf32>
    %1235 = tpu.matmul %1234, %1187, %cst_275 {dimension_numbers = #tpu.dot_dimension_numbers<[1], [0], [0], [1], [0, 0, 1, 1], [], []>} : vector<2x13xf32>, vector<13x52xf32>, vector<2x52xf32> -> vector<2x52xf32>
    %1236 = arith.addf %1190, %1235 : vector<2x52xf32>
    %1237 = math.tanh %1236 : vector<2x52xf32>
    %1238 = arith.negf %1236 : vector<2x52xf32>
    %1239 = math.exp %1238 : vector<2x52xf32>
    %cst_276 = arith.constant 1.000000e+00 : f32
    %1240 = vector.broadcast %cst_276 : f32 to vector<2x52xf32>
    %1241 = arith.addf %1240, %1239 : vector<2x52xf32>
    %1242 = arith.divf %1240, %1241 : vector<2x52xf32>
    %1243 = arith.select %53, %1237, %1242 : vector<2x52xi1>, vector<2x52xf32>
    %1244 = vector.extract_strided_slice %1243 {offsets = [0, 0], sizes = [2, 13], strides = [1, 1]} : vector<2x52xf32> to vector<2x13xf32>
    %1245 = vector.extract_strided_slice %1243 {offsets = [0, 13], sizes = [2, 13], strides = [1, 1]} : vector<2x52xf32> to vector<2x13xf32>
    %1246 = vector.extract_strided_slice %1243 {offsets = [0, 26], sizes = [2, 13], strides = [1, 1]} : vector<2x52xf32> to vector<2x13xf32>
    %1247 = vector.extract_strided_slice %1243 {offsets = [0, 39], sizes = [2, 13], strides = [1, 1]} : vector<2x52xf32> to vector<2x13xf32>
    %1248 = arith.mulf %1245, %1232 : vector<2x13xf32>
    %1249 = arith.mulf %1244, %1246 : vector<2x13xf32>
    %1250 = arith.addf %1248, %1249 : vector<2x13xf32>
    %1251 = math.tanh %1250 : vector<2x13xf32>
    %1252 = arith.mulf %1247, %1251 : vector<2x13xf32>
    %cst_277 = arith.constant dense<0.000000e+00> : vector<2x52xf32>
    %1253 = tpu.matmul %1252, %1187, %cst_277 {dimension_numbers = #tpu.dot_dimension_numbers<[1], [0], [0], [1], [0, 0, 1, 1], [], []>} : vector<2x13xf32>, vector<13x52xf32>, vector<2x52xf32> -> vector<2x52xf32>
    %1254 = arith.addf %1191, %1253 : vector<2x52xf32>
    %1255 = math.tanh %1254 : vector<2x52xf32>
    %1256 = arith.negf %1254 : vector<2x52xf32>
    %1257 = math.exp %1256 : vector<2x52xf32>
    %cst_278 = arith.constant 1.000000e+00 : f32
    %1258 = vector.broadcast %cst_278 : f32 to vector<2x52xf32>
    %1259 = arith.addf %1258, %1257 : vector<2x52xf32>
    %1260 = arith.divf %1258, %1259 : vector<2x52xf32>
    %1261 = arith.select %53, %1255, %1260 : vector<2x52xi1>, vector<2x52xf32>
    %1262 = vector.extract_strided_slice %1261 {offsets = [0, 0], sizes = [2, 13], strides = [1, 1]} : vector<2x52xf32> to vector<2x13xf32>
    %1263 = vector.extract_strided_slice %1261 {offsets = [0, 13], sizes = [2, 13], strides = [1, 1]} : vector<2x52xf32> to vector<2x13xf32>
    %1264 = vector.extract_strided_slice %1261 {offsets = [0, 26], sizes = [2, 13], strides = [1, 1]} : vector<2x52xf32> to vector<2x13xf32>
    %1265 = vector.extract_strided_slice %1261 {offsets = [0, 39], sizes = [2, 13], strides = [1, 1]} : vector<2x52xf32> to vector<2x13xf32>
    %1266 = arith.mulf %1263, %1250 : vector<2x13xf32>
    %1267 = arith.mulf %1262, %1264 : vector<2x13xf32>
    %1268 = arith.addf %1266, %1267 : vector<2x13xf32>
    %1269 = math.tanh %1268 : vector<2x13xf32>
    %1270 = arith.mulf %1265, %1269 : vector<2x13xf32>
    %cst_279 = arith.constant dense<0.000000e+00> : vector<2x52xf32>
    %1271 = tpu.matmul %1270, %1187, %cst_279 {dimension_numbers = #tpu.dot_dimension_numbers<[1], [0], [0], [1], [0, 0, 1, 1], [], []>} : vector<2x13xf32>, vector<13x52xf32>, vector<2x52xf32> -> vector<2x52xf32>
    %1272 = arith.addf %1192, %1271 : vector<2x52xf32>
    %1273 = math.tanh %1272 : vector<2x52xf32>
    %1274 = arith.negf %1272 : vector<2x52xf32>
    %1275 = math.exp %1274 : vector<2x52xf32>
    %cst_280 = arith.constant 1.000000e+00 : f32
    %1276 = vector.broadcast %cst_280 : f32 to vector<2x52xf32>
    %1277 = arith.addf %1276, %1275 : vector<2x52xf32>
    %1278 = arith.divf %1276, %1277 : vector<2x52xf32>
    %1279 = arith.select %53, %1273, %1278 : vector<2x52xi1>, vector<2x52xf32>
    %1280 = vector.extract_strided_slice %1279 {offsets = [0, 0], sizes = [2, 13], strides = [1, 1]} : vector<2x52xf32> to vector<2x13xf32>
    %1281 = vector.extract_strided_slice %1279 {offsets = [0, 13], sizes = [2, 13], strides = [1, 1]} : vector<2x52xf32> to vector<2x13xf32>
    %1282 = vector.extract_strided_slice %1279 {offsets = [0, 26], sizes = [2, 13], strides = [1, 1]} : vector<2x52xf32> to vector<2x13xf32>
    %1283 = vector.extract_strided_slice %1279 {offsets = [0, 39], sizes = [2, 13], strides = [1, 1]} : vector<2x52xf32> to vector<2x13xf32>
    %1284 = arith.mulf %1281, %1268 : vector<2x13xf32>
    %1285 = arith.mulf %1280, %1282 : vector<2x13xf32>
    %1286 = arith.addf %1284, %1285 : vector<2x13xf32>
    %1287 = math.tanh %1286 : vector<2x13xf32>
    %1288 = arith.mulf %1283, %1287 : vector<2x13xf32>
    %cst_281 = arith.constant dense<0.000000e+00> : vector<2x52xf32>
    %1289 = tpu.matmul %1288, %1187, %cst_281 {dimension_numbers = #tpu.dot_dimension_numbers<[1], [0], [0], [1], [0, 0, 1, 1], [], []>} : vector<2x13xf32>, vector<13x52xf32>, vector<2x52xf32> -> vector<2x52xf32>
    %1290 = arith.addf %1193, %1289 : vector<2x52xf32>
    %1291 = math.tanh %1290 : vector<2x52xf32>
    %1292 = arith.negf %1290 : vector<2x52xf32>
    %1293 = math.exp %1292 : vector<2x52xf32>
    %cst_282 = arith.constant 1.000000e+00 : f32
    %1294 = vector.broadcast %cst_282 : f32 to vector<2x52xf32>
    %1295 = arith.addf %1294, %1293 : vector<2x52xf32>
    %1296 = arith.divf %1294, %1295 : vector<2x52xf32>
    %1297 = arith.select %53, %1291, %1296 : vector<2x52xi1>, vector<2x52xf32>
    %1298 = vector.extract_strided_slice %1297 {offsets = [0, 0], sizes = [2, 13], strides = [1, 1]} : vector<2x52xf32> to vector<2x13xf32>
    %1299 = vector.extract_strided_slice %1297 {offsets = [0, 13], sizes = [2, 13], strides = [1, 1]} : vector<2x52xf32> to vector<2x13xf32>
    %1300 = vector.extract_strided_slice %1297 {offsets = [0, 26], sizes = [2, 13], strides = [1, 1]} : vector<2x52xf32> to vector<2x13xf32>
    %1301 = vector.extract_strided_slice %1297 {offsets = [0, 39], sizes = [2, 13], strides = [1, 1]} : vector<2x52xf32> to vector<2x13xf32>
    %1302 = arith.mulf %1299, %1286 : vector<2x13xf32>
    %1303 = arith.mulf %1298, %1300 : vector<2x13xf32>
    %1304 = arith.addf %1302, %1303 : vector<2x13xf32>
    %1305 = math.tanh %1304 : vector<2x13xf32>
    %1306 = arith.mulf %1301, %1305 : vector<2x13xf32>
    %cst_283 = arith.constant dense<0.000000e+00> : vector<2x52xf32>
    %1307 = tpu.matmul %1306, %1187, %cst_283 {dimension_numbers = #tpu.dot_dimension_numbers<[1], [0], [0], [1], [0, 0, 1, 1], [], []>} : vector<2x13xf32>, vector<13x52xf32>, vector<2x52xf32> -> vector<2x52xf32>
    %1308 = arith.addf %1194, %1307 : vector<2x52xf32>
    %1309 = math.tanh %1308 : vector<2x52xf32>
    %1310 = arith.negf %1308 : vector<2x52xf32>
    %1311 = math.exp %1310 : vector<2x52xf32>
    %cst_284 = arith.constant 1.000000e+00 : f32
    %1312 = vector.broadcast %cst_284 : f32 to vector<2x52xf32>
    %1313 = arith.addf %1312, %1311 : vector<2x52xf32>
    %1314 = arith.divf %1312, %1313 : vector<2x52xf32>
    %1315 = arith.select %53, %1309, %1314 : vector<2x52xi1>, vector<2x52xf32>
    %1316 = vector.extract_strided_slice %1315 {offsets = [0, 0], sizes = [2, 13], strides = [1, 1]} : vector<2x52xf32> to vector<2x13xf32>
    %1317 = vector.extract_strided_slice %1315 {offsets = [0, 13], sizes = [2, 13], strides = [1, 1]} : vector<2x52xf32> to vector<2x13xf32>
    %1318 = vector.extract_strided_slice %1315 {offsets = [0, 26], sizes = [2, 13], strides = [1, 1]} : vector<2x52xf32> to vector<2x13xf32>
    %1319 = vector.extract_strided_slice %1315 {offsets = [0, 39], sizes = [2, 13], strides = [1, 1]} : vector<2x52xf32> to vector<2x13xf32>
    %1320 = arith.mulf %1317, %1304 : vector<2x13xf32>
    %1321 = arith.mulf %1316, %1318 : vector<2x13xf32>
    %1322 = arith.addf %1320, %1321 : vector<2x13xf32>
    %1323 = math.tanh %1322 : vector<2x13xf32>
    %1324 = arith.mulf %1319, %1323 : vector<2x13xf32>
    %cst_285 = arith.constant dense<0.000000e+00> : vector<2x52xf32>
    %1325 = tpu.matmul %1324, %1187, %cst_285 {dimension_numbers = #tpu.dot_dimension_numbers<[1], [0], [0], [1], [0, 0, 1, 1], [], []>} : vector<2x13xf32>, vector<13x52xf32>, vector<2x52xf32> -> vector<2x52xf32>
    %1326 = arith.addf %1195, %1325 : vector<2x52xf32>
    %1327 = math.tanh %1326 : vector<2x52xf32>
    %1328 = arith.negf %1326 : vector<2x52xf32>
    %1329 = math.exp %1328 : vector<2x52xf32>
    %cst_286 = arith.constant 1.000000e+00 : f32
    %1330 = vector.broadcast %cst_286 : f32 to vector<2x52xf32>
    %1331 = arith.addf %1330, %1329 : vector<2x52xf32>
    %1332 = arith.divf %1330, %1331 : vector<2x52xf32>
    %1333 = arith.select %53, %1327, %1332 : vector<2x52xi1>, vector<2x52xf32>
    %1334 = vector.extract_strided_slice %1333 {offsets = [0, 0], sizes = [2, 13], strides = [1, 1]} : vector<2x52xf32> to vector<2x13xf32>
    %1335 = vector.extract_strided_slice %1333 {offsets = [0, 13], sizes = [2, 13], strides = [1, 1]} : vector<2x52xf32> to vector<2x13xf32>
    %1336 = vector.extract_strided_slice %1333 {offsets = [0, 26], sizes = [2, 13], strides = [1, 1]} : vector<2x52xf32> to vector<2x13xf32>
    %1337 = vector.extract_strided_slice %1333 {offsets = [0, 39], sizes = [2, 13], strides = [1, 1]} : vector<2x52xf32> to vector<2x13xf32>
    %1338 = arith.mulf %1335, %1322 : vector<2x13xf32>
    %1339 = arith.mulf %1334, %1336 : vector<2x13xf32>
    %1340 = arith.addf %1338, %1339 : vector<2x13xf32>
    %1341 = math.tanh %1340 : vector<2x13xf32>
    %1342 = arith.mulf %1337, %1341 : vector<2x13xf32>
    %cst_287 = arith.constant dense<0.000000e+00> : vector<2x52xf32>
    %1343 = tpu.matmul %1342, %1187, %cst_287 {dimension_numbers = #tpu.dot_dimension_numbers<[1], [0], [0], [1], [0, 0, 1, 1], [], []>} : vector<2x13xf32>, vector<13x52xf32>, vector<2x52xf32> -> vector<2x52xf32>
    %1344 = arith.addf %1196, %1343 : vector<2x52xf32>
    %1345 = math.tanh %1344 : vector<2x52xf32>
    %1346 = arith.negf %1344 : vector<2x52xf32>
    %1347 = math.exp %1346 : vector<2x52xf32>
    %cst_288 = arith.constant 1.000000e+00 : f32
    %1348 = vector.broadcast %cst_288 : f32 to vector<2x52xf32>
    %1349 = arith.addf %1348, %1347 : vector<2x52xf32>
    %1350 = arith.divf %1348, %1349 : vector<2x52xf32>
    %1351 = arith.select %53, %1345, %1350 : vector<2x52xi1>, vector<2x52xf32>
    %1352 = vector.extract_strided_slice %1351 {offsets = [0, 0], sizes = [2, 13], strides = [1, 1]} : vector<2x52xf32> to vector<2x13xf32>
    %1353 = vector.extract_strided_slice %1351 {offsets = [0, 13], sizes = [2, 13], strides = [1, 1]} : vector<2x52xf32> to vector<2x13xf32>
    %1354 = vector.extract_strided_slice %1351 {offsets = [0, 26], sizes = [2, 13], strides = [1, 1]} : vector<2x52xf32> to vector<2x13xf32>
    %1355 = vector.extract_strided_slice %1351 {offsets = [0, 39], sizes = [2, 13], strides = [1, 1]} : vector<2x52xf32> to vector<2x13xf32>
    %1356 = arith.mulf %1353, %1340 : vector<2x13xf32>
    %1357 = arith.mulf %1352, %1354 : vector<2x13xf32>
    %1358 = arith.addf %1356, %1357 : vector<2x13xf32>
    %1359 = math.tanh %1358 : vector<2x13xf32>
    %1360 = arith.mulf %1355, %1359 : vector<2x13xf32>
    %1361 = tpu.concatenate %1216, %1234, %1252, %1270, %1288, %1306, %1324, %1342, %1360 in 0 : vector<2x13xf32>, vector<2x13xf32>, vector<2x13xf32>, vector<2x13xf32>, vector<2x13xf32>, vector<2x13xf32>, vector<2x13xf32>, vector<2x13xf32>, vector<2x13xf32> -> vector<18x13xf32>
    %c3_289 = arith.constant 3 : index
    %c1_290 = arith.constant 1 : index
    %c0_291 = arith.constant 0 : index
    %c0_292 = arith.constant 0 : index
    %1362 = vector.load %arg6[%c3_289, %c1_290, %c0_291, %c0_292] : memref<4x2x13x52xf32, #tpu.memory_space<vmem>>, vector<1x1x13x52xf32>
    %1363 = vector.shape_cast %1362 : vector<1x1x13x52xf32> to vector<13x52xf32>
    %1364 = vector.extract_strided_slice %1185 {offsets = [0, 0], sizes = [2, 52], strides = [1, 1]} : vector<18x52xf32> to vector<2x52xf32>
    %1365 = vector.extract_strided_slice %1185 {offsets = [2, 0], sizes = [2, 52], strides = [1, 1]} : vector<18x52xf32> to vector<2x52xf32>
    %1366 = vector.extract_strided_slice %1185 {offsets = [4, 0], sizes = [2, 52], strides = [1, 1]} : vector<18x52xf32> to vector<2x52xf32>
    %1367 = vector.extract_strided_slice %1185 {offsets = [6, 0], sizes = [2, 52], strides = [1, 1]} : vector<18x52xf32> to vector<2x52xf32>
    %1368 = vector.extract_strided_slice %1185 {offsets = [8, 0], sizes = [2, 52], strides = [1, 1]} : vector<18x52xf32> to vector<2x52xf32>
    %1369 = vector.extract_strided_slice %1185 {offsets = [10, 0], sizes = [2, 52], strides = [1, 1]} : vector<18x52xf32> to vector<2x52xf32>
    %1370 = vector.extract_strided_slice %1185 {offsets = [12, 0], sizes = [2, 52], strides = [1, 1]} : vector<18x52xf32> to vector<2x52xf32>
    %1371 = vector.extract_strided_slice %1185 {offsets = [14, 0], sizes = [2, 52], strides = [1, 1]} : vector<18x52xf32> to vector<2x52xf32>
    %1372 = vector.extract_strided_slice %1185 {offsets = [16, 0], sizes = [2, 52], strides = [1, 1]} : vector<18x52xf32> to vector<2x52xf32>
    %cst_293 = arith.constant 0.000000e+00 : f32
    %1373 = vector.broadcast %cst_293 : f32 to vector<2x13xf32>
    %cst_294 = arith.constant 0.000000e+00 : f32
    %1374 = vector.broadcast %cst_294 : f32 to vector<2x13xf32>
    %cst_295 = arith.constant dense<0.000000e+00> : vector<2x52xf32>
    %1375 = tpu.matmul %1373, %1363, %cst_295 {dimension_numbers = #tpu.dot_dimension_numbers<[1], [0], [0], [1], [0, 0, 1, 1], [], []>} : vector<2x13xf32>, vector<13x52xf32>, vector<2x52xf32> -> vector<2x52xf32>
    %1376 = arith.addf %1372, %1375 : vector<2x52xf32>
    %1377 = math.tanh %1376 : vector<2x52xf32>
    %1378 = arith.negf %1376 : vector<2x52xf32>
    %1379 = math.exp %1378 : vector<2x52xf32>
    %cst_296 = arith.constant 1.000000e+00 : f32
    %1380 = vector.broadcast %cst_296 : f32 to vector<2x52xf32>
    %1381 = arith.addf %1380, %1379 : vector<2x52xf32>
    %1382 = arith.divf %1380, %1381 : vector<2x52xf32>
    %1383 = arith.select %53, %1377, %1382 : vector<2x52xi1>, vector<2x52xf32>
    %1384 = vector.extract_strided_slice %1383 {offsets = [0, 0], sizes = [2, 13], strides = [1, 1]} : vector<2x52xf32> to vector<2x13xf32>
    %1385 = vector.extract_strided_slice %1383 {offsets = [0, 13], sizes = [2, 13], strides = [1, 1]} : vector<2x52xf32> to vector<2x13xf32>
    %1386 = vector.extract_strided_slice %1383 {offsets = [0, 26], sizes = [2, 13], strides = [1, 1]} : vector<2x52xf32> to vector<2x13xf32>
    %1387 = vector.extract_strided_slice %1383 {offsets = [0, 39], sizes = [2, 13], strides = [1, 1]} : vector<2x52xf32> to vector<2x13xf32>
    %1388 = arith.mulf %1385, %1374 : vector<2x13xf32>
    %1389 = arith.mulf %1384, %1386 : vector<2x13xf32>
    %1390 = arith.addf %1388, %1389 : vector<2x13xf32>
    %1391 = math.tanh %1390 : vector<2x13xf32>
    %1392 = arith.mulf %1387, %1391 : vector<2x13xf32>
    %cst_297 = arith.constant dense<0.000000e+00> : vector<2x52xf32>
    %1393 = tpu.matmul %1392, %1363, %cst_297 {dimension_numbers = #tpu.dot_dimension_numbers<[1], [0], [0], [1], [0, 0, 1, 1], [], []>} : vector<2x13xf32>, vector<13x52xf32>, vector<2x52xf32> -> vector<2x52xf32>
    %1394 = arith.addf %1371, %1393 : vector<2x52xf32>
    %1395 = math.tanh %1394 : vector<2x52xf32>
    %1396 = arith.negf %1394 : vector<2x52xf32>
    %1397 = math.exp %1396 : vector<2x52xf32>
    %cst_298 = arith.constant 1.000000e+00 : f32
    %1398 = vector.broadcast %cst_298 : f32 to vector<2x52xf32>
    %1399 = arith.addf %1398, %1397 : vector<2x52xf32>
    %1400 = arith.divf %1398, %1399 : vector<2x52xf32>
    %1401 = arith.select %53, %1395, %1400 : vector<2x52xi1>, vector<2x52xf32>
    %1402 = vector.extract_strided_slice %1401 {offsets = [0, 0], sizes = [2, 13], strides = [1, 1]} : vector<2x52xf32> to vector<2x13xf32>
    %1403 = vector.extract_strided_slice %1401 {offsets = [0, 13], sizes = [2, 13], strides = [1, 1]} : vector<2x52xf32> to vector<2x13xf32>
    %1404 = vector.extract_strided_slice %1401 {offsets = [0, 26], sizes = [2, 13], strides = [1, 1]} : vector<2x52xf32> to vector<2x13xf32>
    %1405 = vector.extract_strided_slice %1401 {offsets = [0, 39], sizes = [2, 13], strides = [1, 1]} : vector<2x52xf32> to vector<2x13xf32>
    %1406 = arith.mulf %1403, %1390 : vector<2x13xf32>
    %1407 = arith.mulf %1402, %1404 : vector<2x13xf32>
    %1408 = arith.addf %1406, %1407 : vector<2x13xf32>
    %1409 = math.tanh %1408 : vector<2x13xf32>
    %1410 = arith.mulf %1405, %1409 : vector<2x13xf32>
    %cst_299 = arith.constant dense<0.000000e+00> : vector<2x52xf32>
    %1411 = tpu.matmul %1410, %1363, %cst_299 {dimension_numbers = #tpu.dot_dimension_numbers<[1], [0], [0], [1], [0, 0, 1, 1], [], []>} : vector<2x13xf32>, vector<13x52xf32>, vector<2x52xf32> -> vector<2x52xf32>
    %1412 = arith.addf %1370, %1411 : vector<2x52xf32>
    %1413 = math.tanh %1412 : vector<2x52xf32>
    %1414 = arith.negf %1412 : vector<2x52xf32>
    %1415 = math.exp %1414 : vector<2x52xf32>
    %cst_300 = arith.constant 1.000000e+00 : f32
    %1416 = vector.broadcast %cst_300 : f32 to vector<2x52xf32>
    %1417 = arith.addf %1416, %1415 : vector<2x52xf32>
    %1418 = arith.divf %1416, %1417 : vector<2x52xf32>
    %1419 = arith.select %53, %1413, %1418 : vector<2x52xi1>, vector<2x52xf32>
    %1420 = vector.extract_strided_slice %1419 {offsets = [0, 0], sizes = [2, 13], strides = [1, 1]} : vector<2x52xf32> to vector<2x13xf32>
    %1421 = vector.extract_strided_slice %1419 {offsets = [0, 13], sizes = [2, 13], strides = [1, 1]} : vector<2x52xf32> to vector<2x13xf32>
    %1422 = vector.extract_strided_slice %1419 {offsets = [0, 26], sizes = [2, 13], strides = [1, 1]} : vector<2x52xf32> to vector<2x13xf32>
    %1423 = vector.extract_strided_slice %1419 {offsets = [0, 39], sizes = [2, 13], strides = [1, 1]} : vector<2x52xf32> to vector<2x13xf32>
    %1424 = arith.mulf %1421, %1408 : vector<2x13xf32>
    %1425 = arith.mulf %1420, %1422 : vector<2x13xf32>
    %1426 = arith.addf %1424, %1425 : vector<2x13xf32>
    %1427 = math.tanh %1426 : vector<2x13xf32>
    %1428 = arith.mulf %1423, %1427 : vector<2x13xf32>
    %cst_301 = arith.constant dense<0.000000e+00> : vector<2x52xf32>
    %1429 = tpu.matmul %1428, %1363, %cst_301 {dimension_numbers = #tpu.dot_dimension_numbers<[1], [0], [0], [1], [0, 0, 1, 1], [], []>} : vector<2x13xf32>, vector<13x52xf32>, vector<2x52xf32> -> vector<2x52xf32>
    %1430 = arith.addf %1369, %1429 : vector<2x52xf32>
    %1431 = math.tanh %1430 : vector<2x52xf32>
    %1432 = arith.negf %1430 : vector<2x52xf32>
    %1433 = math.exp %1432 : vector<2x52xf32>
    %cst_302 = arith.constant 1.000000e+00 : f32
    %1434 = vector.broadcast %cst_302 : f32 to vector<2x52xf32>
    %1435 = arith.addf %1434, %1433 : vector<2x52xf32>
    %1436 = arith.divf %1434, %1435 : vector<2x52xf32>
    %1437 = arith.select %53, %1431, %1436 : vector<2x52xi1>, vector<2x52xf32>
    %1438 = vector.extract_strided_slice %1437 {offsets = [0, 0], sizes = [2, 13], strides = [1, 1]} : vector<2x52xf32> to vector<2x13xf32>
    %1439 = vector.extract_strided_slice %1437 {offsets = [0, 13], sizes = [2, 13], strides = [1, 1]} : vector<2x52xf32> to vector<2x13xf32>
    %1440 = vector.extract_strided_slice %1437 {offsets = [0, 26], sizes = [2, 13], strides = [1, 1]} : vector<2x52xf32> to vector<2x13xf32>
    %1441 = vector.extract_strided_slice %1437 {offsets = [0, 39], sizes = [2, 13], strides = [1, 1]} : vector<2x52xf32> to vector<2x13xf32>
    %1442 = arith.mulf %1439, %1426 : vector<2x13xf32>
    %1443 = arith.mulf %1438, %1440 : vector<2x13xf32>
    %1444 = arith.addf %1442, %1443 : vector<2x13xf32>
    %1445 = math.tanh %1444 : vector<2x13xf32>
    %1446 = arith.mulf %1441, %1445 : vector<2x13xf32>
    %cst_303 = arith.constant dense<0.000000e+00> : vector<2x52xf32>
    %1447 = tpu.matmul %1446, %1363, %cst_303 {dimension_numbers = #tpu.dot_dimension_numbers<[1], [0], [0], [1], [0, 0, 1, 1], [], []>} : vector<2x13xf32>, vector<13x52xf32>, vector<2x52xf32> -> vector<2x52xf32>
    %1448 = arith.addf %1368, %1447 : vector<2x52xf32>
    %1449 = math.tanh %1448 : vector<2x52xf32>
    %1450 = arith.negf %1448 : vector<2x52xf32>
    %1451 = math.exp %1450 : vector<2x52xf32>
    %cst_304 = arith.constant 1.000000e+00 : f32
    %1452 = vector.broadcast %cst_304 : f32 to vector<2x52xf32>
    %1453 = arith.addf %1452, %1451 : vector<2x52xf32>
    %1454 = arith.divf %1452, %1453 : vector<2x52xf32>
    %1455 = arith.select %53, %1449, %1454 : vector<2x52xi1>, vector<2x52xf32>
    %1456 = vector.extract_strided_slice %1455 {offsets = [0, 0], sizes = [2, 13], strides = [1, 1]} : vector<2x52xf32> to vector<2x13xf32>
    %1457 = vector.extract_strided_slice %1455 {offsets = [0, 13], sizes = [2, 13], strides = [1, 1]} : vector<2x52xf32> to vector<2x13xf32>
    %1458 = vector.extract_strided_slice %1455 {offsets = [0, 26], sizes = [2, 13], strides = [1, 1]} : vector<2x52xf32> to vector<2x13xf32>
    %1459 = vector.extract_strided_slice %1455 {offsets = [0, 39], sizes = [2, 13], strides = [1, 1]} : vector<2x52xf32> to vector<2x13xf32>
    %1460 = arith.mulf %1457, %1444 : vector<2x13xf32>
    %1461 = arith.mulf %1456, %1458 : vector<2x13xf32>
    %1462 = arith.addf %1460, %1461 : vector<2x13xf32>
    %1463 = math.tanh %1462 : vector<2x13xf32>
    %1464 = arith.mulf %1459, %1463 : vector<2x13xf32>
    %cst_305 = arith.constant dense<0.000000e+00> : vector<2x52xf32>
    %1465 = tpu.matmul %1464, %1363, %cst_305 {dimension_numbers = #tpu.dot_dimension_numbers<[1], [0], [0], [1], [0, 0, 1, 1], [], []>} : vector<2x13xf32>, vector<13x52xf32>, vector<2x52xf32> -> vector<2x52xf32>
    %1466 = arith.addf %1367, %1465 : vector<2x52xf32>
    %1467 = math.tanh %1466 : vector<2x52xf32>
    %1468 = arith.negf %1466 : vector<2x52xf32>
    %1469 = math.exp %1468 : vector<2x52xf32>
    %cst_306 = arith.constant 1.000000e+00 : f32
    %1470 = vector.broadcast %cst_306 : f32 to vector<2x52xf32>
    %1471 = arith.addf %1470, %1469 : vector<2x52xf32>
    %1472 = arith.divf %1470, %1471 : vector<2x52xf32>
    %1473 = arith.select %53, %1467, %1472 : vector<2x52xi1>, vector<2x52xf32>
    %1474 = vector.extract_strided_slice %1473 {offsets = [0, 0], sizes = [2, 13], strides = [1, 1]} : vector<2x52xf32> to vector<2x13xf32>
    %1475 = vector.extract_strided_slice %1473 {offsets = [0, 13], sizes = [2, 13], strides = [1, 1]} : vector<2x52xf32> to vector<2x13xf32>
    %1476 = vector.extract_strided_slice %1473 {offsets = [0, 26], sizes = [2, 13], strides = [1, 1]} : vector<2x52xf32> to vector<2x13xf32>
    %1477 = vector.extract_strided_slice %1473 {offsets = [0, 39], sizes = [2, 13], strides = [1, 1]} : vector<2x52xf32> to vector<2x13xf32>
    %1478 = arith.mulf %1475, %1462 : vector<2x13xf32>
    %1479 = arith.mulf %1474, %1476 : vector<2x13xf32>
    %1480 = arith.addf %1478, %1479 : vector<2x13xf32>
    %1481 = math.tanh %1480 : vector<2x13xf32>
    %1482 = arith.mulf %1477, %1481 : vector<2x13xf32>
    %cst_307 = arith.constant dense<0.000000e+00> : vector<2x52xf32>
    %1483 = tpu.matmul %1482, %1363, %cst_307 {dimension_numbers = #tpu.dot_dimension_numbers<[1], [0], [0], [1], [0, 0, 1, 1], [], []>} : vector<2x13xf32>, vector<13x52xf32>, vector<2x52xf32> -> vector<2x52xf32>
    %1484 = arith.addf %1366, %1483 : vector<2x52xf32>
    %1485 = math.tanh %1484 : vector<2x52xf32>
    %1486 = arith.negf %1484 : vector<2x52xf32>
    %1487 = math.exp %1486 : vector<2x52xf32>
    %cst_308 = arith.constant 1.000000e+00 : f32
    %1488 = vector.broadcast %cst_308 : f32 to vector<2x52xf32>
    %1489 = arith.addf %1488, %1487 : vector<2x52xf32>
    %1490 = arith.divf %1488, %1489 : vector<2x52xf32>
    %1491 = arith.select %53, %1485, %1490 : vector<2x52xi1>, vector<2x52xf32>
    %1492 = vector.extract_strided_slice %1491 {offsets = [0, 0], sizes = [2, 13], strides = [1, 1]} : vector<2x52xf32> to vector<2x13xf32>
    %1493 = vector.extract_strided_slice %1491 {offsets = [0, 13], sizes = [2, 13], strides = [1, 1]} : vector<2x52xf32> to vector<2x13xf32>
    %1494 = vector.extract_strided_slice %1491 {offsets = [0, 26], sizes = [2, 13], strides = [1, 1]} : vector<2x52xf32> to vector<2x13xf32>
    %1495 = vector.extract_strided_slice %1491 {offsets = [0, 39], sizes = [2, 13], strides = [1, 1]} : vector<2x52xf32> to vector<2x13xf32>
    %1496 = arith.mulf %1493, %1480 : vector<2x13xf32>
    %1497 = arith.mulf %1492, %1494 : vector<2x13xf32>
    %1498 = arith.addf %1496, %1497 : vector<2x13xf32>
    %1499 = math.tanh %1498 : vector<2x13xf32>
    %1500 = arith.mulf %1495, %1499 : vector<2x13xf32>
    %cst_309 = arith.constant dense<0.000000e+00> : vector<2x52xf32>
    %1501 = tpu.matmul %1500, %1363, %cst_309 {dimension_numbers = #tpu.dot_dimension_numbers<[1], [0], [0], [1], [0, 0, 1, 1], [], []>} : vector<2x13xf32>, vector<13x52xf32>, vector<2x52xf32> -> vector<2x52xf32>
    %1502 = arith.addf %1365, %1501 : vector<2x52xf32>
    %1503 = math.tanh %1502 : vector<2x52xf32>
    %1504 = arith.negf %1502 : vector<2x52xf32>
    %1505 = math.exp %1504 : vector<2x52xf32>
    %cst_310 = arith.constant 1.000000e+00 : f32
    %1506 = vector.broadcast %cst_310 : f32 to vector<2x52xf32>
    %1507 = arith.addf %1506, %1505 : vector<2x52xf32>
    %1508 = arith.divf %1506, %1507 : vector<2x52xf32>
    %1509 = arith.select %53, %1503, %1508 : vector<2x52xi1>, vector<2x52xf32>
    %1510 = vector.extract_strided_slice %1509 {offsets = [0, 0], sizes = [2, 13], strides = [1, 1]} : vector<2x52xf32> to vector<2x13xf32>
    %1511 = vector.extract_strided_slice %1509 {offsets = [0, 13], sizes = [2, 13], strides = [1, 1]} : vector<2x52xf32> to vector<2x13xf32>
    %1512 = vector.extract_strided_slice %1509 {offsets = [0, 26], sizes = [2, 13], strides = [1, 1]} : vector<2x52xf32> to vector<2x13xf32>
    %1513 = vector.extract_strided_slice %1509 {offsets = [0, 39], sizes = [2, 13], strides = [1, 1]} : vector<2x52xf32> to vector<2x13xf32>
    %1514 = arith.mulf %1511, %1498 : vector<2x13xf32>
    %1515 = arith.mulf %1510, %1512 : vector<2x13xf32>
    %1516 = arith.addf %1514, %1515 : vector<2x13xf32>
    %1517 = math.tanh %1516 : vector<2x13xf32>
    %1518 = arith.mulf %1513, %1517 : vector<2x13xf32>
    %cst_311 = arith.constant dense<0.000000e+00> : vector<2x52xf32>
    %1519 = tpu.matmul %1518, %1363, %cst_311 {dimension_numbers = #tpu.dot_dimension_numbers<[1], [0], [0], [1], [0, 0, 1, 1], [], []>} : vector<2x13xf32>, vector<13x52xf32>, vector<2x52xf32> -> vector<2x52xf32>
    %1520 = arith.addf %1364, %1519 : vector<2x52xf32>
    %1521 = math.tanh %1520 : vector<2x52xf32>
    %1522 = arith.negf %1520 : vector<2x52xf32>
    %1523 = math.exp %1522 : vector<2x52xf32>
    %cst_312 = arith.constant 1.000000e+00 : f32
    %1524 = vector.broadcast %cst_312 : f32 to vector<2x52xf32>
    %1525 = arith.addf %1524, %1523 : vector<2x52xf32>
    %1526 = arith.divf %1524, %1525 : vector<2x52xf32>
    %1527 = arith.select %53, %1521, %1526 : vector<2x52xi1>, vector<2x52xf32>
    %1528 = vector.extract_strided_slice %1527 {offsets = [0, 0], sizes = [2, 13], strides = [1, 1]} : vector<2x52xf32> to vector<2x13xf32>
    %1529 = vector.extract_strided_slice %1527 {offsets = [0, 13], sizes = [2, 13], strides = [1, 1]} : vector<2x52xf32> to vector<2x13xf32>
    %1530 = vector.extract_strided_slice %1527 {offsets = [0, 26], sizes = [2, 13], strides = [1, 1]} : vector<2x52xf32> to vector<2x13xf32>
    %1531 = vector.extract_strided_slice %1527 {offsets = [0, 39], sizes = [2, 13], strides = [1, 1]} : vector<2x52xf32> to vector<2x13xf32>
    %1532 = arith.mulf %1529, %1516 : vector<2x13xf32>
    %1533 = arith.mulf %1528, %1530 : vector<2x13xf32>
    %1534 = arith.addf %1532, %1533 : vector<2x13xf32>
    %1535 = math.tanh %1534 : vector<2x13xf32>
    %1536 = arith.mulf %1531, %1535 : vector<2x13xf32>
    %1537 = tpu.concatenate %1536, %1518, %1500, %1482, %1464, %1446, %1428, %1410, %1392 in 0 : vector<2x13xf32>, vector<2x13xf32>, vector<2x13xf32>, vector<2x13xf32>, vector<2x13xf32>, vector<2x13xf32>, vector<2x13xf32>, vector<2x13xf32>, vector<2x13xf32> -> vector<18x13xf32>
    %c0_313 = arith.constant 0 : index
    %c0_314 = arith.constant 0 : index
    %c0_315 = arith.constant 0 : index
    %1538 = vector.load %arg8[%c0_313, %c0_314, %c0_315] : memref<2x18x13xf32, #tpu.memory_space<vmem>>, vector<1x18x13xf32>
    %1539 = vector.shape_cast %1538 : vector<1x18x13xf32> to vector<18x13xf32>
    %1540 = vector.shape_cast %1361 : vector<18x13xf32> to vector<1x18x13xf32>
    tpu.vector_store %arg8[%c0_313, %c0_314, %c0_315], %1540 {strides = array<i32>} : memref<2x18x13xf32, #tpu.memory_space<vmem>>, vector<1x18x13xf32>,
    %c1_316 = arith.constant 1 : index
    %c0_317 = arith.constant 0 : index
    %c0_318 = arith.constant 0 : index
    %1541 = vector.load %arg8[%c1_316, %c0_317, %c0_318] : memref<2x18x13xf32, #tpu.memory_space<vmem>>, vector<1x18x13xf32>
    %1542 = vector.shape_cast %1541 : vector<1x18x13xf32> to vector<18x13xf32>
    %1543 = vector.shape_cast %1537 : vector<18x13xf32> to vector<1x18x13xf32>
    tpu.vector_store %arg8[%c1_316, %c0_317, %c0_318], %1543 {strides = array<i32>} : memref<2x18x13xf32, #tpu.memory_space<vmem>>, vector<1x18x13xf32>,
    return
  }
}

</mosaic_0001>

<llo_original>
// kernel: reverse.1
$region0: #{reverse.1}
  %s0 = inlined_call_operand.vmem [shape: f32[2,256], index: 0, kind: input, shape index: {}]
  %s1 = inlined_call_operand.vmem [shape: f32[2,256], index: 1, kind: output, shape index: {}]
  %v2 = vlaneseq
  %v3 = vsub.s32 127, %v2
  %4 = vset.pattern.permute.xlu0 %v3
  $region1: #{reverse.1} parent=0
    #allocation0 [shape = 'u8[4096]{0}', space=vmem, size = 0x1000, scoped, tag = 'operand span for operand 0']
    #allocation1 [shape = 'u8[2048]{0}', space=vmem, size = 0x800, scoped, tag = 'packed  for operand 0']
    #allocation2 [shape = 'u8[4096]{0}', space=vmem, size = 0x1000, scoped, tag = 'operand span for operand 1']
    #allocation3 [shape = 'u8[2048]{0}', space=vmem, size = 0x800, scoped, tag = 'packed  for operand 1']
    loop: start=0, step=1, limit=4
    $region2: #{reverse.1} parent=1 // loop_pre_header
      _
    $region3: #{reverse.1} parent=1 // loop_header
      %s6 = sphi 0, %s10
      %p7 = scmp.ge.s32.totalorder %s6, 4
      %s13 = sphi 0, %s25
      %s14 = sphi 0, %s21
      %s15 = sphi 0, %s13
      %s16 = sphi 0, %s14
      %s17 = sphi 0, %s15
      %s18 = sphi 0, %s16
    $region4: #{reverse.1} parent=1 // loop_header_branch
      %9 = sbr.rel (%p7) target = $region8
    $region5: #{reverse.1} parent=1 // loop_body
      %s11 = ssub.s32 %s6, 1
      %s12 = ssub.s32 %s6, 2
      %s19 = sadd.s32 1, %s14
      %p20 = scmp.ge.s32.totalorder %s19, 2
      %s21 = scalar_select %p20, 0, %s19
      %s22 = sadd.s32 1, %s13
      %s23 = scalar_select %p20, %s22, %s13
      %p24 = scmp.ge.s32.totalorder %s23, 1
      %s25 = scalar_select %p24, 0, %s23
      %p26 = scmp.le.s32.totalorder 1, %s6
      %p27 = scmp.lt.s32.totalorder %s6, 3
      %p28 = pnand %p26, %p27
      %p29 = pneg %p28
      // Predicated region
      $region9: #{reverse.1} parent=5 // pred_check
        _
      $region10: #{reverse.1} parent=5 // pred_check_branch
        %31 = sbr.rel (%p28) target = $region12
      $region11: #{reverse.1} parent=5 // pred_region
        %s32 = ssub.s32 %s6, 1
      $region12: #{reverse.1} parent=5 // pred_fallthru
        _
      %p33 = scmp.lt.s32.totalorder %s6, 2
      // Predicated region
      $region13: #{reverse.1} parent=5 // pred_check
        %p34 = pneg %p33
      $region14: #{reverse.1} parent=5 // pred_check_branch
        %36 = sbr.rel (%p34) target = $region16
      $region15: #{reverse.1} parent=5 // pred_region
        %s37 = sand.u32 %s6, 1
        %s38 = sand.u32 %s6, 1
        %s39 = smul.addr %s38, 2
        %s40 = scalar_lea.vmem [#allocation1], %s39
        %s41 = ssub.s32 1, %s14
        %s42 = smul.addr %s13, 2
        %s43 = sadd.s32 %s41, %s42
        %s44 = smul.addr %s43, 2
        %s45 = scalar_lea.vmem %s0, %s44
        // Predicated region
        $region17: #{reverse.1} parent=15 // pred_check
          _
        $region18: #{reverse.1} parent=15 // pred_check_branch
          %47 = sbr.rel (0) target = $region20
        $region19: #{reverse.1} parent=15 // pred_region
          // Predicated region
          $region21: #{reverse.1} parent=19 // pred_check
            _
          $region22: #{reverse.1} parent=19 // pred_check_branch
            %49 = sbr.rel target = $region24
          $region23: #{reverse.1} parent=19 // pred_region
            // Predicated region
            $region36: #{reverse.1} parent=23 // pred_check
              _
            $region37: #{reverse.1} parent=23 // pred_check_branch
              %65 = sbr.rel (0) target = $region39
            $region38: #{reverse.1} parent=23 // pred_region
              %s67 = ssub.s32 4, 1
              loop: start=0, step=1, limit=1
              $region40: #{reverse.1} parent=38 // loop_pre_header
                _
              $region41: #{reverse.1} parent=38 // loop_header
                %s69 = sphi 0, %s73
                %p70 = scmp.ge.s32.totalorder %s69, 1
                %s74 = sphi %s45, %s45
                %s75 = sphi %s40, %s40
              $region42: #{reverse.1} parent=38 // loop_header_branch
                %72 = sbr.rel (%p70) target = $region46
              $region43: #{reverse.1} parent=38 // loop_body
                %v76 = vld [vmem:[%s74] sm:%s67]
                %77 = vst [vmem:[%s75] sm:%s67] %v76
              $region44: #{reverse.1} parent=38 // loop_footer
                %s73 = sadd.s32 1, %s69
              $region45: #{reverse.1} parent=38 // loop_footer_branch
                %68 = sbr.rel target = $region41
              $region46: #{reverse.1} parent=38 // loop_exit
                _
            $region39: #{reverse.1} parent=23 // pred_fallthru
              _
          $region24: #{reverse.1} parent=19 // pred_fallthru
            _
          // Predicated region
          $region25: #{reverse.1} parent=19 // pred_check
            _
          $region26: #{reverse.1} parent=19 // pred_check_branch
            %51 = sbr.rel (0) target = $region28
          $region27: #{reverse.1} parent=19 // pred_region
            %s53 = ssub.s32 4, 1
            loop: start=0, step=1, limit=1
            $region29: #{reverse.1} parent=27 // loop_pre_header
              _
            $region30: #{reverse.1} parent=27 // loop_header
              %s55 = sphi 0, %s59
              %p56 = scmp.ge.s32.totalorder %s55, 1
              %s60 = sphi %s45, %s45
              %s61 = sphi %s40, %s40
            $region31: #{reverse.1} parent=27 // loop_header_branch
              %58 = sbr.rel (%p56) target = $region35
            $region32: #{reverse.1} parent=27 // loop_body
              %v62 = vld [vmem:[%s60] sm:%s53]
              %63 = vst [vmem:[%s61] sm:%s53] %v62
            $region33: #{reverse.1} parent=27 // loop_footer
              %s59 = sadd.s32 1, %s55
            $region34: #{reverse.1} parent=27 // loop_footer_branch
              %54 = sbr.rel target = $region30
            $region35: #{reverse.1} parent=27 // loop_exit
              _
          $region28: #{reverse.1} parent=19 // pred_fallthru
            _
        $region20: #{reverse.1} parent=15 // pred_fallthru
          _
        %78 = vnop
      $region16: #{reverse.1} parent=5 // pred_fallthru
        _
      %p79 = scmp.le.s32.totalorder 1, %s6
      %p80 = scmp.lt.s32.totalorder %s6, 3
      %p81 = pnand %p79, %p80
      %p82 = pneg %p81
      // Predicated region
      $region47: #{reverse.1} parent=5 // pred_check
        _
      $region48: #{reverse.1} parent=5 // pred_check_branch
        %84 = sbr.rel (%p81) target = $region50
      $region49: #{reverse.1} parent=5 // pred_region
        %s85 = ssub.s32 %s6, 1
        %s86 = sand.u32 %s11, 1
        %s87 = sand.u32 %s11, 1
        %s88 = smul.addr %s87, 2
        %s89 = scalar_lea.vmem [#allocation1], %s88
        %s90 = sand.u32 %s11, 1
        %s91 = sand.u32 %s11, 1
        %s92 = smul.addr %s91, 2
        %s93 = scalar_lea.vmem [#allocation1], %s92
        %s94 = sand.u32 %s11, 1
        %s95 = sand.u32 %s11, 1
        %s96 = smul.addr %s95, 2
        %s97 = scalar_lea.vmem [#allocation3], %s96
        %s99 = sshll.u32 1, 2
        %s100 = ssub.s32 %s99, 1
        %v101 = vld [vmem:[%s93] sm:%s100]
        %102 = vst [vmem:[#allocation0] sm:%s100] %v101
        %s103 = ssub.s32 1, %s16
        %v104 = vld [vmem:[#allocation0] sm:$0xff]
        %105 = vperm.xlu0 %4, %v104
        %v106 = vpop.permute.xlu0 %105
        %107 = vst [vmem:[#allocation2] sm:$0xff] %v106
        %s109 = sshll.u32 1, 2
        %s110 = ssub.s32 %s109, 1
        %v112 = vld [vmem:[#allocation2] sm:%s110]
        %s113 = sshll.u32 1, 2
        %s114 = ssub.s32 %s113, 1
        %115 = vst [vmem:[%s97] sm:%s114] %v112
        %s116 = sand.u32 %s11, 1
        %s117 = sand.u32 %s11, 1
        %s118 = smul.addr %s117, 2
        %s119 = scalar_lea.vmem [#allocation3], %s118
        %s120 = smul.addr %s15, 2
        %s121 = sadd.s32 %s16, %s120
        %s122 = smul.addr %s121, 2
        %s123 = scalar_lea.vmem %s1, %s122
        // Predicated region
        $region51: #{reverse.1} parent=49 // pred_check
          _
        $region52: #{reverse.1} parent=49 // pred_check_branch
          %125 = sbr.rel (0) target = $region54
        $region53: #{reverse.1} parent=49 // pred_region
          // Predicated region
          $region55: #{reverse.1} parent=53 // pred_check
            _
          $region56: #{reverse.1} parent=53 // pred_check_branch
            %127 = sbr.rel target = $region58
          $region57: #{reverse.1} parent=53 // pred_region
            // Predicated region
            $region70: #{reverse.1} parent=57 // pred_check
              _
            $region71: #{reverse.1} parent=57 // pred_check_branch
              %143 = sbr.rel (0) target = $region73
            $region72: #{reverse.1} parent=57 // pred_region
              %s145 = ssub.s32 4, 1
              loop: start=0, step=1, limit=1
              $region74: #{reverse.1} parent=72 // loop_pre_header
                _
              $region75: #{reverse.1} parent=72 // loop_header
                %s147 = sphi 0, %s151
                %p148 = scmp.ge.s32.totalorder %s147, 1
                %s152 = sphi %s119, %s119
                %s153 = sphi %s123, %s123
              $region76: #{reverse.1} parent=72 // loop_header_branch
                %150 = sbr.rel (%p148) target = $region80
              $region77: #{reverse.1} parent=72 // loop_body
                %v154 = vld [vmem:[%s152] sm:%s145]
                %155 = vst [vmem:[%s153] sm:%s145] %v154
              $region78: #{reverse.1} parent=72 // loop_footer
                %s151 = sadd.s32 1, %s147
              $region79: #{reverse.1} parent=72 // loop_footer_branch
                %146 = sbr.rel target = $region75
              $region80: #{reverse.1} parent=72 // loop_exit
                _
            $region73: #{reverse.1} parent=57 // pred_fallthru
              _
          $region58: #{reverse.1} parent=53 // pred_fallthru
            _
          // Predicated region
          $region59: #{reverse.1} parent=53 // pred_check
            _
          $region60: #{reverse.1} parent=53 // pred_check_branch
            %129 = sbr.rel (0) target = $region62
          $region61: #{reverse.1} parent=53 // pred_region
            %s131 = ssub.s32 4, 1
            loop: start=0, step=1, limit=1
            $region63: #{reverse.1} parent=61 // loop_pre_header
              _
            $region64: #{reverse.1} parent=61 // loop_header
              %s133 = sphi 0, %s137
              %p134 = scmp.ge.s32.totalorder %s133, 1
              %s138 = sphi %s119, %s119
              %s139 = sphi %s123, %s123
            $region65: #{reverse.1} parent=61 // loop_header_branch
              %136 = sbr.rel (%p134) target = $region69
            $region66: #{reverse.1} parent=61 // loop_body
              %v140 = vld [vmem:[%s138] sm:%s131]
              %141 = vst [vmem:[%s139] sm:%s131] %v140
            $region67: #{reverse.1} parent=61 // loop_footer
              %s137 = sadd.s32 1, %s133
            $region68: #{reverse.1} parent=61 // loop_footer_branch
              %132 = sbr.rel target = $region64
            $region69: #{reverse.1} parent=61 // loop_exit
              _
          $region62: #{reverse.1} parent=53 // pred_fallthru
            _
        $region54: #{reverse.1} parent=49 // pred_fallthru
          _
        %156 = vnop
      $region50: #{reverse.1} parent=5 // pred_fallthru
        _
      %p157 = scmp.le.s32.totalorder 2, %s6
      // Predicated region
      $region81: #{reverse.1} parent=5 // pred_check
        %p158 = pneg %p157
      $region82: #{reverse.1} parent=5 // pred_check_branch
        %160 = sbr.rel (%p158) target = $region84
      $region83: #{reverse.1} parent=5 // pred_region
        %s161 = ssub.s32 %s6, 2
        %s162 = sand.u32 %s12, 1
        %s163 = sand.u32 %s12, 1
        %s164 = smul.addr %s163, 2
        %s165 = scalar_lea.vmem [#allocation3], %s164
      $region84: #{reverse.1} parent=5 // pred_fallthru
        _
    $region6: #{reverse.1} parent=1 // loop_footer
      %s10 = sadd.s32 1, %s6
    $region7: #{reverse.1} parent=1 // loop_footer_branch
      %5 = sbr.rel target = $region3
    $region8: #{reverse.1} parent=1 // loop_exit
      _

// kernel: audio_lstm_forward.1
$region0: #{audio_lstm_forward.1}
  #allocation0 [shape = 'u32[]', space=smem, size = 0x4, offset = 0x4, fixed_abs, tag = 'smem constant byte address 0x4 - core index']
  #allocation1 [shape = 'u32[144,128]{1,0:T(1,128)}', space=vmem, size = 0x12000, scoped, tag = 'internal scratch']
  %s0 = inlined_call_operand.vmem [shape: f32[18,400], index: 0, kind: input, shape index: {}]
  %s1 = inlined_call_operand.vmem [shape: f32[1,400], index: 1, kind: input, shape index: {}]
  %s2 = inlined_call_operand.vmem [shape: f32[400,512], index: 2, kind: input, shape index: {}]
  %s3 = inlined_call_operand.vmem [shape: f32[256,128], index: 3, kind: input, shape index: {}]
  %s4 = inlined_call_operand.vmem [shape: f32[128,104], index: 4, kind: input, shape index: {}]
  %s5 = inlined_call_operand.vmem [shape: f32[3,2,2,13,52], index: 5, kind: input, shape index: {}]
  %s6 = inlined_call_operand.vmem [shape: f32[4,2,13,52], index: 6, kind: input, shape index: {}]
  %s7 = inlined_call_operand.vmem [shape: f32[4,2,1,52], index: 7, kind: input, shape index: {}]
  %s8 = inlined_call_operand.vmem [shape: f32[2,18,13], index: 8, kind: output, shape index: {}]
  %s9 = sld [smem:[#allocation0]]
  $region42: #{audio_lstm_forward.1} parent=0
    _
  %s11 = ssub.s32 1, %s9
  %s12 = scalar_select 0, %s11, %s9
  // Predicated region
  $region2: #{audio_lstm_forward.1} parent=0 // pred_check
    _
  $region3: #{audio_lstm_forward.1} parent=0 // pred_check_branch
    %14 = sbr.rel (0) target = $region5
  $region4: #{audio_lstm_forward.1} parent=0 // pred_region
    _
  $region5: #{audio_lstm_forward.1} parent=0 // pred_fallthru
    _
  // Predicated region
  $region6: #{audio_lstm_forward.1} parent=0 // pred_check
    _
  $region7: #{audio_lstm_forward.1} parent=0 // pred_check_branch
    %16 = sbr.rel (0) target = $region9
  $region8: #{audio_lstm_forward.1} parent=0 // pred_region
    _
  $region9: #{audio_lstm_forward.1} parent=0 // pred_fallthru
    _
  // Predicated region
  $region10: #{audio_lstm_forward.1} parent=0 // pred_check
    _
  $region11: #{audio_lstm_forward.1} parent=0 // pred_check_branch
    %18 = sbr.rel (0) target = $region13
  $region12: #{audio_lstm_forward.1} parent=0 // pred_region
    _
  $region13: #{audio_lstm_forward.1} parent=0 // pred_fallthru
    _
  // Predicated region
  $region14: #{audio_lstm_forward.1} parent=0 // pred_check
    _
  $region15: #{audio_lstm_forward.1} parent=0 // pred_check_branch
    %20 = sbr.rel (0) target = $region17
  $region16: #{audio_lstm_forward.1} parent=0 // pred_region
    _
  $region17: #{audio_lstm_forward.1} parent=0 // pred_fallthru
    _
  // Predicated region
  $region18: #{audio_lstm_forward.1} parent=0 // pred_check
    _
  $region19: #{audio_lstm_forward.1} parent=0 // pred_check_branch
    %22 = sbr.rel (0) target = $region21
  $region20: #{audio_lstm_forward.1} parent=0 // pred_region
    _
  $region21: #{audio_lstm_forward.1} parent=0 // pred_fallthru
    _
  // Predicated region
  $region22: #{audio_lstm_forward.1} parent=0 // pred_check
    _
  $region23: #{audio_lstm_forward.1} parent=0 // pred_check_branch
    %24 = sbr.rel (0) target = $region25
  $region24: #{audio_lstm_forward.1} parent=0 // pred_region
    _
  $region25: #{audio_lstm_forward.1} parent=0 // pred_fallthru
    _
  // Predicated region
  $region26: #{audio_lstm_forward.1} parent=0 // pred_check
    _
  $region27: #{audio_lstm_forward.1} parent=0 // pred_check_branch
    %26 = sbr.rel (0) target = $region29
  $region28: #{audio_lstm_forward.1} parent=0 // pred_region
    _
  $region29: #{audio_lstm_forward.1} parent=0 // pred_fallthru
    _
  // Predicated region
  $region30: #{audio_lstm_forward.1} parent=0 // pred_check
    _
  $region31: #{audio_lstm_forward.1} parent=0 // pred_check_branch
    %28 = sbr.rel (0) target = $region33
  $region32: #{audio_lstm_forward.1} parent=0 // pred_region
    _
  $region33: #{audio_lstm_forward.1} parent=0 // pred_fallthru
    _
  %v29 = vld [vmem:[%s0] sm:$0xff]
  %v30 = vld [vmem:[%s0 + $0x8] sm:$0xff]
  %v31 = vld [vmem:[%s0 + $0x10] sm:$0xff]
  %v32 = vld [vmem:[%s0 + $0x18] sm:$0xff]
  %v33 = vld [vmem:[%s0 + $0x20] sm:$0xff]
  %v34 = vld [vmem:[%s0 + $0x28] sm:$0xff]
  %v35 = vld [vmem:[%s0 + $0x30] sm:$0xff]
  %v36 = vld [vmem:[%s0 + $0x38] sm:$0xff]
  %v37 = vld [vmem:[%s0 + $0x40] sm:$0x3]
  %v38 = vld [vmem:[%s0 + $0x48] sm:$0x3]
  %v39 = vld [vmem:[%s0 + $0x50] sm:$0x3]
  %v40 = vld [vmem:[%s0 + $0x58] sm:$0x3]
  %v41 = vld [vmem:[%s1] sm:$0xf]
  %v43 = vlaneseq
  %v44 = vshrl.u32 %v43, 7
  %v45 = vsub.s32 0, %v44
  %v46 = vrot.slane %v41, %v45
  %v47 = vlaneseq
  %v48 = vshrl.u32 %v47, 7
  %v49 = vsub.s32 1, %v48
  %v50 = vrot.slane %v41, %v49
  %v51 = vlaneseq
  %v52 = vshrl.u32 %v51, 7
  %v53 = vsub.s32 2, %v52
  %v54 = vrot.slane %v41, %v53
  %v55 = vlaneseq
  %v56 = vshrl.u32 %v55, 7
  %v57 = vsub.s32 3, %v56
  %v58 = vrot.slane %v41, %v57
  %v63 = vmul.f32 %v29, %v46
  %v64 = vmul.f32 %v30, %v50
  %v65 = vmul.f32 %v31, %v54
  %v66 = vmul.f32 %v32, %v58
  %v67 = vmul.f32 %v33, %v46
  %v68 = vmul.f32 %v34, %v50
  %v69 = vmul.f32 %v35, %v54
  %v70 = vmul.f32 %v36, %v58
  %v71 = vmul.f32 %v37, %v46
  %v72 = vmul.f32 %v38, %v50
  %v73 = vmul.f32 %v39, %v54
  %v74 = vmul.f32 %v40, %v58
  %v75 = vld [vmem:[%s2] sm:$0xff]
  %v76 = vld [vmem:[%s2 + $0x8] sm:$0xff]
  %v77 = vld [vmem:[%s2 + $0x10] sm:$0xff]
  %v78 = vld [vmem:[%s2 + $0x18] sm:$0xff]
  %v79 = vld [vmem:[%s2 + $0x20] sm:$0xff]
  %v80 = vld [vmem:[%s2 + $0x28] sm:$0xff]
  %v81 = vld [vmem:[%s2 + $0x30] sm:$0xff]
  %v82 = vld [vmem:[%s2 + $0x38] sm:$0xff]
  %v83 = vld [vmem:[%s2 + $0x40] sm:$0xff]
  %v84 = vld [vmem:[%s2 + $0x48] sm:$0xff]
  %v85 = vld [vmem:[%s2 + $0x50] sm:$0xff]
  %v86 = vld [vmem:[%s2 + $0x58] sm:$0xff]
  %v87 = vld [vmem:[%s2 + $0x60] sm:$0xff]
  %v88 = vld [vmem:[%s2 + $0x68] sm:$0xff]
  %v89 = vld [vmem:[%s2 + $0x70] sm:$0xff]
  %v90 = vld [vmem:[%s2 + $0x78] sm:$0xff]
  %v91 = vld [vmem:[%s2 + $0x80] sm:$0xff]
  %v92 = vld [vmem:[%s2 + $0x88] sm:$0xff]
  %v93 = vld [vmem:[%s2 + $0x90] sm:$0xff]
  %v94 = vld [vmem:[%s2 + $0x98] sm:$0xff]
  %v95 = vld [vmem:[%s2 + $0xa0] sm:$0xff]
  %v96 = vld [vmem:[%s2 + $0xa8] sm:$0xff]
  %v97 = vld [vmem:[%s2 + $0xb0] sm:$0xff]
  %v98 = vld [vmem:[%s2 + $0xb8] sm:$0xff]
  %v99 = vld [vmem:[%s2 + $0xc0] sm:$0xff]
  %v100 = vld [vmem:[%s2 + $0xc8] sm:$0xff]
  %v101 = vld [vmem:[%s2 + $0xd0] sm:$0xff]
  %v102 = vld [vmem:[%s2 + $0xd8] sm:$0xff]
  %v103 = vld [vmem:[%s2 + $0xe0] sm:$0xff]
  %v104 = vld [vmem:[%s2 + $0xe8] sm:$0xff]
  %v105 = vld [vmem:[%s2 + $0xf0] sm:$0xff]
  %v106 = vld [vmem:[%s2 + $0xf8] sm:$0xff]
  %v107 = vld [vmem:[%s2 + $0x100] sm:$0xff]
  %v108 = vld [vmem:[%s2 + $0x108] sm:$0xff]
  %v109 = vld [vmem:[%s2 + $0x110] sm:$0xff]
  %v110 = vld [vmem:[%s2 + $0x118] sm:$0xff]
  %v111 = vld [vmem:[%s2 + $0x120] sm:$0xff]
  %v112 = vld [vmem:[%s2 + $0x128] sm:$0xff]
  %v113 = vld [vmem:[%s2 + $0x130] sm:$0xff]
  %v114 = vld [vmem:[%s2 + $0x138] sm:$0xff]
  %v115 = vld [vmem:[%s2 + $0x140] sm:$0xff]
  %v116 = vld [vmem:[%s2 + $0x148] sm:$0xff]
  %v117 = vld [vmem:[%s2 + $0x150] sm:$0xff]
  %v118 = vld [vmem:[%s2 + $0x158] sm:$0xff]
  %v119 = vld [vmem:[%s2 + $0x160] sm:$0xff]
  %v120 = vld [vmem:[%s2 + $0x168] sm:$0xff]
  %v121 = vld [vmem:[%s2 + $0x170] sm:$0xff]
  %v122 = vld [vmem:[%s2 + $0x178] sm:$0xff]
  %v123 = vld [vmem:[%s2 + $0x180] sm:$0xff]
  %v124 = vld [vmem:[%s2 + $0x188] sm:$0xff]
  %v125 = vld [vmem:[%s2 + $0x190] sm:$0xff]
  %v126 = vld [vmem:[%s2 + $0x198] sm:$0xff]
  %v127 = vld [vmem:[%s2 + $0x1a0] sm:$0xff]
  %v128 = vld [vmem:[%s2 + $0x1a8] sm:$0xff]
  %v129 = vld [vmem:[%s2 + $0x1b0] sm:$0xff]
  %v130 = vld [vmem:[%s2 + $0x1b8] sm:$0xff]
  %v131 = vld [vmem:[%s2 + $0x1c0] sm:$0xff]
  %v132 = vld [vmem:[%s2 + $0x1c8] sm:$0xff]
  %v133 = vld [vmem:[%s2 + $0x1d0] sm:$0xff]
  %v134 = vld [vmem:[%s2 + $0x1d8] sm:$0xff]
  %v135 = vld [vmem:[%s2 + $0x1e0] sm:$0xff]
  %v136 = vld [vmem:[%s2 + $0x1e8] sm:$0xff]
  %v137 = vld [vmem:[%s2 + $0x1f0] sm:$0xff]
  %v138 = vld [vmem:[%s2 + $0x1f8] sm:$0xff]
  %v139 = vld [vmem:[%s2 + $0x200] sm:$0xff]
  %v140 = vld [vmem:[%s2 + $0x208] sm:$0xff]
  %v141 = vld [vmem:[%s2 + $0x210] sm:$0xff]
  %v142 = vld [vmem:[%s2 + $0x218] sm:$0xff]
  %v143 = vld [vmem:[%s2 + $0x220] sm:$0xff]
  %v144 = vld [vmem:[%s2 + $0x228] sm:$0xff]
  %v145 = vld [vmem:[%s2 + $0x230] sm:$0xff]
  %v146 = vld [vmem:[%s2 + $0x238] sm:$0xff]
  %v147 = vld [vmem:[%s2 + $0x240] sm:$0xff]
  %v148 = vld [vmem:[%s2 + $0x248] sm:$0xff]
  %v149 = vld [vmem:[%s2 + $0x250] sm:$0xff]
  %v150 = vld [vmem:[%s2 + $0x258] sm:$0xff]
  %v151 = vld [vmem:[%s2 + $0x260] sm:$0xff]
  %v152 = vld [vmem:[%s2 + $0x268] sm:$0xff]
  %v153 = vld [vmem:[%s2 + $0x270] sm:$0xff]
  %v154 = vld [vmem:[%s2 + $0x278] sm:$0xff]
  %v155 = vld [vmem:[%s2 + $0x280] sm:$0xff]
  %v156 = vld [vmem:[%s2 + $0x288] sm:$0xff]
  %v157 = vld [vmem:[%s2 + $0x290] sm:$0xff]
  %v158 = vld [vmem:[%s2 + $0x298] sm:$0xff]
  %v159 = vld [vmem:[%s2 + $0x2a0] sm:$0xff]
  %v160 = vld [vmem:[%s2 + $0x2a8] sm:$0xff]
  %v161 = vld [vmem:[%s2 + $0x2b0] sm:$0xff]
  %v162 = vld [vmem:[%s2 + $0x2b8] sm:$0xff]
  %v163 = vld [vmem:[%s2 + $0x2c0] sm:$0xff]
  %v164 = vld [vmem:[%s2 + $0x2c8] sm:$0xff]
  %v165 = vld [vmem:[%s2 + $0x2d0] sm:$0xff]
  %v166 = vld [vmem:[%s2 + $0x2d8] sm:$0xff]
  %v167 = vld [vmem:[%s2 + $0x2e0] sm:$0xff]
  %v168 = vld [vmem:[%s2 + $0x2e8] sm:$0xff]
  %v169 = vld [vmem:[%s2 + $0x2f0] sm:$0xff]
  %v170 = vld [vmem:[%s2 + $0x2f8] sm:$0xff]
  %v171 = vld [vmem:[%s2 + $0x300] sm:$0xff]
  %v172 = vld [vmem:[%s2 + $0x308] sm:$0xff]
  %v173 = vld [vmem:[%s2 + $0x310] sm:$0xff]
  %v174 = vld [vmem:[%s2 + $0x318] sm:$0xff]
  %v175 = vld [vmem:[%s2 + $0x320] sm:$0xff]
  %v176 = vld [vmem:[%s2 + $0x328] sm:$0xff]
  %v177 = vld [vmem:[%s2 + $0x330] sm:$0xff]
  %v178 = vld [vmem:[%s2 + $0x338] sm:$0xff]
  %v179 = vld [vmem:[%s2 + $0x340] sm:$0xff]
  %v180 = vld [vmem:[%s2 + $0x348] sm:$0xff]
  %v181 = vld [vmem:[%s2 + $0x350] sm:$0xff]
  %v182 = vld [vmem:[%s2 + $0x358] sm:$0xff]
  %v183 = vld [vmem:[%s2 + $0x360] sm:$0xff]
  %v184 = vld [vmem:[%s2 + $0x368] sm:$0xff]
  %v185 = vld [vmem:[%s2 + $0x370] sm:$0xff]
  %v186 = vld [vmem:[%s2 + $0x378] sm:$0xff]
  %v187 = vld [vmem:[%s2 + $0x380] sm:$0xff]
  %v188 = vld [vmem:[%s2 + $0x388] sm:$0xff]
  %v189 = vld [vmem:[%s2 + $0x390] sm:$0xff]
  %v190 = vld [vmem:[%s2 + $0x398] sm:$0xff]
  %v191 = vld [vmem:[%s2 + $0x3a0] sm:$0xff]
  %v192 = vld [vmem:[%s2 + $0x3a8] sm:$0xff]
  %v193 = vld [vmem:[%s2 + $0x3b0] sm:$0xff]
  %v194 = vld [vmem:[%s2 + $0x3b8] sm:$0xff]
  %v195 = vld [vmem:[%s2 + $0x3c0] sm:$0xff]
  %v196 = vld [vmem:[%s2 + $0x3c8] sm:$0xff]
  %v197 = vld [vmem:[%s2 + $0x3d0] sm:$0xff]
  %v198 = vld [vmem:[%s2 + $0x3d8] sm:$0xff]
  %v199 = vld [vmem:[%s2 + $0x3e0] sm:$0xff]
  %v200 = vld [vmem:[%s2 + $0x3e8] sm:$0xff]
  %v201 = vld [vmem:[%s2 + $0x3f0] sm:$0xff]
  %v202 = vld [vmem:[%s2 + $0x3f8] sm:$0xff]
  %v203 = vld [vmem:[%s2 + $0x400] sm:$0xff]
  %v204 = vld [vmem:[%s2 + $0x408] sm:$0xff]
  %v205 = vld [vmem:[%s2 + $0x410] sm:$0xff]
  %v206 = vld [vmem:[%s2 + $0x418] sm:$0xff]
  %v207 = vld [vmem:[%s2 + $0x420] sm:$0xff]
  %v208 = vld [vmem:[%s2 + $0x428] sm:$0xff]
  %v209 = vld [vmem:[%s2 + $0x430] sm:$0xff]
  %v210 = vld [vmem:[%s2 + $0x438] sm:$0xff]
  %v211 = vld [vmem:[%s2 + $0x440] sm:$0xff]
  %v212 = vld [vmem:[%s2 + $0x448] sm:$0xff]
  %v213 = vld [vmem:[%s2 + $0x450] sm:$0xff]
  %v214 = vld [vmem:[%s2 + $0x458] sm:$0xff]
  %v215 = vld [vmem:[%s2 + $0x460] sm:$0xff]
  %v216 = vld [vmem:[%s2 + $0x468] sm:$0xff]
  %v217 = vld [vmem:[%s2 + $0x470] sm:$0xff]
  %v218 = vld [vmem:[%s2 + $0x478] sm:$0xff]
  %v219 = vld [vmem:[%s2 + $0x480] sm:$0xff]
  %v220 = vld [vmem:[%s2 + $0x488] sm:$0xff]
  %v221 = vld [vmem:[%s2 + $0x490] sm:$0xff]
  %v222 = vld [vmem:[%s2 + $0x498] sm:$0xff]
  %v223 = vld [vmem:[%s2 + $0x4a0] sm:$0xff]
  %v224 = vld [vmem:[%s2 + $0x4a8] sm:$0xff]
  %v225 = vld [vmem:[%s2 + $0x4b0] sm:$0xff]
  %v226 = vld [vmem:[%s2 + $0x4b8] sm:$0xff]
  %v227 = vld [vmem:[%s2 + $0x4c0] sm:$0xff]
  %v228 = vld [vmem:[%s2 + $0x4c8] sm:$0xff]
  %v229 = vld [vmem:[%s2 + $0x4d0] sm:$0xff]
  %v230 = vld [vmem:[%s2 + $0x4d8] sm:$0xff]
  %v231 = vld [vmem:[%s2 + $0x4e0] sm:$0xff]
  %v232 = vld [vmem:[%s2 + $0x4e8] sm:$0xff]
  %v233 = vld [vmem:[%s2 + $0x4f0] sm:$0xff]
  %v234 = vld [vmem:[%s2 + $0x4f8] sm:$0xff]
  %v235 = vld [vmem:[%s2 + $0x500] sm:$0xff]
  %v236 = vld [vmem:[%s2 + $0x508] sm:$0xff]
  %v237 = vld [vmem:[%s2 + $0x510] sm:$0xff]
  %v238 = vld [vmem:[%s2 + $0x518] sm:$0xff]
  %v239 = vld [vmem:[%s2 + $0x520] sm:$0xff]
  %v240 = vld [vmem:[%s2 + $0x528] sm:$0xff]
  %v241 = vld [vmem:[%s2 + $0x530] sm:$0xff]
  %v242 = vld [vmem:[%s2 + $0x538] sm:$0xff]
  %v243 = vld [vmem:[%s2 + $0x540] sm:$0xff]
  %v244 = vld [vmem:[%s2 + $0x548] sm:$0xff]
  %v245 = vld [vmem:[%s2 + $0x550] sm:$0xff]
  %v246 = vld [vmem:[%s2 + $0x558] sm:$0xff]
  %v247 = vld [vmem:[%s2 + $0x560] sm:$0xff]
  %v248 = vld [vmem:[%s2 + $0x568] sm:$0xff]
  %v249 = vld [vmem:[%s2 + $0x570] sm:$0xff]
  %v250 = vld [vmem:[%s2 + $0x578] sm:$0xff]
  %v251 = vld [vmem:[%s2 + $0x580] sm:$0xff]
  %v252 = vld [vmem:[%s2 + $0x588] sm:$0xff]
  %v253 = vld [vmem:[%s2 + $0x590] sm:$0xff]
  %v254 = vld [vmem:[%s2 + $0x598] sm:$0xff]
  %v255 = vld [vmem:[%s2 + $0x5a0] sm:$0xff]
  %v256 = vld [vmem:[%s2 + $0x5a8] sm:$0xff]
  %v257 = vld [vmem:[%s2 + $0x5b0] sm:$0xff]
  %v258 = vld [vmem:[%s2 + $0x5b8] sm:$0xff]
  %v259 = vld [vmem:[%s2 + $0x5c0] sm:$0xff]
  %v260 = vld [vmem:[%s2 + $0x5c8] sm:$0xff]
  %v261 = vld [vmem:[%s2 + $0x5d0] sm:$0xff]
  %v262 = vld [vmem:[%s2 + $0x5d8] sm:$0xff]
  %v263 = vld [vmem:[%s2 + $0x5e0] sm:$0xff]
  %v264 = vld [vmem:[%s2 + $0x5e8] sm:$0xff]
  %v265 = vld [vmem:[%s2 + $0x5f0] sm:$0xff]
  %v266 = vld [vmem:[%s2 + $0x5f8] sm:$0xff]
  %v267 = vld [vmem:[%s2 + $0x600] sm:$0xff]
  %v268 = vld [vmem:[%s2 + $0x608] sm:$0xff]
  %v269 = vld [vmem:[%s2 + $0x610] sm:$0xff]
  %v270 = vld [vmem:[%s2 + $0x618] sm:$0xff]
  %v271 = vld [vmem:[%s2 + $0x620] sm:$0xff]
  %v272 = vld [vmem:[%s2 + $0x628] sm:$0xff]
  %v273 = vld [vmem:[%s2 + $0x630] sm:$0xff]
  %v274 = vld [vmem:[%s2 + $0x638] sm:$0xff]
  %vm275 = vcmask 130048
  %v277 = vsel %vm275, %v66, 0
  %v280 = vsel %vm275, %v70, 0
  %v283 = vsel %vm275, %v74, 0
  %285 = vmatprep.subr.mxu0 %v136
  %286 = vmatpush1.msra.mxu0 %v135
  %287 = vmatprep.subr.mxu0 %v132
  %288 = vmatpush1.msra.mxu0 %v131
  %289 = vmatprep.subr.mxu0 %v128
  %290 = vmatpush1.msra.mxu0 %v127
  %291 = vmatprep.subr.mxu0 %v124
  %292 = vmatpush1.msra.mxu0 %v123
  %293 = vmatprep.subr.mxu0 %v120
  %294 = vmatpush1.msra.mxu0 %v119
  %295 = vmatprep.subr.mxu0 %v116
  %296 = vmatpush1.msra.mxu0 %v115
  %297 = vmatprep.subr.mxu0 %v112
  %298 = vmatpush1.msra.mxu0 %v111
  %299 = vmatprep.subr.mxu0 %v108
  %300 = vmatpush1.msra.mxu0 %v107
  %301 = vmatprep.subr.mxu0 %v104
  %302 = vmatpush1.msra.mxu0 %v103
  %303 = vmatprep.subr.mxu0 %v100
  %304 = vmatpush1.msra.mxu0 %v99
  %305 = vmatprep.subr.mxu0 %v96
  %306 = vmatpush1.msra.mxu0 %v95
  %307 = vmatprep.subr.mxu0 %v92
  %308 = vmatpush1.msra.mxu0 %v91
  %309 = vmatprep.subr.mxu0 %v88
  %310 = vmatpush1.msra.mxu0 %v87
  %311 = vmatprep.subr.mxu0 %v84
  %312 = vmatpush1.msra.mxu0 %v83
  %313 = vmatprep.subr.mxu0 %v80
  %314 = vmatpush1.msra.mxu0 %v79
  %315 = vmatprep.subr.mxu0 %v76
  %316 = vmatpush1.msra.mxu0 %v75
  %317 = vmatprep.subr.mxu0 %v200
  %318 = vmatpush2.msra.mxu0 %v199
  %319 = vmatprep.subr.mxu0 %v196
  %320 = vmatpush2.msra.mxu0 %v195
  %321 = vmatprep.subr.mxu0 %v192
  %322 = vmatpush2.msra.mxu0 %v191
  %323 = vmatprep.subr.mxu0 %v188
  %324 = vmatpush2.msra.mxu0 %v187
  %325 = vmatprep.subr.mxu0 %v184
  %326 = vmatpush2.msra.mxu0 %v183
  %327 = vmatprep.subr.mxu0 %v180
  %328 = vmatpush2.msra.mxu0 %v179
  %329 = vmatprep.subr.mxu0 %v176
  %330 = vmatpush2.msra.mxu0 %v175
  %331 = vmatprep.subr.mxu0 %v172
  %332 = vmatpush2.msra.mxu0 %v171
  %333 = vmatprep.subr.mxu0 %v168
  %334 = vmatpush2.msra.mxu0 %v167
  %335 = vmatprep.subr.mxu0 %v164
  %336 = vmatpush2.msra.mxu0 %v163
  %337 = vmatprep.subr.mxu0 %v160
  %338 = vmatpush2.msra.mxu0 %v159
  %339 = vmatprep.subr.mxu0 %v156
  %340 = vmatpush2.msra.mxu0 %v155
  %341 = vmatprep.subr.mxu0 %v152
  %342 = vmatpush2.msra.mxu0 %v151
  %343 = vmatprep.subr.mxu0 %v148
  %344 = vmatpush2.msra.mxu0 %v147
  %345 = vmatprep.subr.mxu0 %v144
  %346 = vmatpush2.msra.mxu0 %v143
  %347 = vmatprep.subr.mxu0 %v140
  %348 = vmatpush2.msra.mxu0 %v139
  %349 = vmatprep.mubr.f32.mxu0 %v64
  %350 = vmatmul.mubr.f32.gmra.mxu0 %v63
  %v351 = vpop.f32.mrf.mxu0
  %v352 = vadd.f32 0.0, %v351
  %v353 = vpop.f32.mrf.mxu0
  %v354 = vadd.f32 0.0, %v353
  %355 = vmatprep.mubr.f32.mxu0 %v68
  %356 = vmatmul.mubr.f32.gmra.mxu0 %v67
  %v357 = vpop.f32.mrf.mxu0
  %v358 = vadd.f32 0.0, %v357
  %v359 = vpop.f32.mrf.mxu0
  %v360 = vadd.f32 0.0, %v359
  %361 = vmatprep.mubr.f32.mxu0 %v72
  %362 = vmatmul.mubr.f32.gmra.mxu0 %v71
  %v363 = vpop.f32.mrf.mxu0
  %v364 = vadd.f32 0.0, %v363
  %v365 = vpop.f32.mrf.mxu0
  %v366 = vadd.f32 0.0, %v365
  %367 = vdwg.mxu0
  %368 = vmatprep.subr.mxu0 %v264
  %369 = vmatpush1.msra.mxu0 %v263
  %370 = vmatprep.subr.mxu0 %v260
  %371 = vmatpush1.msra.mxu0 %v259
  %372 = vmatprep.subr.mxu0 %v256
  %373 = vmatpush1.msra.mxu0 %v255
  %374 = vmatprep.subr.mxu0 %v252
  %375 = vmatpush1.msra.mxu0 %v251
  %376 = vmatprep.subr.mxu0 %v248
  %377 = vmatpush1.msra.mxu0 %v247
  %378 = vmatprep.subr.mxu0 %v244
  %379 = vmatpush1.msra.mxu0 %v243
  %380 = vmatprep.subr.mxu0 %v240
  %381 = vmatpush1.msra.mxu0 %v239
  %382 = vmatprep.subr.mxu0 %v236
  %383 = vmatpush1.msra.mxu0 %v235
  %384 = vmatprep.subr.mxu0 %v232
  %385 = vmatpush1.msra.mxu0 %v231
  %386 = vmatprep.subr.mxu0 %v228
  %387 = vmatpush1.msra.mxu0 %v227
  %388 = vmatprep.subr.mxu0 %v224
  %389 = vmatpush1.msra.mxu0 %v223
  %390 = vmatprep.subr.mxu0 %v220
  %391 = vmatpush1.msra.mxu0 %v219
  %392 = vmatprep.subr.mxu0 %v216
  %393 = vmatpush1.msra.mxu0 %v215
  %394 = vmatprep.subr.mxu0 %v212
  %395 = vmatpush1.msra.mxu0 %v211
  %396 = vmatprep.subr.mxu0 %v208
  %397 = vmatpush1.msra.mxu0 %v207
  %398 = vmatprep.subr.mxu0 %v204
  %399 = vmatpush1.msra.mxu0 %v203
  %400 = vmatprep.subr.mxu0 0.0
  %401 = vmatpush2.msra.mxu0 0.0
  %402 = vmatprep.subr.mxu0 0.0
  %403 = vmatpush2.msra.mxu0 0.0
  %404 = vmatprep.subr.mxu0 0.0
  %405 = vmatpush2.msra.mxu0 0.0
  %406 = vmatprep.subr.mxu0 0.0
  %407 = vmatpush2.msra.mxu0 0.0
  %408 = vmatprep.subr.mxu0 0.0
  %409 = vmatpush2.msra.mxu0 0.0
  %410 = vmatprep.subr.mxu0 0.0
  %411 = vmatpush2.msra.mxu0 0.0
  %412 = vmatprep.subr.mxu0 0.0
  %413 = vmatpush2.msra.mxu0 0.0
  %414 = vmatprep.subr.mxu0 0.0
  %415 = vmatpush2.msra.mxu0 0.0
  %416 = vmatprep.subr.mxu0 0.0
  %417 = vmatpush2.msra.mxu0 0.0
  %418 = vmatprep.subr.mxu0 0.0
  %419 = vmatpush2.msra.mxu0 0.0
  %420 = vmatprep.subr.mxu0 0.0
  %421 = vmatpush2.msra.mxu0 0.0
  %422 = vmatprep.subr.mxu0 0.0
  %423 = vmatpush2.msra.mxu0 0.0
  %424 = vmatprep.subr.mxu0 0.0
  %425 = vmatpush2.msra.mxu0 0.0
  %426 = vmatprep.subr.mxu0 0.0
  %427 = vmatpush2.msra.mxu0 0.0
  %428 = vmatprep.subr.mxu0 %v272
  %429 = vmatpush2.msra.mxu0 %v271
  %430 = vmatprep.subr.mxu0 %v268
  %431 = vmatpush2.msra.mxu0 %v267
  %432 = vmatprep.mubr.f32.mxu0 %v277
  %433 = vmatmul.mubr.f32.gmra.mxu0 %v65
  %v434 = vpop.f32.mrf.mxu0
  %v435 = vadd.f32 %v352, %v434
  %v436 = vpop.f32.mrf.mxu0
  %v437 = vadd.f32 %v354, %v436
  %438 = vmatprep.mubr.f32.mxu0 %v280
  %439 = vmatmul.mubr.f32.gmra.mxu0 %v69
  %v440 = vpop.f32.mrf.mxu0
  %v441 = vadd.f32 %v358, %v440
  %v442 = vpop.f32.mrf.mxu0
  %v443 = vadd.f32 %v360, %v442
  %444 = vmatprep.mubr.f32.mxu0 %v283
  %445 = vmatmul.mubr.f32.gmra.mxu0 %v73
  %v446 = vpop.f32.mrf.mxu0
  %v447 = vadd.f32 %v364, %v446
  %v448 = vpop.f32.mrf.mxu0
  %v449 = vadd.f32 %v366, %v448
  %450 = vdwg.mxu0
  %451 = vmatprep.subr.mxu0 %v138
  %452 = vmatpush1.msra.mxu0 %v137
  %453 = vmatprep.subr.mxu0 %v134
  %454 = vmatpush1.msra.mxu0 %v133
  %455 = vmatprep.subr.mxu0 %v130
  %456 = vmatpush1.msra.mxu0 %v129
  %457 = vmatprep.subr.mxu0 %v126
  %458 = vmatpush1.msra.mxu0 %v125
  %459 = vmatprep.subr.mxu0 %v122
  %460 = vmatpush1.msra.mxu0 %v121
  %461 = vmatprep.subr.mxu0 %v118
  %462 = vmatpush1.msra.mxu0 %v117
  %463 = vmatprep.subr.mxu0 %v114
  %464 = vmatpush1.msra.mxu0 %v113
  %465 = vmatprep.subr.mxu0 %v110
  %466 = vmatpush1.msra.mxu0 %v109
  %467 = vmatprep.subr.mxu0 %v106
  %468 = vmatpush1.msra.mxu0 %v105
  %469 = vmatprep.subr.mxu0 %v102
  %470 = vmatpush1.msra.mxu0 %v101
  %471 = vmatprep.subr.mxu0 %v98
  %472 = vmatpush1.msra.mxu0 %v97
  %473 = vmatprep.subr.mxu0 %v94
  %474 = vmatpush1.msra.mxu0 %v93
  %475 = vmatprep.subr.mxu0 %v90
  %476 = vmatpush1.msra.mxu0 %v89
  %477 = vmatprep.subr.mxu0 %v86
  %478 = vmatpush1.msra.mxu0 %v85
  %479 = vmatprep.subr.mxu0 %v82
  %480 = vmatpush1.msra.mxu0 %v81
  %481 = vmatprep.subr.mxu0 %v78
  %482 = vmatpush1.msra.mxu0 %v77
  %483 = vmatprep.subr.mxu0 %v202
  %484 = vmatpush2.msra.mxu0 %v201
  %485 = vmatprep.subr.mxu0 %v198
  %486 = vmatpush2.msra.mxu0 %v197
  %487 = vmatprep.subr.mxu0 %v194
  %488 = vmatpush2.msra.mxu0 %v193
  %489 = vmatprep.subr.mxu0 %v190
  %490 = vmatpush2.msra.mxu0 %v189
  %491 = vmatprep.subr.mxu0 %v186
  %492 = vmatpush2.msra.mxu0 %v185
  %493 = vmatprep.subr.mxu0 %v182
  %494 = vmatpush2.msra.mxu0 %v181
  %495 = vmatprep.subr.mxu0 %v178
  %496 = vmatpush2.msra.mxu0 %v177
  %497 = vmatprep.subr.mxu0 %v174
  %498 = vmatpush2.msra.mxu0 %v173
  %499 = vmatprep.subr.mxu0 %v170
  %500 = vmatpush2.msra.mxu0 %v169
  %501 = vmatprep.subr.mxu0 %v166
  %502 = vmatpush2.msra.mxu0 %v165
  %503 = vmatprep.subr.mxu0 %v162
  %504 = vmatpush2.msra.mxu0 %v161
  %505 = vmatprep.subr.mxu0 %v158
  %506 = vmatpush2.msra.mxu0 %v157
  %507 = vmatprep.subr.mxu0 %v154
  %508 = vmatpush2.msra.mxu0 %v153
  %509 = vmatprep.subr.mxu0 %v150
  %510 = vmatpush2.msra.mxu0 %v149
  %511 = vmatprep.subr.mxu0 %v146
  %512 = vmatpush2.msra.mxu0 %v145
  %513 = vmatprep.subr.mxu0 %v142
  %514 = vmatpush2.msra.mxu0 %v141
  %515 = vmatprep.mubr.f32.mxu0 %v64
  %516 = vmatmul.mubr.f32.gmra.mxu0 %v63
  %v517 = vpop.f32.mrf.mxu0
  %v518 = vadd.f32 0.0, %v517
  %v519 = vpop.f32.mrf.mxu0
  %v520 = vadd.f32 0.0, %v519
  %521 = vmatprep.mubr.f32.mxu0 %v68
  %522 = vmatmul.mubr.f32.gmra.mxu0 %v67
  %v523 = vpop.f32.mrf.mxu0
  %v524 = vadd.f32 0.0, %v523
  %v525 = vpop.f32.mrf.mxu0
  %v526 = vadd.f32 0.0, %v525
  %527 = vmatprep.mubr.f32.mxu0 %v72
  %528 = vmatmul.mubr.f32.gmra.mxu0 %v71
  %v529 = vpop.f32.mrf.mxu0
  %v530 = vadd.f32 0.0, %v529
  %v531 = vpop.f32.mrf.mxu0
  %v532 = vadd.f32 0.0, %v531
  %533 = vdwg.mxu0
  %534 = vmatprep.subr.mxu0 %v266
  %535 = vmatpush1.msra.mxu0 %v265
  %536 = vmatprep.subr.mxu0 %v262
  %537 = vmatpush1.msra.mxu0 %v261
  %538 = vmatprep.subr.mxu0 %v258
  %539 = vmatpush1.msra.mxu0 %v257
  %540 = vmatprep.subr.mxu0 %v254
  %541 = vmatpush1.msra.mxu0 %v253
  %542 = vmatprep.subr.mxu0 %v250
  %543 = vmatpush1.msra.mxu0 %v249
  %544 = vmatprep.subr.mxu0 %v246
  %545 = vmatpush1.msra.mxu0 %v245
  %546 = vmatprep.subr.mxu0 %v242
  %547 = vmatpush1.msra.mxu0 %v241
  %548 = vmatprep.subr.mxu0 %v238
  %549 = vmatpush1.msra.mxu0 %v237
  %550 = vmatprep.subr.mxu0 %v234
  %551 = vmatpush1.msra.mxu0 %v233
  %552 = vmatprep.subr.mxu0 %v230
  %553 = vmatpush1.msra.mxu0 %v229
  %554 = vmatprep.subr.mxu0 %v226
  %555 = vmatpush1.msra.mxu0 %v225
  %556 = vmatprep.subr.mxu0 %v222
  %557 = vmatpush1.msra.mxu0 %v221
  %558 = vmatprep.subr.mxu0 %v218
  %559 = vmatpush1.msra.mxu0 %v217
  %560 = vmatprep.subr.mxu0 %v214
  %561 = vmatpush1.msra.mxu0 %v213
  %562 = vmatprep.subr.mxu0 %v210
  %563 = vmatpush1.msra.mxu0 %v209
  %564 = vmatprep.subr.mxu0 %v206
  %565 = vmatpush1.msra.mxu0 %v205
  %566 = vmatprep.subr.mxu0 0.0
  %567 = vmatpush2.msra.mxu0 0.0
  %568 = vmatprep.subr.mxu0 0.0
  %569 = vmatpush2.msra.mxu0 0.0
  %570 = vmatprep.subr.mxu0 0.0
  %571 = vmatpush2.msra.mxu0 0.0
  %572 = vmatprep.subr.mxu0 0.0
  %573 = vmatpush2.msra.mxu0 0.0
  %574 = vmatprep.subr.mxu0 0.0
  %575 = vmatpush2.msra.mxu0 0.0
  %576 = vmatprep.subr.mxu0 0.0
  %577 = vmatpush2.msra.mxu0 0.0
  %578 = vmatprep.subr.mxu0 0.0
  %579 = vmatpush2.msra.mxu0 0.0
  %580 = vmatprep.subr.mxu0 0.0
  %581 = vmatpush2.msra.mxu0 0.0
  %582 = vmatprep.subr.mxu0 0.0
  %583 = vmatpush2.msra.mxu0 0.0
  %584 = vmatprep.subr.mxu0 0.0
  %585 = vmatpush2.msra.mxu0 0.0
  %586 = vmatprep.subr.mxu0 0.0
  %587 = vmatpush2.msra.mxu0 0.0
  %588 = vmatprep.subr.mxu0 0.0
  %589 = vmatpush2.msra.mxu0 0.0
  %590 = vmatprep.subr.mxu0 0.0
  %591 = vmatpush2.msra.mxu0 0.0
  %592 = vmatprep.subr.mxu0 0.0
  %593 = vmatpush2.msra.mxu0 0.0
  %594 = vmatprep.subr.mxu0 %v274
  %595 = vmatpush2.msra.mxu0 %v273
  %596 = vmatprep.subr.mxu0 %v270
  %597 = vmatpush2.msra.mxu0 %v269
  %598 = vmatprep.mubr.f32.mxu0 %v277
  %599 = vmatmul.mubr.f32.gmra.mxu0 %v65
  %v600 = vpop.f32.mrf.mxu0
  %v601 = vadd.f32 %v518, %v600
  %v602 = vpop.f32.mrf.mxu0
  %v603 = vadd.f32 %v520, %v602
  %604 = vmatprep.mubr.f32.mxu0 %v280
  %605 = vmatmul.mubr.f32.gmra.mxu0 %v69
  %v606 = vpop.f32.mrf.mxu0
  %v607 = vadd.f32 %v524, %v606
  %v608 = vpop.f32.mrf.mxu0
  %v609 = vadd.f32 %v526, %v608
  %610 = vmatprep.mubr.f32.mxu0 %v283
  %611 = vmatmul.mubr.f32.gmra.mxu0 %v73
  %v612 = vpop.f32.mrf.mxu0
  %v613 = vadd.f32 %v530, %v612
  %v614 = vpop.f32.mrf.mxu0
  %v615 = vadd.f32 %v532, %v614
  %616 = vdwg.mxu0
  %v617 = vmul.f32 %v435, %v435
  %v618 = vmul.f32 %v437, %v437
  %v619 = vmul.f32 %v441, %v441
  %v620 = vmul.f32 %v443, %v443
  %v621 = vmul.f32 %v447, %v447
  %v622 = vmul.f32 %v449, %v449
  %v623 = vmul.f32 %v601, %v601
  %v624 = vmul.f32 %v603, %v603
  %v625 = vmul.f32 %v607, %v607
  %v626 = vmul.f32 %v609, %v609
  %v627 = vmul.f32 %v613, %v613
  %v628 = vmul.f32 %v615, %v615
  %v629 = vadd.f32 %v617, %v623
  %v630 = vadd.f32 %v618, %v624
  %v631 = vadd.f32 %v619, %v625
  %v632 = vadd.f32 %v620, %v626
  %v633 = vadd.f32 %v621, %v627
  %v634 = vadd.f32 %v622, %v628
  %v635 = vld [vmem:[%s3] sm:$0xff]
  %v636 = vld [vmem:[%s3 + $0x8] sm:$0xff]
  %v637 = vld [vmem:[%s3 + $0x10] sm:$0xff]
  %v638 = vld [vmem:[%s3 + $0x18] sm:$0xff]
  %v639 = vld [vmem:[%s3 + $0x20] sm:$0xff]
  %v640 = vld [vmem:[%s3 + $0x28] sm:$0xff]
  %v641 = vld [vmem:[%s3 + $0x30] sm:$0xff]
  %v642 = vld [vmem:[%s3 + $0x38] sm:$0xff]
  %v643 = vld [vmem:[%s3 + $0x40] sm:$0xff]
  %v644 = vld [vmem:[%s3 + $0x48] sm:$0xff]
  %v645 = vld [vmem:[%s3 + $0x50] sm:$0xff]
  %v646 = vld [vmem:[%s3 + $0x58] sm:$0xff]
  %v647 = vld [vmem:[%s3 + $0x60] sm:$0xff]
  %v648 = vld [vmem:[%s3 + $0x68] sm:$0xff]
  %v649 = vld [vmem:[%s3 + $0x70] sm:$0xff]
  %v650 = vld [vmem:[%s3 + $0x78] sm:$0xff]
  %v651 = vld [vmem:[%s3 + $0x80] sm:$0xff]
  %v652 = vld [vmem:[%s3 + $0x88] sm:$0xff]
  %v653 = vld [vmem:[%s3 + $0x90] sm:$0xff]
  %v654 = vld [vmem:[%s3 + $0x98] sm:$0xff]
  %v655 = vld [vmem:[%s3 + $0xa0] sm:$0xff]
  %v656 = vld [vmem:[%s3 + $0xa8] sm:$0xff]
  %v657 = vld [vmem:[%s3 + $0xb0] sm:$0xff]
  %v658 = vld [vmem:[%s3 + $0xb8] sm:$0xff]
  %v659 = vld [vmem:[%s3 + $0xc0] sm:$0xff]
  %v660 = vld [vmem:[%s3 + $0xc8] sm:$0xff]
  %v661 = vld [vmem:[%s3 + $0xd0] sm:$0xff]
  %v662 = vld [vmem:[%s3 + $0xd8] sm:$0xff]
  %v663 = vld [vmem:[%s3 + $0xe0] sm:$0xff]
  %v664 = vld [vmem:[%s3 + $0xe8] sm:$0xff]
  %v665 = vld [vmem:[%s3 + $0xf0] sm:$0xff]
  %v666 = vld [vmem:[%s3 + $0xf8] sm:$0xff]
  %667 = vmatprep.subr.mxu0 0.0
  %668 = vmatpush1.msra.mxu0 %v650
  %669 = vmatprep.subr.mxu0 0.0
  %670 = vmatpush1.msra.mxu0 %v649
  %671 = vmatprep.subr.mxu0 0.0
  %672 = vmatpush1.msra.mxu0 %v648
  %673 = vmatprep.subr.mxu0 0.0
  %674 = vmatpush1.msra.mxu0 %v647
  %675 = vmatprep.subr.mxu0 0.0
  %676 = vmatpush1.msra.mxu0 %v646
  %677 = vmatprep.subr.mxu0 0.0
  %678 = vmatpush1.msra.mxu0 %v645
  %679 = vmatprep.subr.mxu0 0.0
  %680 = vmatpush1.msra.mxu0 %v644
  %681 = vmatprep.subr.mxu0 0.0
  %682 = vmatpush1.msra.mxu0 %v643
  %683 = vmatprep.subr.mxu0 0.0
  %684 = vmatpush1.msra.mxu0 %v642
  %685 = vmatprep.subr.mxu0 0.0
  %686 = vmatpush1.msra.mxu0 %v641
  %687 = vmatprep.subr.mxu0 0.0
  %688 = vmatpush1.msra.mxu0 %v640
  %689 = vmatprep.subr.mxu0 0.0
  %690 = vmatpush1.msra.mxu0 %v639
  %691 = vmatprep.subr.mxu0 0.0
  %692 = vmatpush1.msra.mxu0 %v638
  %693 = vmatprep.subr.mxu0 0.0
  %694 = vmatpush1.msra.mxu0 %v637
  %695 = vmatprep.subr.mxu0 0.0
  %696 = vmatpush1.msra.mxu0 %v636
  %697 = vmatprep.subr.mxu0 0.0
  %698 = vmatpush1.msra.mxu0 %v635
  %699 = vmatprep.subr.mxu0 0.0
  %700 = vmatpush2.msra.mxu0 %v666
  %701 = vmatprep.subr.mxu0 0.0
  %702 = vmatpush2.msra.mxu0 %v665
  %703 = vmatprep.subr.mxu0 0.0
  %704 = vmatpush2.msra.mxu0 %v664
  %705 = vmatprep.subr.mxu0 0.0
  %706 = vmatpush2.msra.mxu0 %v663
  %707 = vmatprep.subr.mxu0 0.0
  %708 = vmatpush2.msra.mxu0 %v662
  %709 = vmatprep.subr.mxu0 0.0
  %710 = vmatpush2.msra.mxu0 %v661
  %711 = vmatprep.subr.mxu0 0.0
  %712 = vmatpush2.msra.mxu0 %v660
  %713 = vmatprep.subr.mxu0 0.0
  %714 = vmatpush2.msra.mxu0 %v659
  %715 = vmatprep.subr.mxu0 0.0
  %716 = vmatpush2.msra.mxu0 %v658
  %717 = vmatprep.subr.mxu0 0.0
  %718 = vmatpush2.msra.mxu0 %v657
  %719 = vmatprep.subr.mxu0 0.0
  %720 = vmatpush2.msra.mxu0 %v656
  %721 = vmatprep.subr.mxu0 0.0
  %722 = vmatpush2.msra.mxu0 %v655
  %723 = vmatprep.subr.mxu0 0.0
  %724 = vmatpush2.msra.mxu0 %v654
  %725 = vmatprep.subr.mxu0 0.0
  %726 = vmatpush2.msra.mxu0 %v653
  %727 = vmatprep.subr.mxu0 0.0
  %728 = vmatpush2.msra.mxu0 %v652
  %729 = vmatprep.subr.mxu0 0.0
  %730 = vmatpush2.msra.mxu0 %v651
  %731 = vmatprep.mubr.f32.mxu0 %v630
  %732 = vmatmul.mubr.f32.gmra.mxu0 %v629
  %v733 = vpop.f32.mrf.mxu0
  %v734 = vadd.f32 0.0, %v733
  %v735 = vpop.f32.mrf.mxu0
  %736 = vmatprep.mubr.f32.mxu0 %v632
  %737 = vmatmul.mubr.f32.gmra.mxu0 %v631
  %v738 = vpop.f32.mrf.mxu0
  %v739 = vadd.f32 0.0, %v738
  %v740 = vpop.f32.mrf.mxu0
  %741 = vmatprep.mubr.f32.mxu0 %v634
  %742 = vmatmul.mubr.f32.gmra.mxu0 %v633
  %v743 = vpop.f32.mrf.mxu0
  %v744 = vadd.f32 0.0, %v743
  %v745 = vpop.f32.mrf.mxu0
  %746 = vdwg.mxu0
  %v747 = vmax.f32 %v734, 1e-10
  %v748 = vmax.f32 %v739, 1e-10
  %v749 = vmax.f32 %v744, 1e-10
  %v750 = vlog2.pop %v747
  %v751 = vmul.f32 %v750, 0.6931472
  %v752 = vlog2.pop %v748
  %v753 = vmul.f32 %v752, 0.6931472
  %v754 = vlog2.pop %v749
  %v755 = vmul.f32 %v754, 0.6931472
  %v756 = vmul.f32 %v751, 0.4342945
  %v757 = vmul.f32 %v753, 0.4342945
  %v758 = vmul.f32 %v755, 0.4342945
  %v759 = vmul.f32 %v756, 10.0
  %v760 = vmul.f32 %v757, 10.0
  %v761 = vmul.f32 %v758, 10.0
  %v762 = vlaneseq
  %v763 = vshrl.u32 %v762, 7
  %vm764 = vcmp.eq.s32.totalorder %v763, 0
  %v768 = vcombine.high %v759, %v759
  %v770 = vunpack.c.l.s4 1983009808
  %v771 = vunpack.c.0.s8 %v770
  %v772 = vlaneseq
  %v773 = vshrl.u32 %v772, 7
  %v774 = vsub.s32 %v771, %v773
  %v775 = vrot.slane %v759, %v774
  %v777 = vunpack.c.l.s4 1983009808
  %v778 = vunpack.c.0.s8 %v777
  %v779 = vlaneseq
  %v780 = vshrl.u32 %v779, 7
  %v781 = vsub.s32 %v778, %v780
  %v782 = vrot.slane %v768, %v781
  %v783 = vcombine.high %v775, %v775
  %v784 = vcombine.high %v782, %v782
  %v785 = vcombine.high %v760, %v760
  %v787 = vunpack.c.l.s4 1983009808
  %v788 = vunpack.c.0.s8 %v787
  %v789 = vlaneseq
  %v790 = vshrl.u32 %v789, 7
  %v791 = vsub.s32 %v788, %v790
  %v792 = vrot.slane %v760, %v791
  %v794 = vunpack.c.l.s4 1983009808
  %v795 = vunpack.c.0.s8 %v794
  %v796 = vlaneseq
  %v797 = vshrl.u32 %v796, 7
  %v798 = vsub.s32 %v795, %v797
  %v799 = vrot.slane %v785, %v798
  %v800 = vcombine.high %v792, %v792
  %v801 = vcombine.high %v799, %v799
  %v803 = vunpack.c.l.s4 1983009808
  %v804 = vunpack.c.0.s8 %v803
  %v805 = vlaneseq
  %v806 = vshrl.u32 %v805, 7
  %v807 = vsub.s32 %v804, %v806
  %v808 = vrot.slane %v761, %v807
  %v818 = vsel %vm764, %v775, -inf
  %v819 = vsel %vm764, %v783, -inf
  %v820 = vsel %vm764, %v782, -inf
  %v821 = vsel %vm764, %v784, -inf
  %v822 = vsel %vm764, %v792, -inf
  %v823 = vsel %vm764, %v800, -inf
  %v824 = vsel %vm764, %v799, -inf
  %v825 = vsel %vm764, %v801, -inf
  %v826 = vsel %vm764, %v808, -inf
  %v836 = vcombine.low %v818, %v819
  %v837 = vcombine.low %v820, %v821
  %v839 = vunpack.c.l.s4 1983009808
  %v840 = vunpack.c.0.s8 %v839
  %v841 = vlaneseq
  %v842 = vshrl.u32 %v841, 7
  %v843 = vsub.s32 %v840, %v842
  %v844 = vrot.slane %v836, %v843
  %v846 = vunpack.c.l.s4 1983009808
  %v847 = vunpack.c.0.s8 %v846
  %v848 = vlaneseq
  %v849 = vshrl.u32 %v848, 7
  %v850 = vsub.s32 %v847, %v849
  %v851 = vrot.slane %v837, %v850
  %v852 = vcombine.low %v844, %v851
  %v853 = vcombine.low %v822, %v823
  %v854 = vcombine.low %v824, %v825
  %v856 = vunpack.c.l.s4 1983009808
  %v857 = vunpack.c.0.s8 %v856
  %v858 = vlaneseq
  %v859 = vshrl.u32 %v858, 7
  %v860 = vsub.s32 %v857, %v859
  %v861 = vrot.slane %v853, %v860
  %v863 = vunpack.c.l.s4 1983009808
  %v864 = vunpack.c.0.s8 %v863
  %v865 = vlaneseq
  %v866 = vshrl.u32 %v865, 7
  %v867 = vsub.s32 %v864, %v866
  %v868 = vrot.slane %v854, %v867
  %v869 = vcombine.low %v861, %v868
  %v871 = vunpack.c.l.s4 1983009808
  %v872 = vunpack.c.0.s8 %v871
  %v873 = vlaneseq
  %v874 = vshrl.u32 %v873, 7
  %v875 = vsub.s32 %v872, %v874
  %v876 = vrot.slane %v826, %v875
  %vm880 = vcmask 1041408
  %v881 = vsel %vm880, %v876, -inf
  %v882 = vmax.f32 %v852, %v869
  %v883 = vmax.f32 %v882, %v881
  %884 = vmax.xlane.f32.xlu0 %v883
  %v885 = vpop.xlane.xlu0 %884
  %v886 = vrot.slane %v885, 4
  %v887 = vmax.f32 %v885, %v886
  %v888 = vrot.slane %v887, 2
  %v889 = vmax.f32 %v887, %v888
  %v890 = vrot.slane %v889, 1
  %v891 = vmax.f32 %v889, %v890
  %s892 = vtos %v891
  %s893 = ssub.f32 %s892, 80.0
  %v894 = vstv %s893
  %v895 = vmax.f32 %v759, %v894
  %v896 = vmax.f32 %v760, %v894
  %v897 = vmax.f32 %v761, %v894
  %v901 = vcombine.high %v895, %v895
  %v903 = vunpack.c.l.s4 1983009808
  %v904 = vunpack.c.0.s8 %v903
  %v905 = vlaneseq
  %v906 = vshrl.u32 %v905, 7
  %v907 = vsub.s32 %v904, %v906
  %v908 = vrot.slane %v895, %v907
  %v910 = vunpack.c.l.s4 1983009808
  %v911 = vunpack.c.0.s8 %v910
  %v912 = vlaneseq
  %v913 = vshrl.u32 %v912, 7
  %v914 = vsub.s32 %v911, %v913
  %v915 = vrot.slane %v901, %v914
  %v916 = vcombine.high %v908, %v908
  %v917 = vcombine.high %v915, %v915
  %v918 = vcombine.high %v896, %v896
  %v920 = vunpack.c.l.s4 1983009808
  %v921 = vunpack.c.0.s8 %v920
  %v922 = vlaneseq
  %v923 = vshrl.u32 %v922, 7
  %v924 = vsub.s32 %v921, %v923
  %v925 = vrot.slane %v896, %v924
  %v927 = vunpack.c.l.s4 1983009808
  %v928 = vunpack.c.0.s8 %v927
  %v929 = vlaneseq
  %v930 = vshrl.u32 %v929, 7
  %v931 = vsub.s32 %v928, %v930
  %v932 = vrot.slane %v918, %v931
  %v933 = vcombine.high %v925, %v925
  %v934 = vcombine.high %v932, %v932
  %v936 = vunpack.c.l.s4 1983009808
  %v937 = vunpack.c.0.s8 %v936
  %v938 = vlaneseq
  %v939 = vshrl.u32 %v938, 7
  %v940 = vsub.s32 %v937, %v939
  %v941 = vrot.slane %v897, %v940
  %v951 = vsel %vm764, %v908, %v775
  %v952 = vsel %vm764, %v916, %v783
  %v953 = vsel %vm764, %v915, %v782
  %v954 = vsel %vm764, %v917, %v784
  %v955 = vsel %vm764, %v925, %v792
  %v956 = vsel %vm764, %v933, %v800
  %v957 = vsel %vm764, %v932, %v799
  %v958 = vsel %vm764, %v934, %v801
  %v959 = vsel %vm764, %v941, %v808
  %vm960 = vcmp.eq.s32.totalorder %v763, 1
  %v961 = vsel %vm960, %v951, -inf
  %v962 = vsel %vm960, %v952, -inf
  %v963 = vsel %vm960, %v953, -inf
  %v964 = vsel %vm960, %v954, -inf
  %v965 = vsel %vm960, %v955, -inf
  %v966 = vsel %vm960, %v956, -inf
  %v967 = vsel %vm960, %v957, -inf
  %v968 = vsel %vm960, %v958, -inf
  %v969 = vsel %vm960, %v959, -inf
  %v979 = vcombine.low %v961, %v962
  %v980 = vcombine.low %v963, %v964
  %v982 = vunpack.c.l.s4 1983009808
  %v983 = vunpack.c.0.s8 %v982
  %v984 = vlaneseq
  %v985 = vshrl.u32 %v984, 7
  %v986 = vsub.s32 %v983, %v985
  %v987 = vrot.slane %v979, %v986
  %v989 = vunpack.c.l.s4 1983009808
  %v990 = vunpack.c.0.s8 %v989
  %v991 = vlaneseq
  %v992 = vshrl.u32 %v991, 7
  %v993 = vsub.s32 %v990, %v992
  %v994 = vrot.slane %v980, %v993
  %v995 = vcombine.low %v987, %v994
  %v996 = vcombine.low %v965, %v966
  %v997 = vcombine.low %v967, %v968
  %v999 = vunpack.c.l.s4 1983009808
  %v1000 = vunpack.c.0.s8 %v999
  %v1001 = vlaneseq
  %v1002 = vshrl.u32 %v1001, 7
  %v1003 = vsub.s32 %v1000, %v1002
  %v1004 = vrot.slane %v996, %v1003
  %v1006 = vunpack.c.l.s4 1983009808
  %v1007 = vunpack.c.0.s8 %v1006
  %v1008 = vlaneseq
  %v1009 = vshrl.u32 %v1008, 7
  %v1010 = vsub.s32 %v1007, %v1009
  %v1011 = vrot.slane %v997, %v1010
  %v1012 = vcombine.low %v1004, %v1011
  %v1014 = vunpack.c.l.s4 1983009808
  %v1015 = vunpack.c.0.s8 %v1014
  %v1016 = vlaneseq
  %v1017 = vshrl.u32 %v1016, 7
  %v1018 = vsub.s32 %v1015, %v1017
  %v1019 = vrot.slane %v969, %v1018
  %v1023 = vsel %vm880, %v1019, -inf
  %v1024 = vmax.f32 %v995, %v1012
  %v1025 = vmax.f32 %v1024, %v1023
  %1026 = vmax.xlane.f32.xlu0 %v1025
  %v1027 = vpop.xlane.xlu0 %1026
  %v1028 = vrot.slane %v1027, 4
  %v1029 = vmax.f32 %v1027, %v1028
  %v1030 = vrot.slane %v1029, 2
  %v1031 = vmax.f32 %v1029, %v1030
  %v1032 = vrot.slane %v1031, 1
  %v1033 = vmax.f32 %v1031, %v1032
  %s1034 = vtos %v1033
  %s1035 = ssub.f32 %s1034, 80.0
  %v1036 = vstv %s1035
  %v1037 = vmax.f32 %v951, %v1036
  %v1038 = vmax.f32 %v952, %v1036
  %v1039 = vmax.f32 %v953, %v1036
  %v1040 = vmax.f32 %v954, %v1036
  %v1041 = vmax.f32 %v955, %v1036
  %v1042 = vmax.f32 %v956, %v1036
  %v1043 = vmax.f32 %v957, %v1036
  %v1044 = vmax.f32 %v958, %v1036
  %v1045 = vmax.f32 %v959, %v1036
  %v1046 = vsel %vm960, %v1037, %v951
  %v1047 = vsel %vm960, %v1038, %v952
  %v1048 = vsel %vm960, %v1039, %v953
  %v1049 = vsel %vm960, %v1040, %v954
  %v1050 = vsel %vm960, %v1041, %v955
  %v1051 = vsel %vm960, %v1042, %v956
  %v1052 = vsel %vm960, %v1043, %v957
  %v1053 = vsel %vm960, %v1044, %v958
  %v1054 = vsel %vm960, %v1045, %v959
  %v1055 = vld [vmem:[%s4] sm:$0xff]
  %v1056 = vld [vmem:[%s4 + $0x8] sm:$0xff]
  %v1057 = vld [vmem:[%s4 + $0x10] sm:$0xff]
  %v1058 = vld [vmem:[%s4 + $0x18] sm:$0xff]
  %v1059 = vld [vmem:[%s4 + $0x20] sm:$0xff]
  %v1060 = vld [vmem:[%s4 + $0x28] sm:$0xff]
  %v1061 = vld [vmem:[%s4 + $0x30] sm:$0xff]
  %v1062 = vld [vmem:[%s4 + $0x38] sm:$0xff]
  %v1063 = vld [vmem:[%s4 + $0x40] sm:$0xff]
  %v1064 = vld [vmem:[%s4 + $0x48] sm:$0xff]
  %v1065 = vld [vmem:[%s4 + $0x50] sm:$0xff]
  %v1066 = vld [vmem:[%s4 + $0x58] sm:$0xff]
  %v1067 = vld [vmem:[%s4 + $0x60] sm:$0xff]
  %v1068 = vld [vmem:[%s4 + $0x68] sm:$0xff]
  %v1069 = vld [vmem:[%s4 + $0x70] sm:$0xff]
  %v1070 = vld [vmem:[%s4 + $0x78] sm:$0xff]
  %v1080 = vcombine.low %v1046, %v1047
  %v1081 = vcombine.low %v1048, %v1049
  %v1083 = vunpack.c.l.s4 1983009808
  %v1084 = vunpack.c.0.s8 %v1083
  %v1085 = vlaneseq
  %v1086 = vshrl.u32 %v1085, 7
  %v1087 = vsub.s32 %v1084, %v1086
  %v1088 = vrot.slane %v1080, %v1087
  %v1090 = vunpack.c.l.s4 1983009808
  %v1091 = vunpack.c.0.s8 %v1090
  %v1092 = vlaneseq
  %v1093 = vshrl.u32 %v1092, 7
  %v1094 = vsub.s32 %v1091, %v1093
  %v1095 = vrot.slane %v1081, %v1094
  %v1096 = vcombine.low %v1088, %v1095
  %v1097 = vcombine.low %v1050, %v1051
  %v1098 = vcombine.low %v1052, %v1053
  %v1100 = vunpack.c.l.s4 1983009808
  %v1101 = vunpack.c.0.s8 %v1100
  %v1102 = vlaneseq
  %v1103 = vshrl.u32 %v1102, 7
  %v1104 = vsub.s32 %v1101, %v1103
  %v1105 = vrot.slane %v1097, %v1104
  %v1107 = vunpack.c.l.s4 1983009808
  %v1108 = vunpack.c.0.s8 %v1107
  %v1109 = vlaneseq
  %v1110 = vshrl.u32 %v1109, 7
  %v1111 = vsub.s32 %v1108, %v1110
  %v1112 = vrot.slane %v1098, %v1111
  %v1113 = vcombine.low %v1105, %v1112
  %v1115 = vunpack.c.l.s4 1983009808
  %v1116 = vunpack.c.0.s8 %v1115
  %v1117 = vlaneseq
  %v1118 = vshrl.u32 %v1117, 7
  %v1119 = vsub.s32 %v1116, %v1118
  %v1120 = vrot.slane %v1054, %v1119
  %1124 = vmatprep.subr.mxu0 0.0
  %1125 = vmatpush1.msra.mxu0 %v1070
  %1126 = vmatprep.subr.mxu0 0.0
  %1127 = vmatpush1.msra.mxu0 %v1069
  %1128 = vmatprep.subr.mxu0 0.0
  %1129 = vmatpush1.msra.mxu0 %v1068
  %1130 = vmatprep.subr.mxu0 0.0
  %1131 = vmatpush1.msra.mxu0 %v1067
  %1132 = vmatprep.subr.mxu0 0.0
  %1133 = vmatpush1.msra.mxu0 %v1066
  %1134 = vmatprep.subr.mxu0 0.0
  %1135 = vmatpush1.msra.mxu0 %v1065
  %1136 = vmatprep.subr.mxu0 0.0
  %1137 = vmatpush1.msra.mxu0 %v1064
  %1138 = vmatprep.subr.mxu0 0.0
  %1139 = vmatpush1.msra.mxu0 %v1063
  %1140 = vmatprep.subr.mxu0 0.0
  %1141 = vmatpush1.msra.mxu0 %v1062
  %1142 = vmatprep.subr.mxu0 0.0
  %1143 = vmatpush1.msra.mxu0 %v1061
  %1144 = vmatprep.subr.mxu0 0.0
  %1145 = vmatpush1.msra.mxu0 %v1060
  %1146 = vmatprep.subr.mxu0 0.0
  %1147 = vmatpush1.msra.mxu0 %v1059
  %1148 = vmatprep.subr.mxu0 0.0
  %1149 = vmatpush1.msra.mxu0 %v1058
  %1150 = vmatprep.subr.mxu0 0.0
  %1151 = vmatpush1.msra.mxu0 %v1057
  %1152 = vmatprep.subr.mxu0 0.0
  %1153 = vmatpush1.msra.mxu0 %v1056
  %1154 = vmatprep.subr.mxu0 0.0
  %1155 = vmatpush1.msra.mxu0 %v1055
  %1156 = vmatprep.subr.mxu0 0.0
  %1157 = vmatpush2.msra.mxu0 0.0
  %1158 = vmatprep.subr.mxu0 0.0
  %1159 = vmatpush2.msra.mxu0 0.0
  %1160 = vmatprep.subr.mxu0 0.0
  %1161 = vmatpush2.msra.mxu0 0.0
  %1162 = vmatprep.subr.mxu0 0.0
  %1163 = vmatpush2.msra.mxu0 0.0
  %1164 = vmatprep.subr.mxu0 0.0
  %1165 = vmatpush2.msra.mxu0 0.0
  %1166 = vmatprep.subr.mxu0 0.0
  %1167 = vmatpush2.msra.mxu0 0.0
  %1168 = vmatprep.subr.mxu0 0.0
  %1169 = vmatpush2.msra.mxu0 0.0
  %1170 = vmatprep.subr.mxu0 0.0
  %1171 = vmatpush2.msra.mxu0 0.0
  %1172 = vmatprep.subr.mxu0 0.0
  %1173 = vmatpush2.msra.mxu0 0.0
  %1174 = vmatprep.subr.mxu0 0.0
  %1175 = vmatpush2.msra.mxu0 0.0
  %1176 = vmatprep.subr.mxu0 0.0
  %1177 = vmatpush2.msra.mxu0 0.0
  %1178 = vmatprep.subr.mxu0 0.0
  %1179 = vmatpush2.msra.mxu0 0.0
  %1180 = vmatprep.subr.mxu0 0.0
  %1181 = vmatpush2.msra.mxu0 0.0
  %1182 = vmatprep.subr.mxu0 0.0
  %1183 = vmatpush2.msra.mxu0 0.0
  %1184 = vmatprep.subr.mxu0 0.0
  %1185 = vmatpush2.msra.mxu0 0.0
  %1186 = vmatprep.subr.mxu0 0.0
  %1187 = vmatpush2.msra.mxu0 0.0
  %1188 = vmatprep.mubr.f32.mxu0 0.0
  %1189 = vmatmul.mubr.f32.gmra.mxu0 %v1096
  %v1190 = vpop.f32.mrf.mxu0
  %v1191 = vadd.f32 0.0, %v1190
  %v1192 = vpop.f32.mrf.mxu0
  %1193 = vmatprep.mubr.f32.mxu0 0.0
  %1194 = vmatmul.mubr.f32.gmra.mxu0 %v1113
  %v1195 = vpop.f32.mrf.mxu0
  %v1196 = vadd.f32 0.0, %v1195
  %v1197 = vpop.f32.mrf.mxu0
  %1198 = vmatprep.mubr.f32.mxu0 0.0
  %1199 = vmatmul.mubr.f32.gmra.mxu0 %v1120
  %v1200 = vpop.f32.mrf.mxu0
  %v1201 = vadd.f32 0.0, %v1200
  %v1202 = vpop.f32.mrf.mxu0
  %1203 = vdwg.mxu0
  %v1204 = vlaneseq
  %v1205 = vand.u32 %v1204, 127
  %vm1206 = vcmp.ge.s32.totalorder %v1205, 26
  %vm1207 = vcmp.lt.s32.totalorder %v1205, 39
  %vm1208 = vmand %vm1206, %vm1207
  %v1209 = vld [vmem:[%s7] sm:$0x1]
  %v1211 = vlaneseq
  %v1212 = vshrl.u32 %v1211, 7
  %v1213 = vsub.s32 0, %v1212
  %v1214 = vrot.slane %v1209, %v1213
  %v1216 = vadd.f32 %v1191, %v1214
  %v1217 = vadd.f32 %v1196, %v1214
  %v1218 = vadd.f32 %v1201, %v1214
  %s1219 = scalar_lea.vmem %s7, 1
  %v1220 = vld [vmem:[%s1219] sm:$0x1]
  %v1222 = vlaneseq
  %v1223 = vshrl.u32 %v1222, 7
  %v1224 = vsub.s32 0, %v1223
  %v1225 = vrot.slane %v1220, %v1224
  %1226 = vrot.lane.b32.xlu0 %v1225, 52
  %v1227 = vpop.permute.xlu0 %1226
  %v1229 = vadd.f32 %v1191, %v1227
  %v1230 = vadd.f32 %v1196, %v1227
  %v1231 = vadd.f32 %v1201, %v1227
  %v1232 = vld [vmem:[%s6] sm:$0xff]
  %v1233 = vld [vmem:[%s6 + $0x8] sm:$0x1f]
  %vm1234 = vcmask 105472
  %v1236 = vsel %vm1234, 0.0, 0
  %vm1238 = vcmask 1044480
  %v1240 = vsel %vm1238, %v1233, 0
  %1242 = vmatprep.subr.mxu0 0.0
  %1243 = vmatpush1.msra.mxu0 0.0
  %1244 = vmatprep.subr.mxu0 0.0
  %1245 = vmatpush1.msra.mxu0 0.0
  %1246 = vmatprep.subr.mxu0 0.0
  %1247 = vmatpush1.msra.mxu0 0.0
  %1248 = vmatprep.subr.mxu0 0.0
  %1249 = vmatpush1.msra.mxu0 0.0
  %1250 = vmatprep.subr.mxu0 0.0
  %1251 = vmatpush1.msra.mxu0 0.0
  %1252 = vmatprep.subr.mxu0 0.0
  %1253 = vmatpush1.msra.mxu0 0.0
  %1254 = vmatprep.subr.mxu0 0.0
  %1255 = vmatpush1.msra.mxu0 0.0
  %1256 = vmatprep.subr.mxu0 0.0
  %1257 = vmatpush1.msra.mxu0 0.0
  %1258 = vmatprep.subr.mxu0 0.0
  %1259 = vmatpush1.msra.mxu0 0.0
  %1260 = vmatprep.subr.mxu0 0.0
  %1261 = vmatpush1.msra.mxu0 0.0
  %1262 = vmatprep.subr.mxu0 0.0
  %1263 = vmatpush1.msra.mxu0 0.0
  %1264 = vmatprep.subr.mxu0 0.0
  %1265 = vmatpush1.msra.mxu0 0.0
  %1266 = vmatprep.subr.mxu0 0.0
  %1267 = vmatpush1.msra.mxu0 0.0
  %1268 = vmatprep.subr.mxu0 0.0
  %1269 = vmatpush1.msra.mxu0 0.0
  %1270 = vmatprep.subr.mxu0 0.0
  %1271 = vmatpush1.msra.mxu0 %v1240
  %1272 = vmatprep.subr.mxu0 0.0
  %1273 = vmatpush1.msra.mxu0 %v1232
  %1274 = vmatprep.subr.mxu0 0.0
  %1275 = vmatpush2.msra.mxu0 0.0
  %1276 = vmatprep.subr.mxu0 0.0
  %1277 = vmatpush2.msra.mxu0 0.0
  %1278 = vmatprep.subr.mxu0 0.0
  %1279 = vmatpush2.msra.mxu0 0.0
  %1280 = vmatprep.subr.mxu0 0.0
  %1281 = vmatpush2.msra.mxu0 0.0
  %1282 = vmatprep.subr.mxu0 0.0
  %1283 = vmatpush2.msra.mxu0 0.0
  %1284 = vmatprep.subr.mxu0 0.0
  %1285 = vmatpush2.msra.mxu0 0.0
  %1286 = vmatprep.subr.mxu0 0.0
  %1287 = vmatpush2.msra.mxu0 0.0
  %1288 = vmatprep.subr.mxu0 0.0
  %1289 = vmatpush2.msra.mxu0 0.0
  %1290 = vmatprep.subr.mxu0 0.0
  %1291 = vmatpush2.msra.mxu0 0.0
  %1292 = vmatprep.subr.mxu0 0.0
  %1293 = vmatpush2.msra.mxu0 0.0
  %1294 = vmatprep.subr.mxu0 0.0
  %1295 = vmatpush2.msra.mxu0 0.0
  %1296 = vmatprep.subr.mxu0 0.0
  %1297 = vmatpush2.msra.mxu0 0.0
  %1298 = vmatprep.subr.mxu0 0.0
  %1299 = vmatpush2.msra.mxu0 0.0
  %1300 = vmatprep.subr.mxu0 0.0
  %1301 = vmatpush2.msra.mxu0 0.0
  %1302 = vmatprep.subr.mxu0 0.0
  %1303 = vmatpush2.msra.mxu0 0.0
  %1304 = vmatprep.subr.mxu0 0.0
  %1305 = vmatpush2.msra.mxu0 0.0
  %1306 = vmatprep.mubr.f32.mxu0 0.0
  %1307 = vmatmul.mubr.f32.gmra.mxu0 %v1236
  %v1308 = vpop.f32.mrf.mxu0
  %v1309 = vadd.f32 0.0, %v1308
  %v1310 = vpop.f32.mrf.mxu0
  %1311 = vdwg.mxu0
  %v1312 = vadd.f32 %v1216, %v1309
  %v1313 = vtanh.pop %v1312
  %v1314 = vxor.u32 %v1312, 2147483648
  %v1315 = vmul.f32 %v1314, 1.442695
  %v1316 = vpow.pop %v1315
  %v1317 = vadd.f32 %v1316, 1.0
  %v1318 = vrcp.pop %v1317
  %v1319 = vmul.f32 1.0, %v1318
  %v1320 = vsel %vm1208, %v1313, %v1319
  %v1321 = vmul.f32 %v1320, 0.0
  %1323 = vrot.lane.b32.xlu0 %v1320, 102
  %v1324 = vpop.permute.xlu0 %1323
  %v1326 = vmul.f32 %v1320, %v1324
  %1328 = vrot.lane.b32.xlu0 %v1326, 13
  %v1329 = vpop.permute.xlu0 %1328
  %v1331 = vadd.f32 %v1321, %v1329
  %v1332 = vtanh.pop %v1331
  %1334 = vrot.lane.b32.xlu0 %v1332, 26
  %v1335 = vpop.permute.xlu0 %1334
  %v1337 = vmul.f32 %v1320, %v1335
  %1339 = vrot.lane.b32.xlu0 %v1337, 89
  %v1340 = vpop.permute.xlu0 %1339
  %v1341 = vsel %vm1234, %v1340, 0
  %1343 = vmatprep.subr.mxu0 0.0
  %1344 = vmatpush1.msra.mxu0 0.0
  %1345 = vmatprep.subr.mxu0 0.0
  %1346 = vmatpush1.msra.mxu0 0.0
  %1347 = vmatprep.subr.mxu0 0.0
  %1348 = vmatpush1.msra.mxu0 0.0
  %1349 = vmatprep.subr.mxu0 0.0
  %1350 = vmatpush1.msra.mxu0 0.0
  %1351 = vmatprep.subr.mxu0 0.0
  %1352 = vmatpush1.msra.mxu0 0.0
  %1353 = vmatprep.subr.mxu0 0.0
  %1354 = vmatpush1.msra.mxu0 0.0
  %1355 = vmatprep.subr.mxu0 0.0
  %1356 = vmatpush1.msra.mxu0 0.0
  %1357 = vmatprep.subr.mxu0 0.0
  %1358 = vmatpush1.msra.mxu0 0.0
  %1359 = vmatprep.subr.mxu0 0.0
  %1360 = vmatpush1.msra.mxu0 0.0
  %1361 = vmatprep.subr.mxu0 0.0
  %1362 = vmatpush1.msra.mxu0 0.0
  %1363 = vmatprep.subr.mxu0 0.0
  %1364 = vmatpush1.msra.mxu0 0.0
  %1365 = vmatprep.subr.mxu0 0.0
  %1366 = vmatpush1.msra.mxu0 0.0
  %1367 = vmatprep.subr.mxu0 0.0
  %1368 = vmatpush1.msra.mxu0 0.0
  %1369 = vmatprep.subr.mxu0 0.0
  %1370 = vmatpush1.msra.mxu0 0.0
  %1371 = vmatprep.subr.mxu0 0.0
  %1372 = vmatpush1.msra.mxu0 %v1240
  %1373 = vmatprep.subr.mxu0 0.0
  %1374 = vmatpush1.msra.mxu0 %v1232
  %1375 = vmatprep.subr.mxu0 0.0
  %1376 = vmatpush2.msra.mxu0 0.0
  %1377 = vmatprep.subr.mxu0 0.0
  %1378 = vmatpush2.msra.mxu0 0.0
  %1379 = vmatprep.subr.mxu0 0.0
  %1380 = vmatpush2.msra.mxu0 0.0
  %1381 = vmatprep.subr.mxu0 0.0
  %1382 = vmatpush2.msra.mxu0 0.0
  %1383 = vmatprep.subr.mxu0 0.0
  %1384 = vmatpush2.msra.mxu0 0.0
  %1385 = vmatprep.subr.mxu0 0.0
  %1386 = vmatpush2.msra.mxu0 0.0
  %1387 = vmatprep.subr.mxu0 0.0
  %1388 = vmatpush2.msra.mxu0 0.0
  %1389 = vmatprep.subr.mxu0 0.0
  %1390 = vmatpush2.msra.mxu0 0.0
  %1391 = vmatprep.subr.mxu0 0.0
  %1392 = vmatpush2.msra.mxu0 0.0
  %1393 = vmatprep.subr.mxu0 0.0
  %1394 = vmatpush2.msra.mxu0 0.0
  %1395 = vmatprep.subr.mxu0 0.0
  %1396 = vmatpush2.msra.mxu0 0.0
  %1397 = vmatprep.subr.mxu0 0.0
  %1398 = vmatpush2.msra.mxu0 0.0
  %1399 = vmatprep.subr.mxu0 0.0
  %1400 = vmatpush2.msra.mxu0 0.0
  %1401 = vmatprep.subr.mxu0 0.0
  %1402 = vmatpush2.msra.mxu0 0.0
  %1403 = vmatprep.subr.mxu0 0.0
  %1404 = vmatpush2.msra.mxu0 0.0
  %1405 = vmatprep.subr.mxu0 0.0
  %1406 = vmatpush2.msra.mxu0 0.0
  %1407 = vmatprep.mubr.f32.mxu0 0.0
  %1408 = vmatmul.mubr.f32.gmra.mxu0 %v1341
  %v1409 = vpop.f32.mrf.mxu0
  %v1410 = vadd.f32 0.0, %v1409
  %v1411 = vpop.f32.mrf.mxu0
  %1412 = vdwg.mxu0
  %v1414 = vrot.slane %v1410, 6
  %v1416 = vadd.f32 %v1216, %v1414
  %v1417 = vtanh.pop %v1416
  %v1418 = vxor.u32 %v1416, 2147483648
  %v1419 = vmul.f32 %v1418, 1.442695
  %v1420 = vpow.pop %v1419
  %v1421 = vadd.f32 %v1420, 1.0
  %v1422 = vrcp.pop %v1421
  %v1423 = vmul.f32 1.0, %v1422
  %v1424 = vsel %vm1208, %v1417, %v1423
  %v1426 = vrot.slane %v1331, 6
  %v1428 = vmul.f32 %v1424, %v1426
  %1430 = vrot.lane.b32.xlu0 %v1424, 102
  %v1431 = vpop.permute.xlu0 %1430
  %v1433 = vmul.f32 %v1424, %v1431
  %1435 = vrot.lane.b32.xlu0 %v1433, 13
  %v1436 = vpop.permute.xlu0 %1435
  %v1438 = vadd.f32 %v1428, %v1436
  %v1439 = vtanh.pop %v1438
  %1441 = vrot.lane.b32.xlu0 %v1439, 26
  %v1442 = vpop.permute.xlu0 %1441
  %v1444 = vmul.f32 %v1424, %v1442
  %v1446 = vrot.slane %v1444, 2
  %1447 = vrot.lane.b32.xlu0 %v1446, 89
  %v1448 = vpop.permute.xlu0 %1447
  %v1449 = vsel %vm1234, %v1448, 0
  %1451 = vmatprep.subr.mxu0 0.0
  %1452 = vmatpush1.msra.mxu0 0.0
  %1453 = vmatprep.subr.mxu0 0.0
  %1454 = vmatpush1.msra.mxu0 0.0
  %1455 = vmatprep.subr.mxu0 0.0
  %1456 = vmatpush1.msra.mxu0 0.0
  %1457 = vmatprep.subr.mxu0 0.0
  %1458 = vmatpush1.msra.mxu0 0.0
  %1459 = vmatprep.subr.mxu0 0.0
  %1460 = vmatpush1.msra.mxu0 0.0
  %1461 = vmatprep.subr.mxu0 0.0
  %1462 = vmatpush1.msra.mxu0 0.0
  %1463 = vmatprep.subr.mxu0 0.0
  %1464 = vmatpush1.msra.mxu0 0.0
  %1465 = vmatprep.subr.mxu0 0.0
  %1466 = vmatpush1.msra.mxu0 0.0
  %1467 = vmatprep.subr.mxu0 0.0
  %1468 = vmatpush1.msra.mxu0 0.0
  %1469 = vmatprep.subr.mxu0 0.0
  %1470 = vmatpush1.msra.mxu0 0.0
  %1471 = vmatprep.subr.mxu0 0.0
  %1472 = vmatpush1.msra.mxu0 0.0
  %1473 = vmatprep.subr.mxu0 0.0
  %1474 = vmatpush1.msra.mxu0 0.0
  %1475 = vmatprep.subr.mxu0 0.0
  %1476 = vmatpush1.msra.mxu0 0.0
  %1477 = vmatprep.subr.mxu0 0.0
  %1478 = vmatpush1.msra.mxu0 0.0
  %1479 = vmatprep.subr.mxu0 0.0
  %1480 = vmatpush1.msra.mxu0 %v1240
  %1481 = vmatprep.subr.mxu0 0.0
  %1482 = vmatpush1.msra.mxu0 %v1232
  %1483 = vmatprep.subr.mxu0 0.0
  %1484 = vmatpush2.msra.mxu0 0.0
  %1485 = vmatprep.subr.mxu0 0.0
  %1486 = vmatpush2.msra.mxu0 0.0
  %1487 = vmatprep.subr.mxu0 0.0
  %1488 = vmatpush2.msra.mxu0 0.0
  %1489 = vmatprep.subr.mxu0 0.0
  %1490 = vmatpush2.msra.mxu0 0.0
  %1491 = vmatprep.subr.mxu0 0.0
  %1492 = vmatpush2.msra.mxu0 0.0
  %1493 = vmatprep.subr.mxu0 0.0
  %1494 = vmatpush2.msra.mxu0 0.0
  %1495 = vmatprep.subr.mxu0 0.0
  %1496 = vmatpush2.msra.mxu0 0.0
  %1497 = vmatprep.subr.mxu0 0.0
  %1498 = vmatpush2.msra.mxu0 0.0
  %1499 = vmatprep.subr.mxu0 0.0
  %1500 = vmatpush2.msra.mxu0 0.0
  %1501 = vmatprep.subr.mxu0 0.0
  %1502 = vmatpush2.msra.mxu0 0.0
  %1503 = vmatprep.subr.mxu0 0.0
  %1504 = vmatpush2.msra.mxu0 0.0
  %1505 = vmatprep.subr.mxu0 0.0
  %1506 = vmatpush2.msra.mxu0 0.0
  %1507 = vmatprep.subr.mxu0 0.0
  %1508 = vmatpush2.msra.mxu0 0.0
  %1509 = vmatprep.subr.mxu0 0.0
  %1510 = vmatpush2.msra.mxu0 0.0
  %1511 = vmatprep.subr.mxu0 0.0
  %1512 = vmatpush2.msra.mxu0 0.0
  %1513 = vmatprep.subr.mxu0 0.0
  %1514 = vmatpush2.msra.mxu0 0.0
  %1515 = vmatprep.mubr.f32.mxu0 0.0
  %1516 = vmatmul.mubr.f32.gmra.mxu0 %v1449
  %v1517 = vpop.f32.mrf.mxu0
  %v1518 = vadd.f32 0.0, %v1517
  %v1519 = vpop.f32.mrf.mxu0
  %1520 = vdwg.mxu0
  %v1522 = vrot.slane %v1518, 4
  %v1524 = vadd.f32 %v1216, %v1522
  %v1525 = vtanh.pop %v1524
  %v1526 = vxor.u32 %v1524, 2147483648
  %v1527 = vmul.f32 %v1526, 1.442695
  %v1528 = vpow.pop %v1527
  %v1529 = vadd.f32 %v1528, 1.0
  %v1530 = vrcp.pop %v1529
  %v1531 = vmul.f32 1.0, %v1530
  %v1532 = vsel %vm1208, %v1525, %v1531
  %v1534 = vrot.slane %v1438, 6
  %v1536 = vmul.f32 %v1532, %v1534
  %1538 = vrot.lane.b32.xlu0 %v1532, 102
  %v1539 = vpop.permute.xlu0 %1538
  %v1541 = vmul.f32 %v1532, %v1539
  %1543 = vrot.lane.b32.xlu0 %v1541, 13
  %v1544 = vpop.permute.xlu0 %1543
  %v1546 = vadd.f32 %v1536, %v1544
  %v1547 = vtanh.pop %v1546
  %1549 = vrot.lane.b32.xlu0 %v1547, 26
  %v1550 = vpop.permute.xlu0 %1549
  %v1552 = vmul.f32 %v1532, %v1550
  %v1554 = vrot.slane %v1552, 4
  %1555 = vrot.lane.b32.xlu0 %v1554, 89
  %v1556 = vpop.permute.xlu0 %1555
  %v1557 = vsel %vm1234, %v1556, 0
  %1559 = vmatprep.subr.mxu0 0.0
  %1560 = vmatpush1.msra.mxu0 0.0
  %1561 = vmatprep.subr.mxu0 0.0
  %1562 = vmatpush1.msra.mxu0 0.0
  %1563 = vmatprep.subr.mxu0 0.0
  %1564 = vmatpush1.msra.mxu0 0.0
  %1565 = vmatprep.subr.mxu0 0.0
  %1566 = vmatpush1.msra.mxu0 0.0
  %1567 = vmatprep.subr.mxu0 0.0
  %1568 = vmatpush1.msra.mxu0 0.0
  %1569 = vmatprep.subr.mxu0 0.0
  %1570 = vmatpush1.msra.mxu0 0.0
  %1571 = vmatprep.subr.mxu0 0.0
  %1572 = vmatpush1.msra.mxu0 0.0
  %1573 = vmatprep.subr.mxu0 0.0
  %1574 = vmatpush1.msra.mxu0 0.0
  %1575 = vmatprep.subr.mxu0 0.0
  %1576 = vmatpush1.msra.mxu0 0.0
  %1577 = vmatprep.subr.mxu0 0.0
  %1578 = vmatpush1.msra.mxu0 0.0
  %1579 = vmatprep.subr.mxu0 0.0
  %1580 = vmatpush1.msra.mxu0 0.0
  %1581 = vmatprep.subr.mxu0 0.0
  %1582 = vmatpush1.msra.mxu0 0.0
  %1583 = vmatprep.subr.mxu0 0.0
  %1584 = vmatpush1.msra.mxu0 0.0
  %1585 = vmatprep.subr.mxu0 0.0
  %1586 = vmatpush1.msra.mxu0 0.0
  %1587 = vmatprep.subr.mxu0 0.0
  %1588 = vmatpush1.msra.mxu0 %v1240
  %1589 = vmatprep.subr.mxu0 0.0
  %1590 = vmatpush1.msra.mxu0 %v1232
  %1591 = vmatprep.subr.mxu0 0.0
  %1592 = vmatpush2.msra.mxu0 0.0
  %1593 = vmatprep.subr.mxu0 0.0
  %1594 = vmatpush2.msra.mxu0 0.0
  %1595 = vmatprep.subr.mxu0 0.0
  %1596 = vmatpush2.msra.mxu0 0.0
  %1597 = vmatprep.subr.mxu0 0.0
  %1598 = vmatpush2.msra.mxu0 0.0
  %1599 = vmatprep.subr.mxu0 0.0
  %1600 = vmatpush2.msra.mxu0 0.0
  %1601 = vmatprep.subr.mxu0 0.0
  %1602 = vmatpush2.msra.mxu0 0.0
  %1603 = vmatprep.subr.mxu0 0.0
  %1604 = vmatpush2.msra.mxu0 0.0
  %1605 = vmatprep.subr.mxu0 0.0
  %1606 = vmatpush2.msra.mxu0 0.0
  %1607 = vmatprep.subr.mxu0 0.0
  %1608 = vmatpush2.msra.mxu0 0.0
  %1609 = vmatprep.subr.mxu0 0.0
  %1610 = vmatpush2.msra.mxu0 0.0
  %1611 = vmatprep.subr.mxu0 0.0
  %1612 = vmatpush2.msra.mxu0 0.0
  %1613 = vmatprep.subr.mxu0 0.0
  %1614 = vmatpush2.msra.mxu0 0.0
  %1615 = vmatprep.subr.mxu0 0.0
  %1616 = vmatpush2.msra.mxu0 0.0
  %1617 = vmatprep.subr.mxu0 0.0
  %1618 = vmatpush2.msra.mxu0 0.0
  %1619 = vmatprep.subr.mxu0 0.0
  %1620 = vmatpush2.msra.mxu0 0.0
  %1621 = vmatprep.subr.mxu0 0.0
  %1622 = vmatpush2.msra.mxu0 0.0
  %1623 = vmatprep.mubr.f32.mxu0 0.0
  %1624 = vmatmul.mubr.f32.gmra.mxu0 %v1557
  %v1625 = vpop.f32.mrf.mxu0
  %v1626 = vadd.f32 0.0, %v1625
  %v1627 = vpop.f32.mrf.mxu0
  %1628 = vdwg.mxu0
  %v1630 = vrot.slane %v1626, 2
  %v1632 = vadd.f32 %v1216, %v1630
  %v1633 = vtanh.pop %v1632
  %v1634 = vxor.u32 %v1632, 2147483648
  %v1635 = vmul.f32 %v1634, 1.442695
  %v1636 = vpow.pop %v1635
  %v1637 = vadd.f32 %v1636, 1.0
  %v1638 = vrcp.pop %v1637
  %v1639 = vmul.f32 1.0, %v1638
  %v1640 = vsel %vm1208, %v1633, %v1639
  %v1642 = vrot.slane %v1546, 6
  %v1644 = vmul.f32 %v1640, %v1642
  %1646 = vrot.lane.b32.xlu0 %v1640, 102
  %v1647 = vpop.permute.xlu0 %1646
  %v1649 = vmul.f32 %v1640, %v1647
  %1651 = vrot.lane.b32.xlu0 %v1649, 13
  %v1652 = vpop.permute.xlu0 %1651
  %v1654 = vadd.f32 %v1644, %v1652
  %v1655 = vtanh.pop %v1654
  %1657 = vrot.lane.b32.xlu0 %v1655, 26
  %v1658 = vpop.permute.xlu0 %1657
  %v1660 = vmul.f32 %v1640, %v1658
  %v1662 = vrot.slane %v1660, 6
  %1663 = vrot.lane.b32.xlu0 %v1662, 89
  %v1664 = vpop.permute.xlu0 %1663
  %v1665 = vsel %vm1234, %v1664, 0
  %1667 = vmatprep.subr.mxu0 0.0
  %1668 = vmatpush1.msra.mxu0 0.0
  %1669 = vmatprep.subr.mxu0 0.0
  %1670 = vmatpush1.msra.mxu0 0.0
  %1671 = vmatprep.subr.mxu0 0.0
  %1672 = vmatpush1.msra.mxu0 0.0
  %1673 = vmatprep.subr.mxu0 0.0
  %1674 = vmatpush1.msra.mxu0 0.0
  %1675 = vmatprep.subr.mxu0 0.0
  %1676 = vmatpush1.msra.mxu0 0.0
  %1677 = vmatprep.subr.mxu0 0.0
  %1678 = vmatpush1.msra.mxu0 0.0
  %1679 = vmatprep.subr.mxu0 0.0
  %1680 = vmatpush1.msra.mxu0 0.0
  %1681 = vmatprep.subr.mxu0 0.0
  %1682 = vmatpush1.msra.mxu0 0.0
  %1683 = vmatprep.subr.mxu0 0.0
  %1684 = vmatpush1.msra.mxu0 0.0
  %1685 = vmatprep.subr.mxu0 0.0
  %1686 = vmatpush1.msra.mxu0 0.0
  %1687 = vmatprep.subr.mxu0 0.0
  %1688 = vmatpush1.msra.mxu0 0.0
  %1689 = vmatprep.subr.mxu0 0.0
  %1690 = vmatpush1.msra.mxu0 0.0
  %1691 = vmatprep.subr.mxu0 0.0
  %1692 = vmatpush1.msra.mxu0 0.0
  %1693 = vmatprep.subr.mxu0 0.0
  %1694 = vmatpush1.msra.mxu0 0.0
  %1695 = vmatprep.subr.mxu0 0.0
  %1696 = vmatpush1.msra.mxu0 %v1240
  %1697 = vmatprep.subr.mxu0 0.0
  %1698 = vmatpush1.msra.mxu0 %v1232
  %1699 = vmatprep.subr.mxu0 0.0
  %1700 = vmatpush2.msra.mxu0 0.0
  %1701 = vmatprep.subr.mxu0 0.0
  %1702 = vmatpush2.msra.mxu0 0.0
  %1703 = vmatprep.subr.mxu0 0.0
  %1704 = vmatpush2.msra.mxu0 0.0
  %1705 = vmatprep.subr.mxu0 0.0
  %1706 = vmatpush2.msra.mxu0 0.0
  %1707 = vmatprep.subr.mxu0 0.0
  %1708 = vmatpush2.msra.mxu0 0.0
  %1709 = vmatprep.subr.mxu0 0.0
  %1710 = vmatpush2.msra.mxu0 0.0
  %1711 = vmatprep.subr.mxu0 0.0
  %1712 = vmatpush2.msra.mxu0 0.0
  %1713 = vmatprep.subr.mxu0 0.0
  %1714 = vmatpush2.msra.mxu0 0.0
  %1715 = vmatprep.subr.mxu0 0.0
  %1716 = vmatpush2.msra.mxu0 0.0
  %1717 = vmatprep.subr.mxu0 0.0
  %1718 = vmatpush2.msra.mxu0 0.0
  %1719 = vmatprep.subr.mxu0 0.0
  %1720 = vmatpush2.msra.mxu0 0.0
  %1721 = vmatprep.subr.mxu0 0.0
  %1722 = vmatpush2.msra.mxu0 0.0
  %1723 = vmatprep.subr.mxu0 0.0
  %1724 = vmatpush2.msra.mxu0 0.0
  %1725 = vmatprep.subr.mxu0 0.0
  %1726 = vmatpush2.msra.mxu0 0.0
  %1727 = vmatprep.subr.mxu0 0.0
  %1728 = vmatpush2.msra.mxu0 0.0
  %1729 = vmatprep.subr.mxu0 0.0
  %1730 = vmatpush2.msra.mxu0 0.0
  %1731 = vmatprep.mubr.f32.mxu0 0.0
  %1732 = vmatmul.mubr.f32.gmra.mxu0 %v1665
  %v1733 = vpop.f32.mrf.mxu0
  %v1734 = vadd.f32 0.0, %v1733
  %v1735 = vpop.f32.mrf.mxu0
  %1736 = vdwg.mxu0
  %v1737 = vadd.f32 %v1217, %v1734
  %v1738 = vtanh.pop %v1737
  %v1739 = vxor.u32 %v1737, 2147483648
  %v1740 = vmul.f32 %v1739, 1.442695
  %v1741 = vpow.pop %v1740
  %v1742 = vadd.f32 %v1741, 1.0
  %v1743 = vrcp.pop %v1742
  %v1744 = vmul.f32 1.0, %v1743
  %v1745 = vsel %vm1208, %v1738, %v1744
  %v1747 = vrot.slane %v1654, 6
  %v1749 = vmul.f32 %v1745, %v1747
  %1751 = vrot.lane.b32.xlu0 %v1745, 102
  %v1752 = vpop.permute.xlu0 %1751
  %v1754 = vmul.f32 %v1745, %v1752
  %1756 = vrot.lane.b32.xlu0 %v1754, 13
  %v1757 = vpop.permute.xlu0 %1756
  %v1759 = vadd.f32 %v1749, %v1757
  %v1760 = vtanh.pop %v1759
  %1762 = vrot.lane.b32.xlu0 %v1760, 26
  %v1763 = vpop.permute.xlu0 %1762
  %v1765 = vmul.f32 %v1745, %v1763
  %1767 = vrot.lane.b32.xlu0 %v1765, 89
  %v1768 = vpop.permute.xlu0 %1767
  %v1769 = vsel %vm1234, %v1768, 0
  %1771 = vmatprep.subr.mxu0 0.0
  %1772 = vmatpush1.msra.mxu0 0.0
  %1773 = vmatprep.subr.mxu0 0.0
  %1774 = vmatpush1.msra.mxu0 0.0
  %1775 = vmatprep.subr.mxu0 0.0
  %1776 = vmatpush1.msra.mxu0 0.0
  %1777 = vmatprep.subr.mxu0 0.0
  %1778 = vmatpush1.msra.mxu0 0.0
  %1779 = vmatprep.subr.mxu0 0.0
  %1780 = vmatpush1.msra.mxu0 0.0
  %1781 = vmatprep.subr.mxu0 0.0
  %1782 = vmatpush1.msra.mxu0 0.0
  %1783 = vmatprep.subr.mxu0 0.0
  %1784 = vmatpush1.msra.mxu0 0.0
  %1785 = vmatprep.subr.mxu0 0.0
  %1786 = vmatpush1.msra.mxu0 0.0
  %1787 = vmatprep.subr.mxu0 0.0
  %1788 = vmatpush1.msra.mxu0 0.0
  %1789 = vmatprep.subr.mxu0 0.0
  %1790 = vmatpush1.msra.mxu0 0.0
  %1791 = vmatprep.subr.mxu0 0.0
  %1792 = vmatpush1.msra.mxu0 0.0
  %1793 = vmatprep.subr.mxu0 0.0
  %1794 = vmatpush1.msra.mxu0 0.0
  %1795 = vmatprep.subr.mxu0 0.0
  %1796 = vmatpush1.msra.mxu0 0.0
  %1797 = vmatprep.subr.mxu0 0.0
  %1798 = vmatpush1.msra.mxu0 0.0
  %1799 = vmatprep.subr.mxu0 0.0
  %1800 = vmatpush1.msra.mxu0 %v1240
  %1801 = vmatprep.subr.mxu0 0.0
  %1802 = vmatpush1.msra.mxu0 %v1232
  %1803 = vmatprep.subr.mxu0 0.0
  %1804 = vmatpush2.msra.mxu0 0.0
  %1805 = vmatprep.subr.mxu0 0.0
  %1806 = vmatpush2.msra.mxu0 0.0
  %1807 = vmatprep.subr.mxu0 0.0
  %1808 = vmatpush2.msra.mxu0 0.0
  %1809 = vmatprep.subr.mxu0 0.0
  %1810 = vmatpush2.msra.mxu0 0.0
  %1811 = vmatprep.subr.mxu0 0.0
  %1812 = vmatpush2.msra.mxu0 0.0
  %1813 = vmatprep.subr.mxu0 0.0
  %1814 = vmatpush2.msra.mxu0 0.0
  %1815 = vmatprep.subr.mxu0 0.0
  %1816 = vmatpush2.msra.mxu0 0.0
  %1817 = vmatprep.subr.mxu0 0.0
  %1818 = vmatpush2.msra.mxu0 0.0
  %1819 = vmatprep.subr.mxu0 0.0
  %1820 = vmatpush2.msra.mxu0 0.0
  %1821 = vmatprep.subr.mxu0 0.0
  %1822 = vmatpush2.msra.mxu0 0.0
  %1823 = vmatprep.subr.mxu0 0.0
  %1824 = vmatpush2.msra.mxu0 0.0
  %1825 = vmatprep.subr.mxu0 0.0
  %1826 = vmatpush2.msra.mxu0 0.0
  %1827 = vmatprep.subr.mxu0 0.0
  %1828 = vmatpush2.msra.mxu0 0.0
  %1829 = vmatprep.subr.mxu0 0.0
  %1830 = vmatpush2.msra.mxu0 0.0
  %1831 = vmatprep.subr.mxu0 0.0
  %1832 = vmatpush2.msra.mxu0 0.0
  %1833 = vmatprep.subr.mxu0 0.0
  %1834 = vmatpush2.msra.mxu0 0.0
  %1835 = vmatprep.mubr.f32.mxu0 0.0
  %1836 = vmatmul.mubr.f32.gmra.mxu0 %v1769
  %v1837 = vpop.f32.mrf.mxu0
  %v1838 = vadd.f32 0.0, %v1837
  %v1839 = vpop.f32.mrf.mxu0
  %1840 = vdwg.mxu0
  %v1842 = vrot.slane %v1838, 6
  %v1844 = vadd.f32 %v1217, %v1842
  %v1845 = vtanh.pop %v1844
  %v1846 = vxor.u32 %v1844, 2147483648
  %v1847 = vmul.f32 %v1846, 1.442695
  %v1848 = vpow.pop %v1847
  %v1849 = vadd.f32 %v1848, 1.0
  %v1850 = vrcp.pop %v1849
  %v1851 = vmul.f32 1.0, %v1850
  %v1852 = vsel %vm1208, %v1845, %v1851
  %v1854 = vrot.slane %v1759, 6
  %v1856 = vmul.f32 %v1852, %v1854
  %1858 = vrot.lane.b32.xlu0 %v1852, 102
  %v1859 = vpop.permute.xlu0 %1858
  %v1861 = vmul.f32 %v1852, %v1859
  %1863 = vrot.lane.b32.xlu0 %v1861, 13
  %v1864 = vpop.permute.xlu0 %1863
  %v1866 = vadd.f32 %v1856, %v1864
  %v1867 = vtanh.pop %v1866
  %1869 = vrot.lane.b32.xlu0 %v1867, 26
  %v1870 = vpop.permute.xlu0 %1869
  %v1872 = vmul.f32 %v1852, %v1870
  %v1874 = vrot.slane %v1872, 2
  %1875 = vrot.lane.b32.xlu0 %v1874, 89
  %v1876 = vpop.permute.xlu0 %1875
  %v1877 = vsel %vm1234, %v1876, 0
  %1879 = vmatprep.subr.mxu0 0.0
  %1880 = vmatpush1.msra.mxu0 0.0
  %1881 = vmatprep.subr.mxu0 0.0
  %1882 = vmatpush1.msra.mxu0 0.0
  %1883 = vmatprep.subr.mxu0 0.0
  %1884 = vmatpush1.msra.mxu0 0.0
  %1885 = vmatprep.subr.mxu0 0.0
  %1886 = vmatpush1.msra.mxu0 0.0
  %1887 = vmatprep.subr.mxu0 0.0
  %1888 = vmatpush1.msra.mxu0 0.0
  %1889 = vmatprep.subr.mxu0 0.0
  %1890 = vmatpush1.msra.mxu0 0.0
  %1891 = vmatprep.subr.mxu0 0.0
  %1892 = vmatpush1.msra.mxu0 0.0
  %1893 = vmatprep.subr.mxu0 0.0
  %1894 = vmatpush1.msra.mxu0 0.0
  %1895 = vmatprep.subr.mxu0 0.0
  %1896 = vmatpush1.msra.mxu0 0.0
  %1897 = vmatprep.subr.mxu0 0.0
  %1898 = vmatpush1.msra.mxu0 0.0
  %1899 = vmatprep.subr.mxu0 0.0
  %1900 = vmatpush1.msra.mxu0 0.0
  %1901 = vmatprep.subr.mxu0 0.0
  %1902 = vmatpush1.msra.mxu0 0.0
  %1903 = vmatprep.subr.mxu0 0.0
  %1904 = vmatpush1.msra.mxu0 0.0
  %1905 = vmatprep.subr.mxu0 0.0
  %1906 = vmatpush1.msra.mxu0 0.0
  %1907 = vmatprep.subr.mxu0 0.0
  %1908 = vmatpush1.msra.mxu0 %v1240
  %1909 = vmatprep.subr.mxu0 0.0
  %1910 = vmatpush1.msra.mxu0 %v1232
  %1911 = vmatprep.subr.mxu0 0.0
  %1912 = vmatpush2.msra.mxu0 0.0
  %1913 = vmatprep.subr.mxu0 0.0
  %1914 = vmatpush2.msra.mxu0 0.0
  %1915 = vmatprep.subr.mxu0 0.0
  %1916 = vmatpush2.msra.mxu0 0.0
  %1917 = vmatprep.subr.mxu0 0.0
  %1918 = vmatpush2.msra.mxu0 0.0
  %1919 = vmatprep.subr.mxu0 0.0
  %1920 = vmatpush2.msra.mxu0 0.0
  %1921 = vmatprep.subr.mxu0 0.0
  %1922 = vmatpush2.msra.mxu0 0.0
  %1923 = vmatprep.subr.mxu0 0.0
  %1924 = vmatpush2.msra.mxu0 0.0
  %1925 = vmatprep.subr.mxu0 0.0
  %1926 = vmatpush2.msra.mxu0 0.0
  %1927 = vmatprep.subr.mxu0 0.0
  %1928 = vmatpush2.msra.mxu0 0.0
  %1929 = vmatprep.subr.mxu0 0.0
  %1930 = vmatpush2.msra.mxu0 0.0
  %1931 = vmatprep.subr.mxu0 0.0
  %1932 = vmatpush2.msra.mxu0 0.0
  %1933 = vmatprep.subr.mxu0 0.0
  %1934 = vmatpush2.msra.mxu0 0.0
  %1935 = vmatprep.subr.mxu0 0.0
  %1936 = vmatpush2.msra.mxu0 0.0
  %1937 = vmatprep.subr.mxu0 0.0
  %1938 = vmatpush2.msra.mxu0 0.0
  %1939 = vmatprep.subr.mxu0 0.0
  %1940 = vmatpush2.msra.mxu0 0.0
  %1941 = vmatprep.subr.mxu0 0.0
  %1942 = vmatpush2.msra.mxu0 0.0
  %1943 = vmatprep.mubr.f32.mxu0 0.0
  %1944 = vmatmul.mubr.f32.gmra.mxu0 %v1877
  %v1945 = vpop.f32.mrf.mxu0
  %v1946 = vadd.f32 0.0, %v1945
  %v1947 = vpop.f32.mrf.mxu0
  %1948 = vdwg.mxu0
  %v1950 = vrot.slane %v1946, 4
  %v1952 = vadd.f32 %v1217, %v1950
  %v1953 = vtanh.pop %v1952
  %v1954 = vxor.u32 %v1952, 2147483648
  %v1955 = vmul.f32 %v1954, 1.442695
  %v1956 = vpow.pop %v1955
  %v1957 = vadd.f32 %v1956, 1.0
  %v1958 = vrcp.pop %v1957
  %v1959 = vmul.f32 1.0, %v1958
  %v1960 = vsel %vm1208, %v1953, %v1959
  %v1962 = vrot.slane %v1866, 6
  %v1964 = vmul.f32 %v1960, %v1962
  %1966 = vrot.lane.b32.xlu0 %v1960, 102
  %v1967 = vpop.permute.xlu0 %1966
  %v1969 = vmul.f32 %v1960, %v1967
  %1971 = vrot.lane.b32.xlu0 %v1969, 13
  %v1972 = vpop.permute.xlu0 %1971
  %v1974 = vadd.f32 %v1964, %v1972
  %v1975 = vtanh.pop %v1974
  %1977 = vrot.lane.b32.xlu0 %v1975, 26
  %v1978 = vpop.permute.xlu0 %1977
  %v1980 = vmul.f32 %v1960, %v1978
  %v1982 = vrot.slane %v1980, 4
  %1983 = vrot.lane.b32.xlu0 %v1982, 89
  %v1984 = vpop.permute.xlu0 %1983
  %v1985 = vsel %vm1234, %v1984, 0
  %1987 = vmatprep.subr.mxu0 0.0
  %1988 = vmatpush1.msra.mxu0 0.0
  %1989 = vmatprep.subr.mxu0 0.0
  %1990 = vmatpush1.msra.mxu0 0.0
  %1991 = vmatprep.subr.mxu0 0.0
  %1992 = vmatpush1.msra.mxu0 0.0
  %1993 = vmatprep.subr.mxu0 0.0
  %1994 = vmatpush1.msra.mxu0 0.0
  %1995 = vmatprep.subr.mxu0 0.0
  %1996 = vmatpush1.msra.mxu0 0.0
  %1997 = vmatprep.subr.mxu0 0.0
  %1998 = vmatpush1.msra.mxu0 0.0
  %1999 = vmatprep.subr.mxu0 0.0
  %2000 = vmatpush1.msra.mxu0 0.0
  %2001 = vmatprep.subr.mxu0 0.0
  %2002 = vmatpush1.msra.mxu0 0.0
  %2003 = vmatprep.subr.mxu0 0.0
  %2004 = vmatpush1.msra.mxu0 0.0
  %2005 = vmatprep.subr.mxu0 0.0
  %2006 = vmatpush1.msra.mxu0 0.0
  %2007 = vmatprep.subr.mxu0 0.0
  %2008 = vmatpush1.msra.mxu0 0.0
  %2009 = vmatprep.subr.mxu0 0.0
  %2010 = vmatpush1.msra.mxu0 0.0
  %2011 = vmatprep.subr.mxu0 0.0
  %2012 = vmatpush1.msra.mxu0 0.0
  %2013 = vmatprep.subr.mxu0 0.0
  %2014 = vmatpush1.msra.mxu0 0.0
  %2015 = vmatprep.subr.mxu0 0.0
  %2016 = vmatpush1.msra.mxu0 %v1240
  %2017 = vmatprep.subr.mxu0 0.0
  %2018 = vmatpush1.msra.mxu0 %v1232
  %2019 = vmatprep.subr.mxu0 0.0
  %2020 = vmatpush2.msra.mxu0 0.0
  %2021 = vmatprep.subr.mxu0 0.0
  %2022 = vmatpush2.msra.mxu0 0.0
  %2023 = vmatprep.subr.mxu0 0.0
  %2024 = vmatpush2.msra.mxu0 0.0
  %2025 = vmatprep.subr.mxu0 0.0
  %2026 = vmatpush2.msra.mxu0 0.0
  %2027 = vmatprep.subr.mxu0 0.0
  %2028 = vmatpush2.msra.mxu0 0.0
  %2029 = vmatprep.subr.mxu0 0.0
  %2030 = vmatpush2.msra.mxu0 0.0
  %2031 = vmatprep.subr.mxu0 0.0
  %2032 = vmatpush2.msra.mxu0 0.0
  %2033 = vmatprep.subr.mxu0 0.0
  %2034 = vmatpush2.msra.mxu0 0.0
  %2035 = vmatprep.subr.mxu0 0.0
  %2036 = vmatpush2.msra.mxu0 0.0
  %2037 = vmatprep.subr.mxu0 0.0
  %2038 = vmatpush2.msra.mxu0 0.0
  %2039 = vmatprep.subr.mxu0 0.0
  %2040 = vmatpush2.msra.mxu0 0.0
  %2041 = vmatprep.subr.mxu0 0.0
  %2042 = vmatpush2.msra.mxu0 0.0
  %2043 = vmatprep.subr.mxu0 0.0
  %2044 = vmatpush2.msra.mxu0 0.0
  %2045 = vmatprep.subr.mxu0 0.0
  %2046 = vmatpush2.msra.mxu0 0.0
  %2047 = vmatprep.subr.mxu0 0.0
  %2048 = vmatpush2.msra.mxu0 0.0
  %2049 = vmatprep.subr.mxu0 0.0
  %2050 = vmatpush2.msra.mxu0 0.0
  %2051 = vmatprep.mubr.f32.mxu0 0.0
  %2052 = vmatmul.mubr.f32.gmra.mxu0 %v1985
  %v2053 = vpop.f32.mrf.mxu0
  %v2054 = vadd.f32 0.0, %v2053
  %v2055 = vpop.f32.mrf.mxu0
  %2056 = vdwg.mxu0
  %v2058 = vrot.slane %v2054, 2
  %v2060 = vadd.f32 %v1217, %v2058
  %v2061 = vtanh.pop %v2060
  %v2062 = vxor.u32 %v2060, 2147483648
  %v2063 = vmul.f32 %v2062, 1.442695
  %v2064 = vpow.pop %v2063
  %v2065 = vadd.f32 %v2064, 1.0
  %v2066 = vrcp.pop %v2065
  %v2067 = vmul.f32 1.0, %v2066
  %v2068 = vsel %vm1208, %v2061, %v2067
  %v2070 = vrot.slane %v1974, 6
  %v2072 = vmul.f32 %v2068, %v2070
  %2074 = vrot.lane.b32.xlu0 %v2068, 102
  %v2075 = vpop.permute.xlu0 %2074
  %v2077 = vmul.f32 %v2068, %v2075
  %2079 = vrot.lane.b32.xlu0 %v2077, 13
  %v2080 = vpop.permute.xlu0 %2079
  %v2082 = vadd.f32 %v2072, %v2080
  %v2083 = vtanh.pop %v2082
  %2085 = vrot.lane.b32.xlu0 %v2083, 26
  %v2086 = vpop.permute.xlu0 %2085
  %v2088 = vmul.f32 %v2068, %v2086
  %v2090 = vrot.slane %v2088, 6
  %2091 = vrot.lane.b32.xlu0 %v2090, 89
  %v2092 = vpop.permute.xlu0 %2091
  %v2093 = vsel %vm1234, %v2092, 0
  %2095 = vmatprep.subr.mxu0 0.0
  %2096 = vmatpush1.msra.mxu0 0.0
  %2097 = vmatprep.subr.mxu0 0.0
  %2098 = vmatpush1.msra.mxu0 0.0
  %2099 = vmatprep.subr.mxu0 0.0
  %2100 = vmatpush1.msra.mxu0 0.0
  %2101 = vmatprep.subr.mxu0 0.0
  %2102 = vmatpush1.msra.mxu0 0.0
  %2103 = vmatprep.subr.mxu0 0.0
  %2104 = vmatpush1.msra.mxu0 0.0
  %2105 = vmatprep.subr.mxu0 0.0
  %2106 = vmatpush1.msra.mxu0 0.0
  %2107 = vmatprep.subr.mxu0 0.0
  %2108 = vmatpush1.msra.mxu0 0.0
  %2109 = vmatprep.subr.mxu0 0.0
  %2110 = vmatpush1.msra.mxu0 0.0
  %2111 = vmatprep.subr.mxu0 0.0
  %2112 = vmatpush1.msra.mxu0 0.0
  %2113 = vmatprep.subr.mxu0 0.0
  %2114 = vmatpush1.msra.mxu0 0.0
  %2115 = vmatprep.subr.mxu0 0.0
  %2116 = vmatpush1.msra.mxu0 0.0
  %2117 = vmatprep.subr.mxu0 0.0
  %2118 = vmatpush1.msra.mxu0 0.0
  %2119 = vmatprep.subr.mxu0 0.0
  %2120 = vmatpush1.msra.mxu0 0.0
  %2121 = vmatprep.subr.mxu0 0.0
  %2122 = vmatpush1.msra.mxu0 0.0
  %2123 = vmatprep.subr.mxu0 0.0
  %2124 = vmatpush1.msra.mxu0 %v1240
  %2125 = vmatprep.subr.mxu0 0.0
  %2126 = vmatpush1.msra.mxu0 %v1232
  %2127 = vmatprep.subr.mxu0 0.0
  %2128 = vmatpush2.msra.mxu0 0.0
  %2129 = vmatprep.subr.mxu0 0.0
  %2130 = vmatpush2.msra.mxu0 0.0
  %2131 = vmatprep.subr.mxu0 0.0
  %2132 = vmatpush2.msra.mxu0 0.0
  %2133 = vmatprep.subr.mxu0 0.0
  %2134 = vmatpush2.msra.mxu0 0.0
  %2135 = vmatprep.subr.mxu0 0.0
  %2136 = vmatpush2.msra.mxu0 0.0
  %2137 = vmatprep.subr.mxu0 0.0
  %2138 = vmatpush2.msra.mxu0 0.0
  %2139 = vmatprep.subr.mxu0 0.0
  %2140 = vmatpush2.msra.mxu0 0.0
  %2141 = vmatprep.subr.mxu0 0.0
  %2142 = vmatpush2.msra.mxu0 0.0
  %2143 = vmatprep.subr.mxu0 0.0
  %2144 = vmatpush2.msra.mxu0 0.0
  %2145 = vmatprep.subr.mxu0 0.0
  %2146 = vmatpush2.msra.mxu0 0.0
  %2147 = vmatprep.subr.mxu0 0.0
  %2148 = vmatpush2.msra.mxu0 0.0
  %2149 = vmatprep.subr.mxu0 0.0
  %2150 = vmatpush2.msra.mxu0 0.0
  %2151 = vmatprep.subr.mxu0 0.0
  %2152 = vmatpush2.msra.mxu0 0.0
  %2153 = vmatprep.subr.mxu0 0.0
  %2154 = vmatpush2.msra.mxu0 0.0
  %2155 = vmatprep.subr.mxu0 0.0
  %2156 = vmatpush2.msra.mxu0 0.0
  %2157 = vmatprep.subr.mxu0 0.0
  %2158 = vmatpush2.msra.mxu0 0.0
  %2159 = vmatprep.mubr.f32.mxu0 0.0
  %2160 = vmatmul.mubr.f32.gmra.mxu0 %v2093
  %v2161 = vpop.f32.mrf.mxu0
  %v2162 = vadd.f32 0.0, %v2161
  %v2163 = vpop.f32.mrf.mxu0
  %2164 = vdwg.mxu0
  %v2165 = vadd.f32 %v1218, %v2162
  %v2166 = vtanh.pop %v2165
  %v2167 = vxor.u32 %v2165, 2147483648
  %v2168 = vmul.f32 %v2167, 1.442695
  %v2169 = vpow.pop %v2168
  %v2170 = vadd.f32 %v2169, 1.0
  %v2171 = vrcp.pop %v2170
  %v2172 = vmul.f32 1.0, %v2171
  %v2173 = vsel %vm1208, %v2166, %v2172
  %v2175 = vrot.slane %v2082, 6
  %v2177 = vmul.f32 %v2173, %v2175
  %2179 = vrot.lane.b32.xlu0 %v2173, 102
  %v2180 = vpop.permute.xlu0 %2179
  %v2182 = vmul.f32 %v2173, %v2180
  %2184 = vrot.lane.b32.xlu0 %v2182, 13
  %v2185 = vpop.permute.xlu0 %2184
  %v2187 = vadd.f32 %v2177, %v2185
  %v2188 = vtanh.pop %v2187
  %2190 = vrot.lane.b32.xlu0 %v2188, 26
  %v2191 = vpop.permute.xlu0 %2190
  %v2193 = vmul.f32 %v2173, %v2191
  %v2194 = vsel %vm880, %v1337, %v1444
  %vm2195 = vcmask 1043456
  %v2196 = vsel %vm2195, %v2194, %v1552
  %vm2197 = vcmask 1045504
  %v2198 = vsel %vm2197, %v2196, %v1660
  %v2199 = vsel %vm880, %v1765, %v1872
  %v2200 = vsel %vm2195, %v2199, %v1980
  %v2201 = vsel %vm2197, %v2200, %v2088
  %s2202 = scalar_lea.vmem %s6, 16
  %v2203 = vld [vmem:[%s2202] sm:$0xff]
  %v2204 = vld [vmem:[%s2202 + $0x8] sm:$0x1f]
  %v2206 = vsel %vm1238, %v2204, 0
  %2208 = vmatprep.subr.mxu0 0.0
  %2209 = vmatpush1.msra.mxu0 0.0
  %2210 = vmatprep.subr.mxu0 0.0
  %2211 = vmatpush1.msra.mxu0 0.0
  %2212 = vmatprep.subr.mxu0 0.0
  %2213 = vmatpush1.msra.mxu0 0.0
  %2214 = vmatprep.subr.mxu0 0.0
  %2215 = vmatpush1.msra.mxu0 0.0
  %2216 = vmatprep.subr.mxu0 0.0
  %2217 = vmatpush1.msra.mxu0 0.0
  %2218 = vmatprep.subr.mxu0 0.0
  %2219 = vmatpush1.msra.mxu0 0.0
  %2220 = vmatprep.subr.mxu0 0.0
  %2221 = vmatpush1.msra.mxu0 0.0
  %2222 = vmatprep.subr.mxu0 0.0
  %2223 = vmatpush1.msra.mxu0 0.0
  %2224 = vmatprep.subr.mxu0 0.0
  %2225 = vmatpush1.msra.mxu0 0.0
  %2226 = vmatprep.subr.mxu0 0.0
  %2227 = vmatpush1.msra.mxu0 0.0
  %2228 = vmatprep.subr.mxu0 0.0
  %2229 = vmatpush1.msra.mxu0 0.0
  %2230 = vmatprep.subr.mxu0 0.0
  %2231 = vmatpush1.msra.mxu0 0.0
  %2232 = vmatprep.subr.mxu0 0.0
  %2233 = vmatpush1.msra.mxu0 0.0
  %2234 = vmatprep.subr.mxu0 0.0
  %2235 = vmatpush1.msra.mxu0 0.0
  %2236 = vmatprep.subr.mxu0 0.0
  %2237 = vmatpush1.msra.mxu0 %v2206
  %2238 = vmatprep.subr.mxu0 0.0
  %2239 = vmatpush1.msra.mxu0 %v2203
  %2240 = vmatprep.subr.mxu0 0.0
  %2241 = vmatpush2.msra.mxu0 0.0
  %2242 = vmatprep.subr.mxu0 0.0
  %2243 = vmatpush2.msra.mxu0 0.0
  %2244 = vmatprep.subr.mxu0 0.0
  %2245 = vmatpush2.msra.mxu0 0.0
  %2246 = vmatprep.subr.mxu0 0.0
  %2247 = vmatpush2.msra.mxu0 0.0
  %2248 = vmatprep.subr.mxu0 0.0
  %2249 = vmatpush2.msra.mxu0 0.0
  %2250 = vmatprep.subr.mxu0 0.0
  %2251 = vmatpush2.msra.mxu0 0.0
  %2252 = vmatprep.subr.mxu0 0.0
  %2253 = vmatpush2.msra.mxu0 0.0
  %2254 = vmatprep.subr.mxu0 0.0
  %2255 = vmatpush2.msra.mxu0 0.0
  %2256 = vmatprep.subr.mxu0 0.0
  %2257 = vmatpush2.msra.mxu0 0.0
  %2258 = vmatprep.subr.mxu0 0.0
  %2259 = vmatpush2.msra.mxu0 0.0
  %2260 = vmatprep.subr.mxu0 0.0
  %2261 = vmatpush2.msra.mxu0 0.0
  %2262 = vmatprep.subr.mxu0 0.0
  %2263 = vmatpush2.msra.mxu0 0.0
  %2264 = vmatprep.subr.mxu0 0.0
  %2265 = vmatpush2.msra.mxu0 0.0
  %2266 = vmatprep.subr.mxu0 0.0
  %2267 = vmatpush2.msra.mxu0 0.0
  %2268 = vmatprep.subr.mxu0 0.0
  %2269 = vmatpush2.msra.mxu0 0.0
  %2270 = vmatprep.subr.mxu0 0.0
  %2271 = vmatpush2.msra.mxu0 0.0
  %2272 = vmatprep.mubr.f32.mxu0 0.0
  %2273 = vmatmul.mubr.f32.gmra.mxu0 %v1236
  %v2274 = vpop.f32.mrf.mxu0
  %v2275 = vadd.f32 0.0, %v2274
  %v2276 = vpop.f32.mrf.mxu0
  %2277 = vdwg.mxu0
  %2279 = vrot.lane.b32.xlu0 %v2275, 52
  %v2280 = vpop.permute.xlu0 %2279
  %v2282 = vadd.f32 %v1231, %v2280
  %v2283 = vtanh.pop %v2282
  %v2284 = vxor.u32 %v2282, 2147483648
  %v2285 = vmul.f32 %v2284, 1.442695
  %v2286 = vpow.pop %v2285
  %v2287 = vadd.f32 %v2286, 1.0
  %v2288 = vrcp.pop %v2287
  %v2289 = vmul.f32 1.0, %v2288
  %2291 = vrot.lane.b32.xlu0 %v2283, 76
  %v2292 = vpop.permute.xlu0 %2291
  %2295 = vrot.lane.b32.xlu0 %v2289, 76
  %v2296 = vpop.permute.xlu0 %2295
  %v2298 = vsel %vm1208, %v2292, %v2296
  %v2299 = vmul.f32 %v2298, 0.0
  %2301 = vrot.lane.b32.xlu0 %v2298, 102
  %v2302 = vpop.permute.xlu0 %2301
  %v2304 = vmul.f32 %v2298, %v2302
  %2306 = vrot.lane.b32.xlu0 %v2304, 13
  %v2307 = vpop.permute.xlu0 %2306
  %v2309 = vadd.f32 %v2299, %v2307
  %v2310 = vtanh.pop %v2309
  %2312 = vrot.lane.b32.xlu0 %v2310, 26
  %v2313 = vpop.permute.xlu0 %2312
  %v2315 = vmul.f32 %v2298, %v2313
  %2317 = vrot.lane.b32.xlu0 %v2315, 89
  %v2318 = vpop.permute.xlu0 %2317
  %v2319 = vsel %vm1234, %v2318, 0
  %2321 = vmatprep.subr.mxu0 0.0
  %2322 = vmatpush1.msra.mxu0 0.0
  %2323 = vmatprep.subr.mxu0 0.0
  %2324 = vmatpush1.msra.mxu0 0.0
  %2325 = vmatprep.subr.mxu0 0.0
  %2326 = vmatpush1.msra.mxu0 0.0
  %2327 = vmatprep.subr.mxu0 0.0
  %2328 = vmatpush1.msra.mxu0 0.0
  %2329 = vmatprep.subr.mxu0 0.0
  %2330 = vmatpush1.msra.mxu0 0.0
  %2331 = vmatprep.subr.mxu0 0.0
  %2332 = vmatpush1.msra.mxu0 0.0
  %2333 = vmatprep.subr.mxu0 0.0
  %2334 = vmatpush1.msra.mxu0 0.0
  %2335 = vmatprep.subr.mxu0 0.0
  %2336 = vmatpush1.msra.mxu0 0.0
  %2337 = vmatprep.subr.mxu0 0.0
  %2338 = vmatpush1.msra.mxu0 0.0
  %2339 = vmatprep.subr.mxu0 0.0
  %2340 = vmatpush1.msra.mxu0 0.0
  %2341 = vmatprep.subr.mxu0 0.0
  %2342 = vmatpush1.msra.mxu0 0.0
  %2343 = vmatprep.subr.mxu0 0.0
  %2344 = vmatpush1.msra.mxu0 0.0
  %2345 = vmatprep.subr.mxu0 0.0
  %2346 = vmatpush1.msra.mxu0 0.0
  %2347 = vmatprep.subr.mxu0 0.0
  %2348 = vmatpush1.msra.mxu0 0.0
  %2349 = vmatprep.subr.mxu0 0.0
  %2350 = vmatpush1.msra.mxu0 %v2206
  %2351 = vmatprep.subr.mxu0 0.0
  %2352 = vmatpush1.msra.mxu0 %v2203
  %2353 = vmatprep.subr.mxu0 0.0
  %2354 = vmatpush2.msra.mxu0 0.0
  %2355 = vmatprep.subr.mxu0 0.0
  %2356 = vmatpush2.msra.mxu0 0.0
  %2357 = vmatprep.subr.mxu0 0.0
  %2358 = vmatpush2.msra.mxu0 0.0
  %2359 = vmatprep.subr.mxu0 0.0
  %2360 = vmatpush2.msra.mxu0 0.0
  %2361 = vmatprep.subr.mxu0 0.0
  %2362 = vmatpush2.msra.mxu0 0.0
  %2363 = vmatprep.subr.mxu0 0.0
  %2364 = vmatpush2.msra.mxu0 0.0
  %2365 = vmatprep.subr.mxu0 0.0
  %2366 = vmatpush2.msra.mxu0 0.0
  %2367 = vmatprep.subr.mxu0 0.0
  %2368 = vmatpush2.msra.mxu0 0.0
  %2369 = vmatprep.subr.mxu0 0.0
  %2370 = vmatpush2.msra.mxu0 0.0
  %2371 = vmatprep.subr.mxu0 0.0
  %2372 = vmatpush2.msra.mxu0 0.0
  %2373 = vmatprep.subr.mxu0 0.0
  %2374 = vmatpush2.msra.mxu0 0.0
  %2375 = vmatprep.subr.mxu0 0.0
  %2376 = vmatpush2.msra.mxu0 0.0
  %2377 = vmatprep.subr.mxu0 0.0
  %2378 = vmatpush2.msra.mxu0 0.0
  %2379 = vmatprep.subr.mxu0 0.0
  %2380 = vmatpush2.msra.mxu0 0.0
  %2381 = vmatprep.subr.mxu0 0.0
  %2382 = vmatpush2.msra.mxu0 0.0
  %2383 = vmatprep.subr.mxu0 0.0
  %2384 = vmatpush2.msra.mxu0 0.0
  %2385 = vmatprep.mubr.f32.mxu0 0.0
  %2386 = vmatmul.mubr.f32.gmra.mxu0 %v2319
  %v2387 = vpop.f32.mrf.mxu0
  %v2388 = vadd.f32 0.0, %v2387
  %v2389 = vpop.f32.mrf.mxu0
  %2390 = vdwg.mxu0
  %v2392 = vrot.slane %v2388, 2
  %2393 = vrot.lane.b32.xlu0 %v2392, 52
  %v2394 = vpop.permute.xlu0 %2393
  %v2396 = vadd.f32 %v1230, %v2394
  %v2397 = vtanh.pop %v2396
  %v2398 = vxor.u32 %v2396, 2147483648
  %v2399 = vmul.f32 %v2398, 1.442695
  %v2400 = vpow.pop %v2399
  %v2401 = vadd.f32 %v2400, 1.0
  %v2402 = vrcp.pop %v2401
  %v2403 = vmul.f32 1.0, %v2402
  %v2405 = vrot.slane %v2397, 6
  %2406 = vrot.lane.b32.xlu0 %v2405, 76
  %v2407 = vpop.permute.xlu0 %2406
  %v2410 = vrot.slane %v2403, 6
  %2411 = vrot.lane.b32.xlu0 %v2410, 76
  %v2412 = vpop.permute.xlu0 %2411
  %v2414 = vsel %vm1208, %v2407, %v2412
  %v2415 = vmul.f32 %v2414, %v2309
  %2417 = vrot.lane.b32.xlu0 %v2414, 102
  %v2418 = vpop.permute.xlu0 %2417
  %v2420 = vmul.f32 %v2414, %v2418
  %2422 = vrot.lane.b32.xlu0 %v2420, 13
  %v2423 = vpop.permute.xlu0 %2422
  %v2425 = vadd.f32 %v2415, %v2423
  %v2426 = vtanh.pop %v2425
  %2428 = vrot.lane.b32.xlu0 %v2426, 26
  %v2429 = vpop.permute.xlu0 %2428
  %v2431 = vmul.f32 %v2414, %v2429
  %2433 = vrot.lane.b32.xlu0 %v2431, 89
  %v2434 = vpop.permute.xlu0 %2433
  %v2435 = vsel %vm1234, %v2434, 0
  %2437 = vmatprep.subr.mxu0 0.0
  %2438 = vmatpush1.msra.mxu0 0.0
  %2439 = vmatprep.subr.mxu0 0.0
  %2440 = vmatpush1.msra.mxu0 0.0
  %2441 = vmatprep.subr.mxu0 0.0
  %2442 = vmatpush1.msra.mxu0 0.0
  %2443 = vmatprep.subr.mxu0 0.0
  %2444 = vmatpush1.msra.mxu0 0.0
  %2445 = vmatprep.subr.mxu0 0.0
  %2446 = vmatpush1.msra.mxu0 0.0
  %2447 = vmatprep.subr.mxu0 0.0
  %2448 = vmatpush1.msra.mxu0 0.0
  %2449 = vmatprep.subr.mxu0 0.0
  %2450 = vmatpush1.msra.mxu0 0.0
  %2451 = vmatprep.subr.mxu0 0.0
  %2452 = vmatpush1.msra.mxu0 0.0
  %2453 = vmatprep.subr.mxu0 0.0
  %2454 = vmatpush1.msra.mxu0 0.0
  %2455 = vmatprep.subr.mxu0 0.0
  %2456 = vmatpush1.msra.mxu0 0.0
  %2457 = vmatprep.subr.mxu0 0.0
  %2458 = vmatpush1.msra.mxu0 0.0
  %2459 = vmatprep.subr.mxu0 0.0
  %2460 = vmatpush1.msra.mxu0 0.0
  %2461 = vmatprep.subr.mxu0 0.0
  %2462 = vmatpush1.msra.mxu0 0.0
  %2463 = vmatprep.subr.mxu0 0.0
  %2464 = vmatpush1.msra.mxu0 0.0
  %2465 = vmatprep.subr.mxu0 0.0
  %2466 = vmatpush1.msra.mxu0 %v2206
  %2467 = vmatprep.subr.mxu0 0.0
  %2468 = vmatpush1.msra.mxu0 %v2203
  %2469 = vmatprep.subr.mxu0 0.0
  %2470 = vmatpush2.msra.mxu0 0.0
  %2471 = vmatprep.subr.mxu0 0.0
  %2472 = vmatpush2.msra.mxu0 0.0
  %2473 = vmatprep.subr.mxu0 0.0
  %2474 = vmatpush2.msra.mxu0 0.0
  %2475 = vmatprep.subr.mxu0 0.0
  %2476 = vmatpush2.msra.mxu0 0.0
  %2477 = vmatprep.subr.mxu0 0.0
  %2478 = vmatpush2.msra.mxu0 0.0
  %2479 = vmatprep.subr.mxu0 0.0
  %2480 = vmatpush2.msra.mxu0 0.0
  %2481 = vmatprep.subr.mxu0 0.0
  %2482 = vmatpush2.msra.mxu0 0.0
  %2483 = vmatprep.subr.mxu0 0.0
  %2484 = vmatpush2.msra.mxu0 0.0
  %2485 = vmatprep.subr.mxu0 0.0
  %2486 = vmatpush2.msra.mxu0 0.0
  %2487 = vmatprep.subr.mxu0 0.0
  %2488 = vmatpush2.msra.mxu0 0.0
  %2489 = vmatprep.subr.mxu0 0.0
  %2490 = vmatpush2.msra.mxu0 0.0
  %2491 = vmatprep.subr.mxu0 0.0
  %2492 = vmatpush2.msra.mxu0 0.0
  %2493 = vmatprep.subr.mxu0 0.0
  %2494 = vmatpush2.msra.mxu0 0.0
  %2495 = vmatprep.subr.mxu0 0.0
  %2496 = vmatpush2.msra.mxu0 0.0
  %2497 = vmatprep.subr.mxu0 0.0
  %2498 = vmatpush2.msra.mxu0 0.0
  %2499 = vmatprep.subr.mxu0 0.0
  %2500 = vmatpush2.msra.mxu0 0.0
  %2501 = vmatprep.mubr.f32.mxu0 0.0
  %2502 = vmatmul.mubr.f32.gmra.mxu0 %v2435
  %v2503 = vpop.f32.mrf.mxu0
  %v2504 = vadd.f32 0.0, %v2503
  %v2505 = vpop.f32.mrf.mxu0
  %2506 = vdwg.mxu0
  %v2508 = vrot.slane %v2504, 4
  %2509 = vrot.lane.b32.xlu0 %v2508, 52
  %v2510 = vpop.permute.xlu0 %2509
  %v2512 = vadd.f32 %v1230, %v2510
  %v2513 = vtanh.pop %v2512
  %v2514 = vxor.u32 %v2512, 2147483648
  %v2515 = vmul.f32 %v2514, 1.442695
  %v2516 = vpow.pop %v2515
  %v2517 = vadd.f32 %v2516, 1.0
  %v2518 = vrcp.pop %v2517
  %v2519 = vmul.f32 1.0, %v2518
  %v2521 = vrot.slane %v2513, 4
  %2522 = vrot.lane.b32.xlu0 %v2521, 76
  %v2523 = vpop.permute.xlu0 %2522
  %v2526 = vrot.slane %v2519, 4
  %2527 = vrot.lane.b32.xlu0 %v2526, 76
  %v2528 = vpop.permute.xlu0 %2527
  %v2530 = vsel %vm1208, %v2523, %v2528
  %v2531 = vmul.f32 %v2530, %v2425
  %2533 = vrot.lane.b32.xlu0 %v2530, 102
  %v2534 = vpop.permute.xlu0 %2533
  %v2536 = vmul.f32 %v2530, %v2534
  %2538 = vrot.lane.b32.xlu0 %v2536, 13
  %v2539 = vpop.permute.xlu0 %2538
  %v2541 = vadd.f32 %v2531, %v2539
  %v2542 = vtanh.pop %v2541
  %2544 = vrot.lane.b32.xlu0 %v2542, 26
  %v2545 = vpop.permute.xlu0 %2544
  %v2547 = vmul.f32 %v2530, %v2545
  %2549 = vrot.lane.b32.xlu0 %v2547, 89
  %v2550 = vpop.permute.xlu0 %2549
  %v2551 = vsel %vm1234, %v2550, 0
  %2553 = vmatprep.subr.mxu0 0.0
  %2554 = vmatpush1.msra.mxu0 0.0
  %2555 = vmatprep.subr.mxu0 0.0
  %2556 = vmatpush1.msra.mxu0 0.0
  %2557 = vmatprep.subr.mxu0 0.0
  %2558 = vmatpush1.msra.mxu0 0.0
  %2559 = vmatprep.subr.mxu0 0.0
  %2560 = vmatpush1.msra.mxu0 0.0
  %2561 = vmatprep.subr.mxu0 0.0
  %2562 = vmatpush1.msra.mxu0 0.0
  %2563 = vmatprep.subr.mxu0 0.0
  %2564 = vmatpush1.msra.mxu0 0.0
  %2565 = vmatprep.subr.mxu0 0.0
  %2566 = vmatpush1.msra.mxu0 0.0
  %2567 = vmatprep.subr.mxu0 0.0
  %2568 = vmatpush1.msra.mxu0 0.0
  %2569 = vmatprep.subr.mxu0 0.0
  %2570 = vmatpush1.msra.mxu0 0.0
  %2571 = vmatprep.subr.mxu0 0.0
  %2572 = vmatpush1.msra.mxu0 0.0
  %2573 = vmatprep.subr.mxu0 0.0
  %2574 = vmatpush1.msra.mxu0 0.0
  %2575 = vmatprep.subr.mxu0 0.0
  %2576 = vmatpush1.msra.mxu0 0.0
  %2577 = vmatprep.subr.mxu0 0.0
  %2578 = vmatpush1.msra.mxu0 0.0
  %2579 = vmatprep.subr.mxu0 0.0
  %2580 = vmatpush1.msra.mxu0 0.0
  %2581 = vmatprep.subr.mxu0 0.0
  %2582 = vmatpush1.msra.mxu0 %v2206
  %2583 = vmatprep.subr.mxu0 0.0
  %2584 = vmatpush1.msra.mxu0 %v2203
  %2585 = vmatprep.subr.mxu0 0.0
  %2586 = vmatpush2.msra.mxu0 0.0
  %2587 = vmatprep.subr.mxu0 0.0
  %2588 = vmatpush2.msra.mxu0 0.0
  %2589 = vmatprep.subr.mxu0 0.0
  %2590 = vmatpush2.msra.mxu0 0.0
  %2591 = vmatprep.subr.mxu0 0.0
  %2592 = vmatpush2.msra.mxu0 0.0
  %2593 = vmatprep.subr.mxu0 0.0
  %2594 = vmatpush2.msra.mxu0 0.0
  %2595 = vmatprep.subr.mxu0 0.0
  %2596 = vmatpush2.msra.mxu0 0.0
  %2597 = vmatprep.subr.mxu0 0.0
  %2598 = vmatpush2.msra.mxu0 0.0
  %2599 = vmatprep.subr.mxu0 0.0
  %2600 = vmatpush2.msra.mxu0 0.0
  %2601 = vmatprep.subr.mxu0 0.0
  %2602 = vmatpush2.msra.mxu0 0.0
  %2603 = vmatprep.subr.mxu0 0.0
  %2604 = vmatpush2.msra.mxu0 0.0
  %2605 = vmatprep.subr.mxu0 0.0
  %2606 = vmatpush2.msra.mxu0 0.0
  %2607 = vmatprep.subr.mxu0 0.0
  %2608 = vmatpush2.msra.mxu0 0.0
  %2609 = vmatprep.subr.mxu0 0.0
  %2610 = vmatpush2.msra.mxu0 0.0
  %2611 = vmatprep.subr.mxu0 0.0
  %2612 = vmatpush2.msra.mxu0 0.0
  %2613 = vmatprep.subr.mxu0 0.0
  %2614 = vmatpush2.msra.mxu0 0.0
  %2615 = vmatprep.subr.mxu0 0.0
  %2616 = vmatpush2.msra.mxu0 0.0
  %2617 = vmatprep.mubr.f32.mxu0 0.0
  %2618 = vmatmul.mubr.f32.gmra.mxu0 %v2551
  %v2619 = vpop.f32.mrf.mxu0
  %v2620 = vadd.f32 0.0, %v2619
  %v2621 = vpop.f32.mrf.mxu0
  %2622 = vdwg.mxu0
  %v2624 = vrot.slane %v2620, 6
  %2625 = vrot.lane.b32.xlu0 %v2624, 52
  %v2626 = vpop.permute.xlu0 %2625
  %v2628 = vadd.f32 %v1230, %v2626
  %v2629 = vtanh.pop %v2628
  %v2630 = vxor.u32 %v2628, 2147483648
  %v2631 = vmul.f32 %v2630, 1.442695
  %v2632 = vpow.pop %v2631
  %v2633 = vadd.f32 %v2632, 1.0
  %v2634 = vrcp.pop %v2633
  %v2635 = vmul.f32 1.0, %v2634
  %v2637 = vrot.slane %v2629, 2
  %2638 = vrot.lane.b32.xlu0 %v2637, 76
  %v2639 = vpop.permute.xlu0 %2638
  %v2642 = vrot.slane %v2635, 2
  %2643 = vrot.lane.b32.xlu0 %v2642, 76
  %v2644 = vpop.permute.xlu0 %2643
  %v2646 = vsel %vm1208, %v2639, %v2644
  %v2647 = vmul.f32 %v2646, %v2541
  %2649 = vrot.lane.b32.xlu0 %v2646, 102
  %v2650 = vpop.permute.xlu0 %2649
  %v2652 = vmul.f32 %v2646, %v2650
  %2654 = vrot.lane.b32.xlu0 %v2652, 13
  %v2655 = vpop.permute.xlu0 %2654
  %v2657 = vadd.f32 %v2647, %v2655
  %v2658 = vtanh.pop %v2657
  %2660 = vrot.lane.b32.xlu0 %v2658, 26
  %v2661 = vpop.permute.xlu0 %2660
  %v2663 = vmul.f32 %v2646, %v2661
  %2665 = vrot.lane.b32.xlu0 %v2663, 89
  %v2666 = vpop.permute.xlu0 %2665
  %v2667 = vsel %vm1234, %v2666, 0
  %2669 = vmatprep.subr.mxu0 0.0
  %2670 = vmatpush1.msra.mxu0 0.0
  %2671 = vmatprep.subr.mxu0 0.0
  %2672 = vmatpush1.msra.mxu0 0.0
  %2673 = vmatprep.subr.mxu0 0.0
  %2674 = vmatpush1.msra.mxu0 0.0
  %2675 = vmatprep.subr.mxu0 0.0
  %2676 = vmatpush1.msra.mxu0 0.0
  %2677 = vmatprep.subr.mxu0 0.0
  %2678 = vmatpush1.msra.mxu0 0.0
  %2679 = vmatprep.subr.mxu0 0.0
  %2680 = vmatpush1.msra.mxu0 0.0
  %2681 = vmatprep.subr.mxu0 0.0
  %2682 = vmatpush1.msra.mxu0 0.0
  %2683 = vmatprep.subr.mxu0 0.0
  %2684 = vmatpush1.msra.mxu0 0.0
  %2685 = vmatprep.subr.mxu0 0.0
  %2686 = vmatpush1.msra.mxu0 0.0
  %2687 = vmatprep.subr.mxu0 0.0
  %2688 = vmatpush1.msra.mxu0 0.0
  %2689 = vmatprep.subr.mxu0 0.0
  %2690 = vmatpush1.msra.mxu0 0.0
  %2691 = vmatprep.subr.mxu0 0.0
  %2692 = vmatpush1.msra.mxu0 0.0
  %2693 = vmatprep.subr.mxu0 0.0
  %2694 = vmatpush1.msra.mxu0 0.0
  %2695 = vmatprep.subr.mxu0 0.0
  %2696 = vmatpush1.msra.mxu0 0.0
  %2697 = vmatprep.subr.mxu0 0.0
  %2698 = vmatpush1.msra.mxu0 %v2206
  %2699 = vmatprep.subr.mxu0 0.0
  %2700 = vmatpush1.msra.mxu0 %v2203
  %2701 = vmatprep.subr.mxu0 0.0
  %2702 = vmatpush2.msra.mxu0 0.0
  %2703 = vmatprep.subr.mxu0 0.0
  %2704 = vmatpush2.msra.mxu0 0.0
  %2705 = vmatprep.subr.mxu0 0.0
  %2706 = vmatpush2.msra.mxu0 0.0
  %2707 = vmatprep.subr.mxu0 0.0
  %2708 = vmatpush2.msra.mxu0 0.0
  %2709 = vmatprep.subr.mxu0 0.0
  %2710 = vmatpush2.msra.mxu0 0.0
  %2711 = vmatprep.subr.mxu0 0.0
  %2712 = vmatpush2.msra.mxu0 0.0
  %2713 = vmatprep.subr.mxu0 0.0
  %2714 = vmatpush2.msra.mxu0 0.0
  %2715 = vmatprep.subr.mxu0 0.0
  %2716 = vmatpush2.msra.mxu0 0.0
  %2717 = vmatprep.subr.mxu0 0.0
  %2718 = vmatpush2.msra.mxu0 0.0
  %2719 = vmatprep.subr.mxu0 0.0
  %2720 = vmatpush2.msra.mxu0 0.0
  %2721 = vmatprep.subr.mxu0 0.0
  %2722 = vmatpush2.msra.mxu0 0.0
  %2723 = vmatprep.subr.mxu0 0.0
  %2724 = vmatpush2.msra.mxu0 0.0
  %2725 = vmatprep.subr.mxu0 0.0
  %2726 = vmatpush2.msra.mxu0 0.0
  %2727 = vmatprep.subr.mxu0 0.0
  %2728 = vmatpush2.msra.mxu0 0.0
  %2729 = vmatprep.subr.mxu0 0.0
  %2730 = vmatpush2.msra.mxu0 0.0
  %2731 = vmatprep.subr.mxu0 0.0
  %2732 = vmatpush2.msra.mxu0 0.0
  %2733 = vmatprep.mubr.f32.mxu0 0.0
  %2734 = vmatmul.mubr.f32.gmra.mxu0 %v2667
  %v2735 = vpop.f32.mrf.mxu0
  %v2736 = vadd.f32 0.0, %v2735
  %v2737 = vpop.f32.mrf.mxu0
  %2738 = vdwg.mxu0
  %2740 = vrot.lane.b32.xlu0 %v2736, 52
  %v2741 = vpop.permute.xlu0 %2740
  %v2743 = vadd.f32 %v1230, %v2741
  %v2744 = vtanh.pop %v2743
  %v2745 = vxor.u32 %v2743, 2147483648
  %v2746 = vmul.f32 %v2745, 1.442695
  %v2747 = vpow.pop %v2746
  %v2748 = vadd.f32 %v2747, 1.0
  %v2749 = vrcp.pop %v2748
  %v2750 = vmul.f32 1.0, %v2749
  %2752 = vrot.lane.b32.xlu0 %v2744, 76
  %v2753 = vpop.permute.xlu0 %2752
  %2756 = vrot.lane.b32.xlu0 %v2750, 76
  %v2757 = vpop.permute.xlu0 %2756
  %v2759 = vsel %vm1208, %v2753, %v2757
  %v2760 = vmul.f32 %v2759, %v2657
  %2762 = vrot.lane.b32.xlu0 %v2759, 102
  %v2763 = vpop.permute.xlu0 %2762
  %v2765 = vmul.f32 %v2759, %v2763
  %2767 = vrot.lane.b32.xlu0 %v2765, 13
  %v2768 = vpop.permute.xlu0 %2767
  %v2770 = vadd.f32 %v2760, %v2768
  %v2771 = vtanh.pop %v2770
  %2773 = vrot.lane.b32.xlu0 %v2771, 26
  %v2774 = vpop.permute.xlu0 %2773
  %v2776 = vmul.f32 %v2759, %v2774
  %2778 = vrot.lane.b32.xlu0 %v2776, 89
  %v2779 = vpop.permute.xlu0 %2778
  %v2780 = vsel %vm1234, %v2779, 0
  %2782 = vmatprep.subr.mxu0 0.0
  %2783 = vmatpush1.msra.mxu0 0.0
  %2784 = vmatprep.subr.mxu0 0.0
  %2785 = vmatpush1.msra.mxu0 0.0
  %2786 = vmatprep.subr.mxu0 0.0
  %2787 = vmatpush1.msra.mxu0 0.0
  %2788 = vmatprep.subr.mxu0 0.0
  %2789 = vmatpush1.msra.mxu0 0.0
  %2790 = vmatprep.subr.mxu0 0.0
  %2791 = vmatpush1.msra.mxu0 0.0
  %2792 = vmatprep.subr.mxu0 0.0
  %2793 = vmatpush1.msra.mxu0 0.0
  %2794 = vmatprep.subr.mxu0 0.0
  %2795 = vmatpush1.msra.mxu0 0.0
  %2796 = vmatprep.subr.mxu0 0.0
  %2797 = vmatpush1.msra.mxu0 0.0
  %2798 = vmatprep.subr.mxu0 0.0
  %2799 = vmatpush1.msra.mxu0 0.0
  %2800 = vmatprep.subr.mxu0 0.0
  %2801 = vmatpush1.msra.mxu0 0.0
  %2802 = vmatprep.subr.mxu0 0.0
  %2803 = vmatpush1.msra.mxu0 0.0
  %2804 = vmatprep.subr.mxu0 0.0
  %2805 = vmatpush1.msra.mxu0 0.0
  %2806 = vmatprep.subr.mxu0 0.0
  %2807 = vmatpush1.msra.mxu0 0.0
  %2808 = vmatprep.subr.mxu0 0.0
  %2809 = vmatpush1.msra.mxu0 0.0
  %2810 = vmatprep.subr.mxu0 0.0
  %2811 = vmatpush1.msra.mxu0 %v2206
  %2812 = vmatprep.subr.mxu0 0.0
  %2813 = vmatpush1.msra.mxu0 %v2203
  %2814 = vmatprep.subr.mxu0 0.0
  %2815 = vmatpush2.msra.mxu0 0.0
  %2816 = vmatprep.subr.mxu0 0.0
  %2817 = vmatpush2.msra.mxu0 0.0
  %2818 = vmatprep.subr.mxu0 0.0
  %2819 = vmatpush2.msra.mxu0 0.0
  %2820 = vmatprep.subr.mxu0 0.0
  %2821 = vmatpush2.msra.mxu0 0.0
  %2822 = vmatprep.subr.mxu0 0.0
  %2823 = vmatpush2.msra.mxu0 0.0
  %2824 = vmatprep.subr.mxu0 0.0
  %2825 = vmatpush2.msra.mxu0 0.0
  %2826 = vmatprep.subr.mxu0 0.0
  %2827 = vmatpush2.msra.mxu0 0.0
  %2828 = vmatprep.subr.mxu0 0.0
  %2829 = vmatpush2.msra.mxu0 0.0
  %2830 = vmatprep.subr.mxu0 0.0
  %2831 = vmatpush2.msra.mxu0 0.0
  %2832 = vmatprep.subr.mxu0 0.0
  %2833 = vmatpush2.msra.mxu0 0.0
  %2834 = vmatprep.subr.mxu0 0.0
  %2835 = vmatpush2.msra.mxu0 0.0
  %2836 = vmatprep.subr.mxu0 0.0
  %2837 = vmatpush2.msra.mxu0 0.0
  %2838 = vmatprep.subr.mxu0 0.0
  %2839 = vmatpush2.msra.mxu0 0.0
  %2840 = vmatprep.subr.mxu0 0.0
  %2841 = vmatpush2.msra.mxu0 0.0
  %2842 = vmatprep.subr.mxu0 0.0
  %2843 = vmatpush2.msra.mxu0 0.0
  %2844 = vmatprep.subr.mxu0 0.0
  %2845 = vmatpush2.msra.mxu0 0.0
  %2846 = vmatprep.mubr.f32.mxu0 0.0
  %2847 = vmatmul.mubr.f32.gmra.mxu0 %v2780
  %v2848 = vpop.f32.mrf.mxu0
  %v2849 = vadd.f32 0.0, %v2848
  %v2850 = vpop.f32.mrf.mxu0
  %2851 = vdwg.mxu0
  %v2853 = vrot.slane %v2849, 2
  %2854 = vrot.lane.b32.xlu0 %v2853, 52
  %v2855 = vpop.permute.xlu0 %2854
  %v2857 = vadd.f32 %v1229, %v2855
  %v2858 = vtanh.pop %v2857
  %v2859 = vxor.u32 %v2857, 2147483648
  %v2860 = vmul.f32 %v2859, 1.442695
  %v2861 = vpow.pop %v2860
  %v2862 = vadd.f32 %v2861, 1.0
  %v2863 = vrcp.pop %v2862
  %v2864 = vmul.f32 1.0, %v2863
  %v2866 = vrot.slane %v2858, 6
  %2867 = vrot.lane.b32.xlu0 %v2866, 76
  %v2868 = vpop.permute.xlu0 %2867
  %v2871 = vrot.slane %v2864, 6
  %2872 = vrot.lane.b32.xlu0 %v2871, 76
  %v2873 = vpop.permute.xlu0 %2872
  %v2875 = vsel %vm1208, %v2868, %v2873
  %v2876 = vmul.f32 %v2875, %v2770
  %2878 = vrot.lane.b32.xlu0 %v2875, 102
  %v2879 = vpop.permute.xlu0 %2878
  %v2881 = vmul.f32 %v2875, %v2879
  %2883 = vrot.lane.b32.xlu0 %v2881, 13
  %v2884 = vpop.permute.xlu0 %2883
  %v2886 = vadd.f32 %v2876, %v2884
  %v2887 = vtanh.pop %v2886
  %2889 = vrot.lane.b32.xlu0 %v2887, 26
  %v2890 = vpop.permute.xlu0 %2889
  %v2892 = vmul.f32 %v2875, %v2890
  %2894 = vrot.lane.b32.xlu0 %v2892, 89
  %v2895 = vpop.permute.xlu0 %2894
  %v2896 = vsel %vm1234, %v2895, 0
  %2898 = vmatprep.subr.mxu0 0.0
  %2899 = vmatpush1.msra.mxu0 0.0
  %2900 = vmatprep.subr.mxu0 0.0
  %2901 = vmatpush1.msra.mxu0 0.0
  %2902 = vmatprep.subr.mxu0 0.0
  %2903 = vmatpush1.msra.mxu0 0.0
  %2904 = vmatprep.subr.mxu0 0.0
  %2905 = vmatpush1.msra.mxu0 0.0
  %2906 = vmatprep.subr.mxu0 0.0
  %2907 = vmatpush1.msra.mxu0 0.0
  %2908 = vmatprep.subr.mxu0 0.0
  %2909 = vmatpush1.msra.mxu0 0.0
  %2910 = vmatprep.subr.mxu0 0.0
  %2911 = vmatpush1.msra.mxu0 0.0
  %2912 = vmatprep.subr.mxu0 0.0
  %2913 = vmatpush1.msra.mxu0 0.0
  %2914 = vmatprep.subr.mxu0 0.0
  %2915 = vmatpush1.msra.mxu0 0.0
  %2916 = vmatprep.subr.mxu0 0.0
  %2917 = vmatpush1.msra.mxu0 0.0
  %2918 = vmatprep.subr.mxu0 0.0
  %2919 = vmatpush1.msra.mxu0 0.0
  %2920 = vmatprep.subr.mxu0 0.0
  %2921 = vmatpush1.msra.mxu0 0.0
  %2922 = vmatprep.subr.mxu0 0.0
  %2923 = vmatpush1.msra.mxu0 0.0
  %2924 = vmatprep.subr.mxu0 0.0
  %2925 = vmatpush1.msra.mxu0 0.0
  %2926 = vmatprep.subr.mxu0 0.0
  %2927 = vmatpush1.msra.mxu0 %v2206
  %2928 = vmatprep.subr.mxu0 0.0
  %2929 = vmatpush1.msra.mxu0 %v2203
  %2930 = vmatprep.subr.mxu0 0.0
  %2931 = vmatpush2.msra.mxu0 0.0
  %2932 = vmatprep.subr.mxu0 0.0
  %2933 = vmatpush2.msra.mxu0 0.0
  %2934 = vmatprep.subr.mxu0 0.0
  %2935 = vmatpush2.msra.mxu0 0.0
  %2936 = vmatprep.subr.mxu0 0.0
  %2937 = vmatpush2.msra.mxu0 0.0
  %2938 = vmatprep.subr.mxu0 0.0
  %2939 = vmatpush2.msra.mxu0 0.0
  %2940 = vmatprep.subr.mxu0 0.0
  %2941 = vmatpush2.msra.mxu0 0.0
  %2942 = vmatprep.subr.mxu0 0.0
  %2943 = vmatpush2.msra.mxu0 0.0
  %2944 = vmatprep.subr.mxu0 0.0
  %2945 = vmatpush2.msra.mxu0 0.0
  %2946 = vmatprep.subr.mxu0 0.0
  %2947 = vmatpush2.msra.mxu0 0.0
  %2948 = vmatprep.subr.mxu0 0.0
  %2949 = vmatpush2.msra.mxu0 0.0
  %2950 = vmatprep.subr.mxu0 0.0
  %2951 = vmatpush2.msra.mxu0 0.0
  %2952 = vmatprep.subr.mxu0 0.0
  %2953 = vmatpush2.msra.mxu0 0.0
  %2954 = vmatprep.subr.mxu0 0.0
  %2955 = vmatpush2.msra.mxu0 0.0
  %2956 = vmatprep.subr.mxu0 0.0
  %2957 = vmatpush2.msra.mxu0 0.0
  %2958 = vmatprep.subr.mxu0 0.0
  %2959 = vmatpush2.msra.mxu0 0.0
  %2960 = vmatprep.subr.mxu0 0.0
  %2961 = vmatpush2.msra.mxu0 0.0
  %2962 = vmatprep.mubr.f32.mxu0 0.0
  %2963 = vmatmul.mubr.f32.gmra.mxu0 %v2896
  %v2964 = vpop.f32.mrf.mxu0
  %v2965 = vadd.f32 0.0, %v2964
  %v2966 = vpop.f32.mrf.mxu0
  %2967 = vdwg.mxu0
  %v2969 = vrot.slane %v2965, 4
  %2970 = vrot.lane.b32.xlu0 %v2969, 52
  %v2971 = vpop.permute.xlu0 %2970
  %v2973 = vadd.f32 %v1229, %v2971
  %v2974 = vtanh.pop %v2973
  %v2975 = vxor.u32 %v2973, 2147483648
  %v2976 = vmul.f32 %v2975, 1.442695
  %v2977 = vpow.pop %v2976
  %v2978 = vadd.f32 %v2977, 1.0
  %v2979 = vrcp.pop %v2978
  %v2980 = vmul.f32 1.0, %v2979
  %v2982 = vrot.slane %v2974, 4
  %2983 = vrot.lane.b32.xlu0 %v2982, 76
  %v2984 = vpop.permute.xlu0 %2983
  %v2987 = vrot.slane %v2980, 4
  %2988 = vrot.lane.b32.xlu0 %v2987, 76
  %v2989 = vpop.permute.xlu0 %2988
  %v2991 = vsel %vm1208, %v2984, %v2989
  %v2992 = vmul.f32 %v2991, %v2886
  %2994 = vrot.lane.b32.xlu0 %v2991, 102
  %v2995 = vpop.permute.xlu0 %2994
  %v2997 = vmul.f32 %v2991, %v2995
  %2999 = vrot.lane.b32.xlu0 %v2997, 13
  %v3000 = vpop.permute.xlu0 %2999
  %v3002 = vadd.f32 %v2992, %v3000
  %v3003 = vtanh.pop %v3002
  %3005 = vrot.lane.b32.xlu0 %v3003, 26
  %v3006 = vpop.permute.xlu0 %3005
  %v3008 = vmul.f32 %v2991, %v3006
  %3010 = vrot.lane.b32.xlu0 %v3008, 89
  %v3011 = vpop.permute.xlu0 %3010
  %v3012 = vsel %vm1234, %v3011, 0
  %3014 = vmatprep.subr.mxu0 0.0
  %3015 = vmatpush1.msra.mxu0 0.0
  %3016 = vmatprep.subr.mxu0 0.0
  %3017 = vmatpush1.msra.mxu0 0.0
  %3018 = vmatprep.subr.mxu0 0.0
  %3019 = vmatpush1.msra.mxu0 0.0
  %3020 = vmatprep.subr.mxu0 0.0
  %3021 = vmatpush1.msra.mxu0 0.0
  %3022 = vmatprep.subr.mxu0 0.0
  %3023 = vmatpush1.msra.mxu0 0.0
  %3024 = vmatprep.subr.mxu0 0.0
  %3025 = vmatpush1.msra.mxu0 0.0
  %3026 = vmatprep.subr.mxu0 0.0
  %3027 = vmatpush1.msra.mxu0 0.0
  %3028 = vmatprep.subr.mxu0 0.0
  %3029 = vmatpush1.msra.mxu0 0.0
  %3030 = vmatprep.subr.mxu0 0.0
  %3031 = vmatpush1.msra.mxu0 0.0
  %3032 = vmatprep.subr.mxu0 0.0
  %3033 = vmatpush1.msra.mxu0 0.0
  %3034 = vmatprep.subr.mxu0 0.0
  %3035 = vmatpush1.msra.mxu0 0.0
  %3036 = vmatprep.subr.mxu0 0.0
  %3037 = vmatpush1.msra.mxu0 0.0
  %3038 = vmatprep.subr.mxu0 0.0
  %3039 = vmatpush1.msra.mxu0 0.0
  %3040 = vmatprep.subr.mxu0 0.0
  %3041 = vmatpush1.msra.mxu0 0.0
  %3042 = vmatprep.subr.mxu0 0.0
  %3043 = vmatpush1.msra.mxu0 %v2206
  %3044 = vmatprep.subr.mxu0 0.0
  %3045 = vmatpush1.msra.mxu0 %v2203
  %3046 = vmatprep.subr.mxu0 0.0
  %3047 = vmatpush2.msra.mxu0 0.0
  %3048 = vmatprep.subr.mxu0 0.0
  %3049 = vmatpush2.msra.mxu0 0.0
  %3050 = vmatprep.subr.mxu0 0.0
  %3051 = vmatpush2.msra.mxu0 0.0
  %3052 = vmatprep.subr.mxu0 0.0
  %3053 = vmatpush2.msra.mxu0 0.0
  %3054 = vmatprep.subr.mxu0 0.0
  %3055 = vmatpush2.msra.mxu0 0.0
  %3056 = vmatprep.subr.mxu0 0.0
  %3057 = vmatpush2.msra.mxu0 0.0
  %3058 = vmatprep.subr.mxu0 0.0
  %3059 = vmatpush2.msra.mxu0 0.0
  %3060 = vmatprep.subr.mxu0 0.0
  %3061 = vmatpush2.msra.mxu0 0.0
  %3062 = vmatprep.subr.mxu0 0.0
  %3063 = vmatpush2.msra.mxu0 0.0
  %3064 = vmatprep.subr.mxu0 0.0
  %3065 = vmatpush2.msra.mxu0 0.0
  %3066 = vmatprep.subr.mxu0 0.0
  %3067 = vmatpush2.msra.mxu0 0.0
  %3068 = vmatprep.subr.mxu0 0.0
  %3069 = vmatpush2.msra.mxu0 0.0
  %3070 = vmatprep.subr.mxu0 0.0
  %3071 = vmatpush2.msra.mxu0 0.0
  %3072 = vmatprep.subr.mxu0 0.0
  %3073 = vmatpush2.msra.mxu0 0.0
  %3074 = vmatprep.subr.mxu0 0.0
  %3075 = vmatpush2.msra.mxu0 0.0
  %3076 = vmatprep.subr.mxu0 0.0
  %3077 = vmatpush2.msra.mxu0 0.0
  %3078 = vmatprep.mubr.f32.mxu0 0.0
  %3079 = vmatmul.mubr.f32.gmra.mxu0 %v3012
  %v3080 = vpop.f32.mrf.mxu0
  %v3081 = vadd.f32 0.0, %v3080
  %v3082 = vpop.f32.mrf.mxu0
  %3083 = vdwg.mxu0
  %v3085 = vrot.slane %v3081, 6
  %3086 = vrot.lane.b32.xlu0 %v3085, 52
  %v3087 = vpop.permute.xlu0 %3086
  %v3089 = vadd.f32 %v1229, %v3087
  %v3090 = vtanh.pop %v3089
  %v3091 = vxor.u32 %v3089, 2147483648
  %v3092 = vmul.f32 %v3091, 1.442695
  %v3093 = vpow.pop %v3092
  %v3094 = vadd.f32 %v3093, 1.0
  %v3095 = vrcp.pop %v3094
  %v3096 = vmul.f32 1.0, %v3095
  %v3098 = vrot.slane %v3090, 2
  %3099 = vrot.lane.b32.xlu0 %v3098, 76
  %v3100 = vpop.permute.xlu0 %3099
  %v3103 = vrot.slane %v3096, 2
  %3104 = vrot.lane.b32.xlu0 %v3103, 76
  %v3105 = vpop.permute.xlu0 %3104
  %v3107 = vsel %vm1208, %v3100, %v3105
  %v3108 = vmul.f32 %v3107, %v3002
  %3110 = vrot.lane.b32.xlu0 %v3107, 102
  %v3111 = vpop.permute.xlu0 %3110
  %v3113 = vmul.f32 %v3107, %v3111
  %3115 = vrot.lane.b32.xlu0 %v3113, 13
  %v3116 = vpop.permute.xlu0 %3115
  %v3118 = vadd.f32 %v3108, %v3116
  %v3119 = vtanh.pop %v3118
  %3121 = vrot.lane.b32.xlu0 %v3119, 26
  %v3122 = vpop.permute.xlu0 %3121
  %v3124 = vmul.f32 %v3107, %v3122
  %3126 = vrot.lane.b32.xlu0 %v3124, 89
  %v3127 = vpop.permute.xlu0 %3126
  %v3128 = vsel %vm1234, %v3127, 0
  %3130 = vmatprep.subr.mxu0 0.0
  %3131 = vmatpush1.msra.mxu0 0.0
  %3132 = vmatprep.subr.mxu0 0.0
  %3133 = vmatpush1.msra.mxu0 0.0
  %3134 = vmatprep.subr.mxu0 0.0
  %3135 = vmatpush1.msra.mxu0 0.0
  %3136 = vmatprep.subr.mxu0 0.0
  %3137 = vmatpush1.msra.mxu0 0.0
  %3138 = vmatprep.subr.mxu0 0.0
  %3139 = vmatpush1.msra.mxu0 0.0
  %3140 = vmatprep.subr.mxu0 0.0
  %3141 = vmatpush1.msra.mxu0 0.0
  %3142 = vmatprep.subr.mxu0 0.0
  %3143 = vmatpush1.msra.mxu0 0.0
  %3144 = vmatprep.subr.mxu0 0.0
  %3145 = vmatpush1.msra.mxu0 0.0
  %3146 = vmatprep.subr.mxu0 0.0
  %3147 = vmatpush1.msra.mxu0 0.0
  %3148 = vmatprep.subr.mxu0 0.0
  %3149 = vmatpush1.msra.mxu0 0.0
  %3150 = vmatprep.subr.mxu0 0.0
  %3151 = vmatpush1.msra.mxu0 0.0
  %3152 = vmatprep.subr.mxu0 0.0
  %3153 = vmatpush1.msra.mxu0 0.0
  %3154 = vmatprep.subr.mxu0 0.0
  %3155 = vmatpush1.msra.mxu0 0.0
  %3156 = vmatprep.subr.mxu0 0.0
  %3157 = vmatpush1.msra.mxu0 0.0
  %3158 = vmatprep.subr.mxu0 0.0
  %3159 = vmatpush1.msra.mxu0 %v2206
  %3160 = vmatprep.subr.mxu0 0.0
  %3161 = vmatpush1.msra.mxu0 %v2203
  %3162 = vmatprep.subr.mxu0 0.0
  %3163 = vmatpush2.msra.mxu0 0.0
  %3164 = vmatprep.subr.mxu0 0.0
  %3165 = vmatpush2.msra.mxu0 0.0
  %3166 = vmatprep.subr.mxu0 0.0
  %3167 = vmatpush2.msra.mxu0 0.0
  %3168 = vmatprep.subr.mxu0 0.0
  %3169 = vmatpush2.msra.mxu0 0.0
  %3170 = vmatprep.subr.mxu0 0.0
  %3171 = vmatpush2.msra.mxu0 0.0
  %3172 = vmatprep.subr.mxu0 0.0
  %3173 = vmatpush2.msra.mxu0 0.0
  %3174 = vmatprep.subr.mxu0 0.0
  %3175 = vmatpush2.msra.mxu0 0.0
  %3176 = vmatprep.subr.mxu0 0.0
  %3177 = vmatpush2.msra.mxu0 0.0
  %3178 = vmatprep.subr.mxu0 0.0
  %3179 = vmatpush2.msra.mxu0 0.0
  %3180 = vmatprep.subr.mxu0 0.0
  %3181 = vmatpush2.msra.mxu0 0.0
  %3182 = vmatprep.subr.mxu0 0.0
  %3183 = vmatpush2.msra.mxu0 0.0
  %3184 = vmatprep.subr.mxu0 0.0
  %3185 = vmatpush2.msra.mxu0 0.0
  %3186 = vmatprep.subr.mxu0 0.0
  %3187 = vmatpush2.msra.mxu0 0.0
  %3188 = vmatprep.subr.mxu0 0.0
  %3189 = vmatpush2.msra.mxu0 0.0
  %3190 = vmatprep.subr.mxu0 0.0
  %3191 = vmatpush2.msra.mxu0 0.0
  %3192 = vmatprep.subr.mxu0 0.0
  %3193 = vmatpush2.msra.mxu0 0.0
  %3194 = vmatprep.mubr.f32.mxu0 0.0
  %3195 = vmatmul.mubr.f32.gmra.mxu0 %v3128
  %v3196 = vpop.f32.mrf.mxu0
  %v3197 = vadd.f32 0.0, %v3196
  %v3198 = vpop.f32.mrf.mxu0
  %3199 = vdwg.mxu0
  %3201 = vrot.lane.b32.xlu0 %v3197, 52
  %v3202 = vpop.permute.xlu0 %3201
  %v3204 = vadd.f32 %v1229, %v3202
  %v3205 = vtanh.pop %v3204
  %v3206 = vxor.u32 %v3204, 2147483648
  %v3207 = vmul.f32 %v3206, 1.442695
  %v3208 = vpow.pop %v3207
  %v3209 = vadd.f32 %v3208, 1.0
  %v3210 = vrcp.pop %v3209
  %v3211 = vmul.f32 1.0, %v3210
  %3213 = vrot.lane.b32.xlu0 %v3205, 76
  %v3214 = vpop.permute.xlu0 %3213
  %3217 = vrot.lane.b32.xlu0 %v3211, 76
  %v3218 = vpop.permute.xlu0 %3217
  %v3220 = vsel %vm1208, %v3214, %v3218
  %v3221 = vmul.f32 %v3220, %v3118
  %3223 = vrot.lane.b32.xlu0 %v3220, 102
  %v3224 = vpop.permute.xlu0 %3223
  %v3226 = vmul.f32 %v3220, %v3224
  %3228 = vrot.lane.b32.xlu0 %v3226, 13
  %v3229 = vpop.permute.xlu0 %3228
  %v3231 = vadd.f32 %v3221, %v3229
  %v3232 = vtanh.pop %v3231
  %3234 = vrot.lane.b32.xlu0 %v3232, 26
  %v3235 = vpop.permute.xlu0 %3234
  %v3237 = vmul.f32 %v3220, %v3235
  %v3238 = vrot.slane %v3124, 6
  %v3240 = vrot.slane %v3008, 4
  %v3242 = vrot.slane %v2892, 2
  %v3244 = vrot.slane %v2663, 6
  %v3246 = vrot.slane %v2547, 4
  %v3248 = vrot.slane %v2431, 2
  %v3250 = vsel %vm880, %v3237, %v3238
  %v3251 = vsel %vm2195, %v3250, %v3240
  %v3252 = vsel %vm2197, %v3251, %v3242
  %v3253 = vsel %vm880, %v2776, %v3244
  %v3254 = vsel %vm2195, %v3253, %v3246
  %v3255 = vsel %vm2197, %v3254, %v3248
  %v3256 = vld [vmem:[%s5] sm:$0xff]
  %v3257 = vld [vmem:[%s5 + $0x8] sm:$0x1f]
  %s3258 = scalar_lea.vmem %s5, 16
  %v3259 = vld [vmem:[%s3258] sm:$0xff]
  %v3260 = vld [vmem:[%s3258 + $0x8] sm:$0x1f]
  %3263 = vrot.lane.b32.xlu0 %v3252, 89
  %v3264 = vpop.permute.xlu0 %3263
  %3265 = vrot.lane.b32.xlu0 %v3255, 89
  %v3266 = vpop.permute.xlu0 %3265
  %v3267 = vsel %vm1234, %v3264, 0
  %v3269 = vsel %vm1234, %v3266, 0
  %v3272 = vsel %vm1238, %v3260, 0
  %3274 = vmatprep.subr.mxu0 0.0
  %3275 = vmatpush1.msra.mxu0 0.0
  %3276 = vmatprep.subr.mxu0 0.0
  %3277 = vmatpush1.msra.mxu0 0.0
  %3278 = vmatprep.subr.mxu0 0.0
  %3279 = vmatpush1.msra.mxu0 0.0
  %3280 = vmatprep.subr.mxu0 0.0
  %3281 = vmatpush1.msra.mxu0 0.0
  %3282 = vmatprep.subr.mxu0 0.0
  %3283 = vmatpush1.msra.mxu0 0.0
  %3284 = vmatprep.subr.mxu0 0.0
  %3285 = vmatpush1.msra.mxu0 0.0
  %3286 = vmatprep.subr.mxu0 0.0
  %3287 = vmatpush1.msra.mxu0 0.0
  %3288 = vmatprep.subr.mxu0 0.0
  %3289 = vmatpush1.msra.mxu0 0.0
  %3290 = vmatprep.subr.mxu0 0.0
  %3291 = vmatpush1.msra.mxu0 0.0
  %3292 = vmatprep.subr.mxu0 0.0
  %3293 = vmatpush1.msra.mxu0 0.0
  %3294 = vmatprep.subr.mxu0 0.0
  %3295 = vmatpush1.msra.mxu0 0.0
  %3296 = vmatprep.subr.mxu0 0.0
  %3297 = vmatpush1.msra.mxu0 0.0
  %3298 = vmatprep.subr.mxu0 0.0
  %3299 = vmatpush1.msra.mxu0 0.0
  %3300 = vmatprep.subr.mxu0 0.0
  %3301 = vmatpush1.msra.mxu0 0.0
  %3302 = vmatprep.subr.mxu0 0.0
  %3303 = vmatpush1.msra.mxu0 %v3272
  %3304 = vmatprep.subr.mxu0 0.0
  %3305 = vmatpush1.msra.mxu0 %v3259
  %3306 = vmatprep.subr.mxu0 0.0
  %3307 = vmatpush2.msra.mxu0 0.0
  %3308 = vmatprep.subr.mxu0 0.0
  %3309 = vmatpush2.msra.mxu0 0.0
  %3310 = vmatprep.subr.mxu0 0.0
  %3311 = vmatpush2.msra.mxu0 0.0
  %3312 = vmatprep.subr.mxu0 0.0
  %3313 = vmatpush2.msra.mxu0 0.0
  %3314 = vmatprep.subr.mxu0 0.0
  %3315 = vmatpush2.msra.mxu0 0.0
  %3316 = vmatprep.subr.mxu0 0.0
  %3317 = vmatpush2.msra.mxu0 0.0
  %3318 = vmatprep.subr.mxu0 0.0
  %3319 = vmatpush2.msra.mxu0 0.0
  %3320 = vmatprep.subr.mxu0 0.0
  %3321 = vmatpush2.msra.mxu0 0.0
  %3322 = vmatprep.subr.mxu0 0.0
  %3323 = vmatpush2.msra.mxu0 0.0
  %3324 = vmatprep.subr.mxu0 0.0
  %3325 = vmatpush2.msra.mxu0 0.0
  %3326 = vmatprep.subr.mxu0 0.0
  %3327 = vmatpush2.msra.mxu0 0.0
  %3328 = vmatprep.subr.mxu0 0.0
  %3329 = vmatpush2.msra.mxu0 0.0
  %3330 = vmatprep.subr.mxu0 0.0
  %3331 = vmatpush2.msra.mxu0 0.0
  %3332 = vmatprep.subr.mxu0 0.0
  %3333 = vmatpush2.msra.mxu0 0.0
  %3334 = vmatprep.subr.mxu0 0.0
  %3335 = vmatpush2.msra.mxu0 0.0
  %3336 = vmatprep.subr.mxu0 0.0
  %3337 = vmatpush2.msra.mxu0 0.0
  %3338 = vmatprep.mubr.f32.mxu0 0.0
  %3339 = vmatmul.mubr.f32.gmra.mxu0 %v3267
  %v3340 = vpop.f32.mrf.mxu0
  %v3341 = vadd.f32 0.0, %v3340
  %v3342 = vpop.f32.mrf.mxu0
  %3343 = vmatprep.mubr.f32.mxu0 0.0
  %3344 = vmatmul.mubr.f32.gmra.mxu0 %v3269
  %v3345 = vpop.f32.mrf.mxu0
  %v3346 = vadd.f32 0.0, %v3345
  %v3347 = vpop.f32.mrf.mxu0
  %3348 = vmatprep.mubr.f32.mxu0 0.0
  %3349 = vmatmul.mubr.f32.gmra.mxu0 %v2319
  %v3350 = vpop.f32.mrf.mxu0
  %v3351 = vadd.f32 0.0, %v3350
  %v3352 = vpop.f32.mrf.mxu0
  %3353 = vdwg.mxu0
  %3357 = vrot.lane.b32.xlu0 %v2198, 89
  %v3358 = vpop.permute.xlu0 %3357
  %3359 = vrot.lane.b32.xlu0 %v2201, 89
  %v3360 = vpop.permute.xlu0 %3359
  %3361 = vrot.lane.b32.xlu0 %v2193, 89
  %v3362 = vpop.permute.xlu0 %3361
  %v3363 = vsel %vm1234, %v3358, 0
  %v3365 = vsel %vm1234, %v3360, 0
  %v3367 = vsel %vm1234, %v3362, 0
  %v3370 = vsel %vm1238, %v3257, 0
  %3372 = vmatprep.subr.mxu0 0.0
  %3373 = vmatpush1.msra.mxu0 0.0
  %3374 = vmatprep.subr.mxu0 0.0
  %3375 = vmatpush1.msra.mxu0 0.0
  %3376 = vmatprep.subr.mxu0 0.0
  %3377 = vmatpush1.msra.mxu0 0.0
  %3378 = vmatprep.subr.mxu0 0.0
  %3379 = vmatpush1.msra.mxu0 0.0
  %3380 = vmatprep.subr.mxu0 0.0
  %3381 = vmatpush1.msra.mxu0 0.0
  %3382 = vmatprep.subr.mxu0 0.0
  %3383 = vmatpush1.msra.mxu0 0.0
  %3384 = vmatprep.subr.mxu0 0.0
  %3385 = vmatpush1.msra.mxu0 0.0
  %3386 = vmatprep.subr.mxu0 0.0
  %3387 = vmatpush1.msra.mxu0 0.0
  %3388 = vmatprep.subr.mxu0 0.0
  %3389 = vmatpush1.msra.mxu0 0.0
  %3390 = vmatprep.subr.mxu0 0.0
  %3391 = vmatpush1.msra.mxu0 0.0
  %3392 = vmatprep.subr.mxu0 0.0
  %3393 = vmatpush1.msra.mxu0 0.0
  %3394 = vmatprep.subr.mxu0 0.0
  %3395 = vmatpush1.msra.mxu0 0.0
  %3396 = vmatprep.subr.mxu0 0.0
  %3397 = vmatpush1.msra.mxu0 0.0
  %3398 = vmatprep.subr.mxu0 0.0
  %3399 = vmatpush1.msra.mxu0 0.0
  %3400 = vmatprep.subr.mxu0 0.0
  %3401 = vmatpush1.msra.mxu0 %v3370
  %3402 = vmatprep.subr.mxu0 0.0
  %3403 = vmatpush1.msra.mxu0 %v3256
  %3404 = vmatprep.subr.mxu0 0.0
  %3405 = vmatpush2.msra.mxu0 0.0
  %3406 = vmatprep.subr.mxu0 0.0
  %3407 = vmatpush2.msra.mxu0 0.0
  %3408 = vmatprep.subr.mxu0 0.0
  %3409 = vmatpush2.msra.mxu0 0.0
  %3410 = vmatprep.subr.mxu0 0.0
  %3411 = vmatpush2.msra.mxu0 0.0
  %3412 = vmatprep.subr.mxu0 0.0
  %3413 = vmatpush2.msra.mxu0 0.0
  %3414 = vmatprep.subr.mxu0 0.0
  %3415 = vmatpush2.msra.mxu0 0.0
  %3416 = vmatprep.subr.mxu0 0.0
  %3417 = vmatpush2.msra.mxu0 0.0
  %3418 = vmatprep.subr.mxu0 0.0
  %3419 = vmatpush2.msra.mxu0 0.0
  %3420 = vmatprep.subr.mxu0 0.0
  %3421 = vmatpush2.msra.mxu0 0.0
  %3422 = vmatprep.subr.mxu0 0.0
  %3423 = vmatpush2.msra.mxu0 0.0
  %3424 = vmatprep.subr.mxu0 0.0
  %3425 = vmatpush2.msra.mxu0 0.0
  %3426 = vmatprep.subr.mxu0 0.0
  %3427 = vmatpush2.msra.mxu0 0.0
  %3428 = vmatprep.subr.mxu0 0.0
  %3429 = vmatpush2.msra.mxu0 0.0
  %3430 = vmatprep.subr.mxu0 0.0
  %3431 = vmatpush2.msra.mxu0 0.0
  %3432 = vmatprep.subr.mxu0 0.0
  %3433 = vmatpush2.msra.mxu0 0.0
  %3434 = vmatprep.subr.mxu0 0.0
  %3435 = vmatpush2.msra.mxu0 0.0
  %3436 = vmatprep.mubr.f32.mxu0 0.0
  %3437 = vmatmul.mubr.f32.gmra.mxu0 %v3363
  %v3438 = vpop.f32.mrf.mxu0
  %v3439 = vadd.f32 %v3341, %v3438
  %v3440 = vpop.f32.mrf.mxu0
  %3441 = vmatprep.mubr.f32.mxu0 0.0
  %3442 = vmatmul.mubr.f32.gmra.mxu0 %v3365
  %v3443 = vpop.f32.mrf.mxu0
  %v3444 = vadd.f32 %v3346, %v3443
  %v3445 = vpop.f32.mrf.mxu0
  %3446 = vmatprep.mubr.f32.mxu0 0.0
  %3447 = vmatmul.mubr.f32.gmra.mxu0 %v3367
  %v3448 = vpop.f32.mrf.mxu0
  %v3449 = vadd.f32 %v3351, %v3448
  %v3450 = vpop.f32.mrf.mxu0
  %3451 = vdwg.mxu0
  %s3452 = scalar_lea.vmem %s7, 2
  %v3453 = vld [vmem:[%s3452] sm:$0x1]
  %v3455 = vlaneseq
  %v3456 = vshrl.u32 %v3455, 7
  %v3457 = vsub.s32 0, %v3456
  %v3458 = vrot.slane %v3453, %v3457
  %v3460 = vadd.f32 %v3439, %v3458
  %v3461 = vadd.f32 %v3444, %v3458
  %v3462 = vadd.f32 %v3449, %v3458
  %s3463 = scalar_lea.vmem %s5, 32
  %v3464 = vld [vmem:[%s3463] sm:$0xff]
  %v3465 = vld [vmem:[%s3463 + $0x8] sm:$0x1f]
  %s3466 = scalar_lea.vmem %s5, 48
  %v3467 = vld [vmem:[%s3466] sm:$0xff]
  %v3468 = vld [vmem:[%s3466 + $0x8] sm:$0x1f]
  %v3470 = vsel %vm1238, %v3468, 0
  %3472 = vmatprep.subr.mxu0 0.0
  %3473 = vmatpush1.msra.mxu0 0.0
  %3474 = vmatprep.subr.mxu0 0.0
  %3475 = vmatpush1.msra.mxu0 0.0
  %3476 = vmatprep.subr.mxu0 0.0
  %3477 = vmatpush1.msra.mxu0 0.0
  %3478 = vmatprep.subr.mxu0 0.0
  %3479 = vmatpush1.msra.mxu0 0.0
  %3480 = vmatprep.subr.mxu0 0.0
  %3481 = vmatpush1.msra.mxu0 0.0
  %3482 = vmatprep.subr.mxu0 0.0
  %3483 = vmatpush1.msra.mxu0 0.0
  %3484 = vmatprep.subr.mxu0 0.0
  %3485 = vmatpush1.msra.mxu0 0.0
  %3486 = vmatprep.subr.mxu0 0.0
  %3487 = vmatpush1.msra.mxu0 0.0
  %3488 = vmatprep.subr.mxu0 0.0
  %3489 = vmatpush1.msra.mxu0 0.0
  %3490 = vmatprep.subr.mxu0 0.0
  %3491 = vmatpush1.msra.mxu0 0.0
  %3492 = vmatprep.subr.mxu0 0.0
  %3493 = vmatpush1.msra.mxu0 0.0
  %3494 = vmatprep.subr.mxu0 0.0
  %3495 = vmatpush1.msra.mxu0 0.0
  %3496 = vmatprep.subr.mxu0 0.0
  %3497 = vmatpush1.msra.mxu0 0.0
  %3498 = vmatprep.subr.mxu0 0.0
  %3499 = vmatpush1.msra.mxu0 0.0
  %3500 = vmatprep.subr.mxu0 0.0
  %3501 = vmatpush1.msra.mxu0 %v3470
  %3502 = vmatprep.subr.mxu0 0.0
  %3503 = vmatpush1.msra.mxu0 %v3467
  %3504 = vmatprep.subr.mxu0 0.0
  %3505 = vmatpush2.msra.mxu0 0.0
  %3506 = vmatprep.subr.mxu0 0.0
  %3507 = vmatpush2.msra.mxu0 0.0
  %3508 = vmatprep.subr.mxu0 0.0
  %3509 = vmatpush2.msra.mxu0 0.0
  %3510 = vmatprep.subr.mxu0 0.0
  %3511 = vmatpush2.msra.mxu0 0.0
  %3512 = vmatprep.subr.mxu0 0.0
  %3513 = vmatpush2.msra.mxu0 0.0
  %3514 = vmatprep.subr.mxu0 0.0
  %3515 = vmatpush2.msra.mxu0 0.0
  %3516 = vmatprep.subr.mxu0 0.0
  %3517 = vmatpush2.msra.mxu0 0.0
  %3518 = vmatprep.subr.mxu0 0.0
  %3519 = vmatpush2.msra.mxu0 0.0
  %3520 = vmatprep.subr.mxu0 0.0
  %3521 = vmatpush2.msra.mxu0 0.0
  %3522 = vmatprep.subr.mxu0 0.0
  %3523 = vmatpush2.msra.mxu0 0.0
  %3524 = vmatprep.subr.mxu0 0.0
  %3525 = vmatpush2.msra.mxu0 0.0
  %3526 = vmatprep.subr.mxu0 0.0
  %3527 = vmatpush2.msra.mxu0 0.0
  %3528 = vmatprep.subr.mxu0 0.0
  %3529 = vmatpush2.msra.mxu0 0.0
  %3530 = vmatprep.subr.mxu0 0.0
  %3531 = vmatpush2.msra.mxu0 0.0
  %3532 = vmatprep.subr.mxu0 0.0
  %3533 = vmatpush2.msra.mxu0 0.0
  %3534 = vmatprep.subr.mxu0 0.0
  %3535 = vmatpush2.msra.mxu0 0.0
  %3536 = vmatprep.mubr.f32.mxu0 0.0
  %3537 = vmatmul.mubr.f32.gmra.mxu0 %v3267
  %v3538 = vpop.f32.mrf.mxu0
  %v3539 = vadd.f32 0.0, %v3538
  %v3540 = vpop.f32.mrf.mxu0
  %3541 = vmatprep.mubr.f32.mxu0 0.0
  %3542 = vmatmul.mubr.f32.gmra.mxu0 %v3269
  %v3543 = vpop.f32.mrf.mxu0
  %v3544 = vadd.f32 0.0, %v3543
  %v3545 = vpop.f32.mrf.mxu0
  %3546 = vmatprep.mubr.f32.mxu0 0.0
  %3547 = vmatmul.mubr.f32.gmra.mxu0 %v2319
  %v3548 = vpop.f32.mrf.mxu0
  %v3549 = vadd.f32 0.0, %v3548
  %v3550 = vpop.f32.mrf.mxu0
  %3551 = vdwg.mxu0
  %v3553 = vsel %vm1238, %v3465, 0
  %3555 = vmatprep.subr.mxu0 0.0
  %3556 = vmatpush1.msra.mxu0 0.0
  %3557 = vmatprep.subr.mxu0 0.0
  %3558 = vmatpush1.msra.mxu0 0.0
  %3559 = vmatprep.subr.mxu0 0.0
  %3560 = vmatpush1.msra.mxu0 0.0
  %3561 = vmatprep.subr.mxu0 0.0
  %3562 = vmatpush1.msra.mxu0 0.0
  %3563 = vmatprep.subr.mxu0 0.0
  %3564 = vmatpush1.msra.mxu0 0.0
  %3565 = vmatprep.subr.mxu0 0.0
  %3566 = vmatpush1.msra.mxu0 0.0
  %3567 = vmatprep.subr.mxu0 0.0
  %3568 = vmatpush1.msra.mxu0 0.0
  %3569 = vmatprep.subr.mxu0 0.0
  %3570 = vmatpush1.msra.mxu0 0.0
  %3571 = vmatprep.subr.mxu0 0.0
  %3572 = vmatpush1.msra.mxu0 0.0
  %3573 = vmatprep.subr.mxu0 0.0
  %3574 = vmatpush1.msra.mxu0 0.0
  %3575 = vmatprep.subr.mxu0 0.0
  %3576 = vmatpush1.msra.mxu0 0.0
  %3577 = vmatprep.subr.mxu0 0.0
  %3578 = vmatpush1.msra.mxu0 0.0
  %3579 = vmatprep.subr.mxu0 0.0
  %3580 = vmatpush1.msra.mxu0 0.0
  %3581 = vmatprep.subr.mxu0 0.0
  %3582 = vmatpush1.msra.mxu0 0.0
  %3583 = vmatprep.subr.mxu0 0.0
  %3584 = vmatpush1.msra.mxu0 %v3553
  %3585 = vmatprep.subr.mxu0 0.0
  %3586 = vmatpush1.msra.mxu0 %v3464
  %3587 = vmatprep.subr.mxu0 0.0
  %3588 = vmatpush2.msra.mxu0 0.0
  %3589 = vmatprep.subr.mxu0 0.0
  %3590 = vmatpush2.msra.mxu0 0.0
  %3591 = vmatprep.subr.mxu0 0.0
  %3592 = vmatpush2.msra.mxu0 0.0
  %3593 = vmatprep.subr.mxu0 0.0
  %3594 = vmatpush2.msra.mxu0 0.0
  %3595 = vmatprep.subr.mxu0 0.0
  %3596 = vmatpush2.msra.mxu0 0.0
  %3597 = vmatprep.subr.mxu0 0.0
  %3598 = vmatpush2.msra.mxu0 0.0
  %3599 = vmatprep.subr.mxu0 0.0
  %3600 = vmatpush2.msra.mxu0 0.0
  %3601 = vmatprep.subr.mxu0 0.0
  %3602 = vmatpush2.msra.mxu0 0.0
  %3603 = vmatprep.subr.mxu0 0.0
  %3604 = vmatpush2.msra.mxu0 0.0
  %3605 = vmatprep.subr.mxu0 0.0
  %3606 = vmatpush2.msra.mxu0 0.0
  %3607 = vmatprep.subr.mxu0 0.0
  %3608 = vmatpush2.msra.mxu0 0.0
  %3609 = vmatprep.subr.mxu0 0.0
  %3610 = vmatpush2.msra.mxu0 0.0
  %3611 = vmatprep.subr.mxu0 0.0
  %3612 = vmatpush2.msra.mxu0 0.0
  %3613 = vmatprep.subr.mxu0 0.0
  %3614 = vmatpush2.msra.mxu0 0.0
  %3615 = vmatprep.subr.mxu0 0.0
  %3616 = vmatpush2.msra.mxu0 0.0
  %3617 = vmatprep.subr.mxu0 0.0
  %3618 = vmatpush2.msra.mxu0 0.0
  %3619 = vmatprep.mubr.f32.mxu0 0.0
  %3620 = vmatmul.mubr.f32.gmra.mxu0 %v3363
  %v3621 = vpop.f32.mrf.mxu0
  %v3622 = vadd.f32 %v3539, %v3621
  %v3623 = vpop.f32.mrf.mxu0
  %3624 = vmatprep.mubr.f32.mxu0 0.0
  %3625 = vmatmul.mubr.f32.gmra.mxu0 %v3365
  %v3626 = vpop.f32.mrf.mxu0
  %v3627 = vadd.f32 %v3544, %v3626
  %v3628 = vpop.f32.mrf.mxu0
  %3629 = vmatprep.mubr.f32.mxu0 0.0
  %3630 = vmatmul.mubr.f32.gmra.mxu0 %v3367
  %v3631 = vpop.f32.mrf.mxu0
  %v3632 = vadd.f32 %v3549, %v3631
  %v3633 = vpop.f32.mrf.mxu0
  %3634 = vdwg.mxu0
  %s3635 = scalar_lea.vmem %s7, 3
  %v3636 = vld [vmem:[%s3635] sm:$0x1]
  %v3638 = vlaneseq
  %v3639 = vshrl.u32 %v3638, 7
  %v3640 = vsub.s32 0, %v3639
  %v3641 = vrot.slane %v3636, %v3640
  %v3643 = vadd.f32 %v3622, %v3641
  %v3644 = vadd.f32 %v3627, %v3641
  %v3645 = vadd.f32 %v3632, %v3641
  %s3646 = scalar_lea.vmem %s6, 32
  %v3647 = vld [vmem:[%s3646] sm:$0xff]
  %v3648 = vld [vmem:[%s3646 + $0x8] sm:$0x1f]
  %v3650 = vsel %vm1238, %v3648, 0
  %3652 = vmatprep.subr.mxu0 0.0
  %3653 = vmatpush1.msra.mxu0 0.0
  %3654 = vmatprep.subr.mxu0 0.0
  %3655 = vmatpush1.msra.mxu0 0.0
  %3656 = vmatprep.subr.mxu0 0.0
  %3657 = vmatpush1.msra.mxu0 0.0
  %3658 = vmatprep.subr.mxu0 0.0
  %3659 = vmatpush1.msra.mxu0 0.0
  %3660 = vmatprep.subr.mxu0 0.0
  %3661 = vmatpush1.msra.mxu0 0.0
  %3662 = vmatprep.subr.mxu0 0.0
  %3663 = vmatpush1.msra.mxu0 0.0
  %3664 = vmatprep.subr.mxu0 0.0
  %3665 = vmatpush1.msra.mxu0 0.0
  %3666 = vmatprep.subr.mxu0 0.0
  %3667 = vmatpush1.msra.mxu0 0.0
  %3668 = vmatprep.subr.mxu0 0.0
  %3669 = vmatpush1.msra.mxu0 0.0
  %3670 = vmatprep.subr.mxu0 0.0
  %3671 = vmatpush1.msra.mxu0 0.0
  %3672 = vmatprep.subr.mxu0 0.0
  %3673 = vmatpush1.msra.mxu0 0.0
  %3674 = vmatprep.subr.mxu0 0.0
  %3675 = vmatpush1.msra.mxu0 0.0
  %3676 = vmatprep.subr.mxu0 0.0
  %3677 = vmatpush1.msra.mxu0 0.0
  %3678 = vmatprep.subr.mxu0 0.0
  %3679 = vmatpush1.msra.mxu0 0.0
  %3680 = vmatprep.subr.mxu0 0.0
  %3681 = vmatpush1.msra.mxu0 %v3650
  %3682 = vmatprep.subr.mxu0 0.0
  %3683 = vmatpush1.msra.mxu0 %v3647
  %3684 = vmatprep.subr.mxu0 0.0
  %3685 = vmatpush2.msra.mxu0 0.0
  %3686 = vmatprep.subr.mxu0 0.0
  %3687 = vmatpush2.msra.mxu0 0.0
  %3688 = vmatprep.subr.mxu0 0.0
  %3689 = vmatpush2.msra.mxu0 0.0
  %3690 = vmatprep.subr.mxu0 0.0
  %3691 = vmatpush2.msra.mxu0 0.0
  %3692 = vmatprep.subr.mxu0 0.0
  %3693 = vmatpush2.msra.mxu0 0.0
  %3694 = vmatprep.subr.mxu0 0.0
  %3695 = vmatpush2.msra.mxu0 0.0
  %3696 = vmatprep.subr.mxu0 0.0
  %3697 = vmatpush2.msra.mxu0 0.0
  %3698 = vmatprep.subr.mxu0 0.0
  %3699 = vmatpush2.msra.mxu0 0.0
  %3700 = vmatprep.subr.mxu0 0.0
  %3701 = vmatpush2.msra.mxu0 0.0
  %3702 = vmatprep.subr.mxu0 0.0
  %3703 = vmatpush2.msra.mxu0 0.0
  %3704 = vmatprep.subr.mxu0 0.0
  %3705 = vmatpush2.msra.mxu0 0.0
  %3706 = vmatprep.subr.mxu0 0.0
  %3707 = vmatpush2.msra.mxu0 0.0
  %3708 = vmatprep.subr.mxu0 0.0
  %3709 = vmatpush2.msra.mxu0 0.0
  %3710 = vmatprep.subr.mxu0 0.0
  %3711 = vmatpush2.msra.mxu0 0.0
  %3712 = vmatprep.subr.mxu0 0.0
  %3713 = vmatpush2.msra.mxu0 0.0
  %3714 = vmatprep.subr.mxu0 0.0
  %3715 = vmatpush2.msra.mxu0 0.0
  %3716 = vmatprep.mubr.f32.mxu0 0.0
  %3717 = vmatmul.mubr.f32.gmra.mxu0 %v1236
  %v3718 = vpop.f32.mrf.mxu0
  %v3719 = vadd.f32 0.0, %v3718
  %v3720 = vpop.f32.mrf.mxu0
  %3721 = vdwg.mxu0
  %v3722 = vadd.f32 %v3460, %v3719
  %v3723 = vtanh.pop %v3722
  %v3724 = vxor.u32 %v3722, 2147483648
  %v3725 = vmul.f32 %v3724, 1.442695
  %v3726 = vpow.pop %v3725
  %v3727 = vadd.f32 %v3726, 1.0
  %v3728 = vrcp.pop %v3727
  %v3729 = vmul.f32 1.0, %v3728
  %v3730 = vsel %vm1208, %v3723, %v3729
  %v3731 = vmul.f32 %v3730, 0.0
  %3733 = vrot.lane.b32.xlu0 %v3730, 102
  %v3734 = vpop.permute.xlu0 %3733
  %v3736 = vmul.f32 %v3730, %v3734
  %3738 = vrot.lane.b32.xlu0 %v3736, 13
  %v3739 = vpop.permute.xlu0 %3738
  %v3741 = vadd.f32 %v3731, %v3739
  %v3742 = vtanh.pop %v3741
  %3744 = vrot.lane.b32.xlu0 %v3742, 26
  %v3745 = vpop.permute.xlu0 %3744
  %v3747 = vmul.f32 %v3730, %v3745
  %3749 = vrot.lane.b32.xlu0 %v3747, 89
  %v3750 = vpop.permute.xlu0 %3749
  %v3751 = vsel %vm1234, %v3750, 0
  %3753 = vmatprep.subr.mxu0 0.0
  %3754 = vmatpush1.msra.mxu0 0.0
  %3755 = vmatprep.subr.mxu0 0.0
  %3756 = vmatpush1.msra.mxu0 0.0
  %3757 = vmatprep.subr.mxu0 0.0
  %3758 = vmatpush1.msra.mxu0 0.0
  %3759 = vmatprep.subr.mxu0 0.0
  %3760 = vmatpush1.msra.mxu0 0.0
  %3761 = vmatprep.subr.mxu0 0.0
  %3762 = vmatpush1.msra.mxu0 0.0
  %3763 = vmatprep.subr.mxu0 0.0
  %3764 = vmatpush1.msra.mxu0 0.0
  %3765 = vmatprep.subr.mxu0 0.0
  %3766 = vmatpush1.msra.mxu0 0.0
  %3767 = vmatprep.subr.mxu0 0.0
  %3768 = vmatpush1.msra.mxu0 0.0
  %3769 = vmatprep.subr.mxu0 0.0
  %3770 = vmatpush1.msra.mxu0 0.0
  %3771 = vmatprep.subr.mxu0 0.0
  %3772 = vmatpush1.msra.mxu0 0.0
  %3773 = vmatprep.subr.mxu0 0.0
  %3774 = vmatpush1.msra.mxu0 0.0
  %3775 = vmatprep.subr.mxu0 0.0
  %3776 = vmatpush1.msra.mxu0 0.0
  %3777 = vmatprep.subr.mxu0 0.0
  %3778 = vmatpush1.msra.mxu0 0.0
  %3779 = vmatprep.subr.mxu0 0.0
  %3780 = vmatpush1.msra.mxu0 0.0
  %3781 = vmatprep.subr.mxu0 0.0
  %3782 = vmatpush1.msra.mxu0 %v3650
  %3783 = vmatprep.subr.mxu0 0.0
  %3784 = vmatpush1.msra.mxu0 %v3647
  %3785 = vmatprep.subr.mxu0 0.0
  %3786 = vmatpush2.msra.mxu0 0.0
  %3787 = vmatprep.subr.mxu0 0.0
  %3788 = vmatpush2.msra.mxu0 0.0
  %3789 = vmatprep.subr.mxu0 0.0
  %3790 = vmatpush2.msra.mxu0 0.0
  %3791 = vmatprep.subr.mxu0 0.0
  %3792 = vmatpush2.msra.mxu0 0.0
  %3793 = vmatprep.subr.mxu0 0.0
  %3794 = vmatpush2.msra.mxu0 0.0
  %3795 = vmatprep.subr.mxu0 0.0
  %3796 = vmatpush2.msra.mxu0 0.0
  %3797 = vmatprep.subr.mxu0 0.0
  %3798 = vmatpush2.msra.mxu0 0.0
  %3799 = vmatprep.subr.mxu0 0.0
  %3800 = vmatpush2.msra.mxu0 0.0
  %3801 = vmatprep.subr.mxu0 0.0
  %3802 = vmatpush2.msra.mxu0 0.0
  %3803 = vmatprep.subr.mxu0 0.0
  %3804 = vmatpush2.msra.mxu0 0.0
  %3805 = vmatprep.subr.mxu0 0.0
  %3806 = vmatpush2.msra.mxu0 0.0
  %3807 = vmatprep.subr.mxu0 0.0
  %3808 = vmatpush2.msra.mxu0 0.0
  %3809 = vmatprep.subr.mxu0 0.0
  %3810 = vmatpush2.msra.mxu0 0.0
  %3811 = vmatprep.subr.mxu0 0.0
  %3812 = vmatpush2.msra.mxu0 0.0
  %3813 = vmatprep.subr.mxu0 0.0
  %3814 = vmatpush2.msra.mxu0 0.0
  %3815 = vmatprep.subr.mxu0 0.0
  %3816 = vmatpush2.msra.mxu0 0.0
  %3817 = vmatprep.mubr.f32.mxu0 0.0
  %3818 = vmatmul.mubr.f32.gmra.mxu0 %v3751
  %v3819 = vpop.f32.mrf.mxu0
  %v3820 = vadd.f32 0.0, %v3819
  %v3821 = vpop.f32.mrf.mxu0
  %3822 = vdwg.mxu0
  %v3824 = vrot.slane %v3820, 6
  %v3826 = vadd.f32 %v3460, %v3824
  %v3827 = vtanh.pop %v3826
  %v3828 = vxor.u32 %v3826, 2147483648
  %v3829 = vmul.f32 %v3828, 1.442695
  %v3830 = vpow.pop %v3829
  %v3831 = vadd.f32 %v3830, 1.0
  %v3832 = vrcp.pop %v3831
  %v3833 = vmul.f32 1.0, %v3832
  %v3834 = vsel %vm1208, %v3827, %v3833
  %v3836 = vrot.slane %v3741, 6
  %v3838 = vmul.f32 %v3834, %v3836
  %3840 = vrot.lane.b32.xlu0 %v3834, 102
  %v3841 = vpop.permute.xlu0 %3840
  %v3843 = vmul.f32 %v3834, %v3841
  %3845 = vrot.lane.b32.xlu0 %v3843, 13
  %v3846 = vpop.permute.xlu0 %3845
  %v3848 = vadd.f32 %v3838, %v3846
  %v3849 = vtanh.pop %v3848
  %3851 = vrot.lane.b32.xlu0 %v3849, 26
  %v3852 = vpop.permute.xlu0 %3851
  %v3854 = vmul.f32 %v3834, %v3852
  %v3856 = vrot.slane %v3854, 2
  %3857 = vrot.lane.b32.xlu0 %v3856, 89
  %v3858 = vpop.permute.xlu0 %3857
  %v3859 = vsel %vm1234, %v3858, 0
  %3861 = vmatprep.subr.mxu0 0.0
  %3862 = vmatpush1.msra.mxu0 0.0
  %3863 = vmatprep.subr.mxu0 0.0
  %3864 = vmatpush1.msra.mxu0 0.0
  %3865 = vmatprep.subr.mxu0 0.0
  %3866 = vmatpush1.msra.mxu0 0.0
  %3867 = vmatprep.subr.mxu0 0.0
  %3868 = vmatpush1.msra.mxu0 0.0
  %3869 = vmatprep.subr.mxu0 0.0
  %3870 = vmatpush1.msra.mxu0 0.0
  %3871 = vmatprep.subr.mxu0 0.0
  %3872 = vmatpush1.msra.mxu0 0.0
  %3873 = vmatprep.subr.mxu0 0.0
  %3874 = vmatpush1.msra.mxu0 0.0
  %3875 = vmatprep.subr.mxu0 0.0
  %3876 = vmatpush1.msra.mxu0 0.0
  %3877 = vmatprep.subr.mxu0 0.0
  %3878 = vmatpush1.msra.mxu0 0.0
  %3879 = vmatprep.subr.mxu0 0.0
  %3880 = vmatpush1.msra.mxu0 0.0
  %3881 = vmatprep.subr.mxu0 0.0
  %3882 = vmatpush1.msra.mxu0 0.0
  %3883 = vmatprep.subr.mxu0 0.0
  %3884 = vmatpush1.msra.mxu0 0.0
  %3885 = vmatprep.subr.mxu0 0.0
  %3886 = vmatpush1.msra.mxu0 0.0
  %3887 = vmatprep.subr.mxu0 0.0
  %3888 = vmatpush1.msra.mxu0 0.0
  %3889 = vmatprep.subr.mxu0 0.0
  %3890 = vmatpush1.msra.mxu0 %v3650
  %3891 = vmatprep.subr.mxu0 0.0
  %3892 = vmatpush1.msra.mxu0 %v3647
  %3893 = vmatprep.subr.mxu0 0.0
  %3894 = vmatpush2.msra.mxu0 0.0
  %3895 = vmatprep.subr.mxu0 0.0
  %3896 = vmatpush2.msra.mxu0 0.0
  %3897 = vmatprep.subr.mxu0 0.0
  %3898 = vmatpush2.msra.mxu0 0.0
  %3899 = vmatprep.subr.mxu0 0.0
  %3900 = vmatpush2.msra.mxu0 0.0
  %3901 = vmatprep.subr.mxu0 0.0
  %3902 = vmatpush2.msra.mxu0 0.0
  %3903 = vmatprep.subr.mxu0 0.0
  %3904 = vmatpush2.msra.mxu0 0.0
  %3905 = vmatprep.subr.mxu0 0.0
  %3906 = vmatpush2.msra.mxu0 0.0
  %3907 = vmatprep.subr.mxu0 0.0
  %3908 = vmatpush2.msra.mxu0 0.0
  %3909 = vmatprep.subr.mxu0 0.0
  %3910 = vmatpush2.msra.mxu0 0.0
  %3911 = vmatprep.subr.mxu0 0.0
  %3912 = vmatpush2.msra.mxu0 0.0
  %3913 = vmatprep.subr.mxu0 0.0
  %3914 = vmatpush2.msra.mxu0 0.0
  %3915 = vmatprep.subr.mxu0 0.0
  %3916 = vmatpush2.msra.mxu0 0.0
  %3917 = vmatprep.subr.mxu0 0.0
  %3918 = vmatpush2.msra.mxu0 0.0
  %3919 = vmatprep.subr.mxu0 0.0
  %3920 = vmatpush2.msra.mxu0 0.0
  %3921 = vmatprep.subr.mxu0 0.0
  %3922 = vmatpush2.msra.mxu0 0.0
  %3923 = vmatprep.subr.mxu0 0.0
  %3924 = vmatpush2.msra.mxu0 0.0
  %3925 = vmatprep.mubr.f32.mxu0 0.0
  %3926 = vmatmul.mubr.f32.gmra.mxu0 %v3859
  %v3927 = vpop.f32.mrf.mxu0
  %v3928 = vadd.f32 0.0, %v3927
  %v3929 = vpop.f32.mrf.mxu0
  %3930 = vdwg.mxu0
  %v3932 = vrot.slane %v3928, 4
  %v3934 = vadd.f32 %v3460, %v3932
  %v3935 = vtanh.pop %v3934
  %v3936 = vxor.u32 %v3934, 2147483648
  %v3937 = vmul.f32 %v3936, 1.442695
  %v3938 = vpow.pop %v3937
  %v3939 = vadd.f32 %v3938, 1.0
  %v3940 = vrcp.pop %v3939
  %v3941 = vmul.f32 1.0, %v3940
  %v3942 = vsel %vm1208, %v3935, %v3941
  %v3944 = vrot.slane %v3848, 6
  %v3946 = vmul.f32 %v3942, %v3944
  %3948 = vrot.lane.b32.xlu0 %v3942, 102
  %v3949 = vpop.permute.xlu0 %3948
  %v3951 = vmul.f32 %v3942, %v3949
  %3953 = vrot.lane.b32.xlu0 %v3951, 13
  %v3954 = vpop.permute.xlu0 %3953
  %v3956 = vadd.f32 %v3946, %v3954
  %v3957 = vtanh.pop %v3956
  %3959 = vrot.lane.b32.xlu0 %v3957, 26
  %v3960 = vpop.permute.xlu0 %3959
  %v3962 = vmul.f32 %v3942, %v3960
  %v3964 = vrot.slane %v3962, 4
  %3965 = vrot.lane.b32.xlu0 %v3964, 89
  %v3966 = vpop.permute.xlu0 %3965
  %v3967 = vsel %vm1234, %v3966, 0
  %3969 = vmatprep.subr.mxu0 0.0
  %3970 = vmatpush1.msra.mxu0 0.0
  %3971 = vmatprep.subr.mxu0 0.0
  %3972 = vmatpush1.msra.mxu0 0.0
  %3973 = vmatprep.subr.mxu0 0.0
  %3974 = vmatpush1.msra.mxu0 0.0
  %3975 = vmatprep.subr.mxu0 0.0
  %3976 = vmatpush1.msra.mxu0 0.0
  %3977 = vmatprep.subr.mxu0 0.0
  %3978 = vmatpush1.msra.mxu0 0.0
  %3979 = vmatprep.subr.mxu0 0.0
  %3980 = vmatpush1.msra.mxu0 0.0
  %3981 = vmatprep.subr.mxu0 0.0
  %3982 = vmatpush1.msra.mxu0 0.0
  %3983 = vmatprep.subr.mxu0 0.0
  %3984 = vmatpush1.msra.mxu0 0.0
  %3985 = vmatprep.subr.mxu0 0.0
  %3986 = vmatpush1.msra.mxu0 0.0
  %3987 = vmatprep.subr.mxu0 0.0
  %3988 = vmatpush1.msra.mxu0 0.0
  %3989 = vmatprep.subr.mxu0 0.0
  %3990 = vmatpush1.msra.mxu0 0.0
  %3991 = vmatprep.subr.mxu0 0.0
  %3992 = vmatpush1.msra.mxu0 0.0
  %3993 = vmatprep.subr.mxu0 0.0
  %3994 = vmatpush1.msra.mxu0 0.0
  %3995 = vmatprep.subr.mxu0 0.0
  %3996 = vmatpush1.msra.mxu0 0.0
  %3997 = vmatprep.subr.mxu0 0.0
  %3998 = vmatpush1.msra.mxu0 %v3650
  %3999 = vmatprep.subr.mxu0 0.0
  %4000 = vmatpush1.msra.mxu0 %v3647
  %4001 = vmatprep.subr.mxu0 0.0
  %4002 = vmatpush2.msra.mxu0 0.0
  %4003 = vmatprep.subr.mxu0 0.0
  %4004 = vmatpush2.msra.mxu0 0.0
  %4005 = vmatprep.subr.mxu0 0.0
  %4006 = vmatpush2.msra.mxu0 0.0
  %4007 = vmatprep.subr.mxu0 0.0
  %4008 = vmatpush2.msra.mxu0 0.0
  %4009 = vmatprep.subr.mxu0 0.0
  %4010 = vmatpush2.msra.mxu0 0.0
  %4011 = vmatprep.subr.mxu0 0.0
  %4012 = vmatpush2.msra.mxu0 0.0
  %4013 = vmatprep.subr.mxu0 0.0
  %4014 = vmatpush2.msra.mxu0 0.0
  %4015 = vmatprep.subr.mxu0 0.0
  %4016 = vmatpush2.msra.mxu0 0.0
  %4017 = vmatprep.subr.mxu0 0.0
  %4018 = vmatpush2.msra.mxu0 0.0
  %4019 = vmatprep.subr.mxu0 0.0
  %4020 = vmatpush2.msra.mxu0 0.0
  %4021 = vmatprep.subr.mxu0 0.0
  %4022 = vmatpush2.msra.mxu0 0.0
  %4023 = vmatprep.subr.mxu0 0.0
  %4024 = vmatpush2.msra.mxu0 0.0
  %4025 = vmatprep.subr.mxu0 0.0
  %4026 = vmatpush2.msra.mxu0 0.0
  %4027 = vmatprep.subr.mxu0 0.0
  %4028 = vmatpush2.msra.mxu0 0.0
  %4029 = vmatprep.subr.mxu0 0.0
  %4030 = vmatpush2.msra.mxu0 0.0
  %4031 = vmatprep.subr.mxu0 0.0
  %4032 = vmatpush2.msra.mxu0 0.0
  %4033 = vmatprep.mubr.f32.mxu0 0.0
  %4034 = vmatmul.mubr.f32.gmra.mxu0 %v3967
  %v4035 = vpop.f32.mrf.mxu0
  %v4036 = vadd.f32 0.0, %v4035
  %v4037 = vpop.f32.mrf.mxu0
  %4038 = vdwg.mxu0
  %v4040 = vrot.slane %v4036, 2
  %v4042 = vadd.f32 %v3460, %v4040
  %v4043 = vtanh.pop %v4042
  %v4044 = vxor.u32 %v4042, 2147483648
  %v4045 = vmul.f32 %v4044, 1.442695
  %v4046 = vpow.pop %v4045
  %v4047 = vadd.f32 %v4046, 1.0
  %v4048 = vrcp.pop %v4047
  %v4049 = vmul.f32 1.0, %v4048
  %v4050 = vsel %vm1208, %v4043, %v4049
  %v4052 = vrot.slane %v3956, 6
  %v4054 = vmul.f32 %v4050, %v4052
  %4056 = vrot.lane.b32.xlu0 %v4050, 102
  %v4057 = vpop.permute.xlu0 %4056
  %v4059 = vmul.f32 %v4050, %v4057
  %4061 = vrot.lane.b32.xlu0 %v4059, 13
  %v4062 = vpop.permute.xlu0 %4061
  %v4064 = vadd.f32 %v4054, %v4062
  %v4065 = vtanh.pop %v4064
  %4067 = vrot.lane.b32.xlu0 %v4065, 26
  %v4068 = vpop.permute.xlu0 %4067
  %v4070 = vmul.f32 %v4050, %v4068
  %v4072 = vrot.slane %v4070, 6
  %4073 = vrot.lane.b32.xlu0 %v4072, 89
  %v4074 = vpop.permute.xlu0 %4073
  %v4075 = vsel %vm1234, %v4074, 0
  %4077 = vmatprep.subr.mxu0 0.0
  %4078 = vmatpush1.msra.mxu0 0.0
  %4079 = vmatprep.subr.mxu0 0.0
  %4080 = vmatpush1.msra.mxu0 0.0
  %4081 = vmatprep.subr.mxu0 0.0
  %4082 = vmatpush1.msra.mxu0 0.0
  %4083 = vmatprep.subr.mxu0 0.0
  %4084 = vmatpush1.msra.mxu0 0.0
  %4085 = vmatprep.subr.mxu0 0.0
  %4086 = vmatpush1.msra.mxu0 0.0
  %4087 = vmatprep.subr.mxu0 0.0
  %4088 = vmatpush1.msra.mxu0 0.0
  %4089 = vmatprep.subr.mxu0 0.0
  %4090 = vmatpush1.msra.mxu0 0.0
  %4091 = vmatprep.subr.mxu0 0.0
  %4092 = vmatpush1.msra.mxu0 0.0
  %4093 = vmatprep.subr.mxu0 0.0
  %4094 = vmatpush1.msra.mxu0 0.0
  %4095 = vmatprep.subr.mxu0 0.0
  %4096 = vmatpush1.msra.mxu0 0.0
  %4097 = vmatprep.subr.mxu0 0.0
  %4098 = vmatpush1.msra.mxu0 0.0
  %4099 = vmatprep.subr.mxu0 0.0
  %4100 = vmatpush1.msra.mxu0 0.0
  %4101 = vmatprep.subr.mxu0 0.0
  %4102 = vmatpush1.msra.mxu0 0.0
  %4103 = vmatprep.subr.mxu0 0.0
  %4104 = vmatpush1.msra.mxu0 0.0
  %4105 = vmatprep.subr.mxu0 0.0
  %4106 = vmatpush1.msra.mxu0 %v3650
  %4107 = vmatprep.subr.mxu0 0.0
  %4108 = vmatpush1.msra.mxu0 %v3647
  %4109 = vmatprep.subr.mxu0 0.0
  %4110 = vmatpush2.msra.mxu0 0.0
  %4111 = vmatprep.subr.mxu0 0.0
  %4112 = vmatpush2.msra.mxu0 0.0
  %4113 = vmatprep.subr.mxu0 0.0
  %4114 = vmatpush2.msra.mxu0 0.0
  %4115 = vmatprep.subr.mxu0 0.0
  %4116 = vmatpush2.msra.mxu0 0.0
  %4117 = vmatprep.subr.mxu0 0.0
  %4118 = vmatpush2.msra.mxu0 0.0
  %4119 = vmatprep.subr.mxu0 0.0
  %4120 = vmatpush2.msra.mxu0 0.0
  %4121 = vmatprep.subr.mxu0 0.0
  %4122 = vmatpush2.msra.mxu0 0.0
  %4123 = vmatprep.subr.mxu0 0.0
  %4124 = vmatpush2.msra.mxu0 0.0
  %4125 = vmatprep.subr.mxu0 0.0
  %4126 = vmatpush2.msra.mxu0 0.0
  %4127 = vmatprep.subr.mxu0 0.0
  %4128 = vmatpush2.msra.mxu0 0.0
  %4129 = vmatprep.subr.mxu0 0.0
  %4130 = vmatpush2.msra.mxu0 0.0
  %4131 = vmatprep.subr.mxu0 0.0
  %4132 = vmatpush2.msra.mxu0 0.0
  %4133 = vmatprep.subr.mxu0 0.0
  %4134 = vmatpush2.msra.mxu0 0.0
  %4135 = vmatprep.subr.mxu0 0.0
  %4136 = vmatpush2.msra.mxu0 0.0
  %4137 = vmatprep.subr.mxu0 0.0
  %4138 = vmatpush2.msra.mxu0 0.0
  %4139 = vmatprep.subr.mxu0 0.0
  %4140 = vmatpush2.msra.mxu0 0.0
  %4141 = vmatprep.mubr.f32.mxu0 0.0
  %4142 = vmatmul.mubr.f32.gmra.mxu0 %v4075
  %v4143 = vpop.f32.mrf.mxu0
  %v4144 = vadd.f32 0.0, %v4143
  %v4145 = vpop.f32.mrf.mxu0
  %4146 = vdwg.mxu0
  %v4147 = vadd.f32 %v3461, %v4144
  %v4148 = vtanh.pop %v4147
  %v4149 = vxor.u32 %v4147, 2147483648
  %v4150 = vmul.f32 %v4149, 1.442695
  %v4151 = vpow.pop %v4150
  %v4152 = vadd.f32 %v4151, 1.0
  %v4153 = vrcp.pop %v4152
  %v4154 = vmul.f32 1.0, %v4153
  %v4155 = vsel %vm1208, %v4148, %v4154
  %v4157 = vrot.slane %v4064, 6
  %v4159 = vmul.f32 %v4155, %v4157
  %4161 = vrot.lane.b32.xlu0 %v4155, 102
  %v4162 = vpop.permute.xlu0 %4161
  %v4164 = vmul.f32 %v4155, %v4162
  %4166 = vrot.lane.b32.xlu0 %v4164, 13
  %v4167 = vpop.permute.xlu0 %4166
  %v4169 = vadd.f32 %v4159, %v4167
  %v4170 = vtanh.pop %v4169
  %4172 = vrot.lane.b32.xlu0 %v4170, 26
  %v4173 = vpop.permute.xlu0 %4172
  %v4175 = vmul.f32 %v4155, %v4173
  %4177 = vrot.lane.b32.xlu0 %v4175, 89
  %v4178 = vpop.permute.xlu0 %4177
  %v4179 = vsel %vm1234, %v4178, 0
  %4181 = vmatprep.subr.mxu0 0.0
  %4182 = vmatpush1.msra.mxu0 0.0
  %4183 = vmatprep.subr.mxu0 0.0
  %4184 = vmatpush1.msra.mxu0 0.0
  %4185 = vmatprep.subr.mxu0 0.0
  %4186 = vmatpush1.msra.mxu0 0.0
  %4187 = vmatprep.subr.mxu0 0.0
  %4188 = vmatpush1.msra.mxu0 0.0
  %4189 = vmatprep.subr.mxu0 0.0
  %4190 = vmatpush1.msra.mxu0 0.0
  %4191 = vmatprep.subr.mxu0 0.0
  %4192 = vmatpush1.msra.mxu0 0.0
  %4193 = vmatprep.subr.mxu0 0.0
  %4194 = vmatpush1.msra.mxu0 0.0
  %4195 = vmatprep.subr.mxu0 0.0
  %4196 = vmatpush1.msra.mxu0 0.0
  %4197 = vmatprep.subr.mxu0 0.0
  %4198 = vmatpush1.msra.mxu0 0.0
  %4199 = vmatprep.subr.mxu0 0.0
  %4200 = vmatpush1.msra.mxu0 0.0
  %4201 = vmatprep.subr.mxu0 0.0
  %4202 = vmatpush1.msra.mxu0 0.0
  %4203 = vmatprep.subr.mxu0 0.0
  %4204 = vmatpush1.msra.mxu0 0.0
  %4205 = vmatprep.subr.mxu0 0.0
  %4206 = vmatpush1.msra.mxu0 0.0
  %4207 = vmatprep.subr.mxu0 0.0
  %4208 = vmatpush1.msra.mxu0 0.0
  %4209 = vmatprep.subr.mxu0 0.0
  %4210 = vmatpush1.msra.mxu0 %v3650
  %4211 = vmatprep.subr.mxu0 0.0
  %4212 = vmatpush1.msra.mxu0 %v3647
  %4213 = vmatprep.subr.mxu0 0.0
  %4214 = vmatpush2.msra.mxu0 0.0
  %4215 = vmatprep.subr.mxu0 0.0
  %4216 = vmatpush2.msra.mxu0 0.0
  %4217 = vmatprep.subr.mxu0 0.0
  %4218 = vmatpush2.msra.mxu0 0.0
  %4219 = vmatprep.subr.mxu0 0.0
  %4220 = vmatpush2.msra.mxu0 0.0
  %4221 = vmatprep.subr.mxu0 0.0
  %4222 = vmatpush2.msra.mxu0 0.0
  %4223 = vmatprep.subr.mxu0 0.0
  %4224 = vmatpush2.msra.mxu0 0.0
  %4225 = vmatprep.subr.mxu0 0.0
  %4226 = vmatpush2.msra.mxu0 0.0
  %4227 = vmatprep.subr.mxu0 0.0
  %4228 = vmatpush2.msra.mxu0 0.0
  %4229 = vmatprep.subr.mxu0 0.0
  %4230 = vmatpush2.msra.mxu0 0.0
  %4231 = vmatprep.subr.mxu0 0.0
  %4232 = vmatpush2.msra.mxu0 0.0
  %4233 = vmatprep.subr.mxu0 0.0
  %4234 = vmatpush2.msra.mxu0 0.0
  %4235 = vmatprep.subr.mxu0 0.0
  %4236 = vmatpush2.msra.mxu0 0.0
  %4237 = vmatprep.subr.mxu0 0.0
  %4238 = vmatpush2.msra.mxu0 0.0
  %4239 = vmatprep.subr.mxu0 0.0
  %4240 = vmatpush2.msra.mxu0 0.0
  %4241 = vmatprep.subr.mxu0 0.0
  %4242 = vmatpush2.msra.mxu0 0.0
  %4243 = vmatprep.subr.mxu0 0.0
  %4244 = vmatpush2.msra.mxu0 0.0
  %4245 = vmatprep.mubr.f32.mxu0 0.0
  %4246 = vmatmul.mubr.f32.gmra.mxu0 %v4179
  %v4247 = vpop.f32.mrf.mxu0
  %v4248 = vadd.f32 0.0, %v4247
  %v4249 = vpop.f32.mrf.mxu0
  %4250 = vdwg.mxu0
  %v4252 = vrot.slane %v4248, 6
  %v4254 = vadd.f32 %v3461, %v4252
  %v4255 = vtanh.pop %v4254
  %v4256 = vxor.u32 %v4254, 2147483648
  %v4257 = vmul.f32 %v4256, 1.442695
  %v4258 = vpow.pop %v4257
  %v4259 = vadd.f32 %v4258, 1.0
  %v4260 = vrcp.pop %v4259
  %v4261 = vmul.f32 1.0, %v4260
  %v4262 = vsel %vm1208, %v4255, %v4261
  %v4264 = vrot.slane %v4169, 6
  %v4266 = vmul.f32 %v4262, %v4264
  %4268 = vrot.lane.b32.xlu0 %v4262, 102
  %v4269 = vpop.permute.xlu0 %4268
  %v4271 = vmul.f32 %v4262, %v4269
  %4273 = vrot.lane.b32.xlu0 %v4271, 13
  %v4274 = vpop.permute.xlu0 %4273
  %v4276 = vadd.f32 %v4266, %v4274
  %v4277 = vtanh.pop %v4276
  %4279 = vrot.lane.b32.xlu0 %v4277, 26
  %v4280 = vpop.permute.xlu0 %4279
  %v4282 = vmul.f32 %v4262, %v4280
  %v4284 = vrot.slane %v4282, 2
  %4285 = vrot.lane.b32.xlu0 %v4284, 89
  %v4286 = vpop.permute.xlu0 %4285
  %v4287 = vsel %vm1234, %v4286, 0
  %4289 = vmatprep.subr.mxu0 0.0
  %4290 = vmatpush1.msra.mxu0 0.0
  %4291 = vmatprep.subr.mxu0 0.0
  %4292 = vmatpush1.msra.mxu0 0.0
  %4293 = vmatprep.subr.mxu0 0.0
  %4294 = vmatpush1.msra.mxu0 0.0
  %4295 = vmatprep.subr.mxu0 0.0
  %4296 = vmatpush1.msra.mxu0 0.0
  %4297 = vmatprep.subr.mxu0 0.0
  %4298 = vmatpush1.msra.mxu0 0.0
  %4299 = vmatprep.subr.mxu0 0.0
  %4300 = vmatpush1.msra.mxu0 0.0
  %4301 = vmatprep.subr.mxu0 0.0
  %4302 = vmatpush1.msra.mxu0 0.0
  %4303 = vmatprep.subr.mxu0 0.0
  %4304 = vmatpush1.msra.mxu0 0.0
  %4305 = vmatprep.subr.mxu0 0.0
  %4306 = vmatpush1.msra.mxu0 0.0
  %4307 = vmatprep.subr.mxu0 0.0
  %4308 = vmatpush1.msra.mxu0 0.0
  %4309 = vmatprep.subr.mxu0 0.0
  %4310 = vmatpush1.msra.mxu0 0.0
  %4311 = vmatprep.subr.mxu0 0.0
  %4312 = vmatpush1.msra.mxu0 0.0
  %4313 = vmatprep.subr.mxu0 0.0
  %4314 = vmatpush1.msra.mxu0 0.0
  %4315 = vmatprep.subr.mxu0 0.0
  %4316 = vmatpush1.msra.mxu0 0.0
  %4317 = vmatprep.subr.mxu0 0.0
  %4318 = vmatpush1.msra.mxu0 %v3650
  %4319 = vmatprep.subr.mxu0 0.0
  %4320 = vmatpush1.msra.mxu0 %v3647
  %4321 = vmatprep.subr.mxu0 0.0
  %4322 = vmatpush2.msra.mxu0 0.0
  %4323 = vmatprep.subr.mxu0 0.0
  %4324 = vmatpush2.msra.mxu0 0.0
  %4325 = vmatprep.subr.mxu0 0.0
  %4326 = vmatpush2.msra.mxu0 0.0
  %4327 = vmatprep.subr.mxu0 0.0
  %4328 = vmatpush2.msra.mxu0 0.0
  %4329 = vmatprep.subr.mxu0 0.0
  %4330 = vmatpush2.msra.mxu0 0.0
  %4331 = vmatprep.subr.mxu0 0.0
  %4332 = vmatpush2.msra.mxu0 0.0
  %4333 = vmatprep.subr.mxu0 0.0
  %4334 = vmatpush2.msra.mxu0 0.0
  %4335 = vmatprep.subr.mxu0 0.0
  %4336 = vmatpush2.msra.mxu0 0.0
  %4337 = vmatprep.subr.mxu0 0.0
  %4338 = vmatpush2.msra.mxu0 0.0
  %4339 = vmatprep.subr.mxu0 0.0
  %4340 = vmatpush2.msra.mxu0 0.0
  %4341 = vmatprep.subr.mxu0 0.0
  %4342 = vmatpush2.msra.mxu0 0.0
  %4343 = vmatprep.subr.mxu0 0.0
  %4344 = vmatpush2.msra.mxu0 0.0
  %4345 = vmatprep.subr.mxu0 0.0
  %4346 = vmatpush2.msra.mxu0 0.0
  %4347 = vmatprep.subr.mxu0 0.0
  %4348 = vmatpush2.msra.mxu0 0.0
  %4349 = vmatprep.subr.mxu0 0.0
  %4350 = vmatpush2.msra.mxu0 0.0
  %4351 = vmatprep.subr.mxu0 0.0
  %4352 = vmatpush2.msra.mxu0 0.0
  %4353 = vmatprep.mubr.f32.mxu0 0.0
  %4354 = vmatmul.mubr.f32.gmra.mxu0 %v4287
  %v4355 = vpop.f32.mrf.mxu0
  %v4356 = vadd.f32 0.0, %v4355
  %v4357 = vpop.f32.mrf.mxu0
  %4358 = vdwg.mxu0
  %v4360 = vrot.slane %v4356, 4
  %v4362 = vadd.f32 %v3461, %v4360
  %v4363 = vtanh.pop %v4362
  %v4364 = vxor.u32 %v4362, 2147483648
  %v4365 = vmul.f32 %v4364, 1.442695
  %v4366 = vpow.pop %v4365
  %v4367 = vadd.f32 %v4366, 1.0
  %v4368 = vrcp.pop %v4367
  %v4369 = vmul.f32 1.0, %v4368
  %v4370 = vsel %vm1208, %v4363, %v4369
  %v4372 = vrot.slane %v4276, 6
  %v4374 = vmul.f32 %v4370, %v4372
  %4376 = vrot.lane.b32.xlu0 %v4370, 102
  %v4377 = vpop.permute.xlu0 %4376
  %v4379 = vmul.f32 %v4370, %v4377
  %4381 = vrot.lane.b32.xlu0 %v4379, 13
  %v4382 = vpop.permute.xlu0 %4381
  %v4384 = vadd.f32 %v4374, %v4382
  %v4385 = vtanh.pop %v4384
  %4387 = vrot.lane.b32.xlu0 %v4385, 26
  %v4388 = vpop.permute.xlu0 %4387
  %v4390 = vmul.f32 %v4370, %v4388
  %v4392 = vrot.slane %v4390, 4
  %4393 = vrot.lane.b32.xlu0 %v4392, 89
  %v4394 = vpop.permute.xlu0 %4393
  %v4395 = vsel %vm1234, %v4394, 0
  %4397 = vmatprep.subr.mxu0 0.0
  %4398 = vmatpush1.msra.mxu0 0.0
  %4399 = vmatprep.subr.mxu0 0.0
  %4400 = vmatpush1.msra.mxu0 0.0
  %4401 = vmatprep.subr.mxu0 0.0
  %4402 = vmatpush1.msra.mxu0 0.0
  %4403 = vmatprep.subr.mxu0 0.0
  %4404 = vmatpush1.msra.mxu0 0.0
  %4405 = vmatprep.subr.mxu0 0.0
  %4406 = vmatpush1.msra.mxu0 0.0
  %4407 = vmatprep.subr.mxu0 0.0
  %4408 = vmatpush1.msra.mxu0 0.0
  %4409 = vmatprep.subr.mxu0 0.0
  %4410 = vmatpush1.msra.mxu0 0.0
  %4411 = vmatprep.subr.mxu0 0.0
  %4412 = vmatpush1.msra.mxu0 0.0
  %4413 = vmatprep.subr.mxu0 0.0
  %4414 = vmatpush1.msra.mxu0 0.0
  %4415 = vmatprep.subr.mxu0 0.0
  %4416 = vmatpush1.msra.mxu0 0.0
  %4417 = vmatprep.subr.mxu0 0.0
  %4418 = vmatpush1.msra.mxu0 0.0
  %4419 = vmatprep.subr.mxu0 0.0
  %4420 = vmatpush1.msra.mxu0 0.0
  %4421 = vmatprep.subr.mxu0 0.0
  %4422 = vmatpush1.msra.mxu0 0.0
  %4423 = vmatprep.subr.mxu0 0.0
  %4424 = vmatpush1.msra.mxu0 0.0
  %4425 = vmatprep.subr.mxu0 0.0
  %4426 = vmatpush1.msra.mxu0 %v3650
  %4427 = vmatprep.subr.mxu0 0.0
  %4428 = vmatpush1.msra.mxu0 %v3647
  %4429 = vmatprep.subr.mxu0 0.0
  %4430 = vmatpush2.msra.mxu0 0.0
  %4431 = vmatprep.subr.mxu0 0.0
  %4432 = vmatpush2.msra.mxu0 0.0
  %4433 = vmatprep.subr.mxu0 0.0
  %4434 = vmatpush2.msra.mxu0 0.0
  %4435 = vmatprep.subr.mxu0 0.0
  %4436 = vmatpush2.msra.mxu0 0.0
  %4437 = vmatprep.subr.mxu0 0.0
  %4438 = vmatpush2.msra.mxu0 0.0
  %4439 = vmatprep.subr.mxu0 0.0
  %4440 = vmatpush2.msra.mxu0 0.0
  %4441 = vmatprep.subr.mxu0 0.0
  %4442 = vmatpush2.msra.mxu0 0.0
  %4443 = vmatprep.subr.mxu0 0.0
  %4444 = vmatpush2.msra.mxu0 0.0
  %4445 = vmatprep.subr.mxu0 0.0
  %4446 = vmatpush2.msra.mxu0 0.0
  %4447 = vmatprep.subr.mxu0 0.0
  %4448 = vmatpush2.msra.mxu0 0.0
  %4449 = vmatprep.subr.mxu0 0.0
  %4450 = vmatpush2.msra.mxu0 0.0
  %4451 = vmatprep.subr.mxu0 0.0
  %4452 = vmatpush2.msra.mxu0 0.0
  %4453 = vmatprep.subr.mxu0 0.0
  %4454 = vmatpush2.msra.mxu0 0.0
  %4455 = vmatprep.subr.mxu0 0.0
  %4456 = vmatpush2.msra.mxu0 0.0
  %4457 = vmatprep.subr.mxu0 0.0
  %4458 = vmatpush2.msra.mxu0 0.0
  %4459 = vmatprep.subr.mxu0 0.0
  %4460 = vmatpush2.msra.mxu0 0.0
  %4461 = vmatprep.mubr.f32.mxu0 0.0
  %4462 = vmatmul.mubr.f32.gmra.mxu0 %v4395
  %v4463 = vpop.f32.mrf.mxu0
  %v4464 = vadd.f32 0.0, %v4463
  %v4465 = vpop.f32.mrf.mxu0
  %4466 = vdwg.mxu0
  %v4468 = vrot.slane %v4464, 2
  %v4470 = vadd.f32 %v3461, %v4468
  %v4471 = vtanh.pop %v4470
  %v4472 = vxor.u32 %v4470, 2147483648
  %v4473 = vmul.f32 %v4472, 1.442695
  %v4474 = vpow.pop %v4473
  %v4475 = vadd.f32 %v4474, 1.0
  %v4476 = vrcp.pop %v4475
  %v4477 = vmul.f32 1.0, %v4476
  %v4478 = vsel %vm1208, %v4471, %v4477
  %v4480 = vrot.slane %v4384, 6
  %v4482 = vmul.f32 %v4478, %v4480
  %4484 = vrot.lane.b32.xlu0 %v4478, 102
  %v4485 = vpop.permute.xlu0 %4484
  %v4487 = vmul.f32 %v4478, %v4485
  %4489 = vrot.lane.b32.xlu0 %v4487, 13
  %v4490 = vpop.permute.xlu0 %4489
  %v4492 = vadd.f32 %v4482, %v4490
  %v4493 = vtanh.pop %v4492
  %4495 = vrot.lane.b32.xlu0 %v4493, 26
  %v4496 = vpop.permute.xlu0 %4495
  %v4498 = vmul.f32 %v4478, %v4496
  %v4500 = vrot.slane %v4498, 6
  %4501 = vrot.lane.b32.xlu0 %v4500, 89
  %v4502 = vpop.permute.xlu0 %4501
  %v4503 = vsel %vm1234, %v4502, 0
  %4505 = vmatprep.subr.mxu0 0.0
  %4506 = vmatpush1.msra.mxu0 0.0
  %4507 = vmatprep.subr.mxu0 0.0
  %4508 = vmatpush1.msra.mxu0 0.0
  %4509 = vmatprep.subr.mxu0 0.0
  %4510 = vmatpush1.msra.mxu0 0.0
  %4511 = vmatprep.subr.mxu0 0.0
  %4512 = vmatpush1.msra.mxu0 0.0
  %4513 = vmatprep.subr.mxu0 0.0
  %4514 = vmatpush1.msra.mxu0 0.0
  %4515 = vmatprep.subr.mxu0 0.0
  %4516 = vmatpush1.msra.mxu0 0.0
  %4517 = vmatprep.subr.mxu0 0.0
  %4518 = vmatpush1.msra.mxu0 0.0
  %4519 = vmatprep.subr.mxu0 0.0
  %4520 = vmatpush1.msra.mxu0 0.0
  %4521 = vmatprep.subr.mxu0 0.0
  %4522 = vmatpush1.msra.mxu0 0.0
  %4523 = vmatprep.subr.mxu0 0.0
  %4524 = vmatpush1.msra.mxu0 0.0
  %4525 = vmatprep.subr.mxu0 0.0
  %4526 = vmatpush1.msra.mxu0 0.0
  %4527 = vmatprep.subr.mxu0 0.0
  %4528 = vmatpush1.msra.mxu0 0.0
  %4529 = vmatprep.subr.mxu0 0.0
  %4530 = vmatpush1.msra.mxu0 0.0
  %4531 = vmatprep.subr.mxu0 0.0
  %4532 = vmatpush1.msra.mxu0 0.0
  %4533 = vmatprep.subr.mxu0 0.0
  %4534 = vmatpush1.msra.mxu0 %v3650
  %4535 = vmatprep.subr.mxu0 0.0
  %4536 = vmatpush1.msra.mxu0 %v3647
  %4537 = vmatprep.subr.mxu0 0.0
  %4538 = vmatpush2.msra.mxu0 0.0
  %4539 = vmatprep.subr.mxu0 0.0
  %4540 = vmatpush2.msra.mxu0 0.0
  %4541 = vmatprep.subr.mxu0 0.0
  %4542 = vmatpush2.msra.mxu0 0.0
  %4543 = vmatprep.subr.mxu0 0.0
  %4544 = vmatpush2.msra.mxu0 0.0
  %4545 = vmatprep.subr.mxu0 0.0
  %4546 = vmatpush2.msra.mxu0 0.0
  %4547 = vmatprep.subr.mxu0 0.0
  %4548 = vmatpush2.msra.mxu0 0.0
  %4549 = vmatprep.subr.mxu0 0.0
  %4550 = vmatpush2.msra.mxu0 0.0
  %4551 = vmatprep.subr.mxu0 0.0
  %4552 = vmatpush2.msra.mxu0 0.0
  %4553 = vmatprep.subr.mxu0 0.0
  %4554 = vmatpush2.msra.mxu0 0.0
  %4555 = vmatprep.subr.mxu0 0.0
  %4556 = vmatpush2.msra.mxu0 0.0
  %4557 = vmatprep.subr.mxu0 0.0
  %4558 = vmatpush2.msra.mxu0 0.0
  %4559 = vmatprep.subr.mxu0 0.0
  %4560 = vmatpush2.msra.mxu0 0.0
  %4561 = vmatprep.subr.mxu0 0.0
  %4562 = vmatpush2.msra.mxu0 0.0
  %4563 = vmatprep.subr.mxu0 0.0
  %4564 = vmatpush2.msra.mxu0 0.0
  %4565 = vmatprep.subr.mxu0 0.0
  %4566 = vmatpush2.msra.mxu0 0.0
  %4567 = vmatprep.subr.mxu0 0.0
  %4568 = vmatpush2.msra.mxu0 0.0
  %4569 = vmatprep.mubr.f32.mxu0 0.0
  %4570 = vmatmul.mubr.f32.gmra.mxu0 %v4503
  %v4571 = vpop.f32.mrf.mxu0
  %v4572 = vadd.f32 0.0, %v4571
  %v4573 = vpop.f32.mrf.mxu0
  %4574 = vdwg.mxu0
  %v4575 = vadd.f32 %v3462, %v4572
  %v4576 = vtanh.pop %v4575
  %v4577 = vxor.u32 %v4575, 2147483648
  %v4578 = vmul.f32 %v4577, 1.442695
  %v4579 = vpow.pop %v4578
  %v4580 = vadd.f32 %v4579, 1.0
  %v4581 = vrcp.pop %v4580
  %v4582 = vmul.f32 1.0, %v4581
  %v4583 = vsel %vm1208, %v4576, %v4582
  %v4585 = vrot.slane %v4492, 6
  %v4587 = vmul.f32 %v4583, %v4585
  %4589 = vrot.lane.b32.xlu0 %v4583, 102
  %v4590 = vpop.permute.xlu0 %4589
  %v4592 = vmul.f32 %v4583, %v4590
  %4594 = vrot.lane.b32.xlu0 %v4592, 13
  %v4595 = vpop.permute.xlu0 %4594
  %v4597 = vadd.f32 %v4587, %v4595
  %v4598 = vtanh.pop %v4597
  %4600 = vrot.lane.b32.xlu0 %v4598, 26
  %v4601 = vpop.permute.xlu0 %4600
  %v4603 = vmul.f32 %v4583, %v4601
  %v4604 = vsel %vm880, %v3747, %v3854
  %v4605 = vsel %vm2195, %v4604, %v3962
  %v4606 = vsel %vm2197, %v4605, %v4070
  %v4607 = vsel %vm880, %v4175, %v4282
  %v4608 = vsel %vm2195, %v4607, %v4390
  %v4609 = vsel %vm2197, %v4608, %v4498
  %s4610 = scalar_lea.vmem %s6, 48
  %v4611 = vld [vmem:[%s4610] sm:$0xff]
  %v4612 = vld [vmem:[%s4610 + $0x8] sm:$0x1f]
  %v4614 = vsel %vm1238, %v4612, 0
  %4616 = vmatprep.subr.mxu0 0.0
  %4617 = vmatpush1.msra.mxu0 0.0
  %4618 = vmatprep.subr.mxu0 0.0
  %4619 = vmatpush1.msra.mxu0 0.0
  %4620 = vmatprep.subr.mxu0 0.0
  %4621 = vmatpush1.msra.mxu0 0.0
  %4622 = vmatprep.subr.mxu0 0.0
  %4623 = vmatpush1.msra.mxu0 0.0
  %4624 = vmatprep.subr.mxu0 0.0
  %4625 = vmatpush1.msra.mxu0 0.0
  %4626 = vmatprep.subr.mxu0 0.0
  %4627 = vmatpush1.msra.mxu0 0.0
  %4628 = vmatprep.subr.mxu0 0.0
  %4629 = vmatpush1.msra.mxu0 0.0
  %4630 = vmatprep.subr.mxu0 0.0
  %4631 = vmatpush1.msra.mxu0 0.0
  %4632 = vmatprep.subr.mxu0 0.0
  %4633 = vmatpush1.msra.mxu0 0.0
  %4634 = vmatprep.subr.mxu0 0.0
  %4635 = vmatpush1.msra.mxu0 0.0
  %4636 = vmatprep.subr.mxu0 0.0
  %4637 = vmatpush1.msra.mxu0 0.0
  %4638 = vmatprep.subr.mxu0 0.0
  %4639 = vmatpush1.msra.mxu0 0.0
  %4640 = vmatprep.subr.mxu0 0.0
  %4641 = vmatpush1.msra.mxu0 0.0
  %4642 = vmatprep.subr.mxu0 0.0
  %4643 = vmatpush1.msra.mxu0 0.0
  %4644 = vmatprep.subr.mxu0 0.0
  %4645 = vmatpush1.msra.mxu0 %v4614
  %4646 = vmatprep.subr.mxu0 0.0
  %4647 = vmatpush1.msra.mxu0 %v4611
  %4648 = vmatprep.subr.mxu0 0.0
  %4649 = vmatpush2.msra.mxu0 0.0
  %4650 = vmatprep.subr.mxu0 0.0
  %4651 = vmatpush2.msra.mxu0 0.0
  %4652 = vmatprep.subr.mxu0 0.0
  %4653 = vmatpush2.msra.mxu0 0.0
  %4654 = vmatprep.subr.mxu0 0.0
  %4655 = vmatpush2.msra.mxu0 0.0
  %4656 = vmatprep.subr.mxu0 0.0
  %4657 = vmatpush2.msra.mxu0 0.0
  %4658 = vmatprep.subr.mxu0 0.0
  %4659 = vmatpush2.msra.mxu0 0.0
  %4660 = vmatprep.subr.mxu0 0.0
  %4661 = vmatpush2.msra.mxu0 0.0
  %4662 = vmatprep.subr.mxu0 0.0
  %4663 = vmatpush2.msra.mxu0 0.0
  %4664 = vmatprep.subr.mxu0 0.0
  %4665 = vmatpush2.msra.mxu0 0.0
  %4666 = vmatprep.subr.mxu0 0.0
  %4667 = vmatpush2.msra.mxu0 0.0
  %4668 = vmatprep.subr.mxu0 0.0
  %4669 = vmatpush2.msra.mxu0 0.0
  %4670 = vmatprep.subr.mxu0 0.0
  %4671 = vmatpush2.msra.mxu0 0.0
  %4672 = vmatprep.subr.mxu0 0.0
  %4673 = vmatpush2.msra.mxu0 0.0
  %4674 = vmatprep.subr.mxu0 0.0
  %4675 = vmatpush2.msra.mxu0 0.0
  %4676 = vmatprep.subr.mxu0 0.0
  %4677 = vmatpush2.msra.mxu0 0.0
  %4678 = vmatprep.subr.mxu0 0.0
  %4679 = vmatpush2.msra.mxu0 0.0
  %4680 = vmatprep.mubr.f32.mxu0 0.0
  %4681 = vmatmul.mubr.f32.gmra.mxu0 %v1236
  %v4682 = vpop.f32.mrf.mxu0
  %v4683 = vadd.f32 0.0, %v4682
  %v4684 = vpop.f32.mrf.mxu0
  %4685 = vdwg.mxu0
  %v4686 = vadd.f32 %v3645, %v4683
  %v4687 = vtanh.pop %v4686
  %v4688 = vxor.u32 %v4686, 2147483648
  %v4689 = vmul.f32 %v4688, 1.442695
  %v4690 = vpow.pop %v4689
  %v4691 = vadd.f32 %v4690, 1.0
  %v4692 = vrcp.pop %v4691
  %v4693 = vmul.f32 1.0, %v4692
  %v4694 = vsel %vm1208, %v4687, %v4693
  %v4695 = vmul.f32 %v4694, 0.0
  %4697 = vrot.lane.b32.xlu0 %v4694, 102
  %v4698 = vpop.permute.xlu0 %4697
  %v4700 = vmul.f32 %v4694, %v4698
  %4702 = vrot.lane.b32.xlu0 %v4700, 13
  %v4703 = vpop.permute.xlu0 %4702
  %v4705 = vadd.f32 %v4695, %v4703
  %v4706 = vtanh.pop %v4705
  %4708 = vrot.lane.b32.xlu0 %v4706, 26
  %v4709 = vpop.permute.xlu0 %4708
  %v4711 = vmul.f32 %v4694, %v4709
  %4713 = vrot.lane.b32.xlu0 %v4711, 89
  %v4714 = vpop.permute.xlu0 %4713
  %v4715 = vsel %vm1234, %v4714, 0
  %4717 = vmatprep.subr.mxu0 0.0
  %4718 = vmatpush1.msra.mxu0 0.0
  %4719 = vmatprep.subr.mxu0 0.0
  %4720 = vmatpush1.msra.mxu0 0.0
  %4721 = vmatprep.subr.mxu0 0.0
  %4722 = vmatpush1.msra.mxu0 0.0
  %4723 = vmatprep.subr.mxu0 0.0
  %4724 = vmatpush1.msra.mxu0 0.0
  %4725 = vmatprep.subr.mxu0 0.0
  %4726 = vmatpush1.msra.mxu0 0.0
  %4727 = vmatprep.subr.mxu0 0.0
  %4728 = vmatpush1.msra.mxu0 0.0
  %4729 = vmatprep.subr.mxu0 0.0
  %4730 = vmatpush1.msra.mxu0 0.0
  %4731 = vmatprep.subr.mxu0 0.0
  %4732 = vmatpush1.msra.mxu0 0.0
  %4733 = vmatprep.subr.mxu0 0.0
  %4734 = vmatpush1.msra.mxu0 0.0
  %4735 = vmatprep.subr.mxu0 0.0
  %4736 = vmatpush1.msra.mxu0 0.0
  %4737 = vmatprep.subr.mxu0 0.0
  %4738 = vmatpush1.msra.mxu0 0.0
  %4739 = vmatprep.subr.mxu0 0.0
  %4740 = vmatpush1.msra.mxu0 0.0
  %4741 = vmatprep.subr.mxu0 0.0
  %4742 = vmatpush1.msra.mxu0 0.0
  %4743 = vmatprep.subr.mxu0 0.0
  %4744 = vmatpush1.msra.mxu0 0.0
  %4745 = vmatprep.subr.mxu0 0.0
  %4746 = vmatpush1.msra.mxu0 %v4614
  %4747 = vmatprep.subr.mxu0 0.0
  %4748 = vmatpush1.msra.mxu0 %v4611
  %4749 = vmatprep.subr.mxu0 0.0
  %4750 = vmatpush2.msra.mxu0 0.0
  %4751 = vmatprep.subr.mxu0 0.0
  %4752 = vmatpush2.msra.mxu0 0.0
  %4753 = vmatprep.subr.mxu0 0.0
  %4754 = vmatpush2.msra.mxu0 0.0
  %4755 = vmatprep.subr.mxu0 0.0
  %4756 = vmatpush2.msra.mxu0 0.0
  %4757 = vmatprep.subr.mxu0 0.0
  %4758 = vmatpush2.msra.mxu0 0.0
  %4759 = vmatprep.subr.mxu0 0.0
  %4760 = vmatpush2.msra.mxu0 0.0
  %4761 = vmatprep.subr.mxu0 0.0
  %4762 = vmatpush2.msra.mxu0 0.0
  %4763 = vmatprep.subr.mxu0 0.0
  %4764 = vmatpush2.msra.mxu0 0.0
  %4765 = vmatprep.subr.mxu0 0.0
  %4766 = vmatpush2.msra.mxu0 0.0
  %4767 = vmatprep.subr.mxu0 0.0
  %4768 = vmatpush2.msra.mxu0 0.0
  %4769 = vmatprep.subr.mxu0 0.0
  %4770 = vmatpush2.msra.mxu0 0.0
  %4771 = vmatprep.subr.mxu0 0.0
  %4772 = vmatpush2.msra.mxu0 0.0
  %4773 = vmatprep.subr.mxu0 0.0
  %4774 = vmatpush2.msra.mxu0 0.0
  %4775 = vmatprep.subr.mxu0 0.0
  %4776 = vmatpush2.msra.mxu0 0.0
  %4777 = vmatprep.subr.mxu0 0.0
  %4778 = vmatpush2.msra.mxu0 0.0
  %4779 = vmatprep.subr.mxu0 0.0
  %4780 = vmatpush2.msra.mxu0 0.0
  %4781 = vmatprep.mubr.f32.mxu0 0.0
  %4782 = vmatmul.mubr.f32.gmra.mxu0 %v4715
  %v4783 = vpop.f32.mrf.mxu0
  %v4784 = vadd.f32 0.0, %v4783
  %v4785 = vpop.f32.mrf.mxu0
  %4786 = vdwg.mxu0
  %v4788 = vrot.slane %v4784, 2
  %v4790 = vadd.f32 %v3644, %v4788
  %v4791 = vtanh.pop %v4790
  %v4792 = vxor.u32 %v4790, 2147483648
  %v4793 = vmul.f32 %v4792, 1.442695
  %v4794 = vpow.pop %v4793
  %v4795 = vadd.f32 %v4794, 1.0
  %v4796 = vrcp.pop %v4795
  %v4797 = vmul.f32 1.0, %v4796
  %v4798 = vsel %vm1208, %v4791, %v4797
  %v4800 = vrot.slane %v4705, 2
  %v4802 = vmul.f32 %v4798, %v4800
  %4804 = vrot.lane.b32.xlu0 %v4798, 102
  %v4805 = vpop.permute.xlu0 %4804
  %v4807 = vmul.f32 %v4798, %v4805
  %4809 = vrot.lane.b32.xlu0 %v4807, 13
  %v4810 = vpop.permute.xlu0 %4809
  %v4812 = vadd.f32 %v4802, %v4810
  %v4813 = vtanh.pop %v4812
  %4815 = vrot.lane.b32.xlu0 %v4813, 26
  %v4816 = vpop.permute.xlu0 %4815
  %v4818 = vmul.f32 %v4798, %v4816
  %v4820 = vrot.slane %v4818, 6
  %4821 = vrot.lane.b32.xlu0 %v4820, 89
  %v4822 = vpop.permute.xlu0 %4821
  %v4823 = vsel %vm1234, %v4822, 0
  %4825 = vmatprep.subr.mxu0 0.0
  %4826 = vmatpush1.msra.mxu0 0.0
  %4827 = vmatprep.subr.mxu0 0.0
  %4828 = vmatpush1.msra.mxu0 0.0
  %4829 = vmatprep.subr.mxu0 0.0
  %4830 = vmatpush1.msra.mxu0 0.0
  %4831 = vmatprep.subr.mxu0 0.0
  %4832 = vmatpush1.msra.mxu0 0.0
  %4833 = vmatprep.subr.mxu0 0.0
  %4834 = vmatpush1.msra.mxu0 0.0
  %4835 = vmatprep.subr.mxu0 0.0
  %4836 = vmatpush1.msra.mxu0 0.0
  %4837 = vmatprep.subr.mxu0 0.0
  %4838 = vmatpush1.msra.mxu0 0.0
  %4839 = vmatprep.subr.mxu0 0.0
  %4840 = vmatpush1.msra.mxu0 0.0
  %4841 = vmatprep.subr.mxu0 0.0
  %4842 = vmatpush1.msra.mxu0 0.0
  %4843 = vmatprep.subr.mxu0 0.0
  %4844 = vmatpush1.msra.mxu0 0.0
  %4845 = vmatprep.subr.mxu0 0.0
  %4846 = vmatpush1.msra.mxu0 0.0
  %4847 = vmatprep.subr.mxu0 0.0
  %4848 = vmatpush1.msra.mxu0 0.0
  %4849 = vmatprep.subr.mxu0 0.0
  %4850 = vmatpush1.msra.mxu0 0.0
  %4851 = vmatprep.subr.mxu0 0.0
  %4852 = vmatpush1.msra.mxu0 0.0
  %4853 = vmatprep.subr.mxu0 0.0
  %4854 = vmatpush1.msra.mxu0 %v4614
  %4855 = vmatprep.subr.mxu0 0.0
  %4856 = vmatpush1.msra.mxu0 %v4611
  %4857 = vmatprep.subr.mxu0 0.0
  %4858 = vmatpush2.msra.mxu0 0.0
  %4859 = vmatprep.subr.mxu0 0.0
  %4860 = vmatpush2.msra.mxu0 0.0
  %4861 = vmatprep.subr.mxu0 0.0
  %4862 = vmatpush2.msra.mxu0 0.0
  %4863 = vmatprep.subr.mxu0 0.0
  %4864 = vmatpush2.msra.mxu0 0.0
  %4865 = vmatprep.subr.mxu0 0.0
  %4866 = vmatpush2.msra.mxu0 0.0
  %4867 = vmatprep.subr.mxu0 0.0
  %4868 = vmatpush2.msra.mxu0 0.0
  %4869 = vmatprep.subr.mxu0 0.0
  %4870 = vmatpush2.msra.mxu0 0.0
  %4871 = vmatprep.subr.mxu0 0.0
  %4872 = vmatpush2.msra.mxu0 0.0
  %4873 = vmatprep.subr.mxu0 0.0
  %4874 = vmatpush2.msra.mxu0 0.0
  %4875 = vmatprep.subr.mxu0 0.0
  %4876 = vmatpush2.msra.mxu0 0.0
  %4877 = vmatprep.subr.mxu0 0.0
  %4878 = vmatpush2.msra.mxu0 0.0
  %4879 = vmatprep.subr.mxu0 0.0
  %4880 = vmatpush2.msra.mxu0 0.0
  %4881 = vmatprep.subr.mxu0 0.0
  %4882 = vmatpush2.msra.mxu0 0.0
  %4883 = vmatprep.subr.mxu0 0.0
  %4884 = vmatpush2.msra.mxu0 0.0
  %4885 = vmatprep.subr.mxu0 0.0
  %4886 = vmatpush2.msra.mxu0 0.0
  %4887 = vmatprep.subr.mxu0 0.0
  %4888 = vmatpush2.msra.mxu0 0.0
  %4889 = vmatprep.mubr.f32.mxu0 0.0
  %4890 = vmatmul.mubr.f32.gmra.mxu0 %v4823
  %v4891 = vpop.f32.mrf.mxu0
  %v4892 = vadd.f32 0.0, %v4891
  %v4893 = vpop.f32.mrf.mxu0
  %4894 = vdwg.mxu0
  %v4896 = vrot.slane %v4892, 4
  %v4898 = vadd.f32 %v3644, %v4896
  %v4899 = vtanh.pop %v4898
  %v4900 = vxor.u32 %v4898, 2147483648
  %v4901 = vmul.f32 %v4900, 1.442695
  %v4902 = vpow.pop %v4901
  %v4903 = vadd.f32 %v4902, 1.0
  %v4904 = vrcp.pop %v4903
  %v4905 = vmul.f32 1.0, %v4904
  %v4906 = vsel %vm1208, %v4899, %v4905
  %v4908 = vrot.slane %v4812, 2
  %v4910 = vmul.f32 %v4906, %v4908
  %4912 = vrot.lane.b32.xlu0 %v4906, 102
  %v4913 = vpop.permute.xlu0 %4912
  %v4915 = vmul.f32 %v4906, %v4913
  %4917 = vrot.lane.b32.xlu0 %v4915, 13
  %v4918 = vpop.permute.xlu0 %4917
  %v4920 = vadd.f32 %v4910, %v4918
  %v4921 = vtanh.pop %v4920
  %4923 = vrot.lane.b32.xlu0 %v4921, 26
  %v4924 = vpop.permute.xlu0 %4923
  %v4926 = vmul.f32 %v4906, %v4924
  %v4928 = vrot.slane %v4926, 4
  %4929 = vrot.lane.b32.xlu0 %v4928, 89
  %v4930 = vpop.permute.xlu0 %4929
  %v4931 = vsel %vm1234, %v4930, 0
  %4933 = vmatprep.subr.mxu0 0.0
  %4934 = vmatpush1.msra.mxu0 0.0
  %4935 = vmatprep.subr.mxu0 0.0
  %4936 = vmatpush1.msra.mxu0 0.0
  %4937 = vmatprep.subr.mxu0 0.0
  %4938 = vmatpush1.msra.mxu0 0.0
  %4939 = vmatprep.subr.mxu0 0.0
  %4940 = vmatpush1.msra.mxu0 0.0
  %4941 = vmatprep.subr.mxu0 0.0
  %4942 = vmatpush1.msra.mxu0 0.0
  %4943 = vmatprep.subr.mxu0 0.0
  %4944 = vmatpush1.msra.mxu0 0.0
  %4945 = vmatprep.subr.mxu0 0.0
  %4946 = vmatpush1.msra.mxu0 0.0
  %4947 = vmatprep.subr.mxu0 0.0
  %4948 = vmatpush1.msra.mxu0 0.0
  %4949 = vmatprep.subr.mxu0 0.0
  %4950 = vmatpush1.msra.mxu0 0.0
  %4951 = vmatprep.subr.mxu0 0.0
  %4952 = vmatpush1.msra.mxu0 0.0
  %4953 = vmatprep.subr.mxu0 0.0
  %4954 = vmatpush1.msra.mxu0 0.0
  %4955 = vmatprep.subr.mxu0 0.0
  %4956 = vmatpush1.msra.mxu0 0.0
  %4957 = vmatprep.subr.mxu0 0.0
  %4958 = vmatpush1.msra.mxu0 0.0
  %4959 = vmatprep.subr.mxu0 0.0
  %4960 = vmatpush1.msra.mxu0 0.0
  %4961 = vmatprep.subr.mxu0 0.0
  %4962 = vmatpush1.msra.mxu0 %v4614
  %4963 = vmatprep.subr.mxu0 0.0
  %4964 = vmatpush1.msra.mxu0 %v4611
  %4965 = vmatprep.subr.mxu0 0.0
  %4966 = vmatpush2.msra.mxu0 0.0
  %4967 = vmatprep.subr.mxu0 0.0
  %4968 = vmatpush2.msra.mxu0 0.0
  %4969 = vmatprep.subr.mxu0 0.0
  %4970 = vmatpush2.msra.mxu0 0.0
  %4971 = vmatprep.subr.mxu0 0.0
  %4972 = vmatpush2.msra.mxu0 0.0
  %4973 = vmatprep.subr.mxu0 0.0
  %4974 = vmatpush2.msra.mxu0 0.0
  %4975 = vmatprep.subr.mxu0 0.0
  %4976 = vmatpush2.msra.mxu0 0.0
  %4977 = vmatprep.subr.mxu0 0.0
  %4978 = vmatpush2.msra.mxu0 0.0
  %4979 = vmatprep.subr.mxu0 0.0
  %4980 = vmatpush2.msra.mxu0 0.0
  %4981 = vmatprep.subr.mxu0 0.0
  %4982 = vmatpush2.msra.mxu0 0.0
  %4983 = vmatprep.subr.mxu0 0.0
  %4984 = vmatpush2.msra.mxu0 0.0
  %4985 = vmatprep.subr.mxu0 0.0
  %4986 = vmatpush2.msra.mxu0 0.0
  %4987 = vmatprep.subr.mxu0 0.0
  %4988 = vmatpush2.msra.mxu0 0.0
  %4989 = vmatprep.subr.mxu0 0.0
  %4990 = vmatpush2.msra.mxu0 0.0
  %4991 = vmatprep.subr.mxu0 0.0
  %4992 = vmatpush2.msra.mxu0 0.0
  %4993 = vmatprep.subr.mxu0 0.0
  %4994 = vmatpush2.msra.mxu0 0.0
  %4995 = vmatprep.subr.mxu0 0.0
  %4996 = vmatpush2.msra.mxu0 0.0
  %4997 = vmatprep.mubr.f32.mxu0 0.0
  %4998 = vmatmul.mubr.f32.gmra.mxu0 %v4931
  %v4999 = vpop.f32.mrf.mxu0
  %v5000 = vadd.f32 0.0, %v4999
  %v5001 = vpop.f32.mrf.mxu0
  %5002 = vdwg.mxu0
  %v5004 = vrot.slane %v5000, 6
  %v5006 = vadd.f32 %v3644, %v5004
  %v5007 = vtanh.pop %v5006
  %v5008 = vxor.u32 %v5006, 2147483648
  %v5009 = vmul.f32 %v5008, 1.442695
  %v5010 = vpow.pop %v5009
  %v5011 = vadd.f32 %v5010, 1.0
  %v5012 = vrcp.pop %v5011
  %v5013 = vmul.f32 1.0, %v5012
  %v5014 = vsel %vm1208, %v5007, %v5013
  %v5016 = vrot.slane %v4920, 2
  %v5018 = vmul.f32 %v5014, %v5016
  %5020 = vrot.lane.b32.xlu0 %v5014, 102
  %v5021 = vpop.permute.xlu0 %5020
  %v5023 = vmul.f32 %v5014, %v5021
  %5025 = vrot.lane.b32.xlu0 %v5023, 13
  %v5026 = vpop.permute.xlu0 %5025
  %v5028 = vadd.f32 %v5018, %v5026
  %v5029 = vtanh.pop %v5028
  %5031 = vrot.lane.b32.xlu0 %v5029, 26
  %v5032 = vpop.permute.xlu0 %5031
  %v5034 = vmul.f32 %v5014, %v5032
  %v5036 = vrot.slane %v5034, 2
  %5037 = vrot.lane.b32.xlu0 %v5036, 89
  %v5038 = vpop.permute.xlu0 %5037
  %v5039 = vsel %vm1234, %v5038, 0
  %5041 = vmatprep.subr.mxu0 0.0
  %5042 = vmatpush1.msra.mxu0 0.0
  %5043 = vmatprep.subr.mxu0 0.0
  %5044 = vmatpush1.msra.mxu0 0.0
  %5045 = vmatprep.subr.mxu0 0.0
  %5046 = vmatpush1.msra.mxu0 0.0
  %5047 = vmatprep.subr.mxu0 0.0
  %5048 = vmatpush1.msra.mxu0 0.0
  %5049 = vmatprep.subr.mxu0 0.0
  %5050 = vmatpush1.msra.mxu0 0.0
  %5051 = vmatprep.subr.mxu0 0.0
  %5052 = vmatpush1.msra.mxu0 0.0
  %5053 = vmatprep.subr.mxu0 0.0
  %5054 = vmatpush1.msra.mxu0 0.0
  %5055 = vmatprep.subr.mxu0 0.0
  %5056 = vmatpush1.msra.mxu0 0.0
  %5057 = vmatprep.subr.mxu0 0.0
  %5058 = vmatpush1.msra.mxu0 0.0
  %5059 = vmatprep.subr.mxu0 0.0
  %5060 = vmatpush1.msra.mxu0 0.0
  %5061 = vmatprep.subr.mxu0 0.0
  %5062 = vmatpush1.msra.mxu0 0.0
  %5063 = vmatprep.subr.mxu0 0.0
  %5064 = vmatpush1.msra.mxu0 0.0
  %5065 = vmatprep.subr.mxu0 0.0
  %5066 = vmatpush1.msra.mxu0 0.0
  %5067 = vmatprep.subr.mxu0 0.0
  %5068 = vmatpush1.msra.mxu0 0.0
  %5069 = vmatprep.subr.mxu0 0.0
  %5070 = vmatpush1.msra.mxu0 %v4614
  %5071 = vmatprep.subr.mxu0 0.0
  %5072 = vmatpush1.msra.mxu0 %v4611
  %5073 = vmatprep.subr.mxu0 0.0
  %5074 = vmatpush2.msra.mxu0 0.0
  %5075 = vmatprep.subr.mxu0 0.0
  %5076 = vmatpush2.msra.mxu0 0.0
  %5077 = vmatprep.subr.mxu0 0.0
  %5078 = vmatpush2.msra.mxu0 0.0
  %5079 = vmatprep.subr.mxu0 0.0
  %5080 = vmatpush2.msra.mxu0 0.0
  %5081 = vmatprep.subr.mxu0 0.0
  %5082 = vmatpush2.msra.mxu0 0.0
  %5083 = vmatprep.subr.mxu0 0.0
  %5084 = vmatpush2.msra.mxu0 0.0
  %5085 = vmatprep.subr.mxu0 0.0
  %5086 = vmatpush2.msra.mxu0 0.0
  %5087 = vmatprep.subr.mxu0 0.0
  %5088 = vmatpush2.msra.mxu0 0.0
  %5089 = vmatprep.subr.mxu0 0.0
  %5090 = vmatpush2.msra.mxu0 0.0
  %5091 = vmatprep.subr.mxu0 0.0
  %5092 = vmatpush2.msra.mxu0 0.0
  %5093 = vmatprep.subr.mxu0 0.0
  %5094 = vmatpush2.msra.mxu0 0.0
  %5095 = vmatprep.subr.mxu0 0.0
  %5096 = vmatpush2.msra.mxu0 0.0
  %5097 = vmatprep.subr.mxu0 0.0
  %5098 = vmatpush2.msra.mxu0 0.0
  %5099 = vmatprep.subr.mxu0 0.0
  %5100 = vmatpush2.msra.mxu0 0.0
  %5101 = vmatprep.subr.mxu0 0.0
  %5102 = vmatpush2.msra.mxu0 0.0
  %5103 = vmatprep.subr.mxu0 0.0
  %5104 = vmatpush2.msra.mxu0 0.0
  %5105 = vmatprep.mubr.f32.mxu0 0.0
  %5106 = vmatmul.mubr.f32.gmra.mxu0 %v5039
  %v5107 = vpop.f32.mrf.mxu0
  %v5108 = vadd.f32 0.0, %v5107
  %v5109 = vpop.f32.mrf.mxu0
  %5110 = vdwg.mxu0
  %v5111 = vadd.f32 %v3644, %v5108
  %v5112 = vtanh.pop %v5111
  %v5113 = vxor.u32 %v5111, 2147483648
  %v5114 = vmul.f32 %v5113, 1.442695
  %v5115 = vpow.pop %v5114
  %v5116 = vadd.f32 %v5115, 1.0
  %v5117 = vrcp.pop %v5116
  %v5118 = vmul.f32 1.0, %v5117
  %v5119 = vsel %vm1208, %v5112, %v5118
  %v5121 = vrot.slane %v5028, 2
  %v5123 = vmul.f32 %v5119, %v5121
  %5125 = vrot.lane.b32.xlu0 %v5119, 102
  %v5126 = vpop.permute.xlu0 %5125
  %v5128 = vmul.f32 %v5119, %v5126
  %5130 = vrot.lane.b32.xlu0 %v5128, 13
  %v5131 = vpop.permute.xlu0 %5130
  %v5133 = vadd.f32 %v5123, %v5131
  %v5134 = vtanh.pop %v5133
  %5136 = vrot.lane.b32.xlu0 %v5134, 26
  %v5137 = vpop.permute.xlu0 %5136
  %v5139 = vmul.f32 %v5119, %v5137
  %5141 = vrot.lane.b32.xlu0 %v5139, 89
  %v5142 = vpop.permute.xlu0 %5141
  %v5143 = vsel %vm1234, %v5142, 0
  %5145 = vmatprep.subr.mxu0 0.0
  %5146 = vmatpush1.msra.mxu0 0.0
  %5147 = vmatprep.subr.mxu0 0.0
  %5148 = vmatpush1.msra.mxu0 0.0
  %5149 = vmatprep.subr.mxu0 0.0
  %5150 = vmatpush1.msra.mxu0 0.0
  %5151 = vmatprep.subr.mxu0 0.0
  %5152 = vmatpush1.msra.mxu0 0.0
  %5153 = vmatprep.subr.mxu0 0.0
  %5154 = vmatpush1.msra.mxu0 0.0
  %5155 = vmatprep.subr.mxu0 0.0
  %5156 = vmatpush1.msra.mxu0 0.0
  %5157 = vmatprep.subr.mxu0 0.0
  %5158 = vmatpush1.msra.mxu0 0.0
  %5159 = vmatprep.subr.mxu0 0.0
  %5160 = vmatpush1.msra.mxu0 0.0
  %5161 = vmatprep.subr.mxu0 0.0
  %5162 = vmatpush1.msra.mxu0 0.0
  %5163 = vmatprep.subr.mxu0 0.0
  %5164 = vmatpush1.msra.mxu0 0.0
  %5165 = vmatprep.subr.mxu0 0.0
  %5166 = vmatpush1.msra.mxu0 0.0
  %5167 = vmatprep.subr.mxu0 0.0
  %5168 = vmatpush1.msra.mxu0 0.0
  %5169 = vmatprep.subr.mxu0 0.0
  %5170 = vmatpush1.msra.mxu0 0.0
  %5171 = vmatprep.subr.mxu0 0.0
  %5172 = vmatpush1.msra.mxu0 0.0
  %5173 = vmatprep.subr.mxu0 0.0
  %5174 = vmatpush1.msra.mxu0 %v4614
  %5175 = vmatprep.subr.mxu0 0.0
  %5176 = vmatpush1.msra.mxu0 %v4611
  %5177 = vmatprep.subr.mxu0 0.0
  %5178 = vmatpush2.msra.mxu0 0.0
  %5179 = vmatprep.subr.mxu0 0.0
  %5180 = vmatpush2.msra.mxu0 0.0
  %5181 = vmatprep.subr.mxu0 0.0
  %5182 = vmatpush2.msra.mxu0 0.0
  %5183 = vmatprep.subr.mxu0 0.0
  %5184 = vmatpush2.msra.mxu0 0.0
  %5185 = vmatprep.subr.mxu0 0.0
  %5186 = vmatpush2.msra.mxu0 0.0
  %5187 = vmatprep.subr.mxu0 0.0
  %5188 = vmatpush2.msra.mxu0 0.0
  %5189 = vmatprep.subr.mxu0 0.0
  %5190 = vmatpush2.msra.mxu0 0.0
  %5191 = vmatprep.subr.mxu0 0.0
  %5192 = vmatpush2.msra.mxu0 0.0
  %5193 = vmatprep.subr.mxu0 0.0
  %5194 = vmatpush2.msra.mxu0 0.0
  %5195 = vmatprep.subr.mxu0 0.0
  %5196 = vmatpush2.msra.mxu0 0.0
  %5197 = vmatprep.subr.mxu0 0.0
  %5198 = vmatpush2.msra.mxu0 0.0
  %5199 = vmatprep.subr.mxu0 0.0
  %5200 = vmatpush2.msra.mxu0 0.0
  %5201 = vmatprep.subr.mxu0 0.0
  %5202 = vmatpush2.msra.mxu0 0.0
  %5203 = vmatprep.subr.mxu0 0.0
  %5204 = vmatpush2.msra.mxu0 0.0
  %5205 = vmatprep.subr.mxu0 0.0
  %5206 = vmatpush2.msra.mxu0 0.0
  %5207 = vmatprep.subr.mxu0 0.0
  %5208 = vmatpush2.msra.mxu0 0.0
  %5209 = vmatprep.mubr.f32.mxu0 0.0
  %5210 = vmatmul.mubr.f32.gmra.mxu0 %v5143
  %v5211 = vpop.f32.mrf.mxu0
  %v5212 = vadd.f32 0.0, %v5211
  %v5213 = vpop.f32.mrf.mxu0
  %5214 = vdwg.mxu0
  %v5216 = vrot.slane %v5212, 2
  %v5218 = vadd.f32 %v3643, %v5216
  %v5219 = vtanh.pop %v5218
  %v5220 = vxor.u32 %v5218, 2147483648
  %v5221 = vmul.f32 %v5220, 1.442695
  %v5222 = vpow.pop %v5221
  %v5223 = vadd.f32 %v5222, 1.0
  %v5224 = vrcp.pop %v5223
  %v5225 = vmul.f32 1.0, %v5224
  %v5226 = vsel %vm1208, %v5219, %v5225
  %v5228 = vrot.slane %v5133, 2
  %v5230 = vmul.f32 %v5226, %v5228
  %5232 = vrot.lane.b32.xlu0 %v5226, 102
  %v5233 = vpop.permute.xlu0 %5232
  %v5235 = vmul.f32 %v5226, %v5233
  %5237 = vrot.lane.b32.xlu0 %v5235, 13
  %v5238 = vpop.permute.xlu0 %5237
  %v5240 = vadd.f32 %v5230, %v5238
  %v5241 = vtanh.pop %v5240
  %5243 = vrot.lane.b32.xlu0 %v5241, 26
  %v5244 = vpop.permute.xlu0 %5243
  %v5246 = vmul.f32 %v5226, %v5244
  %v5248 = vrot.slane %v5246, 6
  %5249 = vrot.lane.b32.xlu0 %v5248, 89
  %v5250 = vpop.permute.xlu0 %5249
  %v5251 = vsel %vm1234, %v5250, 0
  %5253 = vmatprep.subr.mxu0 0.0
  %5254 = vmatpush1.msra.mxu0 0.0
  %5255 = vmatprep.subr.mxu0 0.0
  %5256 = vmatpush1.msra.mxu0 0.0
  %5257 = vmatprep.subr.mxu0 0.0
  %5258 = vmatpush1.msra.mxu0 0.0
  %5259 = vmatprep.subr.mxu0 0.0
  %5260 = vmatpush1.msra.mxu0 0.0
  %5261 = vmatprep.subr.mxu0 0.0
  %5262 = vmatpush1.msra.mxu0 0.0
  %5263 = vmatprep.subr.mxu0 0.0
  %5264 = vmatpush1.msra.mxu0 0.0
  %5265 = vmatprep.subr.mxu0 0.0
  %5266 = vmatpush1.msra.mxu0 0.0
  %5267 = vmatprep.subr.mxu0 0.0
  %5268 = vmatpush1.msra.mxu0 0.0
  %5269 = vmatprep.subr.mxu0 0.0
  %5270 = vmatpush1.msra.mxu0 0.0
  %5271 = vmatprep.subr.mxu0 0.0
  %5272 = vmatpush1.msra.mxu0 0.0
  %5273 = vmatprep.subr.mxu0 0.0
  %5274 = vmatpush1.msra.mxu0 0.0
  %5275 = vmatprep.subr.mxu0 0.0
  %5276 = vmatpush1.msra.mxu0 0.0
  %5277 = vmatprep.subr.mxu0 0.0
  %5278 = vmatpush1.msra.mxu0 0.0
  %5279 = vmatprep.subr.mxu0 0.0
  %5280 = vmatpush1.msra.mxu0 0.0
  %5281 = vmatprep.subr.mxu0 0.0
  %5282 = vmatpush1.msra.mxu0 %v4614
  %5283 = vmatprep.subr.mxu0 0.0
  %5284 = vmatpush1.msra.mxu0 %v4611
  %5285 = vmatprep.subr.mxu0 0.0
  %5286 = vmatpush2.msra.mxu0 0.0
  %5287 = vmatprep.subr.mxu0 0.0
  %5288 = vmatpush2.msra.mxu0 0.0
  %5289 = vmatprep.subr.mxu0 0.0
  %5290 = vmatpush2.msra.mxu0 0.0
  %5291 = vmatprep.subr.mxu0 0.0
  %5292 = vmatpush2.msra.mxu0 0.0
  %5293 = vmatprep.subr.mxu0 0.0
  %5294 = vmatpush2.msra.mxu0 0.0
  %5295 = vmatprep.subr.mxu0 0.0
  %5296 = vmatpush2.msra.mxu0 0.0
  %5297 = vmatprep.subr.mxu0 0.0
  %5298 = vmatpush2.msra.mxu0 0.0
  %5299 = vmatprep.subr.mxu0 0.0
  %5300 = vmatpush2.msra.mxu0 0.0
  %5301 = vmatprep.subr.mxu0 0.0
  %5302 = vmatpush2.msra.mxu0 0.0
  %5303 = vmatprep.subr.mxu0 0.0
  %5304 = vmatpush2.msra.mxu0 0.0
  %5305 = vmatprep.subr.mxu0 0.0
  %5306 = vmatpush2.msra.mxu0 0.0
  %5307 = vmatprep.subr.mxu0 0.0
  %5308 = vmatpush2.msra.mxu0 0.0
  %5309 = vmatprep.subr.mxu0 0.0
  %5310 = vmatpush2.msra.mxu0 0.0
  %5311 = vmatprep.subr.mxu0 0.0
  %5312 = vmatpush2.msra.mxu0 0.0
  %5313 = vmatprep.subr.mxu0 0.0
  %5314 = vmatpush2.msra.mxu0 0.0
  %5315 = vmatprep.subr.mxu0 0.0
  %5316 = vmatpush2.msra.mxu0 0.0
  %5317 = vmatprep.mubr.f32.mxu0 0.0
  %5318 = vmatmul.mubr.f32.gmra.mxu0 %v5251
  %v5319 = vpop.f32.mrf.mxu0
  %v5320 = vadd.f32 0.0, %v5319
  %v5321 = vpop.f32.mrf.mxu0
  %5322 = vdwg.mxu0
  %v5324 = vrot.slane %v5320, 4
  %v5326 = vadd.f32 %v3643, %v5324
  %v5327 = vtanh.pop %v5326
  %v5328 = vxor.u32 %v5326, 2147483648
  %v5329 = vmul.f32 %v5328, 1.442695
  %v5330 = vpow.pop %v5329
  %v5331 = vadd.f32 %v5330, 1.0
  %v5332 = vrcp.pop %v5331
  %v5333 = vmul.f32 1.0, %v5332
  %v5334 = vsel %vm1208, %v5327, %v5333
  %v5336 = vrot.slane %v5240, 2
  %v5338 = vmul.f32 %v5334, %v5336
  %5340 = vrot.lane.b32.xlu0 %v5334, 102
  %v5341 = vpop.permute.xlu0 %5340
  %v5343 = vmul.f32 %v5334, %v5341
  %5345 = vrot.lane.b32.xlu0 %v5343, 13
  %v5346 = vpop.permute.xlu0 %5345
  %v5348 = vadd.f32 %v5338, %v5346
  %v5349 = vtanh.pop %v5348
  %5351 = vrot.lane.b32.xlu0 %v5349, 26
  %v5352 = vpop.permute.xlu0 %5351
  %v5354 = vmul.f32 %v5334, %v5352
  %v5356 = vrot.slane %v5354, 4
  %5357 = vrot.lane.b32.xlu0 %v5356, 89
  %v5358 = vpop.permute.xlu0 %5357
  %v5359 = vsel %vm1234, %v5358, 0
  %5361 = vmatprep.subr.mxu0 0.0
  %5362 = vmatpush1.msra.mxu0 0.0
  %5363 = vmatprep.subr.mxu0 0.0
  %5364 = vmatpush1.msra.mxu0 0.0
  %5365 = vmatprep.subr.mxu0 0.0
  %5366 = vmatpush1.msra.mxu0 0.0
  %5367 = vmatprep.subr.mxu0 0.0
  %5368 = vmatpush1.msra.mxu0 0.0
  %5369 = vmatprep.subr.mxu0 0.0
  %5370 = vmatpush1.msra.mxu0 0.0
  %5371 = vmatprep.subr.mxu0 0.0
  %5372 = vmatpush1.msra.mxu0 0.0
  %5373 = vmatprep.subr.mxu0 0.0
  %5374 = vmatpush1.msra.mxu0 0.0
  %5375 = vmatprep.subr.mxu0 0.0
  %5376 = vmatpush1.msra.mxu0 0.0
  %5377 = vmatprep.subr.mxu0 0.0
  %5378 = vmatpush1.msra.mxu0 0.0
  %5379 = vmatprep.subr.mxu0 0.0
  %5380 = vmatpush1.msra.mxu0 0.0
  %5381 = vmatprep.subr.mxu0 0.0
  %5382 = vmatpush1.msra.mxu0 0.0
  %5383 = vmatprep.subr.mxu0 0.0
  %5384 = vmatpush1.msra.mxu0 0.0
  %5385 = vmatprep.subr.mxu0 0.0
  %5386 = vmatpush1.msra.mxu0 0.0
  %5387 = vmatprep.subr.mxu0 0.0
  %5388 = vmatpush1.msra.mxu0 0.0
  %5389 = vmatprep.subr.mxu0 0.0
  %5390 = vmatpush1.msra.mxu0 %v4614
  %5391 = vmatprep.subr.mxu0 0.0
  %5392 = vmatpush1.msra.mxu0 %v4611
  %5393 = vmatprep.subr.mxu0 0.0
  %5394 = vmatpush2.msra.mxu0 0.0
  %5395 = vmatprep.subr.mxu0 0.0
  %5396 = vmatpush2.msra.mxu0 0.0
  %5397 = vmatprep.subr.mxu0 0.0
  %5398 = vmatpush2.msra.mxu0 0.0
  %5399 = vmatprep.subr.mxu0 0.0
  %5400 = vmatpush2.msra.mxu0 0.0
  %5401 = vmatprep.subr.mxu0 0.0
  %5402 = vmatpush2.msra.mxu0 0.0
  %5403 = vmatprep.subr.mxu0 0.0
  %5404 = vmatpush2.msra.mxu0 0.0
  %5405 = vmatprep.subr.mxu0 0.0
  %5406 = vmatpush2.msra.mxu0 0.0
  %5407 = vmatprep.subr.mxu0 0.0
  %5408 = vmatpush2.msra.mxu0 0.0
  %5409 = vmatprep.subr.mxu0 0.0
  %5410 = vmatpush2.msra.mxu0 0.0
  %5411 = vmatprep.subr.mxu0 0.0
  %5412 = vmatpush2.msra.mxu0 0.0
  %5413 = vmatprep.subr.mxu0 0.0
  %5414 = vmatpush2.msra.mxu0 0.0
  %5415 = vmatprep.subr.mxu0 0.0
  %5416 = vmatpush2.msra.mxu0 0.0
  %5417 = vmatprep.subr.mxu0 0.0
  %5418 = vmatpush2.msra.mxu0 0.0
  %5419 = vmatprep.subr.mxu0 0.0
  %5420 = vmatpush2.msra.mxu0 0.0
  %5421 = vmatprep.subr.mxu0 0.0
  %5422 = vmatpush2.msra.mxu0 0.0
  %5423 = vmatprep.subr.mxu0 0.0
  %5424 = vmatpush2.msra.mxu0 0.0
  %5425 = vmatprep.mubr.f32.mxu0 0.0
  %5426 = vmatmul.mubr.f32.gmra.mxu0 %v5359
  %v5427 = vpop.f32.mrf.mxu0
  %v5428 = vadd.f32 0.0, %v5427
  %v5429 = vpop.f32.mrf.mxu0
  %5430 = vdwg.mxu0
  %v5432 = vrot.slane %v5428, 6
  %v5434 = vadd.f32 %v3643, %v5432
  %v5435 = vtanh.pop %v5434
  %v5436 = vxor.u32 %v5434, 2147483648
  %v5437 = vmul.f32 %v5436, 1.442695
  %v5438 = vpow.pop %v5437
  %v5439 = vadd.f32 %v5438, 1.0
  %v5440 = vrcp.pop %v5439
  %v5441 = vmul.f32 1.0, %v5440
  %v5442 = vsel %vm1208, %v5435, %v5441
  %v5444 = vrot.slane %v5348, 2
  %v5446 = vmul.f32 %v5442, %v5444
  %5448 = vrot.lane.b32.xlu0 %v5442, 102
  %v5449 = vpop.permute.xlu0 %5448
  %v5451 = vmul.f32 %v5442, %v5449
  %5453 = vrot.lane.b32.xlu0 %v5451, 13
  %v5454 = vpop.permute.xlu0 %5453
  %v5456 = vadd.f32 %v5446, %v5454
  %v5457 = vtanh.pop %v5456
  %5459 = vrot.lane.b32.xlu0 %v5457, 26
  %v5460 = vpop.permute.xlu0 %5459
  %v5462 = vmul.f32 %v5442, %v5460
  %v5464 = vrot.slane %v5462, 2
  %5465 = vrot.lane.b32.xlu0 %v5464, 89
  %v5466 = vpop.permute.xlu0 %5465
  %v5467 = vsel %vm1234, %v5466, 0
  %5469 = vmatprep.subr.mxu0 0.0
  %5470 = vmatpush1.msra.mxu0 0.0
  %5471 = vmatprep.subr.mxu0 0.0
  %5472 = vmatpush1.msra.mxu0 0.0
  %5473 = vmatprep.subr.mxu0 0.0
  %5474 = vmatpush1.msra.mxu0 0.0
  %5475 = vmatprep.subr.mxu0 0.0
  %5476 = vmatpush1.msra.mxu0 0.0
  %5477 = vmatprep.subr.mxu0 0.0
  %5478 = vmatpush1.msra.mxu0 0.0
  %5479 = vmatprep.subr.mxu0 0.0
  %5480 = vmatpush1.msra.mxu0 0.0
  %5481 = vmatprep.subr.mxu0 0.0
  %5482 = vmatpush1.msra.mxu0 0.0
  %5483 = vmatprep.subr.mxu0 0.0
  %5484 = vmatpush1.msra.mxu0 0.0
  %5485 = vmatprep.subr.mxu0 0.0
  %5486 = vmatpush1.msra.mxu0 0.0
  %5487 = vmatprep.subr.mxu0 0.0
  %5488 = vmatpush1.msra.mxu0 0.0
  %5489 = vmatprep.subr.mxu0 0.0
  %5490 = vmatpush1.msra.mxu0 0.0
  %5491 = vmatprep.subr.mxu0 0.0
  %5492 = vmatpush1.msra.mxu0 0.0
  %5493 = vmatprep.subr.mxu0 0.0
  %5494 = vmatpush1.msra.mxu0 0.0
  %5495 = vmatprep.subr.mxu0 0.0
  %5496 = vmatpush1.msra.mxu0 0.0
  %5497 = vmatprep.subr.mxu0 0.0
  %5498 = vmatpush1.msra.mxu0 %v4614
  %5499 = vmatprep.subr.mxu0 0.0
  %5500 = vmatpush1.msra.mxu0 %v4611
  %5501 = vmatprep.subr.mxu0 0.0
  %5502 = vmatpush2.msra.mxu0 0.0
  %5503 = vmatprep.subr.mxu0 0.0
  %5504 = vmatpush2.msra.mxu0 0.0
  %5505 = vmatprep.subr.mxu0 0.0
  %5506 = vmatpush2.msra.mxu0 0.0
  %5507 = vmatprep.subr.mxu0 0.0
  %5508 = vmatpush2.msra.mxu0 0.0
  %5509 = vmatprep.subr.mxu0 0.0
  %5510 = vmatpush2.msra.mxu0 0.0
  %5511 = vmatprep.subr.mxu0 0.0
  %5512 = vmatpush2.msra.mxu0 0.0
  %5513 = vmatprep.subr.mxu0 0.0
  %5514 = vmatpush2.msra.mxu0 0.0
  %5515 = vmatprep.subr.mxu0 0.0
  %5516 = vmatpush2.msra.mxu0 0.0
  %5517 = vmatprep.subr.mxu0 0.0
  %5518 = vmatpush2.msra.mxu0 0.0
  %5519 = vmatprep.subr.mxu0 0.0
  %5520 = vmatpush2.msra.mxu0 0.0
  %5521 = vmatprep.subr.mxu0 0.0
  %5522 = vmatpush2.msra.mxu0 0.0
  %5523 = vmatprep.subr.mxu0 0.0
  %5524 = vmatpush2.msra.mxu0 0.0
  %5525 = vmatprep.subr.mxu0 0.0
  %5526 = vmatpush2.msra.mxu0 0.0
  %5527 = vmatprep.subr.mxu0 0.0
  %5528 = vmatpush2.msra.mxu0 0.0
  %5529 = vmatprep.subr.mxu0 0.0
  %5530 = vmatpush2.msra.mxu0 0.0
  %5531 = vmatprep.subr.mxu0 0.0
  %5532 = vmatpush2.msra.mxu0 0.0
  %5533 = vmatprep.mubr.f32.mxu0 0.0
  %5534 = vmatmul.mubr.f32.gmra.mxu0 %v5467
  %v5535 = vpop.f32.mrf.mxu0
  %v5536 = vadd.f32 0.0, %v5535
  %v5537 = vpop.f32.mrf.mxu0
  %5538 = vdwg.mxu0
  %v5539 = vadd.f32 %v3643, %v5536
  %v5540 = vtanh.pop %v5539
  %v5541 = vxor.u32 %v5539, 2147483648
  %v5542 = vmul.f32 %v5541, 1.442695
  %v5543 = vpow.pop %v5542
  %v5544 = vadd.f32 %v5543, 1.0
  %v5545 = vrcp.pop %v5544
  %v5546 = vmul.f32 1.0, %v5545
  %v5547 = vsel %vm1208, %v5540, %v5546
  %v5549 = vrot.slane %v5456, 2
  %v5551 = vmul.f32 %v5547, %v5549
  %5553 = vrot.lane.b32.xlu0 %v5547, 102
  %v5554 = vpop.permute.xlu0 %5553
  %v5556 = vmul.f32 %v5547, %v5554
  %5558 = vrot.lane.b32.xlu0 %v5556, 13
  %v5559 = vpop.permute.xlu0 %5558
  %v5561 = vadd.f32 %v5551, %v5559
  %v5562 = vtanh.pop %v5561
  %5564 = vrot.lane.b32.xlu0 %v5562, 26
  %v5565 = vpop.permute.xlu0 %5564
  %v5567 = vmul.f32 %v5547, %v5565
  %v5568 = vsel %vm880, %v5567, %v5462
  %v5569 = vsel %vm2195, %v5568, %v5354
  %v5570 = vsel %vm2197, %v5569, %v5246
  %v5571 = vsel %vm880, %v5139, %v5034
  %v5572 = vsel %vm2195, %v5571, %v4926
  %v5573 = vsel %vm2197, %v5572, %v4818
  %s5574 = scalar_lea.vmem %s5, 64
  %v5575 = vld [vmem:[%s5574] sm:$0xff]
  %v5576 = vld [vmem:[%s5574 + $0x8] sm:$0x1f]
  %s5577 = scalar_lea.vmem %s5, 80
  %v5578 = vld [vmem:[%s5577] sm:$0xff]
  %v5579 = vld [vmem:[%s5577 + $0x8] sm:$0x1f]
  %5582 = vrot.lane.b32.xlu0 %v5570, 89
  %v5583 = vpop.permute.xlu0 %5582
  %5584 = vrot.lane.b32.xlu0 %v5573, 89
  %v5585 = vpop.permute.xlu0 %5584
  %v5586 = vsel %vm1234, %v5583, 0
  %v5588 = vsel %vm1234, %v5585, 0
  %v5591 = vsel %vm1238, %v5579, 0
  %5593 = vmatprep.subr.mxu0 0.0
  %5594 = vmatpush1.msra.mxu0 0.0
  %5595 = vmatprep.subr.mxu0 0.0
  %5596 = vmatpush1.msra.mxu0 0.0
  %5597 = vmatprep.subr.mxu0 0.0
  %5598 = vmatpush1.msra.mxu0 0.0
  %5599 = vmatprep.subr.mxu0 0.0
  %5600 = vmatpush1.msra.mxu0 0.0
  %5601 = vmatprep.subr.mxu0 0.0
  %5602 = vmatpush1.msra.mxu0 0.0
  %5603 = vmatprep.subr.mxu0 0.0
  %5604 = vmatpush1.msra.mxu0 0.0
  %5605 = vmatprep.subr.mxu0 0.0
  %5606 = vmatpush1.msra.mxu0 0.0
  %5607 = vmatprep.subr.mxu0 0.0
  %5608 = vmatpush1.msra.mxu0 0.0
  %5609 = vmatprep.subr.mxu0 0.0
  %5610 = vmatpush1.msra.mxu0 0.0
  %5611 = vmatprep.subr.mxu0 0.0
  %5612 = vmatpush1.msra.mxu0 0.0
  %5613 = vmatprep.subr.mxu0 0.0
  %5614 = vmatpush1.msra.mxu0 0.0
  %5615 = vmatprep.subr.mxu0 0.0
  %5616 = vmatpush1.msra.mxu0 0.0
  %5617 = vmatprep.subr.mxu0 0.0
  %5618 = vmatpush1.msra.mxu0 0.0
  %5619 = vmatprep.subr.mxu0 0.0
  %5620 = vmatpush1.msra.mxu0 0.0
  %5621 = vmatprep.subr.mxu0 0.0
  %5622 = vmatpush1.msra.mxu0 %v5591
  %5623 = vmatprep.subr.mxu0 0.0
  %5624 = vmatpush1.msra.mxu0 %v5578
  %5625 = vmatprep.subr.mxu0 0.0
  %5626 = vmatpush2.msra.mxu0 0.0
  %5627 = vmatprep.subr.mxu0 0.0
  %5628 = vmatpush2.msra.mxu0 0.0
  %5629 = vmatprep.subr.mxu0 0.0
  %5630 = vmatpush2.msra.mxu0 0.0
  %5631 = vmatprep.subr.mxu0 0.0
  %5632 = vmatpush2.msra.mxu0 0.0
  %5633 = vmatprep.subr.mxu0 0.0
  %5634 = vmatpush2.msra.mxu0 0.0
  %5635 = vmatprep.subr.mxu0 0.0
  %5636 = vmatpush2.msra.mxu0 0.0
  %5637 = vmatprep.subr.mxu0 0.0
  %5638 = vmatpush2.msra.mxu0 0.0
  %5639 = vmatprep.subr.mxu0 0.0
  %5640 = vmatpush2.msra.mxu0 0.0
  %5641 = vmatprep.subr.mxu0 0.0
  %5642 = vmatpush2.msra.mxu0 0.0
  %5643 = vmatprep.subr.mxu0 0.0
  %5644 = vmatpush2.msra.mxu0 0.0
  %5645 = vmatprep.subr.mxu0 0.0
  %5646 = vmatpush2.msra.mxu0 0.0
  %5647 = vmatprep.subr.mxu0 0.0
  %5648 = vmatpush2.msra.mxu0 0.0
  %5649 = vmatprep.subr.mxu0 0.0
  %5650 = vmatpush2.msra.mxu0 0.0
  %5651 = vmatprep.subr.mxu0 0.0
  %5652 = vmatpush2.msra.mxu0 0.0
  %5653 = vmatprep.subr.mxu0 0.0
  %5654 = vmatpush2.msra.mxu0 0.0
  %5655 = vmatprep.subr.mxu0 0.0
  %5656 = vmatpush2.msra.mxu0 0.0
  %5657 = vmatprep.mubr.f32.mxu0 0.0
  %5658 = vmatmul.mubr.f32.gmra.mxu0 %v5586
  %v5659 = vpop.f32.mrf.mxu0
  %v5660 = vadd.f32 0.0, %v5659
  %v5661 = vpop.f32.mrf.mxu0
  %5662 = vmatprep.mubr.f32.mxu0 0.0
  %5663 = vmatmul.mubr.f32.gmra.mxu0 %v5588
  %v5664 = vpop.f32.mrf.mxu0
  %v5665 = vadd.f32 0.0, %v5664
  %v5666 = vpop.f32.mrf.mxu0
  %5667 = vmatprep.mubr.f32.mxu0 0.0
  %5668 = vmatmul.mubr.f32.gmra.mxu0 %v4715
  %v5669 = vpop.f32.mrf.mxu0
  %v5670 = vadd.f32 0.0, %v5669
  %v5671 = vpop.f32.mrf.mxu0
  %5672 = vdwg.mxu0
  %5676 = vrot.lane.b32.xlu0 %v4606, 89
  %v5677 = vpop.permute.xlu0 %5676
  %5678 = vrot.lane.b32.xlu0 %v4609, 89
  %v5679 = vpop.permute.xlu0 %5678
  %5680 = vrot.lane.b32.xlu0 %v4603, 89
  %v5681 = vpop.permute.xlu0 %5680
  %v5682 = vsel %vm1234, %v5677, 0
  %v5684 = vsel %vm1234, %v5679, 0
  %v5686 = vsel %vm1234, %v5681, 0
  %v5689 = vsel %vm1238, %v5576, 0
  %5691 = vmatprep.subr.mxu0 0.0
  %5692 = vmatpush1.msra.mxu0 0.0
  %5693 = vmatprep.subr.mxu0 0.0
  %5694 = vmatpush1.msra.mxu0 0.0
  %5695 = vmatprep.subr.mxu0 0.0
  %5696 = vmatpush1.msra.mxu0 0.0
  %5697 = vmatprep.subr.mxu0 0.0
  %5698 = vmatpush1.msra.mxu0 0.0
  %5699 = vmatprep.subr.mxu0 0.0
  %5700 = vmatpush1.msra.mxu0 0.0
  %5701 = vmatprep.subr.mxu0 0.0
  %5702 = vmatpush1.msra.mxu0 0.0
  %5703 = vmatprep.subr.mxu0 0.0
  %5704 = vmatpush1.msra.mxu0 0.0
  %5705 = vmatprep.subr.mxu0 0.0
  %5706 = vmatpush1.msra.mxu0 0.0
  %5707 = vmatprep.subr.mxu0 0.0
  %5708 = vmatpush1.msra.mxu0 0.0
  %5709 = vmatprep.subr.mxu0 0.0
  %5710 = vmatpush1.msra.mxu0 0.0
  %5711 = vmatprep.subr.mxu0 0.0
  %5712 = vmatpush1.msra.mxu0 0.0
  %5713 = vmatprep.subr.mxu0 0.0
  %5714 = vmatpush1.msra.mxu0 0.0
  %5715 = vmatprep.subr.mxu0 0.0
  %5716 = vmatpush1.msra.mxu0 0.0
  %5717 = vmatprep.subr.mxu0 0.0
  %5718 = vmatpush1.msra.mxu0 0.0
  %5719 = vmatprep.subr.mxu0 0.0
  %5720 = vmatpush1.msra.mxu0 %v5689
  %5721 = vmatprep.subr.mxu0 0.0
  %5722 = vmatpush1.msra.mxu0 %v5575
  %5723 = vmatprep.subr.mxu0 0.0
  %5724 = vmatpush2.msra.mxu0 0.0
  %5725 = vmatprep.subr.mxu0 0.0
  %5726 = vmatpush2.msra.mxu0 0.0
  %5727 = vmatprep.subr.mxu0 0.0
  %5728 = vmatpush2.msra.mxu0 0.0
  %5729 = vmatprep.subr.mxu0 0.0
  %5730 = vmatpush2.msra.mxu0 0.0
  %5731 = vmatprep.subr.mxu0 0.0
  %5732 = vmatpush2.msra.mxu0 0.0
  %5733 = vmatprep.subr.mxu0 0.0
  %5734 = vmatpush2.msra.mxu0 0.0
  %5735 = vmatprep.subr.mxu0 0.0
  %5736 = vmatpush2.msra.mxu0 0.0
  %5737 = vmatprep.subr.mxu0 0.0
  %5738 = vmatpush2.msra.mxu0 0.0
  %5739 = vmatprep.subr.mxu0 0.0
  %5740 = vmatpush2.msra.mxu0 0.0
  %5741 = vmatprep.subr.mxu0 0.0
  %5742 = vmatpush2.msra.mxu0 0.0
  %5743 = vmatprep.subr.mxu0 0.0
  %5744 = vmatpush2.msra.mxu0 0.0
  %5745 = vmatprep.subr.mxu0 0.0
  %5746 = vmatpush2.msra.mxu0 0.0
  %5747 = vmatprep.subr.mxu0 0.0
  %5748 = vmatpush2.msra.mxu0 0.0
  %5749 = vmatprep.subr.mxu0 0.0
  %5750 = vmatpush2.msra.mxu0 0.0
  %5751 = vmatprep.subr.mxu0 0.0
  %5752 = vmatpush2.msra.mxu0 0.0
  %5753 = vmatprep.subr.mxu0 0.0
  %5754 = vmatpush2.msra.mxu0 0.0
  %5755 = vmatprep.mubr.f32.mxu0 0.0
  %5756 = vmatmul.mubr.f32.gmra.mxu0 %v5682
  %v5757 = vpop.f32.mrf.mxu0
  %v5758 = vadd.f32 %v5660, %v5757
  %v5759 = vpop.f32.mrf.mxu0
  %5760 = vmatprep.mubr.f32.mxu0 0.0
  %5761 = vmatmul.mubr.f32.gmra.mxu0 %v5684
  %v5762 = vpop.f32.mrf.mxu0
  %v5763 = vadd.f32 %v5665, %v5762
  %v5764 = vpop.f32.mrf.mxu0
  %5765 = vmatprep.mubr.f32.mxu0 0.0
  %5766 = vmatmul.mubr.f32.gmra.mxu0 %v5686
  %v5767 = vpop.f32.mrf.mxu0
  %v5768 = vadd.f32 %v5670, %v5767
  %v5769 = vpop.f32.mrf.mxu0
  %5770 = vdwg.mxu0
  %s5771 = scalar_lea.vmem %s7, 4
  %v5772 = vld [vmem:[%s5771] sm:$0x1]
  %v5774 = vlaneseq
  %v5775 = vshrl.u32 %v5774, 7
  %v5776 = vsub.s32 0, %v5775
  %v5777 = vrot.slane %v5772, %v5776
  %v5779 = vadd.f32 %v5758, %v5777
  %v5780 = vadd.f32 %v5763, %v5777
  %v5781 = vadd.f32 %v5768, %v5777
  %s5782 = scalar_lea.vmem %s5, 96
  %v5783 = vld [vmem:[%s5782] sm:$0xff]
  %v5784 = vld [vmem:[%s5782 + $0x8] sm:$0x1f]
  %s5785 = scalar_lea.vmem %s5, 112
  %v5786 = vld [vmem:[%s5785] sm:$0xff]
  %v5787 = vld [vmem:[%s5785 + $0x8] sm:$0x1f]
  %v5789 = vsel %vm1238, %v5787, 0
  %5791 = vmatprep.subr.mxu0 0.0
  %5792 = vmatpush1.msra.mxu0 0.0
  %5793 = vmatprep.subr.mxu0 0.0
  %5794 = vmatpush1.msra.mxu0 0.0
  %5795 = vmatprep.subr.mxu0 0.0
  %5796 = vmatpush1.msra.mxu0 0.0
  %5797 = vmatprep.subr.mxu0 0.0
  %5798 = vmatpush1.msra.mxu0 0.0
  %5799 = vmatprep.subr.mxu0 0.0
  %5800 = vmatpush1.msra.mxu0 0.0
  %5801 = vmatprep.subr.mxu0 0.0
  %5802 = vmatpush1.msra.mxu0 0.0
  %5803 = vmatprep.subr.mxu0 0.0
  %5804 = vmatpush1.msra.mxu0 0.0
  %5805 = vmatprep.subr.mxu0 0.0
  %5806 = vmatpush1.msra.mxu0 0.0
  %5807 = vmatprep.subr.mxu0 0.0
  %5808 = vmatpush1.msra.mxu0 0.0
  %5809 = vmatprep.subr.mxu0 0.0
  %5810 = vmatpush1.msra.mxu0 0.0
  %5811 = vmatprep.subr.mxu0 0.0
  %5812 = vmatpush1.msra.mxu0 0.0
  %5813 = vmatprep.subr.mxu0 0.0
  %5814 = vmatpush1.msra.mxu0 0.0
  %5815 = vmatprep.subr.mxu0 0.0
  %5816 = vmatpush1.msra.mxu0 0.0
  %5817 = vmatprep.subr.mxu0 0.0
  %5818 = vmatpush1.msra.mxu0 0.0
  %5819 = vmatprep.subr.mxu0 0.0
  %5820 = vmatpush1.msra.mxu0 %v5789
  %5821 = vmatprep.subr.mxu0 0.0
  %5822 = vmatpush1.msra.mxu0 %v5786
  %5823 = vmatprep.subr.mxu0 0.0
  %5824 = vmatpush2.msra.mxu0 0.0
  %5825 = vmatprep.subr.mxu0 0.0
  %5826 = vmatpush2.msra.mxu0 0.0
  %5827 = vmatprep.subr.mxu0 0.0
  %5828 = vmatpush2.msra.mxu0 0.0
  %5829 = vmatprep.subr.mxu0 0.0
  %5830 = vmatpush2.msra.mxu0 0.0
  %5831 = vmatprep.subr.mxu0 0.0
  %5832 = vmatpush2.msra.mxu0 0.0
  %5833 = vmatprep.subr.mxu0 0.0
  %5834 = vmatpush2.msra.mxu0 0.0
  %5835 = vmatprep.subr.mxu0 0.0
  %5836 = vmatpush2.msra.mxu0 0.0
  %5837 = vmatprep.subr.mxu0 0.0
  %5838 = vmatpush2.msra.mxu0 0.0
  %5839 = vmatprep.subr.mxu0 0.0
  %5840 = vmatpush2.msra.mxu0 0.0
  %5841 = vmatprep.subr.mxu0 0.0
  %5842 = vmatpush2.msra.mxu0 0.0
  %5843 = vmatprep.subr.mxu0 0.0
  %5844 = vmatpush2.msra.mxu0 0.0
  %5845 = vmatprep.subr.mxu0 0.0
  %5846 = vmatpush2.msra.mxu0 0.0
  %5847 = vmatprep.subr.mxu0 0.0
  %5848 = vmatpush2.msra.mxu0 0.0
  %5849 = vmatprep.subr.mxu0 0.0
  %5850 = vmatpush2.msra.mxu0 0.0
  %5851 = vmatprep.subr.mxu0 0.0
  %5852 = vmatpush2.msra.mxu0 0.0
  %5853 = vmatprep.subr.mxu0 0.0
  %5854 = vmatpush2.msra.mxu0 0.0
  %5855 = vmatprep.mubr.f32.mxu0 0.0
  %5856 = vmatmul.mubr.f32.gmra.mxu0 %v5586
  %v5857 = vpop.f32.mrf.mxu0
  %v5858 = vadd.f32 0.0, %v5857
  %v5859 = vpop.f32.mrf.mxu0
  %5860 = vmatprep.mubr.f32.mxu0 0.0
  %5861 = vmatmul.mubr.f32.gmra.mxu0 %v5588
  %v5862 = vpop.f32.mrf.mxu0
  %v5863 = vadd.f32 0.0, %v5862
  %v5864 = vpop.f32.mrf.mxu0
  %5865 = vmatprep.mubr.f32.mxu0 0.0
  %5866 = vmatmul.mubr.f32.gmra.mxu0 %v4715
  %v5867 = vpop.f32.mrf.mxu0
  %v5868 = vadd.f32 0.0, %v5867
  %v5869 = vpop.f32.mrf.mxu0
  %5870 = vdwg.mxu0
  %v5872 = vsel %vm1238, %v5784, 0
  %5874 = vmatprep.subr.mxu0 0.0
  %5875 = vmatpush1.msra.mxu0 0.0
  %5876 = vmatprep.subr.mxu0 0.0
  %5877 = vmatpush1.msra.mxu0 0.0
  %5878 = vmatprep.subr.mxu0 0.0
  %5879 = vmatpush1.msra.mxu0 0.0
  %5880 = vmatprep.subr.mxu0 0.0
  %5881 = vmatpush1.msra.mxu0 0.0
  %5882 = vmatprep.subr.mxu0 0.0
  %5883 = vmatpush1.msra.mxu0 0.0
  %5884 = vmatprep.subr.mxu0 0.0
  %5885 = vmatpush1.msra.mxu0 0.0
  %5886 = vmatprep.subr.mxu0 0.0
  %5887 = vmatpush1.msra.mxu0 0.0
  %5888 = vmatprep.subr.mxu0 0.0
  %5889 = vmatpush1.msra.mxu0 0.0
  %5890 = vmatprep.subr.mxu0 0.0
  %5891 = vmatpush1.msra.mxu0 0.0
  %5892 = vmatprep.subr.mxu0 0.0
  %5893 = vmatpush1.msra.mxu0 0.0
  %5894 = vmatprep.subr.mxu0 0.0
  %5895 = vmatpush1.msra.mxu0 0.0
  %5896 = vmatprep.subr.mxu0 0.0
  %5897 = vmatpush1.msra.mxu0 0.0
  %5898 = vmatprep.subr.mxu0 0.0
  %5899 = vmatpush1.msra.mxu0 0.0
  %5900 = vmatprep.subr.mxu0 0.0
  %5901 = vmatpush1.msra.mxu0 0.0
  %5902 = vmatprep.subr.mxu0 0.0
  %5903 = vmatpush1.msra.mxu0 %v5872
  %5904 = vmatprep.subr.mxu0 0.0
  %5905 = vmatpush1.msra.mxu0 %v5783
  %5906 = vmatprep.subr.mxu0 0.0
  %5907 = vmatpush2.msra.mxu0 0.0
  %5908 = vmatprep.subr.mxu0 0.0
  %5909 = vmatpush2.msra.mxu0 0.0
  %5910 = vmatprep.subr.mxu0 0.0
  %5911 = vmatpush2.msra.mxu0 0.0
  %5912 = vmatprep.subr.mxu0 0.0
  %5913 = vmatpush2.msra.mxu0 0.0
  %5914 = vmatprep.subr.mxu0 0.0
  %5915 = vmatpush2.msra.mxu0 0.0
  %5916 = vmatprep.subr.mxu0 0.0
  %5917 = vmatpush2.msra.mxu0 0.0
  %5918 = vmatprep.subr.mxu0 0.0
  %5919 = vmatpush2.msra.mxu0 0.0
  %5920 = vmatprep.subr.mxu0 0.0
  %5921 = vmatpush2.msra.mxu0 0.0
  %5922 = vmatprep.subr.mxu0 0.0
  %5923 = vmatpush2.msra.mxu0 0.0
  %5924 = vmatprep.subr.mxu0 0.0
  %5925 = vmatpush2.msra.mxu0 0.0
  %5926 = vmatprep.subr.mxu0 0.0
  %5927 = vmatpush2.msra.mxu0 0.0
  %5928 = vmatprep.subr.mxu0 0.0
  %5929 = vmatpush2.msra.mxu0 0.0
  %5930 = vmatprep.subr.mxu0 0.0
  %5931 = vmatpush2.msra.mxu0 0.0
  %5932 = vmatprep.subr.mxu0 0.0
  %5933 = vmatpush2.msra.mxu0 0.0
  %5934 = vmatprep.subr.mxu0 0.0
  %5935 = vmatpush2.msra.mxu0 0.0
  %5936 = vmatprep.subr.mxu0 0.0
  %5937 = vmatpush2.msra.mxu0 0.0
  %5938 = vmatprep.mubr.f32.mxu0 0.0
  %5939 = vmatmul.mubr.f32.gmra.mxu0 %v5682
  %v5940 = vpop.f32.mrf.mxu0
  %v5941 = vadd.f32 %v5858, %v5940
  %v5942 = vpop.f32.mrf.mxu0
  %5943 = vmatprep.mubr.f32.mxu0 0.0
  %5944 = vmatmul.mubr.f32.gmra.mxu0 %v5684
  %v5945 = vpop.f32.mrf.mxu0
  %v5946 = vadd.f32 %v5863, %v5945
  %v5947 = vpop.f32.mrf.mxu0
  %5948 = vmatprep.mubr.f32.mxu0 0.0
  %5949 = vmatmul.mubr.f32.gmra.mxu0 %v5686
  %v5950 = vpop.f32.mrf.mxu0
  %v5951 = vadd.f32 %v5868, %v5950
  %v5952 = vpop.f32.mrf.mxu0
  %5953 = vdwg.mxu0
  %s5954 = scalar_lea.vmem %s7, 5
  %v5955 = vld [vmem:[%s5954] sm:$0x1]
  %v5957 = vlaneseq
  %v5958 = vshrl.u32 %v5957, 7
  %v5959 = vsub.s32 0, %v5958
  %v5960 = vrot.slane %v5955, %v5959
  %v5962 = vadd.f32 %v5941, %v5960
  %v5963 = vadd.f32 %v5946, %v5960
  %v5964 = vadd.f32 %v5951, %v5960
  %s5965 = scalar_lea.vmem %s6, 64
  %v5966 = vld [vmem:[%s5965] sm:$0xff]
  %v5967 = vld [vmem:[%s5965 + $0x8] sm:$0x1f]
  %v5969 = vsel %vm1238, %v5967, 0
  %5971 = vmatprep.subr.mxu0 0.0
  %5972 = vmatpush1.msra.mxu0 0.0
  %5973 = vmatprep.subr.mxu0 0.0
  %5974 = vmatpush1.msra.mxu0 0.0
  %5975 = vmatprep.subr.mxu0 0.0
  %5976 = vmatpush1.msra.mxu0 0.0
  %5977 = vmatprep.subr.mxu0 0.0
  %5978 = vmatpush1.msra.mxu0 0.0
  %5979 = vmatprep.subr.mxu0 0.0
  %5980 = vmatpush1.msra.mxu0 0.0
  %5981 = vmatprep.subr.mxu0 0.0
  %5982 = vmatpush1.msra.mxu0 0.0
  %5983 = vmatprep.subr.mxu0 0.0
  %5984 = vmatpush1.msra.mxu0 0.0
  %5985 = vmatprep.subr.mxu0 0.0
  %5986 = vmatpush1.msra.mxu0 0.0
  %5987 = vmatprep.subr.mxu0 0.0
  %5988 = vmatpush1.msra.mxu0 0.0
  %5989 = vmatprep.subr.mxu0 0.0
  %5990 = vmatpush1.msra.mxu0 0.0
  %5991 = vmatprep.subr.mxu0 0.0
  %5992 = vmatpush1.msra.mxu0 0.0
  %5993 = vmatprep.subr.mxu0 0.0
  %5994 = vmatpush1.msra.mxu0 0.0
  %5995 = vmatprep.subr.mxu0 0.0
  %5996 = vmatpush1.msra.mxu0 0.0
  %5997 = vmatprep.subr.mxu0 0.0
  %5998 = vmatpush1.msra.mxu0 0.0
  %5999 = vmatprep.subr.mxu0 0.0
  %6000 = vmatpush1.msra.mxu0 %v5969
  %6001 = vmatprep.subr.mxu0 0.0
  %6002 = vmatpush1.msra.mxu0 %v5966
  %6003 = vmatprep.subr.mxu0 0.0
  %6004 = vmatpush2.msra.mxu0 0.0
  %6005 = vmatprep.subr.mxu0 0.0
  %6006 = vmatpush2.msra.mxu0 0.0
  %6007 = vmatprep.subr.mxu0 0.0
  %6008 = vmatpush2.msra.mxu0 0.0
  %6009 = vmatprep.subr.mxu0 0.0
  %6010 = vmatpush2.msra.mxu0 0.0
  %6011 = vmatprep.subr.mxu0 0.0
  %6012 = vmatpush2.msra.mxu0 0.0
  %6013 = vmatprep.subr.mxu0 0.0
  %6014 = vmatpush2.msra.mxu0 0.0
  %6015 = vmatprep.subr.mxu0 0.0
  %6016 = vmatpush2.msra.mxu0 0.0
  %6017 = vmatprep.subr.mxu0 0.0
  %6018 = vmatpush2.msra.mxu0 0.0
  %6019 = vmatprep.subr.mxu0 0.0
  %6020 = vmatpush2.msra.mxu0 0.0
  %6021 = vmatprep.subr.mxu0 0.0
  %6022 = vmatpush2.msra.mxu0 0.0
  %6023 = vmatprep.subr.mxu0 0.0
  %6024 = vmatpush2.msra.mxu0 0.0
  %6025 = vmatprep.subr.mxu0 0.0
  %6026 = vmatpush2.msra.mxu0 0.0
  %6027 = vmatprep.subr.mxu0 0.0
  %6028 = vmatpush2.msra.mxu0 0.0
  %6029 = vmatprep.subr.mxu0 0.0
  %6030 = vmatpush2.msra.mxu0 0.0
  %6031 = vmatprep.subr.mxu0 0.0
  %6032 = vmatpush2.msra.mxu0 0.0
  %6033 = vmatprep.subr.mxu0 0.0
  %6034 = vmatpush2.msra.mxu0 0.0
  %6035 = vmatprep.mubr.f32.mxu0 0.0
  %6036 = vmatmul.mubr.f32.gmra.mxu0 %v1236
  %v6037 = vpop.f32.mrf.mxu0
  %v6038 = vadd.f32 0.0, %v6037
  %v6039 = vpop.f32.mrf.mxu0
  %6040 = vdwg.mxu0
  %v6041 = vadd.f32 %v5779, %v6038
  %v6042 = vtanh.pop %v6041
  %v6043 = vxor.u32 %v6041, 2147483648
  %v6044 = vmul.f32 %v6043, 1.442695
  %v6045 = vpow.pop %v6044
  %v6046 = vadd.f32 %v6045, 1.0
  %v6047 = vrcp.pop %v6046
  %v6048 = vmul.f32 1.0, %v6047
  %v6049 = vsel %vm1208, %v6042, %v6048
  %v6050 = vmul.f32 %v6049, 0.0
  %6052 = vrot.lane.b32.xlu0 %v6049, 102
  %v6053 = vpop.permute.xlu0 %6052
  %v6055 = vmul.f32 %v6049, %v6053
  %6057 = vrot.lane.b32.xlu0 %v6055, 13
  %v6058 = vpop.permute.xlu0 %6057
  %v6060 = vadd.f32 %v6050, %v6058
  %v6061 = vtanh.pop %v6060
  %6063 = vrot.lane.b32.xlu0 %v6061, 26
  %v6064 = vpop.permute.xlu0 %6063
  %v6066 = vmul.f32 %v6049, %v6064
  %6068 = vrot.lane.b32.xlu0 %v6066, 89
  %v6069 = vpop.permute.xlu0 %6068
  %v6070 = vsel %vm1234, %v6069, 0
  %6072 = vmatprep.subr.mxu0 0.0
  %6073 = vmatpush1.msra.mxu0 0.0
  %6074 = vmatprep.subr.mxu0 0.0
  %6075 = vmatpush1.msra.mxu0 0.0
  %6076 = vmatprep.subr.mxu0 0.0
  %6077 = vmatpush1.msra.mxu0 0.0
  %6078 = vmatprep.subr.mxu0 0.0
  %6079 = vmatpush1.msra.mxu0 0.0
  %6080 = vmatprep.subr.mxu0 0.0
  %6081 = vmatpush1.msra.mxu0 0.0
  %6082 = vmatprep.subr.mxu0 0.0
  %6083 = vmatpush1.msra.mxu0 0.0
  %6084 = vmatprep.subr.mxu0 0.0
  %6085 = vmatpush1.msra.mxu0 0.0
  %6086 = vmatprep.subr.mxu0 0.0
  %6087 = vmatpush1.msra.mxu0 0.0
  %6088 = vmatprep.subr.mxu0 0.0
  %6089 = vmatpush1.msra.mxu0 0.0
  %6090 = vmatprep.subr.mxu0 0.0
  %6091 = vmatpush1.msra.mxu0 0.0
  %6092 = vmatprep.subr.mxu0 0.0
  %6093 = vmatpush1.msra.mxu0 0.0
  %6094 = vmatprep.subr.mxu0 0.0
  %6095 = vmatpush1.msra.mxu0 0.0
  %6096 = vmatprep.subr.mxu0 0.0
  %6097 = vmatpush1.msra.mxu0 0.0
  %6098 = vmatprep.subr.mxu0 0.0
  %6099 = vmatpush1.msra.mxu0 0.0
  %6100 = vmatprep.subr.mxu0 0.0
  %6101 = vmatpush1.msra.mxu0 %v5969
  %6102 = vmatprep.subr.mxu0 0.0
  %6103 = vmatpush1.msra.mxu0 %v5966
  %6104 = vmatprep.subr.mxu0 0.0
  %6105 = vmatpush2.msra.mxu0 0.0
  %6106 = vmatprep.subr.mxu0 0.0
  %6107 = vmatpush2.msra.mxu0 0.0
  %6108 = vmatprep.subr.mxu0 0.0
  %6109 = vmatpush2.msra.mxu0 0.0
  %6110 = vmatprep.subr.mxu0 0.0
  %6111 = vmatpush2.msra.mxu0 0.0
  %6112 = vmatprep.subr.mxu0 0.0
  %6113 = vmatpush2.msra.mxu0 0.0
  %6114 = vmatprep.subr.mxu0 0.0
  %6115 = vmatpush2.msra.mxu0 0.0
  %6116 = vmatprep.subr.mxu0 0.0
  %6117 = vmatpush2.msra.mxu0 0.0
  %6118 = vmatprep.subr.mxu0 0.0
  %6119 = vmatpush2.msra.mxu0 0.0
  %6120 = vmatprep.subr.mxu0 0.0
  %6121 = vmatpush2.msra.mxu0 0.0
  %6122 = vmatprep.subr.mxu0 0.0
  %6123 = vmatpush2.msra.mxu0 0.0
  %6124 = vmatprep.subr.mxu0 0.0
  %6125 = vmatpush2.msra.mxu0 0.0
  %6126 = vmatprep.subr.mxu0 0.0
  %6127 = vmatpush2.msra.mxu0 0.0
  %6128 = vmatprep.subr.mxu0 0.0
  %6129 = vmatpush2.msra.mxu0 0.0
  %6130 = vmatprep.subr.mxu0 0.0
  %6131 = vmatpush2.msra.mxu0 0.0
  %6132 = vmatprep.subr.mxu0 0.0
  %6133 = vmatpush2.msra.mxu0 0.0
  %6134 = vmatprep.subr.mxu0 0.0
  %6135 = vmatpush2.msra.mxu0 0.0
  %6136 = vmatprep.mubr.f32.mxu0 0.0
  %6137 = vmatmul.mubr.f32.gmra.mxu0 %v6070
  %v6138 = vpop.f32.mrf.mxu0
  %v6139 = vadd.f32 0.0, %v6138
  %v6140 = vpop.f32.mrf.mxu0
  %6141 = vdwg.mxu0
  %v6143 = vrot.slane %v6139, 6
  %v6145 = vadd.f32 %v5779, %v6143
  %v6146 = vtanh.pop %v6145
  %v6147 = vxor.u32 %v6145, 2147483648
  %v6148 = vmul.f32 %v6147, 1.442695
  %v6149 = vpow.pop %v6148
  %v6150 = vadd.f32 %v6149, 1.0
  %v6151 = vrcp.pop %v6150
  %v6152 = vmul.f32 1.0, %v6151
  %v6153 = vsel %vm1208, %v6146, %v6152
  %v6155 = vrot.slane %v6060, 6
  %v6157 = vmul.f32 %v6153, %v6155
  %6159 = vrot.lane.b32.xlu0 %v6153, 102
  %v6160 = vpop.permute.xlu0 %6159
  %v6162 = vmul.f32 %v6153, %v6160
  %6164 = vrot.lane.b32.xlu0 %v6162, 13
  %v6165 = vpop.permute.xlu0 %6164
  %v6167 = vadd.f32 %v6157, %v6165
  %v6168 = vtanh.pop %v6167
  %6170 = vrot.lane.b32.xlu0 %v6168, 26
  %v6171 = vpop.permute.xlu0 %6170
  %v6173 = vmul.f32 %v6153, %v6171
  %v6175 = vrot.slane %v6173, 2
  %6176 = vrot.lane.b32.xlu0 %v6175, 89
  %v6177 = vpop.permute.xlu0 %6176
  %v6178 = vsel %vm1234, %v6177, 0
  %6180 = vmatprep.subr.mxu0 0.0
  %6181 = vmatpush1.msra.mxu0 0.0
  %6182 = vmatprep.subr.mxu0 0.0
  %6183 = vmatpush1.msra.mxu0 0.0
  %6184 = vmatprep.subr.mxu0 0.0
  %6185 = vmatpush1.msra.mxu0 0.0
  %6186 = vmatprep.subr.mxu0 0.0
  %6187 = vmatpush1.msra.mxu0 0.0
  %6188 = vmatprep.subr.mxu0 0.0
  %6189 = vmatpush1.msra.mxu0 0.0
  %6190 = vmatprep.subr.mxu0 0.0
  %6191 = vmatpush1.msra.mxu0 0.0
  %6192 = vmatprep.subr.mxu0 0.0
  %6193 = vmatpush1.msra.mxu0 0.0
  %6194 = vmatprep.subr.mxu0 0.0
  %6195 = vmatpush1.msra.mxu0 0.0
  %6196 = vmatprep.subr.mxu0 0.0
  %6197 = vmatpush1.msra.mxu0 0.0
  %6198 = vmatprep.subr.mxu0 0.0
  %6199 = vmatpush1.msra.mxu0 0.0
  %6200 = vmatprep.subr.mxu0 0.0
  %6201 = vmatpush1.msra.mxu0 0.0
  %6202 = vmatprep.subr.mxu0 0.0
  %6203 = vmatpush1.msra.mxu0 0.0
  %6204 = vmatprep.subr.mxu0 0.0
  %6205 = vmatpush1.msra.mxu0 0.0
  %6206 = vmatprep.subr.mxu0 0.0
  %6207 = vmatpush1.msra.mxu0 0.0
  %6208 = vmatprep.subr.mxu0 0.0
  %6209 = vmatpush1.msra.mxu0 %v5969
  %6210 = vmatprep.subr.mxu0 0.0
  %6211 = vmatpush1.msra.mxu0 %v5966
  %6212 = vmatprep.subr.mxu0 0.0
  %6213 = vmatpush2.msra.mxu0 0.0
  %6214 = vmatprep.subr.mxu0 0.0
  %6215 = vmatpush2.msra.mxu0 0.0
  %6216 = vmatprep.subr.mxu0 0.0
  %6217 = vmatpush2.msra.mxu0 0.0
  %6218 = vmatprep.subr.mxu0 0.0
  %6219 = vmatpush2.msra.mxu0 0.0
  %6220 = vmatprep.subr.mxu0 0.0
  %6221 = vmatpush2.msra.mxu0 0.0
  %6222 = vmatprep.subr.mxu0 0.0
  %6223 = vmatpush2.msra.mxu0 0.0
  %6224 = vmatprep.subr.mxu0 0.0
  %6225 = vmatpush2.msra.mxu0 0.0
  %6226 = vmatprep.subr.mxu0 0.0
  %6227 = vmatpush2.msra.mxu0 0.0
  %6228 = vmatprep.subr.mxu0 0.0
  %6229 = vmatpush2.msra.mxu0 0.0
  %6230 = vmatprep.subr.mxu0 0.0
  %6231 = vmatpush2.msra.mxu0 0.0
  %6232 = vmatprep.subr.mxu0 0.0
  %6233 = vmatpush2.msra.mxu0 0.0
  %6234 = vmatprep.subr.mxu0 0.0
  %6235 = vmatpush2.msra.mxu0 0.0
  %6236 = vmatprep.subr.mxu0 0.0
  %6237 = vmatpush2.msra.mxu0 0.0
  %6238 = vmatprep.subr.mxu0 0.0
  %6239 = vmatpush2.msra.mxu0 0.0
  %6240 = vmatprep.subr.mxu0 0.0
  %6241 = vmatpush2.msra.mxu0 0.0
  %6242 = vmatprep.subr.mxu0 0.0
  %6243 = vmatpush2.msra.mxu0 0.0
  %6244 = vmatprep.mubr.f32.mxu0 0.0
  %6245 = vmatmul.mubr.f32.gmra.mxu0 %v6178
  %v6246 = vpop.f32.mrf.mxu0
  %v6247 = vadd.f32 0.0, %v6246
  %v6248 = vpop.f32.mrf.mxu0
  %6249 = vdwg.mxu0
  %v6251 = vrot.slane %v6247, 4
  %v6253 = vadd.f32 %v5779, %v6251
  %v6254 = vtanh.pop %v6253
  %v6255 = vxor.u32 %v6253, 2147483648
  %v6256 = vmul.f32 %v6255, 1.442695
  %v6257 = vpow.pop %v6256
  %v6258 = vadd.f32 %v6257, 1.0
  %v6259 = vrcp.pop %v6258
  %v6260 = vmul.f32 1.0, %v6259
  %v6261 = vsel %vm1208, %v6254, %v6260
  %v6263 = vrot.slane %v6167, 6
  %v6265 = vmul.f32 %v6261, %v6263
  %6267 = vrot.lane.b32.xlu0 %v6261, 102
  %v6268 = vpop.permute.xlu0 %6267
  %v6270 = vmul.f32 %v6261, %v6268
  %6272 = vrot.lane.b32.xlu0 %v6270, 13
  %v6273 = vpop.permute.xlu0 %6272
  %v6275 = vadd.f32 %v6265, %v6273
  %v6276 = vtanh.pop %v6275
  %6278 = vrot.lane.b32.xlu0 %v6276, 26
  %v6279 = vpop.permute.xlu0 %6278
  %v6281 = vmul.f32 %v6261, %v6279
  %v6283 = vrot.slane %v6281, 4
  %6284 = vrot.lane.b32.xlu0 %v6283, 89
  %v6285 = vpop.permute.xlu0 %6284
  %v6286 = vsel %vm1234, %v6285, 0
  %6288 = vmatprep.subr.mxu0 0.0
  %6289 = vmatpush1.msra.mxu0 0.0
  %6290 = vmatprep.subr.mxu0 0.0
  %6291 = vmatpush1.msra.mxu0 0.0
  %6292 = vmatprep.subr.mxu0 0.0
  %6293 = vmatpush1.msra.mxu0 0.0
  %6294 = vmatprep.subr.mxu0 0.0
  %6295 = vmatpush1.msra.mxu0 0.0
  %6296 = vmatprep.subr.mxu0 0.0
  %6297 = vmatpush1.msra.mxu0 0.0
  %6298 = vmatprep.subr.mxu0 0.0
  %6299 = vmatpush1.msra.mxu0 0.0
  %6300 = vmatprep.subr.mxu0 0.0
  %6301 = vmatpush1.msra.mxu0 0.0
  %6302 = vmatprep.subr.mxu0 0.0
  %6303 = vmatpush1.msra.mxu0 0.0
  %6304 = vmatprep.subr.mxu0 0.0
  %6305 = vmatpush1.msra.mxu0 0.0
  %6306 = vmatprep.subr.mxu0 0.0
  %6307 = vmatpush1.msra.mxu0 0.0
  %6308 = vmatprep.subr.mxu0 0.0
  %6309 = vmatpush1.msra.mxu0 0.0
  %6310 = vmatprep.subr.mxu0 0.0
  %6311 = vmatpush1.msra.mxu0 0.0
  %6312 = vmatprep.subr.mxu0 0.0
  %6313 = vmatpush1.msra.mxu0 0.0
  %6314 = vmatprep.subr.mxu0 0.0
  %6315 = vmatpush1.msra.mxu0 0.0
  %6316 = vmatprep.subr.mxu0 0.0
  %6317 = vmatpush1.msra.mxu0 %v5969
  %6318 = vmatprep.subr.mxu0 0.0
  %6319 = vmatpush1.msra.mxu0 %v5966
  %6320 = vmatprep.subr.mxu0 0.0
  %6321 = vmatpush2.msra.mxu0 0.0
  %6322 = vmatprep.subr.mxu0 0.0
  %6323 = vmatpush2.msra.mxu0 0.0
  %6324 = vmatprep.subr.mxu0 0.0
  %6325 = vmatpush2.msra.mxu0 0.0
  %6326 = vmatprep.subr.mxu0 0.0
  %6327 = vmatpush2.msra.mxu0 0.0
  %6328 = vmatprep.subr.mxu0 0.0
  %6329 = vmatpush2.msra.mxu0 0.0
  %6330 = vmatprep.subr.mxu0 0.0
  %6331 = vmatpush2.msra.mxu0 0.0
  %6332 = vmatprep.subr.mxu0 0.0
  %6333 = vmatpush2.msra.mxu0 0.0
  %6334 = vmatprep.subr.mxu0 0.0
  %6335 = vmatpush2.msra.mxu0 0.0
  %6336 = vmatprep.subr.mxu0 0.0
  %6337 = vmatpush2.msra.mxu0 0.0
  %6338 = vmatprep.subr.mxu0 0.0
  %6339 = vmatpush2.msra.mxu0 0.0
  %6340 = vmatprep.subr.mxu0 0.0
  %6341 = vmatpush2.msra.mxu0 0.0
  %6342 = vmatprep.subr.mxu0 0.0
  %6343 = vmatpush2.msra.mxu0 0.0
  %6344 = vmatprep.subr.mxu0 0.0
  %6345 = vmatpush2.msra.mxu0 0.0
  %6346 = vmatprep.subr.mxu0 0.0
  %6347 = vmatpush2.msra.mxu0 0.0
  %6348 = vmatprep.subr.mxu0 0.0
  %6349 = vmatpush2.msra.mxu0 0.0
  %6350 = vmatprep.subr.mxu0 0.0
  %6351 = vmatpush2.msra.mxu0 0.0
  %6352 = vmatprep.mubr.f32.mxu0 0.0
  %6353 = vmatmul.mubr.f32.gmra.mxu0 %v6286
  %v6354 = vpop.f32.mrf.mxu0
  %v6355 = vadd.f32 0.0, %v6354
  %v6356 = vpop.f32.mrf.mxu0
  %6357 = vdwg.mxu0
  %v6359 = vrot.slane %v6355, 2
  %v6361 = vadd.f32 %v5779, %v6359
  %v6362 = vtanh.pop %v6361
  %v6363 = vxor.u32 %v6361, 2147483648
  %v6364 = vmul.f32 %v6363, 1.442695
  %v6365 = vpow.pop %v6364
  %v6366 = vadd.f32 %v6365, 1.0
  %v6367 = vrcp.pop %v6366
  %v6368 = vmul.f32 1.0, %v6367
  %v6369 = vsel %vm1208, %v6362, %v6368
  %v6371 = vrot.slane %v6275, 6
  %v6373 = vmul.f32 %v6369, %v6371
  %6375 = vrot.lane.b32.xlu0 %v6369, 102
  %v6376 = vpop.permute.xlu0 %6375
  %v6378 = vmul.f32 %v6369, %v6376
  %6380 = vrot.lane.b32.xlu0 %v6378, 13
  %v6381 = vpop.permute.xlu0 %6380
  %v6383 = vadd.f32 %v6373, %v6381
  %v6384 = vtanh.pop %v6383
  %6386 = vrot.lane.b32.xlu0 %v6384, 26
  %v6387 = vpop.permute.xlu0 %6386
  %v6389 = vmul.f32 %v6369, %v6387
  %v6391 = vrot.slane %v6389, 6
  %6392 = vrot.lane.b32.xlu0 %v6391, 89
  %v6393 = vpop.permute.xlu0 %6392
  %v6394 = vsel %vm1234, %v6393, 0
  %6396 = vmatprep.subr.mxu0 0.0
  %6397 = vmatpush1.msra.mxu0 0.0
  %6398 = vmatprep.subr.mxu0 0.0
  %6399 = vmatpush1.msra.mxu0 0.0
  %6400 = vmatprep.subr.mxu0 0.0
  %6401 = vmatpush1.msra.mxu0 0.0
  %6402 = vmatprep.subr.mxu0 0.0
  %6403 = vmatpush1.msra.mxu0 0.0
  %6404 = vmatprep.subr.mxu0 0.0
  %6405 = vmatpush1.msra.mxu0 0.0
  %6406 = vmatprep.subr.mxu0 0.0
  %6407 = vmatpush1.msra.mxu0 0.0
  %6408 = vmatprep.subr.mxu0 0.0
  %6409 = vmatpush1.msra.mxu0 0.0
  %6410 = vmatprep.subr.mxu0 0.0
  %6411 = vmatpush1.msra.mxu0 0.0
  %6412 = vmatprep.subr.mxu0 0.0
  %6413 = vmatpush1.msra.mxu0 0.0
  %6414 = vmatprep.subr.mxu0 0.0
  %6415 = vmatpush1.msra.mxu0 0.0
  %6416 = vmatprep.subr.mxu0 0.0
  %6417 = vmatpush1.msra.mxu0 0.0
  %6418 = vmatprep.subr.mxu0 0.0
  %6419 = vmatpush1.msra.mxu0 0.0
  %6420 = vmatprep.subr.mxu0 0.0
  %6421 = vmatpush1.msra.mxu0 0.0
  %6422 = vmatprep.subr.mxu0 0.0
  %6423 = vmatpush1.msra.mxu0 0.0
  %6424 = vmatprep.subr.mxu0 0.0
  %6425 = vmatpush1.msra.mxu0 %v5969
  %6426 = vmatprep.subr.mxu0 0.0
  %6427 = vmatpush1.msra.mxu0 %v5966
  %6428 = vmatprep.subr.mxu0 0.0
  %6429 = vmatpush2.msra.mxu0 0.0
  %6430 = vmatprep.subr.mxu0 0.0
  %6431 = vmatpush2.msra.mxu0 0.0
  %6432 = vmatprep.subr.mxu0 0.0
  %6433 = vmatpush2.msra.mxu0 0.0
  %6434 = vmatprep.subr.mxu0 0.0
  %6435 = vmatpush2.msra.mxu0 0.0
  %6436 = vmatprep.subr.mxu0 0.0
  %6437 = vmatpush2.msra.mxu0 0.0
  %6438 = vmatprep.subr.mxu0 0.0
  %6439 = vmatpush2.msra.mxu0 0.0
  %6440 = vmatprep.subr.mxu0 0.0
  %6441 = vmatpush2.msra.mxu0 0.0
  %6442 = vmatprep.subr.mxu0 0.0
  %6443 = vmatpush2.msra.mxu0 0.0
  %6444 = vmatprep.subr.mxu0 0.0
  %6445 = vmatpush2.msra.mxu0 0.0
  %6446 = vmatprep.subr.mxu0 0.0
  %6447 = vmatpush2.msra.mxu0 0.0
  %6448 = vmatprep.subr.mxu0 0.0
  %6449 = vmatpush2.msra.mxu0 0.0
  %6450 = vmatprep.subr.mxu0 0.0
  %6451 = vmatpush2.msra.mxu0 0.0
  %6452 = vmatprep.subr.mxu0 0.0
  %6453 = vmatpush2.msra.mxu0 0.0
  %6454 = vmatprep.subr.mxu0 0.0
  %6455 = vmatpush2.msra.mxu0 0.0
  %6456 = vmatprep.subr.mxu0 0.0
  %6457 = vmatpush2.msra.mxu0 0.0
  %6458 = vmatprep.subr.mxu0 0.0
  %6459 = vmatpush2.msra.mxu0 0.0
  %6460 = vmatprep.mubr.f32.mxu0 0.0
  %6461 = vmatmul.mubr.f32.gmra.mxu0 %v6394
  %v6462 = vpop.f32.mrf.mxu0
  %v6463 = vadd.f32 0.0, %v6462
  %v6464 = vpop.f32.mrf.mxu0
  %6465 = vdwg.mxu0
  %v6466 = vadd.f32 %v5780, %v6463
  %v6467 = vtanh.pop %v6466
  %v6468 = vxor.u32 %v6466, 2147483648
  %v6469 = vmul.f32 %v6468, 1.442695
  %v6470 = vpow.pop %v6469
  %v6471 = vadd.f32 %v6470, 1.0
  %v6472 = vrcp.pop %v6471
  %v6473 = vmul.f32 1.0, %v6472
  %v6474 = vsel %vm1208, %v6467, %v6473
  %v6476 = vrot.slane %v6383, 6
  %v6478 = vmul.f32 %v6474, %v6476
  %6480 = vrot.lane.b32.xlu0 %v6474, 102
  %v6481 = vpop.permute.xlu0 %6480
  %v6483 = vmul.f32 %v6474, %v6481
  %6485 = vrot.lane.b32.xlu0 %v6483, 13
  %v6486 = vpop.permute.xlu0 %6485
  %v6488 = vadd.f32 %v6478, %v6486
  %v6489 = vtanh.pop %v6488
  %6491 = vrot.lane.b32.xlu0 %v6489, 26
  %v6492 = vpop.permute.xlu0 %6491
  %v6494 = vmul.f32 %v6474, %v6492
  %6496 = vrot.lane.b32.xlu0 %v6494, 89
  %v6497 = vpop.permute.xlu0 %6496
  %v6498 = vsel %vm1234, %v6497, 0
  %6500 = vmatprep.subr.mxu0 0.0
  %6501 = vmatpush1.msra.mxu0 0.0
  %6502 = vmatprep.subr.mxu0 0.0
  %6503 = vmatpush1.msra.mxu0 0.0
  %6504 = vmatprep.subr.mxu0 0.0
  %6505 = vmatpush1.msra.mxu0 0.0
  %6506 = vmatprep.subr.mxu0 0.0
  %6507 = vmatpush1.msra.mxu0 0.0
  %6508 = vmatprep.subr.mxu0 0.0
  %6509 = vmatpush1.msra.mxu0 0.0
  %6510 = vmatprep.subr.mxu0 0.0
  %6511 = vmatpush1.msra.mxu0 0.0
  %6512 = vmatprep.subr.mxu0 0.0
  %6513 = vmatpush1.msra.mxu0 0.0
  %6514 = vmatprep.subr.mxu0 0.0
  %6515 = vmatpush1.msra.mxu0 0.0
  %6516 = vmatprep.subr.mxu0 0.0
  %6517 = vmatpush1.msra.mxu0 0.0
  %6518 = vmatprep.subr.mxu0 0.0
  %6519 = vmatpush1.msra.mxu0 0.0
  %6520 = vmatprep.subr.mxu0 0.0
  %6521 = vmatpush1.msra.mxu0 0.0
  %6522 = vmatprep.subr.mxu0 0.0
  %6523 = vmatpush1.msra.mxu0 0.0
  %6524 = vmatprep.subr.mxu0 0.0
  %6525 = vmatpush1.msra.mxu0 0.0
  %6526 = vmatprep.subr.mxu0 0.0
  %6527 = vmatpush1.msra.mxu0 0.0
  %6528 = vmatprep.subr.mxu0 0.0
  %6529 = vmatpush1.msra.mxu0 %v5969
  %6530 = vmatprep.subr.mxu0 0.0
  %6531 = vmatpush1.msra.mxu0 %v5966
  %6532 = vmatprep.subr.mxu0 0.0
  %6533 = vmatpush2.msra.mxu0 0.0
  %6534 = vmatprep.subr.mxu0 0.0
  %6535 = vmatpush2.msra.mxu0 0.0
  %6536 = vmatprep.subr.mxu0 0.0
  %6537 = vmatpush2.msra.mxu0 0.0
  %6538 = vmatprep.subr.mxu0 0.0
  %6539 = vmatpush2.msra.mxu0 0.0
  %6540 = vmatprep.subr.mxu0 0.0
  %6541 = vmatpush2.msra.mxu0 0.0
  %6542 = vmatprep.subr.mxu0 0.0
  %6543 = vmatpush2.msra.mxu0 0.0
  %6544 = vmatprep.subr.mxu0 0.0
  %6545 = vmatpush2.msra.mxu0 0.0
  %6546 = vmatprep.subr.mxu0 0.0
  %6547 = vmatpush2.msra.mxu0 0.0
  %6548 = vmatprep.subr.mxu0 0.0
  %6549 = vmatpush2.msra.mxu0 0.0
  %6550 = vmatprep.subr.mxu0 0.0
  %6551 = vmatpush2.msra.mxu0 0.0
  %6552 = vmatprep.subr.mxu0 0.0
  %6553 = vmatpush2.msra.mxu0 0.0
  %6554 = vmatprep.subr.mxu0 0.0
  %6555 = vmatpush2.msra.mxu0 0.0
  %6556 = vmatprep.subr.mxu0 0.0
  %6557 = vmatpush2.msra.mxu0 0.0
  %6558 = vmatprep.subr.mxu0 0.0
  %6559 = vmatpush2.msra.mxu0 0.0
  %6560 = vmatprep.subr.mxu0 0.0
  %6561 = vmatpush2.msra.mxu0 0.0
  %6562 = vmatprep.subr.mxu0 0.0
  %6563 = vmatpush2.msra.mxu0 0.0
  %6564 = vmatprep.mubr.f32.mxu0 0.0
  %6565 = vmatmul.mubr.f32.gmra.mxu0 %v6498
  %v6566 = vpop.f32.mrf.mxu0
  %v6567 = vadd.f32 0.0, %v6566
  %v6568 = vpop.f32.mrf.mxu0
  %6569 = vdwg.mxu0
  %v6571 = vrot.slane %v6567, 6
  %v6573 = vadd.f32 %v5780, %v6571
  %v6574 = vtanh.pop %v6573
  %v6575 = vxor.u32 %v6573, 2147483648
  %v6576 = vmul.f32 %v6575, 1.442695
  %v6577 = vpow.pop %v6576
  %v6578 = vadd.f32 %v6577, 1.0
  %v6579 = vrcp.pop %v6578
  %v6580 = vmul.f32 1.0, %v6579
  %v6581 = vsel %vm1208, %v6574, %v6580
  %v6583 = vrot.slane %v6488, 6
  %v6585 = vmul.f32 %v6581, %v6583
  %6587 = vrot.lane.b32.xlu0 %v6581, 102
  %v6588 = vpop.permute.xlu0 %6587
  %v6590 = vmul.f32 %v6581, %v6588
  %6592 = vrot.lane.b32.xlu0 %v6590, 13
  %v6593 = vpop.permute.xlu0 %6592
  %v6595 = vadd.f32 %v6585, %v6593
  %v6596 = vtanh.pop %v6595
  %6598 = vrot.lane.b32.xlu0 %v6596, 26
  %v6599 = vpop.permute.xlu0 %6598
  %v6601 = vmul.f32 %v6581, %v6599
  %v6603 = vrot.slane %v6601, 2
  %6604 = vrot.lane.b32.xlu0 %v6603, 89
  %v6605 = vpop.permute.xlu0 %6604
  %v6606 = vsel %vm1234, %v6605, 0
  %6608 = vmatprep.subr.mxu0 0.0
  %6609 = vmatpush1.msra.mxu0 0.0
  %6610 = vmatprep.subr.mxu0 0.0
  %6611 = vmatpush1.msra.mxu0 0.0
  %6612 = vmatprep.subr.mxu0 0.0
  %6613 = vmatpush1.msra.mxu0 0.0
  %6614 = vmatprep.subr.mxu0 0.0
  %6615 = vmatpush1.msra.mxu0 0.0
  %6616 = vmatprep.subr.mxu0 0.0
  %6617 = vmatpush1.msra.mxu0 0.0
  %6618 = vmatprep.subr.mxu0 0.0
  %6619 = vmatpush1.msra.mxu0 0.0
  %6620 = vmatprep.subr.mxu0 0.0
  %6621 = vmatpush1.msra.mxu0 0.0
  %6622 = vmatprep.subr.mxu0 0.0
  %6623 = vmatpush1.msra.mxu0 0.0
  %6624 = vmatprep.subr.mxu0 0.0
  %6625 = vmatpush1.msra.mxu0 0.0
  %6626 = vmatprep.subr.mxu0 0.0
  %6627 = vmatpush1.msra.mxu0 0.0
  %6628 = vmatprep.subr.mxu0 0.0
  %6629 = vmatpush1.msra.mxu0 0.0
  %6630 = vmatprep.subr.mxu0 0.0
  %6631 = vmatpush1.msra.mxu0 0.0
  %6632 = vmatprep.subr.mxu0 0.0
  %6633 = vmatpush1.msra.mxu0 0.0
  %6634 = vmatprep.subr.mxu0 0.0
  %6635 = vmatpush1.msra.mxu0 0.0
  %6636 = vmatprep.subr.mxu0 0.0
  %6637 = vmatpush1.msra.mxu0 %v5969
  %6638 = vmatprep.subr.mxu0 0.0
  %6639 = vmatpush1.msra.mxu0 %v5966
  %6640 = vmatprep.subr.mxu0 0.0
  %6641 = vmatpush2.msra.mxu0 0.0
  %6642 = vmatprep.subr.mxu0 0.0
  %6643 = vmatpush2.msra.mxu0 0.0
  %6644 = vmatprep.subr.mxu0 0.0
  %6645 = vmatpush2.msra.mxu0 0.0
  %6646 = vmatprep.subr.mxu0 0.0
  %6647 = vmatpush2.msra.mxu0 0.0
  %6648 = vmatprep.subr.mxu0 0.0
  %6649 = vmatpush2.msra.mxu0 0.0
  %6650 = vmatprep.subr.mxu0 0.0
  %6651 = vmatpush2.msra.mxu0 0.0
  %6652 = vmatprep.subr.mxu0 0.0
  %6653 = vmatpush2.msra.mxu0 0.0
  %6654 = vmatprep.subr.mxu0 0.0
  %6655 = vmatpush2.msra.mxu0 0.0
  %6656 = vmatprep.subr.mxu0 0.0
  %6657 = vmatpush2.msra.mxu0 0.0
  %6658 = vmatprep.subr.mxu0 0.0
  %6659 = vmatpush2.msra.mxu0 0.0
  %6660 = vmatprep.subr.mxu0 0.0
  %6661 = vmatpush2.msra.mxu0 0.0
  %6662 = vmatprep.subr.mxu0 0.0
  %6663 = vmatpush2.msra.mxu0 0.0
  %6664 = vmatprep.subr.mxu0 0.0
  %6665 = vmatpush2.msra.mxu0 0.0
  %6666 = vmatprep.subr.mxu0 0.0
  %6667 = vmatpush2.msra.mxu0 0.0
  %6668 = vmatprep.subr.mxu0 0.0
  %6669 = vmatpush2.msra.mxu0 0.0
  %6670 = vmatprep.subr.mxu0 0.0
  %6671 = vmatpush2.msra.mxu0 0.0
  %6672 = vmatprep.mubr.f32.mxu0 0.0
  %6673 = vmatmul.mubr.f32.gmra.mxu0 %v6606
  %v6674 = vpop.f32.mrf.mxu0
  %v6675 = vadd.f32 0.0, %v6674
  %v6676 = vpop.f32.mrf.mxu0
  %6677 = vdwg.mxu0
  %v6679 = vrot.slane %v6675, 4
  %v6681 = vadd.f32 %v5780, %v6679
  %v6682 = vtanh.pop %v6681
  %v6683 = vxor.u32 %v6681, 2147483648
  %v6684 = vmul.f32 %v6683, 1.442695
  %v6685 = vpow.pop %v6684
  %v6686 = vadd.f32 %v6685, 1.0
  %v6687 = vrcp.pop %v6686
  %v6688 = vmul.f32 1.0, %v6687
  %v6689 = vsel %vm1208, %v6682, %v6688
  %v6691 = vrot.slane %v6595, 6
  %v6693 = vmul.f32 %v6689, %v6691
  %6695 = vrot.lane.b32.xlu0 %v6689, 102
  %v6696 = vpop.permute.xlu0 %6695
  %v6698 = vmul.f32 %v6689, %v6696
  %6700 = vrot.lane.b32.xlu0 %v6698, 13
  %v6701 = vpop.permute.xlu0 %6700
  %v6703 = vadd.f32 %v6693, %v6701
  %v6704 = vtanh.pop %v6703
  %6706 = vrot.lane.b32.xlu0 %v6704, 26
  %v6707 = vpop.permute.xlu0 %6706
  %v6709 = vmul.f32 %v6689, %v6707
  %v6711 = vrot.slane %v6709, 4
  %6712 = vrot.lane.b32.xlu0 %v6711, 89
  %v6713 = vpop.permute.xlu0 %6712
  %v6714 = vsel %vm1234, %v6713, 0
  %6716 = vmatprep.subr.mxu0 0.0
  %6717 = vmatpush1.msra.mxu0 0.0
  %6718 = vmatprep.subr.mxu0 0.0
  %6719 = vmatpush1.msra.mxu0 0.0
  %6720 = vmatprep.subr.mxu0 0.0
  %6721 = vmatpush1.msra.mxu0 0.0
  %6722 = vmatprep.subr.mxu0 0.0
  %6723 = vmatpush1.msra.mxu0 0.0
  %6724 = vmatprep.subr.mxu0 0.0
  %6725 = vmatpush1.msra.mxu0 0.0
  %6726 = vmatprep.subr.mxu0 0.0
  %6727 = vmatpush1.msra.mxu0 0.0
  %6728 = vmatprep.subr.mxu0 0.0
  %6729 = vmatpush1.msra.mxu0 0.0
  %6730 = vmatprep.subr.mxu0 0.0
  %6731 = vmatpush1.msra.mxu0 0.0
  %6732 = vmatprep.subr.mxu0 0.0
  %6733 = vmatpush1.msra.mxu0 0.0
  %6734 = vmatprep.subr.mxu0 0.0
  %6735 = vmatpush1.msra.mxu0 0.0
  %6736 = vmatprep.subr.mxu0 0.0
  %6737 = vmatpush1.msra.mxu0 0.0
  %6738 = vmatprep.subr.mxu0 0.0
  %6739 = vmatpush1.msra.mxu0 0.0
  %6740 = vmatprep.subr.mxu0 0.0
  %6741 = vmatpush1.msra.mxu0 0.0
  %6742 = vmatprep.subr.mxu0 0.0
  %6743 = vmatpush1.msra.mxu0 0.0
  %6744 = vmatprep.subr.mxu0 0.0
  %6745 = vmatpush1.msra.mxu0 %v5969
  %6746 = vmatprep.subr.mxu0 0.0
  %6747 = vmatpush1.msra.mxu0 %v5966
  %6748 = vmatprep.subr.mxu0 0.0
  %6749 = vmatpush2.msra.mxu0 0.0
  %6750 = vmatprep.subr.mxu0 0.0
  %6751 = vmatpush2.msra.mxu0 0.0
  %6752 = vmatprep.subr.mxu0 0.0
  %6753 = vmatpush2.msra.mxu0 0.0
  %6754 = vmatprep.subr.mxu0 0.0
  %6755 = vmatpush2.msra.mxu0 0.0
  %6756 = vmatprep.subr.mxu0 0.0
  %6757 = vmatpush2.msra.mxu0 0.0
  %6758 = vmatprep.subr.mxu0 0.0
  %6759 = vmatpush2.msra.mxu0 0.0
  %6760 = vmatprep.subr.mxu0 0.0
  %6761 = vmatpush2.msra.mxu0 0.0
  %6762 = vmatprep.subr.mxu0 0.0
  %6763 = vmatpush2.msra.mxu0 0.0
  %6764 = vmatprep.subr.mxu0 0.0
  %6765 = vmatpush2.msra.mxu0 0.0
  %6766 = vmatprep.subr.mxu0 0.0
  %6767 = vmatpush2.msra.mxu0 0.0
  %6768 = vmatprep.subr.mxu0 0.0
  %6769 = vmatpush2.msra.mxu0 0.0
  %6770 = vmatprep.subr.mxu0 0.0
  %6771 = vmatpush2.msra.mxu0 0.0
  %6772 = vmatprep.subr.mxu0 0.0
  %6773 = vmatpush2.msra.mxu0 0.0
  %6774 = vmatprep.subr.mxu0 0.0
  %6775 = vmatpush2.msra.mxu0 0.0
  %6776 = vmatprep.subr.mxu0 0.0
  %6777 = vmatpush2.msra.mxu0 0.0
  %6778 = vmatprep.subr.mxu0 0.0
  %6779 = vmatpush2.msra.mxu0 0.0
  %6780 = vmatprep.mubr.f32.mxu0 0.0
  %6781 = vmatmul.mubr.f32.gmra.mxu0 %v6714
  %v6782 = vpop.f32.mrf.mxu0
  %v6783 = vadd.f32 0.0, %v6782
  %v6784 = vpop.f32.mrf.mxu0
  %6785 = vdwg.mxu0
  %v6787 = vrot.slane %v6783, 2
  %v6789 = vadd.f32 %v5780, %v6787
  %v6790 = vtanh.pop %v6789
  %v6791 = vxor.u32 %v6789, 2147483648
  %v6792 = vmul.f32 %v6791, 1.442695
  %v6793 = vpow.pop %v6792
  %v6794 = vadd.f32 %v6793, 1.0
  %v6795 = vrcp.pop %v6794
  %v6796 = vmul.f32 1.0, %v6795
  %v6797 = vsel %vm1208, %v6790, %v6796
  %v6799 = vrot.slane %v6703, 6
  %v6801 = vmul.f32 %v6797, %v6799
  %6803 = vrot.lane.b32.xlu0 %v6797, 102
  %v6804 = vpop.permute.xlu0 %6803
  %v6806 = vmul.f32 %v6797, %v6804
  %6808 = vrot.lane.b32.xlu0 %v6806, 13
  %v6809 = vpop.permute.xlu0 %6808
  %v6811 = vadd.f32 %v6801, %v6809
  %v6812 = vtanh.pop %v6811
  %6814 = vrot.lane.b32.xlu0 %v6812, 26
  %v6815 = vpop.permute.xlu0 %6814
  %v6817 = vmul.f32 %v6797, %v6815
  %v6819 = vrot.slane %v6817, 6
  %6820 = vrot.lane.b32.xlu0 %v6819, 89
  %v6821 = vpop.permute.xlu0 %6820
  %v6822 = vsel %vm1234, %v6821, 0
  %6824 = vmatprep.subr.mxu0 0.0
  %6825 = vmatpush1.msra.mxu0 0.0
  %6826 = vmatprep.subr.mxu0 0.0
  %6827 = vmatpush1.msra.mxu0 0.0
  %6828 = vmatprep.subr.mxu0 0.0
  %6829 = vmatpush1.msra.mxu0 0.0
  %6830 = vmatprep.subr.mxu0 0.0
  %6831 = vmatpush1.msra.mxu0 0.0
  %6832 = vmatprep.subr.mxu0 0.0
  %6833 = vmatpush1.msra.mxu0 0.0
  %6834 = vmatprep.subr.mxu0 0.0
  %6835 = vmatpush1.msra.mxu0 0.0
  %6836 = vmatprep.subr.mxu0 0.0
  %6837 = vmatpush1.msra.mxu0 0.0
  %6838 = vmatprep.subr.mxu0 0.0
  %6839 = vmatpush1.msra.mxu0 0.0
  %6840 = vmatprep.subr.mxu0 0.0
  %6841 = vmatpush1.msra.mxu0 0.0
  %6842 = vmatprep.subr.mxu0 0.0
  %6843 = vmatpush1.msra.mxu0 0.0
  %6844 = vmatprep.subr.mxu0 0.0
  %6845 = vmatpush1.msra.mxu0 0.0
  %6846 = vmatprep.subr.mxu0 0.0
  %6847 = vmatpush1.msra.mxu0 0.0
  %6848 = vmatprep.subr.mxu0 0.0
  %6849 = vmatpush1.msra.mxu0 0.0
  %6850 = vmatprep.subr.mxu0 0.0
  %6851 = vmatpush1.msra.mxu0 0.0
  %6852 = vmatprep.subr.mxu0 0.0
  %6853 = vmatpush1.msra.mxu0 %v5969
  %6854 = vmatprep.subr.mxu0 0.0
  %6855 = vmatpush1.msra.mxu0 %v5966
  %6856 = vmatprep.subr.mxu0 0.0
  %6857 = vmatpush2.msra.mxu0 0.0
  %6858 = vmatprep.subr.mxu0 0.0
  %6859 = vmatpush2.msra.mxu0 0.0
  %6860 = vmatprep.subr.mxu0 0.0
  %6861 = vmatpush2.msra.mxu0 0.0
  %6862 = vmatprep.subr.mxu0 0.0
  %6863 = vmatpush2.msra.mxu0 0.0
  %6864 = vmatprep.subr.mxu0 0.0
  %6865 = vmatpush2.msra.mxu0 0.0
  %6866 = vmatprep.subr.mxu0 0.0
  %6867 = vmatpush2.msra.mxu0 0.0
  %6868 = vmatprep.subr.mxu0 0.0
  %6869 = vmatpush2.msra.mxu0 0.0
  %6870 = vmatprep.subr.mxu0 0.0
  %6871 = vmatpush2.msra.mxu0 0.0
  %6872 = vmatprep.subr.mxu0 0.0
  %6873 = vmatpush2.msra.mxu0 0.0
  %6874 = vmatprep.subr.mxu0 0.0
  %6875 = vmatpush2.msra.mxu0 0.0
  %6876 = vmatprep.subr.mxu0 0.0
  %6877 = vmatpush2.msra.mxu0 0.0
  %6878 = vmatprep.subr.mxu0 0.0
  %6879 = vmatpush2.msra.mxu0 0.0
  %6880 = vmatprep.subr.mxu0 0.0
  %6881 = vmatpush2.msra.mxu0 0.0
  %6882 = vmatprep.subr.mxu0 0.0
  %6883 = vmatpush2.msra.mxu0 0.0
  %6884 = vmatprep.subr.mxu0 0.0
  %6885 = vmatpush2.msra.mxu0 0.0
  %6886 = vmatprep.subr.mxu0 0.0
  %6887 = vmatpush2.msra.mxu0 0.0
  %6888 = vmatprep.mubr.f32.mxu0 0.0
  %6889 = vmatmul.mubr.f32.gmra.mxu0 %v6822
  %v6890 = vpop.f32.mrf.mxu0
  %v6891 = vadd.f32 0.0, %v6890
  %v6892 = vpop.f32.mrf.mxu0
  %6893 = vdwg.mxu0
  %v6894 = vadd.f32 %v5781, %v6891
  %v6895 = vtanh.pop %v6894
  %v6896 = vxor.u32 %v6894, 2147483648
  %v6897 = vmul.f32 %v6896, 1.442695
  %v6898 = vpow.pop %v6897
  %v6899 = vadd.f32 %v6898, 1.0
  %v6900 = vrcp.pop %v6899
  %v6901 = vmul.f32 1.0, %v6900
  %v6902 = vsel %vm1208, %v6895, %v6901
  %v6904 = vrot.slane %v6811, 6
  %v6906 = vmul.f32 %v6902, %v6904
  %6908 = vrot.lane.b32.xlu0 %v6902, 102
  %v6909 = vpop.permute.xlu0 %6908
  %v6911 = vmul.f32 %v6902, %v6909
  %6913 = vrot.lane.b32.xlu0 %v6911, 13
  %v6914 = vpop.permute.xlu0 %6913
  %v6916 = vadd.f32 %v6906, %v6914
  %v6917 = vtanh.pop %v6916
  %6919 = vrot.lane.b32.xlu0 %v6917, 26
  %v6920 = vpop.permute.xlu0 %6919
  %v6922 = vmul.f32 %v6902, %v6920
  %v6923 = vsel %vm880, %v6066, %v6173
  %v6924 = vsel %vm2195, %v6923, %v6281
  %v6925 = vsel %vm2197, %v6924, %v6389
  %v6926 = vsel %vm880, %v6494, %v6601
  %v6927 = vsel %vm2195, %v6926, %v6709
  %v6928 = vsel %vm2197, %v6927, %v6817
  %s6929 = scalar_lea.vmem %s6, 80
  %v6930 = vld [vmem:[%s6929] sm:$0xff]
  %v6931 = vld [vmem:[%s6929 + $0x8] sm:$0x1f]
  %v6933 = vsel %vm1238, %v6931, 0
  %6935 = vmatprep.subr.mxu0 0.0
  %6936 = vmatpush1.msra.mxu0 0.0
  %6937 = vmatprep.subr.mxu0 0.0
  %6938 = vmatpush1.msra.mxu0 0.0
  %6939 = vmatprep.subr.mxu0 0.0
  %6940 = vmatpush1.msra.mxu0 0.0
  %6941 = vmatprep.subr.mxu0 0.0
  %6942 = vmatpush1.msra.mxu0 0.0
  %6943 = vmatprep.subr.mxu0 0.0
  %6944 = vmatpush1.msra.mxu0 0.0
  %6945 = vmatprep.subr.mxu0 0.0
  %6946 = vmatpush1.msra.mxu0 0.0
  %6947 = vmatprep.subr.mxu0 0.0
  %6948 = vmatpush1.msra.mxu0 0.0
  %6949 = vmatprep.subr.mxu0 0.0
  %6950 = vmatpush1.msra.mxu0 0.0
  %6951 = vmatprep.subr.mxu0 0.0
  %6952 = vmatpush1.msra.mxu0 0.0
  %6953 = vmatprep.subr.mxu0 0.0
  %6954 = vmatpush1.msra.mxu0 0.0
  %6955 = vmatprep.subr.mxu0 0.0
  %6956 = vmatpush1.msra.mxu0 0.0
  %6957 = vmatprep.subr.mxu0 0.0
  %6958 = vmatpush1.msra.mxu0 0.0
  %6959 = vmatprep.subr.mxu0 0.0
  %6960 = vmatpush1.msra.mxu0 0.0
  %6961 = vmatprep.subr.mxu0 0.0
  %6962 = vmatpush1.msra.mxu0 0.0
  %6963 = vmatprep.subr.mxu0 0.0
  %6964 = vmatpush1.msra.mxu0 %v6933
  %6965 = vmatprep.subr.mxu0 0.0
  %6966 = vmatpush1.msra.mxu0 %v6930
  %6967 = vmatprep.subr.mxu0 0.0
  %6968 = vmatpush2.msra.mxu0 0.0
  %6969 = vmatprep.subr.mxu0 0.0
  %6970 = vmatpush2.msra.mxu0 0.0
  %6971 = vmatprep.subr.mxu0 0.0
  %6972 = vmatpush2.msra.mxu0 0.0
  %6973 = vmatprep.subr.mxu0 0.0
  %6974 = vmatpush2.msra.mxu0 0.0
  %6975 = vmatprep.subr.mxu0 0.0
  %6976 = vmatpush2.msra.mxu0 0.0
  %6977 = vmatprep.subr.mxu0 0.0
  %6978 = vmatpush2.msra.mxu0 0.0
  %6979 = vmatprep.subr.mxu0 0.0
  %6980 = vmatpush2.msra.mxu0 0.0
  %6981 = vmatprep.subr.mxu0 0.0
  %6982 = vmatpush2.msra.mxu0 0.0
  %6983 = vmatprep.subr.mxu0 0.0
  %6984 = vmatpush2.msra.mxu0 0.0
  %6985 = vmatprep.subr.mxu0 0.0
  %6986 = vmatpush2.msra.mxu0 0.0
  %6987 = vmatprep.subr.mxu0 0.0
  %6988 = vmatpush2.msra.mxu0 0.0
  %6989 = vmatprep.subr.mxu0 0.0
  %6990 = vmatpush2.msra.mxu0 0.0
  %6991 = vmatprep.subr.mxu0 0.0
  %6992 = vmatpush2.msra.mxu0 0.0
  %6993 = vmatprep.subr.mxu0 0.0
  %6994 = vmatpush2.msra.mxu0 0.0
  %6995 = vmatprep.subr.mxu0 0.0
  %6996 = vmatpush2.msra.mxu0 0.0
  %6997 = vmatprep.subr.mxu0 0.0
  %6998 = vmatpush2.msra.mxu0 0.0
  %6999 = vmatprep.mubr.f32.mxu0 0.0
  %7000 = vmatmul.mubr.f32.gmra.mxu0 %v1236
  %v7001 = vpop.f32.mrf.mxu0
  %v7002 = vadd.f32 0.0, %v7001
  %v7003 = vpop.f32.mrf.mxu0
  %7004 = vdwg.mxu0
  %v7005 = vadd.f32 %v5964, %v7002
  %v7006 = vtanh.pop %v7005
  %v7007 = vxor.u32 %v7005, 2147483648
  %v7008 = vmul.f32 %v7007, 1.442695
  %v7009 = vpow.pop %v7008
  %v7010 = vadd.f32 %v7009, 1.0
  %v7011 = vrcp.pop %v7010
  %v7012 = vmul.f32 1.0, %v7011
  %v7013 = vsel %vm1208, %v7006, %v7012
  %v7014 = vmul.f32 %v7013, 0.0
  %7016 = vrot.lane.b32.xlu0 %v7013, 102
  %v7017 = vpop.permute.xlu0 %7016
  %v7019 = vmul.f32 %v7013, %v7017
  %7021 = vrot.lane.b32.xlu0 %v7019, 13
  %v7022 = vpop.permute.xlu0 %7021
  %v7024 = vadd.f32 %v7014, %v7022
  %v7025 = vtanh.pop %v7024
  %7027 = vrot.lane.b32.xlu0 %v7025, 26
  %v7028 = vpop.permute.xlu0 %7027
  %v7030 = vmul.f32 %v7013, %v7028
  %7032 = vrot.lane.b32.xlu0 %v7030, 89
  %v7033 = vpop.permute.xlu0 %7032
  %v7034 = vsel %vm1234, %v7033, 0
  %7036 = vmatprep.subr.mxu0 0.0
  %7037 = vmatpush1.msra.mxu0 0.0
  %7038 = vmatprep.subr.mxu0 0.0
  %7039 = vmatpush1.msra.mxu0 0.0
  %7040 = vmatprep.subr.mxu0 0.0
  %7041 = vmatpush1.msra.mxu0 0.0
  %7042 = vmatprep.subr.mxu0 0.0
  %7043 = vmatpush1.msra.mxu0 0.0
  %7044 = vmatprep.subr.mxu0 0.0
  %7045 = vmatpush1.msra.mxu0 0.0
  %7046 = vmatprep.subr.mxu0 0.0
  %7047 = vmatpush1.msra.mxu0 0.0
  %7048 = vmatprep.subr.mxu0 0.0
  %7049 = vmatpush1.msra.mxu0 0.0
  %7050 = vmatprep.subr.mxu0 0.0
  %7051 = vmatpush1.msra.mxu0 0.0
  %7052 = vmatprep.subr.mxu0 0.0
  %7053 = vmatpush1.msra.mxu0 0.0
  %7054 = vmatprep.subr.mxu0 0.0
  %7055 = vmatpush1.msra.mxu0 0.0
  %7056 = vmatprep.subr.mxu0 0.0
  %7057 = vmatpush1.msra.mxu0 0.0
  %7058 = vmatprep.subr.mxu0 0.0
  %7059 = vmatpush1.msra.mxu0 0.0
  %7060 = vmatprep.subr.mxu0 0.0
  %7061 = vmatpush1.msra.mxu0 0.0
  %7062 = vmatprep.subr.mxu0 0.0
  %7063 = vmatpush1.msra.mxu0 0.0
  %7064 = vmatprep.subr.mxu0 0.0
  %7065 = vmatpush1.msra.mxu0 %v6933
  %7066 = vmatprep.subr.mxu0 0.0
  %7067 = vmatpush1.msra.mxu0 %v6930
  %7068 = vmatprep.subr.mxu0 0.0
  %7069 = vmatpush2.msra.mxu0 0.0
  %7070 = vmatprep.subr.mxu0 0.0
  %7071 = vmatpush2.msra.mxu0 0.0
  %7072 = vmatprep.subr.mxu0 0.0
  %7073 = vmatpush2.msra.mxu0 0.0
  %7074 = vmatprep.subr.mxu0 0.0
  %7075 = vmatpush2.msra.mxu0 0.0
  %7076 = vmatprep.subr.mxu0 0.0
  %7077 = vmatpush2.msra.mxu0 0.0
  %7078 = vmatprep.subr.mxu0 0.0
  %7079 = vmatpush2.msra.mxu0 0.0
  %7080 = vmatprep.subr.mxu0 0.0
  %7081 = vmatpush2.msra.mxu0 0.0
  %7082 = vmatprep.subr.mxu0 0.0
  %7083 = vmatpush2.msra.mxu0 0.0
  %7084 = vmatprep.subr.mxu0 0.0
  %7085 = vmatpush2.msra.mxu0 0.0
  %7086 = vmatprep.subr.mxu0 0.0
  %7087 = vmatpush2.msra.mxu0 0.0
  %7088 = vmatprep.subr.mxu0 0.0
  %7089 = vmatpush2.msra.mxu0 0.0
  %7090 = vmatprep.subr.mxu0 0.0
  %7091 = vmatpush2.msra.mxu0 0.0
  %7092 = vmatprep.subr.mxu0 0.0
  %7093 = vmatpush2.msra.mxu0 0.0
  %7094 = vmatprep.subr.mxu0 0.0
  %7095 = vmatpush2.msra.mxu0 0.0
  %7096 = vmatprep.subr.mxu0 0.0
  %7097 = vmatpush2.msra.mxu0 0.0
  %7098 = vmatprep.subr.mxu0 0.0
  %7099 = vmatpush2.msra.mxu0 0.0
  %7100 = vmatprep.mubr.f32.mxu0 0.0
  %7101 = vmatmul.mubr.f32.gmra.mxu0 %v7034
  %v7102 = vpop.f32.mrf.mxu0
  %v7103 = vadd.f32 0.0, %v7102
  %v7104 = vpop.f32.mrf.mxu0
  %7105 = vdwg.mxu0
  %v7107 = vrot.slane %v7103, 2
  %v7109 = vadd.f32 %v5963, %v7107
  %v7110 = vtanh.pop %v7109
  %v7111 = vxor.u32 %v7109, 2147483648
  %v7112 = vmul.f32 %v7111, 1.442695
  %v7113 = vpow.pop %v7112
  %v7114 = vadd.f32 %v7113, 1.0
  %v7115 = vrcp.pop %v7114
  %v7116 = vmul.f32 1.0, %v7115
  %v7117 = vsel %vm1208, %v7110, %v7116
  %v7119 = vrot.slane %v7024, 2
  %v7121 = vmul.f32 %v7117, %v7119
  %7123 = vrot.lane.b32.xlu0 %v7117, 102
  %v7124 = vpop.permute.xlu0 %7123
  %v7126 = vmul.f32 %v7117, %v7124
  %7128 = vrot.lane.b32.xlu0 %v7126, 13
  %v7129 = vpop.permute.xlu0 %7128
  %v7131 = vadd.f32 %v7121, %v7129
  %v7132 = vtanh.pop %v7131
  %7134 = vrot.lane.b32.xlu0 %v7132, 26
  %v7135 = vpop.permute.xlu0 %7134
  %v7137 = vmul.f32 %v7117, %v7135
  %v7139 = vrot.slane %v7137, 6
  %7140 = vrot.lane.b32.xlu0 %v7139, 89
  %v7141 = vpop.permute.xlu0 %7140
  %v7142 = vsel %vm1234, %v7141, 0
  %7144 = vmatprep.subr.mxu0 0.0
  %7145 = vmatpush1.msra.mxu0 0.0
  %7146 = vmatprep.subr.mxu0 0.0
  %7147 = vmatpush1.msra.mxu0 0.0
  %7148 = vmatprep.subr.mxu0 0.0
  %7149 = vmatpush1.msra.mxu0 0.0
  %7150 = vmatprep.subr.mxu0 0.0
  %7151 = vmatpush1.msra.mxu0 0.0
  %7152 = vmatprep.subr.mxu0 0.0
  %7153 = vmatpush1.msra.mxu0 0.0
  %7154 = vmatprep.subr.mxu0 0.0
  %7155 = vmatpush1.msra.mxu0 0.0
  %7156 = vmatprep.subr.mxu0 0.0
  %7157 = vmatpush1.msra.mxu0 0.0
  %7158 = vmatprep.subr.mxu0 0.0
  %7159 = vmatpush1.msra.mxu0 0.0
  %7160 = vmatprep.subr.mxu0 0.0
  %7161 = vmatpush1.msra.mxu0 0.0
  %7162 = vmatprep.subr.mxu0 0.0
  %7163 = vmatpush1.msra.mxu0 0.0
  %7164 = vmatprep.subr.mxu0 0.0
  %7165 = vmatpush1.msra.mxu0 0.0
  %7166 = vmatprep.subr.mxu0 0.0
  %7167 = vmatpush1.msra.mxu0 0.0
  %7168 = vmatprep.subr.mxu0 0.0
  %7169 = vmatpush1.msra.mxu0 0.0
  %7170 = vmatprep.subr.mxu0 0.0
  %7171 = vmatpush1.msra.mxu0 0.0
  %7172 = vmatprep.subr.mxu0 0.0
  %7173 = vmatpush1.msra.mxu0 %v6933
  %7174 = vmatprep.subr.mxu0 0.0
  %7175 = vmatpush1.msra.mxu0 %v6930
  %7176 = vmatprep.subr.mxu0 0.0
  %7177 = vmatpush2.msra.mxu0 0.0
  %7178 = vmatprep.subr.mxu0 0.0
  %7179 = vmatpush2.msra.mxu0 0.0
  %7180 = vmatprep.subr.mxu0 0.0
  %7181 = vmatpush2.msra.mxu0 0.0
  %7182 = vmatprep.subr.mxu0 0.0
  %7183 = vmatpush2.msra.mxu0 0.0
  %7184 = vmatprep.subr.mxu0 0.0
  %7185 = vmatpush2.msra.mxu0 0.0
  %7186 = vmatprep.subr.mxu0 0.0
  %7187 = vmatpush2.msra.mxu0 0.0
  %7188 = vmatprep.subr.mxu0 0.0
  %7189 = vmatpush2.msra.mxu0 0.0
  %7190 = vmatprep.subr.mxu0 0.0
  %7191 = vmatpush2.msra.mxu0 0.0
  %7192 = vmatprep.subr.mxu0 0.0
  %7193 = vmatpush2.msra.mxu0 0.0
  %7194 = vmatprep.subr.mxu0 0.0
  %7195 = vmatpush2.msra.mxu0 0.0
  %7196 = vmatprep.subr.mxu0 0.0
  %7197 = vmatpush2.msra.mxu0 0.0
  %7198 = vmatprep.subr.mxu0 0.0
  %7199 = vmatpush2.msra.mxu0 0.0
  %7200 = vmatprep.subr.mxu0 0.0
  %7201 = vmatpush2.msra.mxu0 0.0
  %7202 = vmatprep.subr.mxu0 0.0
  %7203 = vmatpush2.msra.mxu0 0.0
  %7204 = vmatprep.subr.mxu0 0.0
  %7205 = vmatpush2.msra.mxu0 0.0
  %7206 = vmatprep.subr.mxu0 0.0
  %7207 = vmatpush2.msra.mxu0 0.0
  %7208 = vmatprep.mubr.f32.mxu0 0.0
  %7209 = vmatmul.mubr.f32.gmra.mxu0 %v7142
  %v7210 = vpop.f32.mrf.mxu0
  %v7211 = vadd.f32 0.0, %v7210
  %v7212 = vpop.f32.mrf.mxu0
  %7213 = vdwg.mxu0
  %v7215 = vrot.slane %v7211, 4
  %v7217 = vadd.f32 %v5963, %v7215
  %v7218 = vtanh.pop %v7217
  %v7219 = vxor.u32 %v7217, 2147483648
  %v7220 = vmul.f32 %v7219, 1.442695
  %v7221 = vpow.pop %v7220
  %v7222 = vadd.f32 %v7221, 1.0
  %v7223 = vrcp.pop %v7222
  %v7224 = vmul.f32 1.0, %v7223
  %v7225 = vsel %vm1208, %v7218, %v7224
  %v7227 = vrot.slane %v7131, 2
  %v7229 = vmul.f32 %v7225, %v7227
  %7231 = vrot.lane.b32.xlu0 %v7225, 102
  %v7232 = vpop.permute.xlu0 %7231
  %v7234 = vmul.f32 %v7225, %v7232
  %7236 = vrot.lane.b32.xlu0 %v7234, 13
  %v7237 = vpop.permute.xlu0 %7236
  %v7239 = vadd.f32 %v7229, %v7237
  %v7240 = vtanh.pop %v7239
  %7242 = vrot.lane.b32.xlu0 %v7240, 26
  %v7243 = vpop.permute.xlu0 %7242
  %v7245 = vmul.f32 %v7225, %v7243
  %v7247 = vrot.slane %v7245, 4
  %7248 = vrot.lane.b32.xlu0 %v7247, 89
  %v7249 = vpop.permute.xlu0 %7248
  %v7250 = vsel %vm1234, %v7249, 0
  %7252 = vmatprep.subr.mxu0 0.0
  %7253 = vmatpush1.msra.mxu0 0.0
  %7254 = vmatprep.subr.mxu0 0.0
  %7255 = vmatpush1.msra.mxu0 0.0
  %7256 = vmatprep.subr.mxu0 0.0
  %7257 = vmatpush1.msra.mxu0 0.0
  %7258 = vmatprep.subr.mxu0 0.0
  %7259 = vmatpush1.msra.mxu0 0.0
  %7260 = vmatprep.subr.mxu0 0.0
  %7261 = vmatpush1.msra.mxu0 0.0
  %7262 = vmatprep.subr.mxu0 0.0
  %7263 = vmatpush1.msra.mxu0 0.0
  %7264 = vmatprep.subr.mxu0 0.0
  %7265 = vmatpush1.msra.mxu0 0.0
  %7266 = vmatprep.subr.mxu0 0.0
  %7267 = vmatpush1.msra.mxu0 0.0
  %7268 = vmatprep.subr.mxu0 0.0
  %7269 = vmatpush1.msra.mxu0 0.0
  %7270 = vmatprep.subr.mxu0 0.0
  %7271 = vmatpush1.msra.mxu0 0.0
  %7272 = vmatprep.subr.mxu0 0.0
  %7273 = vmatpush1.msra.mxu0 0.0
  %7274 = vmatprep.subr.mxu0 0.0
  %7275 = vmatpush1.msra.mxu0 0.0
  %7276 = vmatprep.subr.mxu0 0.0
  %7277 = vmatpush1.msra.mxu0 0.0
  %7278 = vmatprep.subr.mxu0 0.0
  %7279 = vmatpush1.msra.mxu0 0.0
  %7280 = vmatprep.subr.mxu0 0.0
  %7281 = vmatpush1.msra.mxu0 %v6933
  %7282 = vmatprep.subr.mxu0 0.0
  %7283 = vmatpush1.msra.mxu0 %v6930
  %7284 = vmatprep.subr.mxu0 0.0
  %7285 = vmatpush2.msra.mxu0 0.0
  %7286 = vmatprep.subr.mxu0 0.0
  %7287 = vmatpush2.msra.mxu0 0.0
  %7288 = vmatprep.subr.mxu0 0.0
  %7289 = vmatpush2.msra.mxu0 0.0
  %7290 = vmatprep.subr.mxu0 0.0
  %7291 = vmatpush2.msra.mxu0 0.0
  %7292 = vmatprep.subr.mxu0 0.0
  %7293 = vmatpush2.msra.mxu0 0.0
  %7294 = vmatprep.subr.mxu0 0.0
  %7295 = vmatpush2.msra.mxu0 0.0
  %7296 = vmatprep.subr.mxu0 0.0
  %7297 = vmatpush2.msra.mxu0 0.0
  %7298 = vmatprep.subr.mxu0 0.0
  %7299 = vmatpush2.msra.mxu0 0.0
  %7300 = vmatprep.subr.mxu0 0.0
  %7301 = vmatpush2.msra.mxu0 0.0
  %7302 = vmatprep.subr.mxu0 0.0
  %7303 = vmatpush2.msra.mxu0 0.0
  %7304 = vmatprep.subr.mxu0 0.0
  %7305 = vmatpush2.msra.mxu0 0.0
  %7306 = vmatprep.subr.mxu0 0.0
  %7307 = vmatpush2.msra.mxu0 0.0
  %7308 = vmatprep.subr.mxu0 0.0
  %7309 = vmatpush2.msra.mxu0 0.0
  %7310 = vmatprep.subr.mxu0 0.0
  %7311 = vmatpush2.msra.mxu0 0.0
  %7312 = vmatprep.subr.mxu0 0.0
  %7313 = vmatpush2.msra.mxu0 0.0
  %7314 = vmatprep.subr.mxu0 0.0
  %7315 = vmatpush2.msra.mxu0 0.0
  %7316 = vmatprep.mubr.f32.mxu0 0.0
  %7317 = vmatmul.mubr.f32.gmra.mxu0 %v7250
  %v7318 = vpop.f32.mrf.mxu0
  %v7319 = vadd.f32 0.0, %v7318
  %v7320 = vpop.f32.mrf.mxu0
  %7321 = vdwg.mxu0
  %v7323 = vrot.slane %v7319, 6
  %v7325 = vadd.f32 %v5963, %v7323
  %v7326 = vtanh.pop %v7325
  %v7327 = vxor.u32 %v7325, 2147483648
  %v7328 = vmul.f32 %v7327, 1.442695
  %v7329 = vpow.pop %v7328
  %v7330 = vadd.f32 %v7329, 1.0
  %v7331 = vrcp.pop %v7330
  %v7332 = vmul.f32 1.0, %v7331
  %v7333 = vsel %vm1208, %v7326, %v7332
  %v7335 = vrot.slane %v7239, 2
  %v7337 = vmul.f32 %v7333, %v7335
  %7339 = vrot.lane.b32.xlu0 %v7333, 102
  %v7340 = vpop.permute.xlu0 %7339
  %v7342 = vmul.f32 %v7333, %v7340
  %7344 = vrot.lane.b32.xlu0 %v7342, 13
  %v7345 = vpop.permute.xlu0 %7344
  %v7347 = vadd.f32 %v7337, %v7345
  %v7348 = vtanh.pop %v7347
  %7350 = vrot.lane.b32.xlu0 %v7348, 26
  %v7351 = vpop.permute.xlu0 %7350
  %v7353 = vmul.f32 %v7333, %v7351
  %v7355 = vrot.slane %v7353, 2
  %7356 = vrot.lane.b32.xlu0 %v7355, 89
  %v7357 = vpop.permute.xlu0 %7356
  %v7358 = vsel %vm1234, %v7357, 0
  %7360 = vmatprep.subr.mxu0 0.0
  %7361 = vmatpush1.msra.mxu0 0.0
  %7362 = vmatprep.subr.mxu0 0.0
  %7363 = vmatpush1.msra.mxu0 0.0
  %7364 = vmatprep.subr.mxu0 0.0
  %7365 = vmatpush1.msra.mxu0 0.0
  %7366 = vmatprep.subr.mxu0 0.0
  %7367 = vmatpush1.msra.mxu0 0.0
  %7368 = vmatprep.subr.mxu0 0.0
  %7369 = vmatpush1.msra.mxu0 0.0
  %7370 = vmatprep.subr.mxu0 0.0
  %7371 = vmatpush1.msra.mxu0 0.0
  %7372 = vmatprep.subr.mxu0 0.0
  %7373 = vmatpush1.msra.mxu0 0.0
  %7374 = vmatprep.subr.mxu0 0.0
  %7375 = vmatpush1.msra.mxu0 0.0
  %7376 = vmatprep.subr.mxu0 0.0
  %7377 = vmatpush1.msra.mxu0 0.0
  %7378 = vmatprep.subr.mxu0 0.0
  %7379 = vmatpush1.msra.mxu0 0.0
  %7380 = vmatprep.subr.mxu0 0.0
  %7381 = vmatpush1.msra.mxu0 0.0
  %7382 = vmatprep.subr.mxu0 0.0
  %7383 = vmatpush1.msra.mxu0 0.0
  %7384 = vmatprep.subr.mxu0 0.0
  %7385 = vmatpush1.msra.mxu0 0.0
  %7386 = vmatprep.subr.mxu0 0.0
  %7387 = vmatpush1.msra.mxu0 0.0
  %7388 = vmatprep.subr.mxu0 0.0
  %7389 = vmatpush1.msra.mxu0 %v6933
  %7390 = vmatprep.subr.mxu0 0.0
  %7391 = vmatpush1.msra.mxu0 %v6930
  %7392 = vmatprep.subr.mxu0 0.0
  %7393 = vmatpush2.msra.mxu0 0.0
  %7394 = vmatprep.subr.mxu0 0.0
  %7395 = vmatpush2.msra.mxu0 0.0
  %7396 = vmatprep.subr.mxu0 0.0
  %7397 = vmatpush2.msra.mxu0 0.0
  %7398 = vmatprep.subr.mxu0 0.0
  %7399 = vmatpush2.msra.mxu0 0.0
  %7400 = vmatprep.subr.mxu0 0.0
  %7401 = vmatpush2.msra.mxu0 0.0
  %7402 = vmatprep.subr.mxu0 0.0
  %7403 = vmatpush2.msra.mxu0 0.0
  %7404 = vmatprep.subr.mxu0 0.0
  %7405 = vmatpush2.msra.mxu0 0.0
  %7406 = vmatprep.subr.mxu0 0.0
  %7407 = vmatpush2.msra.mxu0 0.0
  %7408 = vmatprep.subr.mxu0 0.0
  %7409 = vmatpush2.msra.mxu0 0.0
  %7410 = vmatprep.subr.mxu0 0.0
  %7411 = vmatpush2.msra.mxu0 0.0
  %7412 = vmatprep.subr.mxu0 0.0
  %7413 = vmatpush2.msra.mxu0 0.0
  %7414 = vmatprep.subr.mxu0 0.0
  %7415 = vmatpush2.msra.mxu0 0.0
  %7416 = vmatprep.subr.mxu0 0.0
  %7417 = vmatpush2.msra.mxu0 0.0
  %7418 = vmatprep.subr.mxu0 0.0
  %7419 = vmatpush2.msra.mxu0 0.0
  %7420 = vmatprep.subr.mxu0 0.0
  %7421 = vmatpush2.msra.mxu0 0.0
  %7422 = vmatprep.subr.mxu0 0.0
  %7423 = vmatpush2.msra.mxu0 0.0
  %7424 = vmatprep.mubr.f32.mxu0 0.0
  %7425 = vmatmul.mubr.f32.gmra.mxu0 %v7358
  %v7426 = vpop.f32.mrf.mxu0
  %v7427 = vadd.f32 0.0, %v7426
  %v7428 = vpop.f32.mrf.mxu0
  %7429 = vdwg.mxu0
  %v7430 = vadd.f32 %v5963, %v7427
  %v7431 = vtanh.pop %v7430
  %v7432 = vxor.u32 %v7430, 2147483648
  %v7433 = vmul.f32 %v7432, 1.442695
  %v7434 = vpow.pop %v7433
  %v7435 = vadd.f32 %v7434, 1.0
  %v7436 = vrcp.pop %v7435
  %v7437 = vmul.f32 1.0, %v7436
  %v7438 = vsel %vm1208, %v7431, %v7437
  %v7440 = vrot.slane %v7347, 2
  %v7442 = vmul.f32 %v7438, %v7440
  %7444 = vrot.lane.b32.xlu0 %v7438, 102
  %v7445 = vpop.permute.xlu0 %7444
  %v7447 = vmul.f32 %v7438, %v7445
  %7449 = vrot.lane.b32.xlu0 %v7447, 13
  %v7450 = vpop.permute.xlu0 %7449
  %v7452 = vadd.f32 %v7442, %v7450
  %v7453 = vtanh.pop %v7452
  %7455 = vrot.lane.b32.xlu0 %v7453, 26
  %v7456 = vpop.permute.xlu0 %7455
  %v7458 = vmul.f32 %v7438, %v7456
  %7460 = vrot.lane.b32.xlu0 %v7458, 89
  %v7461 = vpop.permute.xlu0 %7460
  %v7462 = vsel %vm1234, %v7461, 0
  %7464 = vmatprep.subr.mxu0 0.0
  %7465 = vmatpush1.msra.mxu0 0.0
  %7466 = vmatprep.subr.mxu0 0.0
  %7467 = vmatpush1.msra.mxu0 0.0
  %7468 = vmatprep.subr.mxu0 0.0
  %7469 = vmatpush1.msra.mxu0 0.0
  %7470 = vmatprep.subr.mxu0 0.0
  %7471 = vmatpush1.msra.mxu0 0.0
  %7472 = vmatprep.subr.mxu0 0.0
  %7473 = vmatpush1.msra.mxu0 0.0
  %7474 = vmatprep.subr.mxu0 0.0
  %7475 = vmatpush1.msra.mxu0 0.0
  %7476 = vmatprep.subr.mxu0 0.0
  %7477 = vmatpush1.msra.mxu0 0.0
  %7478 = vmatprep.subr.mxu0 0.0
  %7479 = vmatpush1.msra.mxu0 0.0
  %7480 = vmatprep.subr.mxu0 0.0
  %7481 = vmatpush1.msra.mxu0 0.0
  %7482 = vmatprep.subr.mxu0 0.0
  %7483 = vmatpush1.msra.mxu0 0.0
  %7484 = vmatprep.subr.mxu0 0.0
  %7485 = vmatpush1.msra.mxu0 0.0
  %7486 = vmatprep.subr.mxu0 0.0
  %7487 = vmatpush1.msra.mxu0 0.0
  %7488 = vmatprep.subr.mxu0 0.0
  %7489 = vmatpush1.msra.mxu0 0.0
  %7490 = vmatprep.subr.mxu0 0.0
  %7491 = vmatpush1.msra.mxu0 0.0
  %7492 = vmatprep.subr.mxu0 0.0
  %7493 = vmatpush1.msra.mxu0 %v6933
  %7494 = vmatprep.subr.mxu0 0.0
  %7495 = vmatpush1.msra.mxu0 %v6930
  %7496 = vmatprep.subr.mxu0 0.0
  %7497 = vmatpush2.msra.mxu0 0.0
  %7498 = vmatprep.subr.mxu0 0.0
  %7499 = vmatpush2.msra.mxu0 0.0
  %7500 = vmatprep.subr.mxu0 0.0
  %7501 = vmatpush2.msra.mxu0 0.0
  %7502 = vmatprep.subr.mxu0 0.0
  %7503 = vmatpush2.msra.mxu0 0.0
  %7504 = vmatprep.subr.mxu0 0.0
  %7505 = vmatpush2.msra.mxu0 0.0
  %7506 = vmatprep.subr.mxu0 0.0
  %7507 = vmatpush2.msra.mxu0 0.0
  %7508 = vmatprep.subr.mxu0 0.0
  %7509 = vmatpush2.msra.mxu0 0.0
  %7510 = vmatprep.subr.mxu0 0.0
  %7511 = vmatpush2.msra.mxu0 0.0
  %7512 = vmatprep.subr.mxu0 0.0
  %7513 = vmatpush2.msra.mxu0 0.0
  %7514 = vmatprep.subr.mxu0 0.0
  %7515 = vmatpush2.msra.mxu0 0.0
  %7516 = vmatprep.subr.mxu0 0.0
  %7517 = vmatpush2.msra.mxu0 0.0
  %7518 = vmatprep.subr.mxu0 0.0
  %7519 = vmatpush2.msra.mxu0 0.0
  %7520 = vmatprep.subr.mxu0 0.0
  %7521 = vmatpush2.msra.mxu0 0.0
  %7522 = vmatprep.subr.mxu0 0.0
  %7523 = vmatpush2.msra.mxu0 0.0
  %7524 = vmatprep.subr.mxu0 0.0
  %7525 = vmatpush2.msra.mxu0 0.0
  %7526 = vmatprep.subr.mxu0 0.0
  %7527 = vmatpush2.msra.mxu0 0.0
  %7528 = vmatprep.mubr.f32.mxu0 0.0
  %7529 = vmatmul.mubr.f32.gmra.mxu0 %v7462
  %v7530 = vpop.f32.mrf.mxu0
  %v7531 = vadd.f32 0.0, %v7530
  %v7532 = vpop.f32.mrf.mxu0
  %7533 = vdwg.mxu0
  %v7535 = vrot.slane %v7531, 2
  %v7537 = vadd.f32 %v5962, %v7535
  %v7538 = vtanh.pop %v7537
  %v7539 = vxor.u32 %v7537, 2147483648
  %v7540 = vmul.f32 %v7539, 1.442695
  %v7541 = vpow.pop %v7540
  %v7542 = vadd.f32 %v7541, 1.0
  %v7543 = vrcp.pop %v7542
  %v7544 = vmul.f32 1.0, %v7543
  %v7545 = vsel %vm1208, %v7538, %v7544
  %v7547 = vrot.slane %v7452, 2
  %v7549 = vmul.f32 %v7545, %v7547
  %7551 = vrot.lane.b32.xlu0 %v7545, 102
  %v7552 = vpop.permute.xlu0 %7551
  %v7554 = vmul.f32 %v7545, %v7552
  %7556 = vrot.lane.b32.xlu0 %v7554, 13
  %v7557 = vpop.permute.xlu0 %7556
  %v7559 = vadd.f32 %v7549, %v7557
  %v7560 = vtanh.pop %v7559
  %7562 = vrot.lane.b32.xlu0 %v7560, 26
  %v7563 = vpop.permute.xlu0 %7562
  %v7565 = vmul.f32 %v7545, %v7563
  %v7567 = vrot.slane %v7565, 6
  %7568 = vrot.lane.b32.xlu0 %v7567, 89
  %v7569 = vpop.permute.xlu0 %7568
  %v7570 = vsel %vm1234, %v7569, 0
  %7572 = vmatprep.subr.mxu0 0.0
  %7573 = vmatpush1.msra.mxu0 0.0
  %7574 = vmatprep.subr.mxu0 0.0
  %7575 = vmatpush1.msra.mxu0 0.0
  %7576 = vmatprep.subr.mxu0 0.0
  %7577 = vmatpush1.msra.mxu0 0.0
  %7578 = vmatprep.subr.mxu0 0.0
  %7579 = vmatpush1.msra.mxu0 0.0
  %7580 = vmatprep.subr.mxu0 0.0
  %7581 = vmatpush1.msra.mxu0 0.0
  %7582 = vmatprep.subr.mxu0 0.0
  %7583 = vmatpush1.msra.mxu0 0.0
  %7584 = vmatprep.subr.mxu0 0.0
  %7585 = vmatpush1.msra.mxu0 0.0
  %7586 = vmatprep.subr.mxu0 0.0
  %7587 = vmatpush1.msra.mxu0 0.0
  %7588 = vmatprep.subr.mxu0 0.0
  %7589 = vmatpush1.msra.mxu0 0.0
  %7590 = vmatprep.subr.mxu0 0.0
  %7591 = vmatpush1.msra.mxu0 0.0
  %7592 = vmatprep.subr.mxu0 0.0
  %7593 = vmatpush1.msra.mxu0 0.0
  %7594 = vmatprep.subr.mxu0 0.0
  %7595 = vmatpush1.msra.mxu0 0.0
  %7596 = vmatprep.subr.mxu0 0.0
  %7597 = vmatpush1.msra.mxu0 0.0
  %7598 = vmatprep.subr.mxu0 0.0
  %7599 = vmatpush1.msra.mxu0 0.0
  %7600 = vmatprep.subr.mxu0 0.0
  %7601 = vmatpush1.msra.mxu0 %v6933
  %7602 = vmatprep.subr.mxu0 0.0
  %7603 = vmatpush1.msra.mxu0 %v6930
  %7604 = vmatprep.subr.mxu0 0.0
  %7605 = vmatpush2.msra.mxu0 0.0
  %7606 = vmatprep.subr.mxu0 0.0
  %7607 = vmatpush2.msra.mxu0 0.0
  %7608 = vmatprep.subr.mxu0 0.0
  %7609 = vmatpush2.msra.mxu0 0.0
  %7610 = vmatprep.subr.mxu0 0.0
  %7611 = vmatpush2.msra.mxu0 0.0
  %7612 = vmatprep.subr.mxu0 0.0
  %7613 = vmatpush2.msra.mxu0 0.0
  %7614 = vmatprep.subr.mxu0 0.0
  %7615 = vmatpush2.msra.mxu0 0.0
  %7616 = vmatprep.subr.mxu0 0.0
  %7617 = vmatpush2.msra.mxu0 0.0
  %7618 = vmatprep.subr.mxu0 0.0
  %7619 = vmatpush2.msra.mxu0 0.0
  %7620 = vmatprep.subr.mxu0 0.0
  %7621 = vmatpush2.msra.mxu0 0.0
  %7622 = vmatprep.subr.mxu0 0.0
  %7623 = vmatpush2.msra.mxu0 0.0
  %7624 = vmatprep.subr.mxu0 0.0
  %7625 = vmatpush2.msra.mxu0 0.0
  %7626 = vmatprep.subr.mxu0 0.0
  %7627 = vmatpush2.msra.mxu0 0.0
  %7628 = vmatprep.subr.mxu0 0.0
  %7629 = vmatpush2.msra.mxu0 0.0
  %7630 = vmatprep.subr.mxu0 0.0
  %7631 = vmatpush2.msra.mxu0 0.0
  %7632 = vmatprep.subr.mxu0 0.0
  %7633 = vmatpush2.msra.mxu0 0.0
  %7634 = vmatprep.subr.mxu0 0.0
  %7635 = vmatpush2.msra.mxu0 0.0
  %7636 = vmatprep.mubr.f32.mxu0 0.0
  %7637 = vmatmul.mubr.f32.gmra.mxu0 %v7570
  %v7638 = vpop.f32.mrf.mxu0
  %v7639 = vadd.f32 0.0, %v7638
  %v7640 = vpop.f32.mrf.mxu0
  %7641 = vdwg.mxu0
  %v7643 = vrot.slane %v7639, 4
  %v7645 = vadd.f32 %v5962, %v7643
  %v7646 = vtanh.pop %v7645
  %v7647 = vxor.u32 %v7645, 2147483648
  %v7648 = vmul.f32 %v7647, 1.442695
  %v7649 = vpow.pop %v7648
  %v7650 = vadd.f32 %v7649, 1.0
  %v7651 = vrcp.pop %v7650
  %v7652 = vmul.f32 1.0, %v7651
  %v7653 = vsel %vm1208, %v7646, %v7652
  %v7655 = vrot.slane %v7559, 2
  %v7657 = vmul.f32 %v7653, %v7655
  %7659 = vrot.lane.b32.xlu0 %v7653, 102
  %v7660 = vpop.permute.xlu0 %7659
  %v7662 = vmul.f32 %v7653, %v7660
  %7664 = vrot.lane.b32.xlu0 %v7662, 13
  %v7665 = vpop.permute.xlu0 %7664
  %v7667 = vadd.f32 %v7657, %v7665
  %v7668 = vtanh.pop %v7667
  %7670 = vrot.lane.b32.xlu0 %v7668, 26
  %v7671 = vpop.permute.xlu0 %7670
  %v7673 = vmul.f32 %v7653, %v7671
  %v7675 = vrot.slane %v7673, 4
  %7676 = vrot.lane.b32.xlu0 %v7675, 89
  %v7677 = vpop.permute.xlu0 %7676
  %v7678 = vsel %vm1234, %v7677, 0
  %7680 = vmatprep.subr.mxu0 0.0
  %7681 = vmatpush1.msra.mxu0 0.0
  %7682 = vmatprep.subr.mxu0 0.0
  %7683 = vmatpush1.msra.mxu0 0.0
  %7684 = vmatprep.subr.mxu0 0.0
  %7685 = vmatpush1.msra.mxu0 0.0
  %7686 = vmatprep.subr.mxu0 0.0
  %7687 = vmatpush1.msra.mxu0 0.0
  %7688 = vmatprep.subr.mxu0 0.0
  %7689 = vmatpush1.msra.mxu0 0.0
  %7690 = vmatprep.subr.mxu0 0.0
  %7691 = vmatpush1.msra.mxu0 0.0
  %7692 = vmatprep.subr.mxu0 0.0
  %7693 = vmatpush1.msra.mxu0 0.0
  %7694 = vmatprep.subr.mxu0 0.0
  %7695 = vmatpush1.msra.mxu0 0.0
  %7696 = vmatprep.subr.mxu0 0.0
  %7697 = vmatpush1.msra.mxu0 0.0
  %7698 = vmatprep.subr.mxu0 0.0
  %7699 = vmatpush1.msra.mxu0 0.0
  %7700 = vmatprep.subr.mxu0 0.0
  %7701 = vmatpush1.msra.mxu0 0.0
  %7702 = vmatprep.subr.mxu0 0.0
  %7703 = vmatpush1.msra.mxu0 0.0
  %7704 = vmatprep.subr.mxu0 0.0
  %7705 = vmatpush1.msra.mxu0 0.0
  %7706 = vmatprep.subr.mxu0 0.0
  %7707 = vmatpush1.msra.mxu0 0.0
  %7708 = vmatprep.subr.mxu0 0.0
  %7709 = vmatpush1.msra.mxu0 %v6933
  %7710 = vmatprep.subr.mxu0 0.0
  %7711 = vmatpush1.msra.mxu0 %v6930
  %7712 = vmatprep.subr.mxu0 0.0
  %7713 = vmatpush2.msra.mxu0 0.0
  %7714 = vmatprep.subr.mxu0 0.0
  %7715 = vmatpush2.msra.mxu0 0.0
  %7716 = vmatprep.subr.mxu0 0.0
  %7717 = vmatpush2.msra.mxu0 0.0
  %7718 = vmatprep.subr.mxu0 0.0
  %7719 = vmatpush2.msra.mxu0 0.0
  %7720 = vmatprep.subr.mxu0 0.0
  %7721 = vmatpush2.msra.mxu0 0.0
  %7722 = vmatprep.subr.mxu0 0.0
  %7723 = vmatpush2.msra.mxu0 0.0
  %7724 = vmatprep.subr.mxu0 0.0
  %7725 = vmatpush2.msra.mxu0 0.0
  %7726 = vmatprep.subr.mxu0 0.0
  %7727 = vmatpush2.msra.mxu0 0.0
  %7728 = vmatprep.subr.mxu0 0.0
  %7729 = vmatpush2.msra.mxu0 0.0
  %7730 = vmatprep.subr.mxu0 0.0
  %7731 = vmatpush2.msra.mxu0 0.0
  %7732 = vmatprep.subr.mxu0 0.0
  %7733 = vmatpush2.msra.mxu0 0.0
  %7734 = vmatprep.subr.mxu0 0.0
  %7735 = vmatpush2.msra.mxu0 0.0
  %7736 = vmatprep.subr.mxu0 0.0
  %7737 = vmatpush2.msra.mxu0 0.0
  %7738 = vmatprep.subr.mxu0 0.0
  %7739 = vmatpush2.msra.mxu0 0.0
  %7740 = vmatprep.subr.mxu0 0.0
  %7741 = vmatpush2.msra.mxu0 0.0
  %7742 = vmatprep.subr.mxu0 0.0
  %7743 = vmatpush2.msra.mxu0 0.0
  %7744 = vmatprep.mubr.f32.mxu0 0.0
  %7745 = vmatmul.mubr.f32.gmra.mxu0 %v7678
  %v7746 = vpop.f32.mrf.mxu0
  %v7747 = vadd.f32 0.0, %v7746
  %v7748 = vpop.f32.mrf.mxu0
  %7749 = vdwg.mxu0
  %v7751 = vrot.slane %v7747, 6
  %v7753 = vadd.f32 %v5962, %v7751
  %v7754 = vtanh.pop %v7753
  %v7755 = vxor.u32 %v7753, 2147483648
  %v7756 = vmul.f32 %v7755, 1.442695
  %v7757 = vpow.pop %v7756
  %v7758 = vadd.f32 %v7757, 1.0
  %v7759 = vrcp.pop %v7758
  %v7760 = vmul.f32 1.0, %v7759
  %v7761 = vsel %vm1208, %v7754, %v7760
  %v7763 = vrot.slane %v7667, 2
  %v7765 = vmul.f32 %v7761, %v7763
  %7767 = vrot.lane.b32.xlu0 %v7761, 102
  %v7768 = vpop.permute.xlu0 %7767
  %v7770 = vmul.f32 %v7761, %v7768
  %7772 = vrot.lane.b32.xlu0 %v7770, 13
  %v7773 = vpop.permute.xlu0 %7772
  %v7775 = vadd.f32 %v7765, %v7773
  %v7776 = vtanh.pop %v7775
  %7778 = vrot.lane.b32.xlu0 %v7776, 26
  %v7779 = vpop.permute.xlu0 %7778
  %v7781 = vmul.f32 %v7761, %v7779
  %v7783 = vrot.slane %v7781, 2
  %7784 = vrot.lane.b32.xlu0 %v7783, 89
  %v7785 = vpop.permute.xlu0 %7784
  %v7786 = vsel %vm1234, %v7785, 0
  %7788 = vmatprep.subr.mxu0 0.0
  %7789 = vmatpush1.msra.mxu0 0.0
  %7790 = vmatprep.subr.mxu0 0.0
  %7791 = vmatpush1.msra.mxu0 0.0
  %7792 = vmatprep.subr.mxu0 0.0
  %7793 = vmatpush1.msra.mxu0 0.0
  %7794 = vmatprep.subr.mxu0 0.0
  %7795 = vmatpush1.msra.mxu0 0.0
  %7796 = vmatprep.subr.mxu0 0.0
  %7797 = vmatpush1.msra.mxu0 0.0
  %7798 = vmatprep.subr.mxu0 0.0
  %7799 = vmatpush1.msra.mxu0 0.0
  %7800 = vmatprep.subr.mxu0 0.0
  %7801 = vmatpush1.msra.mxu0 0.0
  %7802 = vmatprep.subr.mxu0 0.0
  %7803 = vmatpush1.msra.mxu0 0.0
  %7804 = vmatprep.subr.mxu0 0.0
  %7805 = vmatpush1.msra.mxu0 0.0
  %7806 = vmatprep.subr.mxu0 0.0
  %7807 = vmatpush1.msra.mxu0 0.0
  %7808 = vmatprep.subr.mxu0 0.0
  %7809 = vmatpush1.msra.mxu0 0.0
  %7810 = vmatprep.subr.mxu0 0.0
  %7811 = vmatpush1.msra.mxu0 0.0
  %7812 = vmatprep.subr.mxu0 0.0
  %7813 = vmatpush1.msra.mxu0 0.0
  %7814 = vmatprep.subr.mxu0 0.0
  %7815 = vmatpush1.msra.mxu0 0.0
  %7816 = vmatprep.subr.mxu0 0.0
  %7817 = vmatpush1.msra.mxu0 %v6933
  %7818 = vmatprep.subr.mxu0 0.0
  %7819 = vmatpush1.msra.mxu0 %v6930
  %7820 = vmatprep.subr.mxu0 0.0
  %7821 = vmatpush2.msra.mxu0 0.0
  %7822 = vmatprep.subr.mxu0 0.0
  %7823 = vmatpush2.msra.mxu0 0.0
  %7824 = vmatprep.subr.mxu0 0.0
  %7825 = vmatpush2.msra.mxu0 0.0
  %7826 = vmatprep.subr.mxu0 0.0
  %7827 = vmatpush2.msra.mxu0 0.0
  %7828 = vmatprep.subr.mxu0 0.0
  %7829 = vmatpush2.msra.mxu0 0.0
  %7830 = vmatprep.subr.mxu0 0.0
  %7831 = vmatpush2.msra.mxu0 0.0
  %7832 = vmatprep.subr.mxu0 0.0
  %7833 = vmatpush2.msra.mxu0 0.0
  %7834 = vmatprep.subr.mxu0 0.0
  %7835 = vmatpush2.msra.mxu0 0.0
  %7836 = vmatprep.subr.mxu0 0.0
  %7837 = vmatpush2.msra.mxu0 0.0
  %7838 = vmatprep.subr.mxu0 0.0
  %7839 = vmatpush2.msra.mxu0 0.0
  %7840 = vmatprep.subr.mxu0 0.0
  %7841 = vmatpush2.msra.mxu0 0.0
  %7842 = vmatprep.subr.mxu0 0.0
  %7843 = vmatpush2.msra.mxu0 0.0
  %7844 = vmatprep.subr.mxu0 0.0
  %7845 = vmatpush2.msra.mxu0 0.0
  %7846 = vmatprep.subr.mxu0 0.0
  %7847 = vmatpush2.msra.mxu0 0.0
  %7848 = vmatprep.subr.mxu0 0.0
  %7849 = vmatpush2.msra.mxu0 0.0
  %7850 = vmatprep.subr.mxu0 0.0
  %7851 = vmatpush2.msra.mxu0 0.0
  %7852 = vmatprep.mubr.f32.mxu0 0.0
  %7853 = vmatmul.mubr.f32.gmra.mxu0 %v7786
  %v7854 = vpop.f32.mrf.mxu0
  %v7855 = vadd.f32 0.0, %v7854
  %v7856 = vpop.f32.mrf.mxu0
  %7857 = vdwg.mxu0
  %v7858 = vadd.f32 %v5962, %v7855
  %v7859 = vtanh.pop %v7858
  %v7860 = vxor.u32 %v7858, 2147483648
  %v7861 = vmul.f32 %v7860, 1.442695
  %v7862 = vpow.pop %v7861
  %v7863 = vadd.f32 %v7862, 1.0
  %v7864 = vrcp.pop %v7863
  %v7865 = vmul.f32 1.0, %v7864
  %v7866 = vsel %vm1208, %v7859, %v7865
  %v7868 = vrot.slane %v7775, 2
  %v7870 = vmul.f32 %v7866, %v7868
  %7872 = vrot.lane.b32.xlu0 %v7866, 102
  %v7873 = vpop.permute.xlu0 %7872
  %v7875 = vmul.f32 %v7866, %v7873
  %7877 = vrot.lane.b32.xlu0 %v7875, 13
  %v7878 = vpop.permute.xlu0 %7877
  %v7880 = vadd.f32 %v7870, %v7878
  %v7881 = vtanh.pop %v7880
  %7883 = vrot.lane.b32.xlu0 %v7881, 26
  %v7884 = vpop.permute.xlu0 %7883
  %v7886 = vmul.f32 %v7866, %v7884
  %v7887 = vsel %vm880, %v7886, %v7781
  %v7888 = vsel %vm2195, %v7887, %v7673
  %v7889 = vsel %vm2197, %v7888, %v7565
  %v7890 = vsel %vm880, %v7458, %v7353
  %v7891 = vsel %vm2195, %v7890, %v7245
  %v7892 = vsel %vm2197, %v7891, %v7137
  %s7893 = scalar_lea.vmem %s5, 128
  %v7894 = vld [vmem:[%s7893] sm:$0xff]
  %v7895 = vld [vmem:[%s7893 + $0x8] sm:$0x1f]
  %s7896 = scalar_lea.vmem %s5, 144
  %v7897 = vld [vmem:[%s7896] sm:$0xff]
  %v7898 = vld [vmem:[%s7896 + $0x8] sm:$0x1f]
  %7901 = vrot.lane.b32.xlu0 %v7889, 89
  %v7902 = vpop.permute.xlu0 %7901
  %7903 = vrot.lane.b32.xlu0 %v7892, 89
  %v7904 = vpop.permute.xlu0 %7903
  %v7905 = vsel %vm1234, %v7902, 0
  %v7907 = vsel %vm1234, %v7904, 0
  %v7910 = vsel %vm1238, %v7898, 0
  %7912 = vmatprep.subr.mxu0 0.0
  %7913 = vmatpush1.msra.mxu0 0.0
  %7914 = vmatprep.subr.mxu0 0.0
  %7915 = vmatpush1.msra.mxu0 0.0
  %7916 = vmatprep.subr.mxu0 0.0
  %7917 = vmatpush1.msra.mxu0 0.0
  %7918 = vmatprep.subr.mxu0 0.0
  %7919 = vmatpush1.msra.mxu0 0.0
  %7920 = vmatprep.subr.mxu0 0.0
  %7921 = vmatpush1.msra.mxu0 0.0
  %7922 = vmatprep.subr.mxu0 0.0
  %7923 = vmatpush1.msra.mxu0 0.0
  %7924 = vmatprep.subr.mxu0 0.0
  %7925 = vmatpush1.msra.mxu0 0.0
  %7926 = vmatprep.subr.mxu0 0.0
  %7927 = vmatpush1.msra.mxu0 0.0
  %7928 = vmatprep.subr.mxu0 0.0
  %7929 = vmatpush1.msra.mxu0 0.0
  %7930 = vmatprep.subr.mxu0 0.0
  %7931 = vmatpush1.msra.mxu0 0.0
  %7932 = vmatprep.subr.mxu0 0.0
  %7933 = vmatpush1.msra.mxu0 0.0
  %7934 = vmatprep.subr.mxu0 0.0
  %7935 = vmatpush1.msra.mxu0 0.0
  %7936 = vmatprep.subr.mxu0 0.0
  %7937 = vmatpush1.msra.mxu0 0.0
  %7938 = vmatprep.subr.mxu0 0.0
  %7939 = vmatpush1.msra.mxu0 0.0
  %7940 = vmatprep.subr.mxu0 0.0
  %7941 = vmatpush1.msra.mxu0 %v7910
  %7942 = vmatprep.subr.mxu0 0.0
  %7943 = vmatpush1.msra.mxu0 %v7897
  %7944 = vmatprep.subr.mxu0 0.0
  %7945 = vmatpush2.msra.mxu0 0.0
  %7946 = vmatprep.subr.mxu0 0.0
  %7947 = vmatpush2.msra.mxu0 0.0
  %7948 = vmatprep.subr.mxu0 0.0
  %7949 = vmatpush2.msra.mxu0 0.0
  %7950 = vmatprep.subr.mxu0 0.0
  %7951 = vmatpush2.msra.mxu0 0.0
  %7952 = vmatprep.subr.mxu0 0.0
  %7953 = vmatpush2.msra.mxu0 0.0
  %7954 = vmatprep.subr.mxu0 0.0
  %7955 = vmatpush2.msra.mxu0 0.0
  %7956 = vmatprep.subr.mxu0 0.0
  %7957 = vmatpush2.msra.mxu0 0.0
  %7958 = vmatprep.subr.mxu0 0.0
  %7959 = vmatpush2.msra.mxu0 0.0
  %7960 = vmatprep.subr.mxu0 0.0
  %7961 = vmatpush2.msra.mxu0 0.0
  %7962 = vmatprep.subr.mxu0 0.0
  %7963 = vmatpush2.msra.mxu0 0.0
  %7964 = vmatprep.subr.mxu0 0.0
  %7965 = vmatpush2.msra.mxu0 0.0
  %7966 = vmatprep.subr.mxu0 0.0
  %7967 = vmatpush2.msra.mxu0 0.0
  %7968 = vmatprep.subr.mxu0 0.0
  %7969 = vmatpush2.msra.mxu0 0.0
  %7970 = vmatprep.subr.mxu0 0.0
  %7971 = vmatpush2.msra.mxu0 0.0
  %7972 = vmatprep.subr.mxu0 0.0
  %7973 = vmatpush2.msra.mxu0 0.0
  %7974 = vmatprep.subr.mxu0 0.0
  %7975 = vmatpush2.msra.mxu0 0.0
  %7976 = vmatprep.mubr.f32.mxu0 0.0
  %7977 = vmatmul.mubr.f32.gmra.mxu0 %v7905
  %v7978 = vpop.f32.mrf.mxu0
  %v7979 = vadd.f32 0.0, %v7978
  %v7980 = vpop.f32.mrf.mxu0
  %7981 = vmatprep.mubr.f32.mxu0 0.0
  %7982 = vmatmul.mubr.f32.gmra.mxu0 %v7907
  %v7983 = vpop.f32.mrf.mxu0
  %v7984 = vadd.f32 0.0, %v7983
  %v7985 = vpop.f32.mrf.mxu0
  %7986 = vmatprep.mubr.f32.mxu0 0.0
  %7987 = vmatmul.mubr.f32.gmra.mxu0 %v7034
  %v7988 = vpop.f32.mrf.mxu0
  %v7989 = vadd.f32 0.0, %v7988
  %v7990 = vpop.f32.mrf.mxu0
  %7991 = vdwg.mxu0
  %7995 = vrot.lane.b32.xlu0 %v6925, 89
  %v7996 = vpop.permute.xlu0 %7995
  %7997 = vrot.lane.b32.xlu0 %v6928, 89
  %v7998 = vpop.permute.xlu0 %7997
  %7999 = vrot.lane.b32.xlu0 %v6922, 89
  %v8000 = vpop.permute.xlu0 %7999
  %v8001 = vsel %vm1234, %v7996, 0
  %v8003 = vsel %vm1234, %v7998, 0
  %v8005 = vsel %vm1234, %v8000, 0
  %v8008 = vsel %vm1238, %v7895, 0
  %8010 = vmatprep.subr.mxu0 0.0
  %8011 = vmatpush1.msra.mxu0 0.0
  %8012 = vmatprep.subr.mxu0 0.0
  %8013 = vmatpush1.msra.mxu0 0.0
  %8014 = vmatprep.subr.mxu0 0.0
  %8015 = vmatpush1.msra.mxu0 0.0
  %8016 = vmatprep.subr.mxu0 0.0
  %8017 = vmatpush1.msra.mxu0 0.0
  %8018 = vmatprep.subr.mxu0 0.0
  %8019 = vmatpush1.msra.mxu0 0.0
  %8020 = vmatprep.subr.mxu0 0.0
  %8021 = vmatpush1.msra.mxu0 0.0
  %8022 = vmatprep.subr.mxu0 0.0
  %8023 = vmatpush1.msra.mxu0 0.0
  %8024 = vmatprep.subr.mxu0 0.0
  %8025 = vmatpush1.msra.mxu0 0.0
  %8026 = vmatprep.subr.mxu0 0.0
  %8027 = vmatpush1.msra.mxu0 0.0
  %8028 = vmatprep.subr.mxu0 0.0
  %8029 = vmatpush1.msra.mxu0 0.0
  %8030 = vmatprep.subr.mxu0 0.0
  %8031 = vmatpush1.msra.mxu0 0.0
  %8032 = vmatprep.subr.mxu0 0.0
  %8033 = vmatpush1.msra.mxu0 0.0
  %8034 = vmatprep.subr.mxu0 0.0
  %8035 = vmatpush1.msra.mxu0 0.0
  %8036 = vmatprep.subr.mxu0 0.0
  %8037 = vmatpush1.msra.mxu0 0.0
  %8038 = vmatprep.subr.mxu0 0.0
  %8039 = vmatpush1.msra.mxu0 %v8008
  %8040 = vmatprep.subr.mxu0 0.0
  %8041 = vmatpush1.msra.mxu0 %v7894
  %8042 = vmatprep.subr.mxu0 0.0
  %8043 = vmatpush2.msra.mxu0 0.0
  %8044 = vmatprep.subr.mxu0 0.0
  %8045 = vmatpush2.msra.mxu0 0.0
  %8046 = vmatprep.subr.mxu0 0.0
  %8047 = vmatpush2.msra.mxu0 0.0
  %8048 = vmatprep.subr.mxu0 0.0
  %8049 = vmatpush2.msra.mxu0 0.0
  %8050 = vmatprep.subr.mxu0 0.0
  %8051 = vmatpush2.msra.mxu0 0.0
  %8052 = vmatprep.subr.mxu0 0.0
  %8053 = vmatpush2.msra.mxu0 0.0
  %8054 = vmatprep.subr.mxu0 0.0
  %8055 = vmatpush2.msra.mxu0 0.0
  %8056 = vmatprep.subr.mxu0 0.0
  %8057 = vmatpush2.msra.mxu0 0.0
  %8058 = vmatprep.subr.mxu0 0.0
  %8059 = vmatpush2.msra.mxu0 0.0
  %8060 = vmatprep.subr.mxu0 0.0
  %8061 = vmatpush2.msra.mxu0 0.0
  %8062 = vmatprep.subr.mxu0 0.0
  %8063 = vmatpush2.msra.mxu0 0.0
  %8064 = vmatprep.subr.mxu0 0.0
  %8065 = vmatpush2.msra.mxu0 0.0
  %8066 = vmatprep.subr.mxu0 0.0
  %8067 = vmatpush2.msra.mxu0 0.0
  %8068 = vmatprep.subr.mxu0 0.0
  %8069 = vmatpush2.msra.mxu0 0.0
  %8070 = vmatprep.subr.mxu0 0.0
  %8071 = vmatpush2.msra.mxu0 0.0
  %8072 = vmatprep.subr.mxu0 0.0
  %8073 = vmatpush2.msra.mxu0 0.0
  %8074 = vmatprep.mubr.f32.mxu0 0.0
  %8075 = vmatmul.mubr.f32.gmra.mxu0 %v8001
  %v8076 = vpop.f32.mrf.mxu0
  %v8077 = vadd.f32 %v7979, %v8076
  %v8078 = vpop.f32.mrf.mxu0
  %8079 = vmatprep.mubr.f32.mxu0 0.0
  %8080 = vmatmul.mubr.f32.gmra.mxu0 %v8003
  %v8081 = vpop.f32.mrf.mxu0
  %v8082 = vadd.f32 %v7984, %v8081
  %v8083 = vpop.f32.mrf.mxu0
  %8084 = vmatprep.mubr.f32.mxu0 0.0
  %8085 = vmatmul.mubr.f32.gmra.mxu0 %v8005
  %v8086 = vpop.f32.mrf.mxu0
  %v8087 = vadd.f32 %v7989, %v8086
  %v8088 = vpop.f32.mrf.mxu0
  %8089 = vdwg.mxu0
  %s8090 = scalar_lea.vmem %s7, 6
  %v8091 = vld [vmem:[%s8090] sm:$0x1]
  %v8093 = vlaneseq
  %v8094 = vshrl.u32 %v8093, 7
  %v8095 = vsub.s32 0, %v8094
  %v8096 = vrot.slane %v8091, %v8095
  %v8098 = vadd.f32 %v8077, %v8096
  %v8099 = vadd.f32 %v8082, %v8096
  %v8100 = vadd.f32 %v8087, %v8096
  %s8101 = scalar_lea.vmem %s5, 160
  %v8102 = vld [vmem:[%s8101] sm:$0xff]
  %v8103 = vld [vmem:[%s8101 + $0x8] sm:$0x1f]
  %s8104 = scalar_lea.vmem %s5, 176
  %v8105 = vld [vmem:[%s8104] sm:$0xff]
  %v8106 = vld [vmem:[%s8104 + $0x8] sm:$0x1f]
  %v8108 = vsel %vm1238, %v8106, 0
  %8110 = vmatprep.subr.mxu0 0.0
  %8111 = vmatpush1.msra.mxu0 0.0
  %8112 = vmatprep.subr.mxu0 0.0
  %8113 = vmatpush1.msra.mxu0 0.0
  %8114 = vmatprep.subr.mxu0 0.0
  %8115 = vmatpush1.msra.mxu0 0.0
  %8116 = vmatprep.subr.mxu0 0.0
  %8117 = vmatpush1.msra.mxu0 0.0
  %8118 = vmatprep.subr.mxu0 0.0
  %8119 = vmatpush1.msra.mxu0 0.0
  %8120 = vmatprep.subr.mxu0 0.0
  %8121 = vmatpush1.msra.mxu0 0.0
  %8122 = vmatprep.subr.mxu0 0.0
  %8123 = vmatpush1.msra.mxu0 0.0
  %8124 = vmatprep.subr.mxu0 0.0
  %8125 = vmatpush1.msra.mxu0 0.0
  %8126 = vmatprep.subr.mxu0 0.0
  %8127 = vmatpush1.msra.mxu0 0.0
  %8128 = vmatprep.subr.mxu0 0.0
  %8129 = vmatpush1.msra.mxu0 0.0
  %8130 = vmatprep.subr.mxu0 0.0
  %8131 = vmatpush1.msra.mxu0 0.0
  %8132 = vmatprep.subr.mxu0 0.0
  %8133 = vmatpush1.msra.mxu0 0.0
  %8134 = vmatprep.subr.mxu0 0.0
  %8135 = vmatpush1.msra.mxu0 0.0
  %8136 = vmatprep.subr.mxu0 0.0
  %8137 = vmatpush1.msra.mxu0 0.0
  %8138 = vmatprep.subr.mxu0 0.0
  %8139 = vmatpush1.msra.mxu0 %v8108
  %8140 = vmatprep.subr.mxu0 0.0
  %8141 = vmatpush1.msra.mxu0 %v8105
  %8142 = vmatprep.subr.mxu0 0.0
  %8143 = vmatpush2.msra.mxu0 0.0
  %8144 = vmatprep.subr.mxu0 0.0
  %8145 = vmatpush2.msra.mxu0 0.0
  %8146 = vmatprep.subr.mxu0 0.0
  %8147 = vmatpush2.msra.mxu0 0.0
  %8148 = vmatprep.subr.mxu0 0.0
  %8149 = vmatpush2.msra.mxu0 0.0
  %8150 = vmatprep.subr.mxu0 0.0
  %8151 = vmatpush2.msra.mxu0 0.0
  %8152 = vmatprep.subr.mxu0 0.0
  %8153 = vmatpush2.msra.mxu0 0.0
  %8154 = vmatprep.subr.mxu0 0.0
  %8155 = vmatpush2.msra.mxu0 0.0
  %8156 = vmatprep.subr.mxu0 0.0
  %8157 = vmatpush2.msra.mxu0 0.0
  %8158 = vmatprep.subr.mxu0 0.0
  %8159 = vmatpush2.msra.mxu0 0.0
  %8160 = vmatprep.subr.mxu0 0.0
  %8161 = vmatpush2.msra.mxu0 0.0
  %8162 = vmatprep.subr.mxu0 0.0
  %8163 = vmatpush2.msra.mxu0 0.0
  %8164 = vmatprep.subr.mxu0 0.0
  %8165 = vmatpush2.msra.mxu0 0.0
  %8166 = vmatprep.subr.mxu0 0.0
  %8167 = vmatpush2.msra.mxu0 0.0
  %8168 = vmatprep.subr.mxu0 0.0
  %8169 = vmatpush2.msra.mxu0 0.0
  %8170 = vmatprep.subr.mxu0 0.0
  %8171 = vmatpush2.msra.mxu0 0.0
  %8172 = vmatprep.subr.mxu0 0.0
  %8173 = vmatpush2.msra.mxu0 0.0
  %8174 = vmatprep.mubr.f32.mxu0 0.0
  %8175 = vmatmul.mubr.f32.gmra.mxu0 %v7905
  %v8176 = vpop.f32.mrf.mxu0
  %v8177 = vadd.f32 0.0, %v8176
  %v8178 = vpop.f32.mrf.mxu0
  %8179 = vmatprep.mubr.f32.mxu0 0.0
  %8180 = vmatmul.mubr.f32.gmra.mxu0 %v7907
  %v8181 = vpop.f32.mrf.mxu0
  %v8182 = vadd.f32 0.0, %v8181
  %v8183 = vpop.f32.mrf.mxu0
  %8184 = vmatprep.mubr.f32.mxu0 0.0
  %8185 = vmatmul.mubr.f32.gmra.mxu0 %v7034
  %v8186 = vpop.f32.mrf.mxu0
  %v8187 = vadd.f32 0.0, %v8186
  %v8188 = vpop.f32.mrf.mxu0
  %8189 = vdwg.mxu0
  %v8191 = vsel %vm1238, %v8103, 0
  %8193 = vmatprep.subr.mxu0 0.0
  %8194 = vmatpush1.msra.mxu0 0.0
  %8195 = vmatprep.subr.mxu0 0.0
  %8196 = vmatpush1.msra.mxu0 0.0
  %8197 = vmatprep.subr.mxu0 0.0
  %8198 = vmatpush1.msra.mxu0 0.0
  %8199 = vmatprep.subr.mxu0 0.0
  %8200 = vmatpush1.msra.mxu0 0.0
  %8201 = vmatprep.subr.mxu0 0.0
  %8202 = vmatpush1.msra.mxu0 0.0
  %8203 = vmatprep.subr.mxu0 0.0
  %8204 = vmatpush1.msra.mxu0 0.0
  %8205 = vmatprep.subr.mxu0 0.0
  %8206 = vmatpush1.msra.mxu0 0.0
  %8207 = vmatprep.subr.mxu0 0.0
  %8208 = vmatpush1.msra.mxu0 0.0
  %8209 = vmatprep.subr.mxu0 0.0
  %8210 = vmatpush1.msra.mxu0 0.0
  %8211 = vmatprep.subr.mxu0 0.0
  %8212 = vmatpush1.msra.mxu0 0.0
  %8213 = vmatprep.subr.mxu0 0.0
  %8214 = vmatpush1.msra.mxu0 0.0
  %8215 = vmatprep.subr.mxu0 0.0
  %8216 = vmatpush1.msra.mxu0 0.0
  %8217 = vmatprep.subr.mxu0 0.0
  %8218 = vmatpush1.msra.mxu0 0.0
  %8219 = vmatprep.subr.mxu0 0.0
  %8220 = vmatpush1.msra.mxu0 0.0
  %8221 = vmatprep.subr.mxu0 0.0
  %8222 = vmatpush1.msra.mxu0 %v8191
  %8223 = vmatprep.subr.mxu0 0.0
  %8224 = vmatpush1.msra.mxu0 %v8102
  %8225 = vmatprep.subr.mxu0 0.0
  %8226 = vmatpush2.msra.mxu0 0.0
  %8227 = vmatprep.subr.mxu0 0.0
  %8228 = vmatpush2.msra.mxu0 0.0
  %8229 = vmatprep.subr.mxu0 0.0
  %8230 = vmatpush2.msra.mxu0 0.0
  %8231 = vmatprep.subr.mxu0 0.0
  %8232 = vmatpush2.msra.mxu0 0.0
  %8233 = vmatprep.subr.mxu0 0.0
  %8234 = vmatpush2.msra.mxu0 0.0
  %8235 = vmatprep.subr.mxu0 0.0
  %8236 = vmatpush2.msra.mxu0 0.0
  %8237 = vmatprep.subr.mxu0 0.0
  %8238 = vmatpush2.msra.mxu0 0.0
  %8239 = vmatprep.subr.mxu0 0.0
  %8240 = vmatpush2.msra.mxu0 0.0
  %8241 = vmatprep.subr.mxu0 0.0
  %8242 = vmatpush2.msra.mxu0 0.0
  %8243 = vmatprep.subr.mxu0 0.0
  %8244 = vmatpush2.msra.mxu0 0.0
  %8245 = vmatprep.subr.mxu0 0.0
  %8246 = vmatpush2.msra.mxu0 0.0
  %8247 = vmatprep.subr.mxu0 0.0
  %8248 = vmatpush2.msra.mxu0 0.0
  %8249 = vmatprep.subr.mxu0 0.0
  %8250 = vmatpush2.msra.mxu0 0.0
  %8251 = vmatprep.subr.mxu0 0.0
  %8252 = vmatpush2.msra.mxu0 0.0
  %8253 = vmatprep.subr.mxu0 0.0
  %8254 = vmatpush2.msra.mxu0 0.0
  %8255 = vmatprep.subr.mxu0 0.0
  %8256 = vmatpush2.msra.mxu0 0.0
  %8257 = vmatprep.mubr.f32.mxu0 0.0
  %8258 = vmatmul.mubr.f32.gmra.mxu0 %v8001
  %v8259 = vpop.f32.mrf.mxu0
  %v8260 = vadd.f32 %v8177, %v8259
  %v8261 = vpop.f32.mrf.mxu0
  %8262 = vmatprep.mubr.f32.mxu0 0.0
  %8263 = vmatmul.mubr.f32.gmra.mxu0 %v8003
  %v8264 = vpop.f32.mrf.mxu0
  %v8265 = vadd.f32 %v8182, %v8264
  %v8266 = vpop.f32.mrf.mxu0
  %8267 = vmatprep.mubr.f32.mxu0 0.0
  %8268 = vmatmul.mubr.f32.gmra.mxu0 %v8005
  %v8269 = vpop.f32.mrf.mxu0
  %v8270 = vadd.f32 %v8187, %v8269
  %v8271 = vpop.f32.mrf.mxu0
  %8272 = vdwg.mxu0
  %s8273 = scalar_lea.vmem %s7, 7
  %v8274 = vld [vmem:[%s8273] sm:$0x1]
  %v8276 = vlaneseq
  %v8277 = vshrl.u32 %v8276, 7
  %v8278 = vsub.s32 0, %v8277
  %v8279 = vrot.slane %v8274, %v8278
  %v8281 = vadd.f32 %v8260, %v8279
  %v8282 = vadd.f32 %v8265, %v8279
  %v8283 = vadd.f32 %v8270, %v8279
  %s8284 = scalar_lea.vmem %s6, 96
  %v8285 = vld [vmem:[%s8284] sm:$0xff]
  %v8286 = vld [vmem:[%s8284 + $0x8] sm:$0x1f]
  %v8288 = vsel %vm1238, %v8286, 0
  %8290 = vmatprep.subr.mxu0 0.0
  %8291 = vmatpush1.msra.mxu0 0.0
  %8292 = vmatprep.subr.mxu0 0.0
  %8293 = vmatpush1.msra.mxu0 0.0
  %8294 = vmatprep.subr.mxu0 0.0
  %8295 = vmatpush1.msra.mxu0 0.0
  %8296 = vmatprep.subr.mxu0 0.0
  %8297 = vmatpush1.msra.mxu0 0.0
  %8298 = vmatprep.subr.mxu0 0.0
  %8299 = vmatpush1.msra.mxu0 0.0
  %8300 = vmatprep.subr.mxu0 0.0
  %8301 = vmatpush1.msra.mxu0 0.0
  %8302 = vmatprep.subr.mxu0 0.0
  %8303 = vmatpush1.msra.mxu0 0.0
  %8304 = vmatprep.subr.mxu0 0.0
  %8305 = vmatpush1.msra.mxu0 0.0
  %8306 = vmatprep.subr.mxu0 0.0
  %8307 = vmatpush1.msra.mxu0 0.0
  %8308 = vmatprep.subr.mxu0 0.0
  %8309 = vmatpush1.msra.mxu0 0.0
  %8310 = vmatprep.subr.mxu0 0.0
  %8311 = vmatpush1.msra.mxu0 0.0
  %8312 = vmatprep.subr.mxu0 0.0
  %8313 = vmatpush1.msra.mxu0 0.0
  %8314 = vmatprep.subr.mxu0 0.0
  %8315 = vmatpush1.msra.mxu0 0.0
  %8316 = vmatprep.subr.mxu0 0.0
  %8317 = vmatpush1.msra.mxu0 0.0
  %8318 = vmatprep.subr.mxu0 0.0
  %8319 = vmatpush1.msra.mxu0 %v8288
  %8320 = vmatprep.subr.mxu0 0.0
  %8321 = vmatpush1.msra.mxu0 %v8285
  %8322 = vmatprep.subr.mxu0 0.0
  %8323 = vmatpush2.msra.mxu0 0.0
  %8324 = vmatprep.subr.mxu0 0.0
  %8325 = vmatpush2.msra.mxu0 0.0
  %8326 = vmatprep.subr.mxu0 0.0
  %8327 = vmatpush2.msra.mxu0 0.0
  %8328 = vmatprep.subr.mxu0 0.0
  %8329 = vmatpush2.msra.mxu0 0.0
  %8330 = vmatprep.subr.mxu0 0.0
  %8331 = vmatpush2.msra.mxu0 0.0
  %8332 = vmatprep.subr.mxu0 0.0
  %8333 = vmatpush2.msra.mxu0 0.0
  %8334 = vmatprep.subr.mxu0 0.0
  %8335 = vmatpush2.msra.mxu0 0.0
  %8336 = vmatprep.subr.mxu0 0.0
  %8337 = vmatpush2.msra.mxu0 0.0
  %8338 = vmatprep.subr.mxu0 0.0
  %8339 = vmatpush2.msra.mxu0 0.0
  %8340 = vmatprep.subr.mxu0 0.0
  %8341 = vmatpush2.msra.mxu0 0.0
  %8342 = vmatprep.subr.mxu0 0.0
  %8343 = vmatpush2.msra.mxu0 0.0
  %8344 = vmatprep.subr.mxu0 0.0
  %8345 = vmatpush2.msra.mxu0 0.0
  %8346 = vmatprep.subr.mxu0 0.0
  %8347 = vmatpush2.msra.mxu0 0.0
  %8348 = vmatprep.subr.mxu0 0.0
  %8349 = vmatpush2.msra.mxu0 0.0
  %8350 = vmatprep.subr.mxu0 0.0
  %8351 = vmatpush2.msra.mxu0 0.0
  %8352 = vmatprep.subr.mxu0 0.0
  %8353 = vmatpush2.msra.mxu0 0.0
  %8354 = vmatprep.mubr.f32.mxu0 0.0
  %8355 = vmatmul.mubr.f32.gmra.mxu0 %v1236
  %v8356 = vpop.f32.mrf.mxu0
  %v8357 = vadd.f32 0.0, %v8356
  %v8358 = vpop.f32.mrf.mxu0
  %8359 = vdwg.mxu0
  %v8360 = vadd.f32 %v8098, %v8357
  %v8361 = vtanh.pop %v8360
  %v8362 = vxor.u32 %v8360, 2147483648
  %v8363 = vmul.f32 %v8362, 1.442695
  %v8364 = vpow.pop %v8363
  %v8365 = vadd.f32 %v8364, 1.0
  %v8366 = vrcp.pop %v8365
  %v8367 = vmul.f32 1.0, %v8366
  %v8368 = vsel %vm1208, %v8361, %v8367
  %v8369 = vmul.f32 %v8368, 0.0
  %8371 = vrot.lane.b32.xlu0 %v8368, 102
  %v8372 = vpop.permute.xlu0 %8371
  %v8374 = vmul.f32 %v8368, %v8372
  %8376 = vrot.lane.b32.xlu0 %v8374, 13
  %v8377 = vpop.permute.xlu0 %8376
  %v8379 = vadd.f32 %v8369, %v8377
  %v8380 = vtanh.pop %v8379
  %8382 = vrot.lane.b32.xlu0 %v8380, 26
  %v8383 = vpop.permute.xlu0 %8382
  %v8385 = vmul.f32 %v8368, %v8383
  %8387 = vrot.lane.b32.xlu0 %v8385, 89
  %v8388 = vpop.permute.xlu0 %8387
  %v8389 = vsel %vm1234, %v8388, 0
  %8391 = vmatprep.subr.mxu0 0.0
  %8392 = vmatpush1.msra.mxu0 0.0
  %8393 = vmatprep.subr.mxu0 0.0
  %8394 = vmatpush1.msra.mxu0 0.0
  %8395 = vmatprep.subr.mxu0 0.0
  %8396 = vmatpush1.msra.mxu0 0.0
  %8397 = vmatprep.subr.mxu0 0.0
  %8398 = vmatpush1.msra.mxu0 0.0
  %8399 = vmatprep.subr.mxu0 0.0
  %8400 = vmatpush1.msra.mxu0 0.0
  %8401 = vmatprep.subr.mxu0 0.0
  %8402 = vmatpush1.msra.mxu0 0.0
  %8403 = vmatprep.subr.mxu0 0.0
  %8404 = vmatpush1.msra.mxu0 0.0
  %8405 = vmatprep.subr.mxu0 0.0
  %8406 = vmatpush1.msra.mxu0 0.0
  %8407 = vmatprep.subr.mxu0 0.0
  %8408 = vmatpush1.msra.mxu0 0.0
  %8409 = vmatprep.subr.mxu0 0.0
  %8410 = vmatpush1.msra.mxu0 0.0
  %8411 = vmatprep.subr.mxu0 0.0
  %8412 = vmatpush1.msra.mxu0 0.0
  %8413 = vmatprep.subr.mxu0 0.0
  %8414 = vmatpush1.msra.mxu0 0.0
  %8415 = vmatprep.subr.mxu0 0.0
  %8416 = vmatpush1.msra.mxu0 0.0
  %8417 = vmatprep.subr.mxu0 0.0
  %8418 = vmatpush1.msra.mxu0 0.0
  %8419 = vmatprep.subr.mxu0 0.0
  %8420 = vmatpush1.msra.mxu0 %v8288
  %8421 = vmatprep.subr.mxu0 0.0
  %8422 = vmatpush1.msra.mxu0 %v8285
  %8423 = vmatprep.subr.mxu0 0.0
  %8424 = vmatpush2.msra.mxu0 0.0
  %8425 = vmatprep.subr.mxu0 0.0
  %8426 = vmatpush2.msra.mxu0 0.0
  %8427 = vmatprep.subr.mxu0 0.0
  %8428 = vmatpush2.msra.mxu0 0.0
  %8429 = vmatprep.subr.mxu0 0.0
  %8430 = vmatpush2.msra.mxu0 0.0
  %8431 = vmatprep.subr.mxu0 0.0
  %8432 = vmatpush2.msra.mxu0 0.0
  %8433 = vmatprep.subr.mxu0 0.0
  %8434 = vmatpush2.msra.mxu0 0.0
  %8435 = vmatprep.subr.mxu0 0.0
  %8436 = vmatpush2.msra.mxu0 0.0
  %8437 = vmatprep.subr.mxu0 0.0
  %8438 = vmatpush2.msra.mxu0 0.0
  %8439 = vmatprep.subr.mxu0 0.0
  %8440 = vmatpush2.msra.mxu0 0.0
  %8441 = vmatprep.subr.mxu0 0.0
  %8442 = vmatpush2.msra.mxu0 0.0
  %8443 = vmatprep.subr.mxu0 0.0
  %8444 = vmatpush2.msra.mxu0 0.0
  %8445 = vmatprep.subr.mxu0 0.0
  %8446 = vmatpush2.msra.mxu0 0.0
  %8447 = vmatprep.subr.mxu0 0.0
  %8448 = vmatpush2.msra.mxu0 0.0
  %8449 = vmatprep.subr.mxu0 0.0
  %8450 = vmatpush2.msra.mxu0 0.0
  %8451 = vmatprep.subr.mxu0 0.0
  %8452 = vmatpush2.msra.mxu0 0.0
  %8453 = vmatprep.subr.mxu0 0.0
  %8454 = vmatpush2.msra.mxu0 0.0
  %8455 = vmatprep.mubr.f32.mxu0 0.0
  %8456 = vmatmul.mubr.f32.gmra.mxu0 %v8389
  %v8457 = vpop.f32.mrf.mxu0
  %v8458 = vadd.f32 0.0, %v8457
  %v8459 = vpop.f32.mrf.mxu0
  %8460 = vdwg.mxu0
  %v8462 = vrot.slane %v8458, 6
  %v8464 = vadd.f32 %v8098, %v8462
  %v8465 = vtanh.pop %v8464
  %v8466 = vxor.u32 %v8464, 2147483648
  %v8467 = vmul.f32 %v8466, 1.442695
  %v8468 = vpow.pop %v8467
  %v8469 = vadd.f32 %v8468, 1.0
  %v8470 = vrcp.pop %v8469
  %v8471 = vmul.f32 1.0, %v8470
  %v8472 = vsel %vm1208, %v8465, %v8471
  %v8474 = vrot.slane %v8379, 6
  %v8476 = vmul.f32 %v8472, %v8474
  %8478 = vrot.lane.b32.xlu0 %v8472, 102
  %v8479 = vpop.permute.xlu0 %8478
  %v8481 = vmul.f32 %v8472, %v8479
  %8483 = vrot.lane.b32.xlu0 %v8481, 13
  %v8484 = vpop.permute.xlu0 %8483
  %v8486 = vadd.f32 %v8476, %v8484
  %v8487 = vtanh.pop %v8486
  %8489 = vrot.lane.b32.xlu0 %v8487, 26
  %v8490 = vpop.permute.xlu0 %8489
  %v8492 = vmul.f32 %v8472, %v8490
  %v8494 = vrot.slane %v8492, 2
  %8495 = vrot.lane.b32.xlu0 %v8494, 89
  %v8496 = vpop.permute.xlu0 %8495
  %v8497 = vsel %vm1234, %v8496, 0
  %8499 = vmatprep.subr.mxu0 0.0
  %8500 = vmatpush1.msra.mxu0 0.0
  %8501 = vmatprep.subr.mxu0 0.0
  %8502 = vmatpush1.msra.mxu0 0.0
  %8503 = vmatprep.subr.mxu0 0.0
  %8504 = vmatpush1.msra.mxu0 0.0
  %8505 = vmatprep.subr.mxu0 0.0
  %8506 = vmatpush1.msra.mxu0 0.0
  %8507 = vmatprep.subr.mxu0 0.0
  %8508 = vmatpush1.msra.mxu0 0.0
  %8509 = vmatprep.subr.mxu0 0.0
  %8510 = vmatpush1.msra.mxu0 0.0
  %8511 = vmatprep.subr.mxu0 0.0
  %8512 = vmatpush1.msra.mxu0 0.0
  %8513 = vmatprep.subr.mxu0 0.0
  %8514 = vmatpush1.msra.mxu0 0.0
  %8515 = vmatprep.subr.mxu0 0.0
  %8516 = vmatpush1.msra.mxu0 0.0
  %8517 = vmatprep.subr.mxu0 0.0
  %8518 = vmatpush1.msra.mxu0 0.0
  %8519 = vmatprep.subr.mxu0 0.0
  %8520 = vmatpush1.msra.mxu0 0.0
  %8521 = vmatprep.subr.mxu0 0.0
  %8522 = vmatpush1.msra.mxu0 0.0
  %8523 = vmatprep.subr.mxu0 0.0
  %8524 = vmatpush1.msra.mxu0 0.0
  %8525 = vmatprep.subr.mxu0 0.0
  %8526 = vmatpush1.msra.mxu0 0.0
  %8527 = vmatprep.subr.mxu0 0.0
  %8528 = vmatpush1.msra.mxu0 %v8288
  %8529 = vmatprep.subr.mxu0 0.0
  %8530 = vmatpush1.msra.mxu0 %v8285
  %8531 = vmatprep.subr.mxu0 0.0
  %8532 = vmatpush2.msra.mxu0 0.0
  %8533 = vmatprep.subr.mxu0 0.0
  %8534 = vmatpush2.msra.mxu0 0.0
  %8535 = vmatprep.subr.mxu0 0.0
  %8536 = vmatpush2.msra.mxu0 0.0
  %8537 = vmatprep.subr.mxu0 0.0
  %8538 = vmatpush2.msra.mxu0 0.0
  %8539 = vmatprep.subr.mxu0 0.0
  %8540 = vmatpush2.msra.mxu0 0.0
  %8541 = vmatprep.subr.mxu0 0.0
  %8542 = vmatpush2.msra.mxu0 0.0
  %8543 = vmatprep.subr.mxu0 0.0
  %8544 = vmatpush2.msra.mxu0 0.0
  %8545 = vmatprep.subr.mxu0 0.0
  %8546 = vmatpush2.msra.mxu0 0.0
  %8547 = vmatprep.subr.mxu0 0.0
  %8548 = vmatpush2.msra.mxu0 0.0
  %8549 = vmatprep.subr.mxu0 0.0
  %8550 = vmatpush2.msra.mxu0 0.0
  %8551 = vmatprep.subr.mxu0 0.0
  %8552 = vmatpush2.msra.mxu0 0.0
  %8553 = vmatprep.subr.mxu0 0.0
  %8554 = vmatpush2.msra.mxu0 0.0
  %8555 = vmatprep.subr.mxu0 0.0
  %8556 = vmatpush2.msra.mxu0 0.0
  %8557 = vmatprep.subr.mxu0 0.0
  %8558 = vmatpush2.msra.mxu0 0.0
  %8559 = vmatprep.subr.mxu0 0.0
  %8560 = vmatpush2.msra.mxu0 0.0
  %8561 = vmatprep.subr.mxu0 0.0
  %8562 = vmatpush2.msra.mxu0 0.0
  %8563 = vmatprep.mubr.f32.mxu0 0.0
  %8564 = vmatmul.mubr.f32.gmra.mxu0 %v8497
  %v8565 = vpop.f32.mrf.mxu0
  %v8566 = vadd.f32 0.0, %v8565
  %v8567 = vpop.f32.mrf.mxu0
  %8568 = vdwg.mxu0
  %v8570 = vrot.slane %v8566, 4
  %v8572 = vadd.f32 %v8098, %v8570
  %v8573 = vtanh.pop %v8572
  %v8574 = vxor.u32 %v8572, 2147483648
  %v8575 = vmul.f32 %v8574, 1.442695
  %v8576 = vpow.pop %v8575
  %v8577 = vadd.f32 %v8576, 1.0
  %v8578 = vrcp.pop %v8577
  %v8579 = vmul.f32 1.0, %v8578
  %v8580 = vsel %vm1208, %v8573, %v8579
  %v8582 = vrot.slane %v8486, 6
  %v8584 = vmul.f32 %v8580, %v8582
  %8586 = vrot.lane.b32.xlu0 %v8580, 102
  %v8587 = vpop.permute.xlu0 %8586
  %v8589 = vmul.f32 %v8580, %v8587
  %8591 = vrot.lane.b32.xlu0 %v8589, 13
  %v8592 = vpop.permute.xlu0 %8591
  %v8594 = vadd.f32 %v8584, %v8592
  %v8595 = vtanh.pop %v8594
  %8597 = vrot.lane.b32.xlu0 %v8595, 26
  %v8598 = vpop.permute.xlu0 %8597
  %v8600 = vmul.f32 %v8580, %v8598
  %v8602 = vrot.slane %v8600, 4
  %8603 = vrot.lane.b32.xlu0 %v8602, 89
  %v8604 = vpop.permute.xlu0 %8603
  %v8605 = vsel %vm1234, %v8604, 0
  %8607 = vmatprep.subr.mxu0 0.0
  %8608 = vmatpush1.msra.mxu0 0.0
  %8609 = vmatprep.subr.mxu0 0.0
  %8610 = vmatpush1.msra.mxu0 0.0
  %8611 = vmatprep.subr.mxu0 0.0
  %8612 = vmatpush1.msra.mxu0 0.0
  %8613 = vmatprep.subr.mxu0 0.0
  %8614 = vmatpush1.msra.mxu0 0.0
  %8615 = vmatprep.subr.mxu0 0.0
  %8616 = vmatpush1.msra.mxu0 0.0
  %8617 = vmatprep.subr.mxu0 0.0
  %8618 = vmatpush1.msra.mxu0 0.0
  %8619 = vmatprep.subr.mxu0 0.0
  %8620 = vmatpush1.msra.mxu0 0.0
  %8621 = vmatprep.subr.mxu0 0.0
  %8622 = vmatpush1.msra.mxu0 0.0
  %8623 = vmatprep.subr.mxu0 0.0
  %8624 = vmatpush1.msra.mxu0 0.0
  %8625 = vmatprep.subr.mxu0 0.0
  %8626 = vmatpush1.msra.mxu0 0.0
  %8627 = vmatprep.subr.mxu0 0.0
  %8628 = vmatpush1.msra.mxu0 0.0
  %8629 = vmatprep.subr.mxu0 0.0
  %8630 = vmatpush1.msra.mxu0 0.0
  %8631 = vmatprep.subr.mxu0 0.0
  %8632 = vmatpush1.msra.mxu0 0.0
  %8633 = vmatprep.subr.mxu0 0.0
  %8634 = vmatpush1.msra.mxu0 0.0
  %8635 = vmatprep.subr.mxu0 0.0
  %8636 = vmatpush1.msra.mxu0 %v8288
  %8637 = vmatprep.subr.mxu0 0.0
  %8638 = vmatpush1.msra.mxu0 %v8285
  %8639 = vmatprep.subr.mxu0 0.0
  %8640 = vmatpush2.msra.mxu0 0.0
  %8641 = vmatprep.subr.mxu0 0.0
  %8642 = vmatpush2.msra.mxu0 0.0
  %8643 = vmatprep.subr.mxu0 0.0
  %8644 = vmatpush2.msra.mxu0 0.0
  %8645 = vmatprep.subr.mxu0 0.0
  %8646 = vmatpush2.msra.mxu0 0.0
  %8647 = vmatprep.subr.mxu0 0.0
  %8648 = vmatpush2.msra.mxu0 0.0
  %8649 = vmatprep.subr.mxu0 0.0
  %8650 = vmatpush2.msra.mxu0 0.0
  %8651 = vmatprep.subr.mxu0 0.0
  %8652 = vmatpush2.msra.mxu0 0.0
  %8653 = vmatprep.subr.mxu0 0.0
  %8654 = vmatpush2.msra.mxu0 0.0
  %8655 = vmatprep.subr.mxu0 0.0
  %8656 = vmatpush2.msra.mxu0 0.0
  %8657 = vmatprep.subr.mxu0 0.0
  %8658 = vmatpush2.msra.mxu0 0.0
  %8659 = vmatprep.subr.mxu0 0.0
  %8660 = vmatpush2.msra.mxu0 0.0
  %8661 = vmatprep.subr.mxu0 0.0
  %8662 = vmatpush2.msra.mxu0 0.0
  %8663 = vmatprep.subr.mxu0 0.0
  %8664 = vmatpush2.msra.mxu0 0.0
  %8665 = vmatprep.subr.mxu0 0.0
  %8666 = vmatpush2.msra.mxu0 0.0
  %8667 = vmatprep.subr.mxu0 0.0
  %8668 = vmatpush2.msra.mxu0 0.0
  %8669 = vmatprep.subr.mxu0 0.0
  %8670 = vmatpush2.msra.mxu0 0.0
  %8671 = vmatprep.mubr.f32.mxu0 0.0
  %8672 = vmatmul.mubr.f32.gmra.mxu0 %v8605
  %v8673 = vpop.f32.mrf.mxu0
  %v8674 = vadd.f32 0.0, %v8673
  %v8675 = vpop.f32.mrf.mxu0
  %8676 = vdwg.mxu0
  %v8678 = vrot.slane %v8674, 2
  %v8680 = vadd.f32 %v8098, %v8678
  %v8681 = vtanh.pop %v8680
  %v8682 = vxor.u32 %v8680, 2147483648
  %v8683 = vmul.f32 %v8682, 1.442695
  %v8684 = vpow.pop %v8683
  %v8685 = vadd.f32 %v8684, 1.0
  %v8686 = vrcp.pop %v8685
  %v8687 = vmul.f32 1.0, %v8686
  %v8688 = vsel %vm1208, %v8681, %v8687
  %v8690 = vrot.slane %v8594, 6
  %v8692 = vmul.f32 %v8688, %v8690
  %8694 = vrot.lane.b32.xlu0 %v8688, 102
  %v8695 = vpop.permute.xlu0 %8694
  %v8697 = vmul.f32 %v8688, %v8695
  %8699 = vrot.lane.b32.xlu0 %v8697, 13
  %v8700 = vpop.permute.xlu0 %8699
  %v8702 = vadd.f32 %v8692, %v8700
  %v8703 = vtanh.pop %v8702
  %8705 = vrot.lane.b32.xlu0 %v8703, 26
  %v8706 = vpop.permute.xlu0 %8705
  %v8708 = vmul.f32 %v8688, %v8706
  %v8710 = vrot.slane %v8708, 6
  %8711 = vrot.lane.b32.xlu0 %v8710, 89
  %v8712 = vpop.permute.xlu0 %8711
  %v8713 = vsel %vm1234, %v8712, 0
  %8715 = vmatprep.subr.mxu0 0.0
  %8716 = vmatpush1.msra.mxu0 0.0
  %8717 = vmatprep.subr.mxu0 0.0
  %8718 = vmatpush1.msra.mxu0 0.0
  %8719 = vmatprep.subr.mxu0 0.0
  %8720 = vmatpush1.msra.mxu0 0.0
  %8721 = vmatprep.subr.mxu0 0.0
  %8722 = vmatpush1.msra.mxu0 0.0
  %8723 = vmatprep.subr.mxu0 0.0
  %8724 = vmatpush1.msra.mxu0 0.0
  %8725 = vmatprep.subr.mxu0 0.0
  %8726 = vmatpush1.msra.mxu0 0.0
  %8727 = vmatprep.subr.mxu0 0.0
  %8728 = vmatpush1.msra.mxu0 0.0
  %8729 = vmatprep.subr.mxu0 0.0
  %8730 = vmatpush1.msra.mxu0 0.0
  %8731 = vmatprep.subr.mxu0 0.0
  %8732 = vmatpush1.msra.mxu0 0.0
  %8733 = vmatprep.subr.mxu0 0.0
  %8734 = vmatpush1.msra.mxu0 0.0
  %8735 = vmatprep.subr.mxu0 0.0
  %8736 = vmatpush1.msra.mxu0 0.0
  %8737 = vmatprep.subr.mxu0 0.0
  %8738 = vmatpush1.msra.mxu0 0.0
  %8739 = vmatprep.subr.mxu0 0.0
  %8740 = vmatpush1.msra.mxu0 0.0
  %8741 = vmatprep.subr.mxu0 0.0
  %8742 = vmatpush1.msra.mxu0 0.0
  %8743 = vmatprep.subr.mxu0 0.0
  %8744 = vmatpush1.msra.mxu0 %v8288
  %8745 = vmatprep.subr.mxu0 0.0
  %8746 = vmatpush1.msra.mxu0 %v8285
  %8747 = vmatprep.subr.mxu0 0.0
  %8748 = vmatpush2.msra.mxu0 0.0
  %8749 = vmatprep.subr.mxu0 0.0
  %8750 = vmatpush2.msra.mxu0 0.0
  %8751 = vmatprep.subr.mxu0 0.0
  %8752 = vmatpush2.msra.mxu0 0.0
  %8753 = vmatprep.subr.mxu0 0.0
  %8754 = vmatpush2.msra.mxu0 0.0
  %8755 = vmatprep.subr.mxu0 0.0
  %8756 = vmatpush2.msra.mxu0 0.0
  %8757 = vmatprep.subr.mxu0 0.0
  %8758 = vmatpush2.msra.mxu0 0.0
  %8759 = vmatprep.subr.mxu0 0.0
  %8760 = vmatpush2.msra.mxu0 0.0
  %8761 = vmatprep.subr.mxu0 0.0
  %8762 = vmatpush2.msra.mxu0 0.0
  %8763 = vmatprep.subr.mxu0 0.0
  %8764 = vmatpush2.msra.mxu0 0.0
  %8765 = vmatprep.subr.mxu0 0.0
  %8766 = vmatpush2.msra.mxu0 0.0
  %8767 = vmatprep.subr.mxu0 0.0
  %8768 = vmatpush2.msra.mxu0 0.0
  %8769 = vmatprep.subr.mxu0 0.0
  %8770 = vmatpush2.msra.mxu0 0.0
  %8771 = vmatprep.subr.mxu0 0.0
  %8772 = vmatpush2.msra.mxu0 0.0
  %8773 = vmatprep.subr.mxu0 0.0
  %8774 = vmatpush2.msra.mxu0 0.0
  %8775 = vmatprep.subr.mxu0 0.0
  %8776 = vmatpush2.msra.mxu0 0.0
  %8777 = vmatprep.subr.mxu0 0.0
  %8778 = vmatpush2.msra.mxu0 0.0
  %8779 = vmatprep.mubr.f32.mxu0 0.0
  %8780 = vmatmul.mubr.f32.gmra.mxu0 %v8713
  %v8781 = vpop.f32.mrf.mxu0
  %v8782 = vadd.f32 0.0, %v8781
  %v8783 = vpop.f32.mrf.mxu0
  %8784 = vdwg.mxu0
  %v8785 = vadd.f32 %v8099, %v8782
  %v8786 = vtanh.pop %v8785
  %v8787 = vxor.u32 %v8785, 2147483648
  %v8788 = vmul.f32 %v8787, 1.442695
  %v8789 = vpow.pop %v8788
  %v8790 = vadd.f32 %v8789, 1.0
  %v8791 = vrcp.pop %v8790
  %v8792 = vmul.f32 1.0, %v8791
  %v8793 = vsel %vm1208, %v8786, %v8792
  %v8795 = vrot.slane %v8702, 6
  %v8797 = vmul.f32 %v8793, %v8795
  %8799 = vrot.lane.b32.xlu0 %v8793, 102
  %v8800 = vpop.permute.xlu0 %8799
  %v8802 = vmul.f32 %v8793, %v8800
  %8804 = vrot.lane.b32.xlu0 %v8802, 13
  %v8805 = vpop.permute.xlu0 %8804
  %v8807 = vadd.f32 %v8797, %v8805
  %v8808 = vtanh.pop %v8807
  %8810 = vrot.lane.b32.xlu0 %v8808, 26
  %v8811 = vpop.permute.xlu0 %8810
  %v8813 = vmul.f32 %v8793, %v8811
  %8815 = vrot.lane.b32.xlu0 %v8813, 89
  %v8816 = vpop.permute.xlu0 %8815
  %v8817 = vsel %vm1234, %v8816, 0
  %8819 = vmatprep.subr.mxu0 0.0
  %8820 = vmatpush1.msra.mxu0 0.0
  %8821 = vmatprep.subr.mxu0 0.0
  %8822 = vmatpush1.msra.mxu0 0.0
  %8823 = vmatprep.subr.mxu0 0.0
  %8824 = vmatpush1.msra.mxu0 0.0
  %8825 = vmatprep.subr.mxu0 0.0
  %8826 = vmatpush1.msra.mxu0 0.0
  %8827 = vmatprep.subr.mxu0 0.0
  %8828 = vmatpush1.msra.mxu0 0.0
  %8829 = vmatprep.subr.mxu0 0.0
  %8830 = vmatpush1.msra.mxu0 0.0
  %8831 = vmatprep.subr.mxu0 0.0
  %8832 = vmatpush1.msra.mxu0 0.0
  %8833 = vmatprep.subr.mxu0 0.0
  %8834 = vmatpush1.msra.mxu0 0.0
  %8835 = vmatprep.subr.mxu0 0.0
  %8836 = vmatpush1.msra.mxu0 0.0
  %8837 = vmatprep.subr.mxu0 0.0
  %8838 = vmatpush1.msra.mxu0 0.0
  %8839 = vmatprep.subr.mxu0 0.0
  %8840 = vmatpush1.msra.mxu0 0.0
  %8841 = vmatprep.subr.mxu0 0.0
  %8842 = vmatpush1.msra.mxu0 0.0
  %8843 = vmatprep.subr.mxu0 0.0
  %8844 = vmatpush1.msra.mxu0 0.0
  %8845 = vmatprep.subr.mxu0 0.0
  %8846 = vmatpush1.msra.mxu0 0.0
  %8847 = vmatprep.subr.mxu0 0.0
  %8848 = vmatpush1.msra.mxu0 %v8288
  %8849 = vmatprep.subr.mxu0 0.0
  %8850 = vmatpush1.msra.mxu0 %v8285
  %8851 = vmatprep.subr.mxu0 0.0
  %8852 = vmatpush2.msra.mxu0 0.0
  %8853 = vmatprep.subr.mxu0 0.0
  %8854 = vmatpush2.msra.mxu0 0.0
  %8855 = vmatprep.subr.mxu0 0.0
  %8856 = vmatpush2.msra.mxu0 0.0
  %8857 = vmatprep.subr.mxu0 0.0
  %8858 = vmatpush2.msra.mxu0 0.0
  %8859 = vmatprep.subr.mxu0 0.0
  %8860 = vmatpush2.msra.mxu0 0.0
  %8861 = vmatprep.subr.mxu0 0.0
  %8862 = vmatpush2.msra.mxu0 0.0
  %8863 = vmatprep.subr.mxu0 0.0
  %8864 = vmatpush2.msra.mxu0 0.0
  %8865 = vmatprep.subr.mxu0 0.0
  %8866 = vmatpush2.msra.mxu0 0.0
  %8867 = vmatprep.subr.mxu0 0.0
  %8868 = vmatpush2.msra.mxu0 0.0
  %8869 = vmatprep.subr.mxu0 0.0
  %8870 = vmatpush2.msra.mxu0 0.0
  %8871 = vmatprep.subr.mxu0 0.0
  %8872 = vmatpush2.msra.mxu0 0.0
  %8873 = vmatprep.subr.mxu0 0.0
  %8874 = vmatpush2.msra.mxu0 0.0
  %8875 = vmatprep.subr.mxu0 0.0
  %8876 = vmatpush2.msra.mxu0 0.0
  %8877 = vmatprep.subr.mxu0 0.0
  %8878 = vmatpush2.msra.mxu0 0.0
  %8879 = vmatprep.subr.mxu0 0.0
  %8880 = vmatpush2.msra.mxu0 0.0
  %8881 = vmatprep.subr.mxu0 0.0
  %8882 = vmatpush2.msra.mxu0 0.0
  %8883 = vmatprep.mubr.f32.mxu0 0.0
  %8884 = vmatmul.mubr.f32.gmra.mxu0 %v8817
  %v8885 = vpop.f32.mrf.mxu0
  %v8886 = vadd.f32 0.0, %v8885
  %v8887 = vpop.f32.mrf.mxu0
  %8888 = vdwg.mxu0
  %v8890 = vrot.slane %v8886, 6
  %v8892 = vadd.f32 %v8099, %v8890
  %v8893 = vtanh.pop %v8892
  %v8894 = vxor.u32 %v8892, 2147483648
  %v8895 = vmul.f32 %v8894, 1.442695
  %v8896 = vpow.pop %v8895
  %v8897 = vadd.f32 %v8896, 1.0
  %v8898 = vrcp.pop %v8897
  %v8899 = vmul.f32 1.0, %v8898
  %v8900 = vsel %vm1208, %v8893, %v8899
  %v8902 = vrot.slane %v8807, 6
  %v8904 = vmul.f32 %v8900, %v8902
  %8906 = vrot.lane.b32.xlu0 %v8900, 102
  %v8907 = vpop.permute.xlu0 %8906
  %v8909 = vmul.f32 %v8900, %v8907
  %8911 = vrot.lane.b32.xlu0 %v8909, 13
  %v8912 = vpop.permute.xlu0 %8911
  %v8914 = vadd.f32 %v8904, %v8912
  %v8915 = vtanh.pop %v8914
  %8917 = vrot.lane.b32.xlu0 %v8915, 26
  %v8918 = vpop.permute.xlu0 %8917
  %v8920 = vmul.f32 %v8900, %v8918
  %v8922 = vrot.slane %v8920, 2
  %8923 = vrot.lane.b32.xlu0 %v8922, 89
  %v8924 = vpop.permute.xlu0 %8923
  %v8925 = vsel %vm1234, %v8924, 0
  %8927 = vmatprep.subr.mxu0 0.0
  %8928 = vmatpush1.msra.mxu0 0.0
  %8929 = vmatprep.subr.mxu0 0.0
  %8930 = vmatpush1.msra.mxu0 0.0
  %8931 = vmatprep.subr.mxu0 0.0
  %8932 = vmatpush1.msra.mxu0 0.0
  %8933 = vmatprep.subr.mxu0 0.0
  %8934 = vmatpush1.msra.mxu0 0.0
  %8935 = vmatprep.subr.mxu0 0.0
  %8936 = vmatpush1.msra.mxu0 0.0
  %8937 = vmatprep.subr.mxu0 0.0
  %8938 = vmatpush1.msra.mxu0 0.0
  %8939 = vmatprep.subr.mxu0 0.0
  %8940 = vmatpush1.msra.mxu0 0.0
  %8941 = vmatprep.subr.mxu0 0.0
  %8942 = vmatpush1.msra.mxu0 0.0
  %8943 = vmatprep.subr.mxu0 0.0
  %8944 = vmatpush1.msra.mxu0 0.0
  %8945 = vmatprep.subr.mxu0 0.0
  %8946 = vmatpush1.msra.mxu0 0.0
  %8947 = vmatprep.subr.mxu0 0.0
  %8948 = vmatpush1.msra.mxu0 0.0
  %8949 = vmatprep.subr.mxu0 0.0
  %8950 = vmatpush1.msra.mxu0 0.0
  %8951 = vmatprep.subr.mxu0 0.0
  %8952 = vmatpush1.msra.mxu0 0.0
  %8953 = vmatprep.subr.mxu0 0.0
  %8954 = vmatpush1.msra.mxu0 0.0
  %8955 = vmatprep.subr.mxu0 0.0
  %8956 = vmatpush1.msra.mxu0 %v8288
  %8957 = vmatprep.subr.mxu0 0.0
  %8958 = vmatpush1.msra.mxu0 %v8285
  %8959 = vmatprep.subr.mxu0 0.0
  %8960 = vmatpush2.msra.mxu0 0.0
  %8961 = vmatprep.subr.mxu0 0.0
  %8962 = vmatpush2.msra.mxu0 0.0
  %8963 = vmatprep.subr.mxu0 0.0
  %8964 = vmatpush2.msra.mxu0 0.0
  %8965 = vmatprep.subr.mxu0 0.0
  %8966 = vmatpush2.msra.mxu0 0.0
  %8967 = vmatprep.subr.mxu0 0.0
  %8968 = vmatpush2.msra.mxu0 0.0
  %8969 = vmatprep.subr.mxu0 0.0
  %8970 = vmatpush2.msra.mxu0 0.0
  %8971 = vmatprep.subr.mxu0 0.0
  %8972 = vmatpush2.msra.mxu0 0.0
  %8973 = vmatprep.subr.mxu0 0.0
  %8974 = vmatpush2.msra.mxu0 0.0
  %8975 = vmatprep.subr.mxu0 0.0
  %8976 = vmatpush2.msra.mxu0 0.0
  %8977 = vmatprep.subr.mxu0 0.0
  %8978 = vmatpush2.msra.mxu0 0.0
  %8979 = vmatprep.subr.mxu0 0.0
  %8980 = vmatpush2.msra.mxu0 0.0
  %8981 = vmatprep.subr.mxu0 0.0
  %8982 = vmatpush2.msra.mxu0 0.0
  %8983 = vmatprep.subr.mxu0 0.0
  %8984 = vmatpush2.msra.mxu0 0.0
  %8985 = vmatprep.subr.mxu0 0.0
  %8986 = vmatpush2.msra.mxu0 0.0
  %8987 = vmatprep.subr.mxu0 0.0
  %8988 = vmatpush2.msra.mxu0 0.0
  %8989 = vmatprep.subr.mxu0 0.0
  %8990 = vmatpush2.msra.mxu0 0.0
  %8991 = vmatprep.mubr.f32.mxu0 0.0
  %8992 = vmatmul.mubr.f32.gmra.mxu0 %v8925
  %v8993 = vpop.f32.mrf.mxu0
  %v8994 = vadd.f32 0.0, %v8993
  %v8995 = vpop.f32.mrf.mxu0
  %8996 = vdwg.mxu0
  %v8998 = vrot.slane %v8994, 4
  %v9000 = vadd.f32 %v8099, %v8998
  %v9001 = vtanh.pop %v9000
  %v9002 = vxor.u32 %v9000, 2147483648
  %v9003 = vmul.f32 %v9002, 1.442695
  %v9004 = vpow.pop %v9003
  %v9005 = vadd.f32 %v9004, 1.0
  %v9006 = vrcp.pop %v9005
  %v9007 = vmul.f32 1.0, %v9006
  %v9008 = vsel %vm1208, %v9001, %v9007
  %v9010 = vrot.slane %v8914, 6
  %v9012 = vmul.f32 %v9008, %v9010
  %9014 = vrot.lane.b32.xlu0 %v9008, 102
  %v9015 = vpop.permute.xlu0 %9014
  %v9017 = vmul.f32 %v9008, %v9015
  %9019 = vrot.lane.b32.xlu0 %v9017, 13
  %v9020 = vpop.permute.xlu0 %9019
  %v9022 = vadd.f32 %v9012, %v9020
  %v9023 = vtanh.pop %v9022
  %9025 = vrot.lane.b32.xlu0 %v9023, 26
  %v9026 = vpop.permute.xlu0 %9025
  %v9028 = vmul.f32 %v9008, %v9026
  %v9030 = vrot.slane %v9028, 4
  %9031 = vrot.lane.b32.xlu0 %v9030, 89
  %v9032 = vpop.permute.xlu0 %9031
  %v9033 = vsel %vm1234, %v9032, 0
  %9035 = vmatprep.subr.mxu0 0.0
  %9036 = vmatpush1.msra.mxu0 0.0
  %9037 = vmatprep.subr.mxu0 0.0
  %9038 = vmatpush1.msra.mxu0 0.0
  %9039 = vmatprep.subr.mxu0 0.0
  %9040 = vmatpush1.msra.mxu0 0.0
  %9041 = vmatprep.subr.mxu0 0.0
  %9042 = vmatpush1.msra.mxu0 0.0
  %9043 = vmatprep.subr.mxu0 0.0
  %9044 = vmatpush1.msra.mxu0 0.0
  %9045 = vmatprep.subr.mxu0 0.0
  %9046 = vmatpush1.msra.mxu0 0.0
  %9047 = vmatprep.subr.mxu0 0.0
  %9048 = vmatpush1.msra.mxu0 0.0
  %9049 = vmatprep.subr.mxu0 0.0
  %9050 = vmatpush1.msra.mxu0 0.0
  %9051 = vmatprep.subr.mxu0 0.0
  %9052 = vmatpush1.msra.mxu0 0.0
  %9053 = vmatprep.subr.mxu0 0.0
  %9054 = vmatpush1.msra.mxu0 0.0
  %9055 = vmatprep.subr.mxu0 0.0
  %9056 = vmatpush1.msra.mxu0 0.0
  %9057 = vmatprep.subr.mxu0 0.0
  %9058 = vmatpush1.msra.mxu0 0.0
  %9059 = vmatprep.subr.mxu0 0.0
  %9060 = vmatpush1.msra.mxu0 0.0
  %9061 = vmatprep.subr.mxu0 0.0
  %9062 = vmatpush1.msra.mxu0 0.0
  %9063 = vmatprep.subr.mxu0 0.0
  %9064 = vmatpush1.msra.mxu0 %v8288
  %9065 = vmatprep.subr.mxu0 0.0
  %9066 = vmatpush1.msra.mxu0 %v8285
  %9067 = vmatprep.subr.mxu0 0.0
  %9068 = vmatpush2.msra.mxu0 0.0
  %9069 = vmatprep.subr.mxu0 0.0
  %9070 = vmatpush2.msra.mxu0 0.0
  %9071 = vmatprep.subr.mxu0 0.0
  %9072 = vmatpush2.msra.mxu0 0.0
  %9073 = vmatprep.subr.mxu0 0.0
  %9074 = vmatpush2.msra.mxu0 0.0
  %9075 = vmatprep.subr.mxu0 0.0
  %9076 = vmatpush2.msra.mxu0 0.0
  %9077 = vmatprep.subr.mxu0 0.0
  %9078 = vmatpush2.msra.mxu0 0.0
  %9079 = vmatprep.subr.mxu0 0.0
  %9080 = vmatpush2.msra.mxu0 0.0
  %9081 = vmatprep.subr.mxu0 0.0
  %9082 = vmatpush2.msra.mxu0 0.0
  %9083 = vmatprep.subr.mxu0 0.0
  %9084 = vmatpush2.msra.mxu0 0.0
  %9085 = vmatprep.subr.mxu0 0.0
  %9086 = vmatpush2.msra.mxu0 0.0
  %9087 = vmatprep.subr.mxu0 0.0
  %9088 = vmatpush2.msra.mxu0 0.0
  %9089 = vmatprep.subr.mxu0 0.0
  %9090 = vmatpush2.msra.mxu0 0.0
  %9091 = vmatprep.subr.mxu0 0.0
  %9092 = vmatpush2.msra.mxu0 0.0
  %9093 = vmatprep.subr.mxu0 0.0
  %9094 = vmatpush2.msra.mxu0 0.0
  %9095 = vmatprep.subr.mxu0 0.0
  %9096 = vmatpush2.msra.mxu0 0.0
  %9097 = vmatprep.subr.mxu0 0.0
  %9098 = vmatpush2.msra.mxu0 0.0
  %9099 = vmatprep.mubr.f32.mxu0 0.0
  %9100 = vmatmul.mubr.f32.gmra.mxu0 %v9033
  %v9101 = vpop.f32.mrf.mxu0
  %v9102 = vadd.f32 0.0, %v9101
  %v9103 = vpop.f32.mrf.mxu0
  %9104 = vdwg.mxu0
  %v9106 = vrot.slane %v9102, 2
  %v9108 = vadd.f32 %v8099, %v9106
  %v9109 = vtanh.pop %v9108
  %v9110 = vxor.u32 %v9108, 2147483648
  %v9111 = vmul.f32 %v9110, 1.442695
  %v9112 = vpow.pop %v9111
  %v9113 = vadd.f32 %v9112, 1.0
  %v9114 = vrcp.pop %v9113
  %v9115 = vmul.f32 1.0, %v9114
  %v9116 = vsel %vm1208, %v9109, %v9115
  %v9118 = vrot.slane %v9022, 6
  %v9120 = vmul.f32 %v9116, %v9118
  %9122 = vrot.lane.b32.xlu0 %v9116, 102
  %v9123 = vpop.permute.xlu0 %9122
  %v9125 = vmul.f32 %v9116, %v9123
  %9127 = vrot.lane.b32.xlu0 %v9125, 13
  %v9128 = vpop.permute.xlu0 %9127
  %v9130 = vadd.f32 %v9120, %v9128
  %v9131 = vtanh.pop %v9130
  %9133 = vrot.lane.b32.xlu0 %v9131, 26
  %v9134 = vpop.permute.xlu0 %9133
  %v9136 = vmul.f32 %v9116, %v9134
  %v9138 = vrot.slane %v9136, 6
  %9139 = vrot.lane.b32.xlu0 %v9138, 89
  %v9140 = vpop.permute.xlu0 %9139
  %v9141 = vsel %vm1234, %v9140, 0
  %9143 = vmatprep.subr.mxu0 0.0
  %9144 = vmatpush1.msra.mxu0 0.0
  %9145 = vmatprep.subr.mxu0 0.0
  %9146 = vmatpush1.msra.mxu0 0.0
  %9147 = vmatprep.subr.mxu0 0.0
  %9148 = vmatpush1.msra.mxu0 0.0
  %9149 = vmatprep.subr.mxu0 0.0
  %9150 = vmatpush1.msra.mxu0 0.0
  %9151 = vmatprep.subr.mxu0 0.0
  %9152 = vmatpush1.msra.mxu0 0.0
  %9153 = vmatprep.subr.mxu0 0.0
  %9154 = vmatpush1.msra.mxu0 0.0
  %9155 = vmatprep.subr.mxu0 0.0
  %9156 = vmatpush1.msra.mxu0 0.0
  %9157 = vmatprep.subr.mxu0 0.0
  %9158 = vmatpush1.msra.mxu0 0.0
  %9159 = vmatprep.subr.mxu0 0.0
  %9160 = vmatpush1.msra.mxu0 0.0
  %9161 = vmatprep.subr.mxu0 0.0
  %9162 = vmatpush1.msra.mxu0 0.0
  %9163 = vmatprep.subr.mxu0 0.0
  %9164 = vmatpush1.msra.mxu0 0.0
  %9165 = vmatprep.subr.mxu0 0.0
  %9166 = vmatpush1.msra.mxu0 0.0
  %9167 = vmatprep.subr.mxu0 0.0
  %9168 = vmatpush1.msra.mxu0 0.0
  %9169 = vmatprep.subr.mxu0 0.0
  %9170 = vmatpush1.msra.mxu0 0.0
  %9171 = vmatprep.subr.mxu0 0.0
  %9172 = vmatpush1.msra.mxu0 %v8288
  %9173 = vmatprep.subr.mxu0 0.0
  %9174 = vmatpush1.msra.mxu0 %v8285
  %9175 = vmatprep.subr.mxu0 0.0
  %9176 = vmatpush2.msra.mxu0 0.0
  %9177 = vmatprep.subr.mxu0 0.0
  %9178 = vmatpush2.msra.mxu0 0.0
  %9179 = vmatprep.subr.mxu0 0.0
  %9180 = vmatpush2.msra.mxu0 0.0
  %9181 = vmatprep.subr.mxu0 0.0
  %9182 = vmatpush2.msra.mxu0 0.0
  %9183 = vmatprep.subr.mxu0 0.0
  %9184 = vmatpush2.msra.mxu0 0.0
  %9185 = vmatprep.subr.mxu0 0.0
  %9186 = vmatpush2.msra.mxu0 0.0
  %9187 = vmatprep.subr.mxu0 0.0
  %9188 = vmatpush2.msra.mxu0 0.0
  %9189 = vmatprep.subr.mxu0 0.0
  %9190 = vmatpush2.msra.mxu0 0.0
  %9191 = vmatprep.subr.mxu0 0.0
  %9192 = vmatpush2.msra.mxu0 0.0
  %9193 = vmatprep.subr.mxu0 0.0
  %9194 = vmatpush2.msra.mxu0 0.0
  %9195 = vmatprep.subr.mxu0 0.0
  %9196 = vmatpush2.msra.mxu0 0.0
  %9197 = vmatprep.subr.mxu0 0.0
  %9198 = vmatpush2.msra.mxu0 0.0
  %9199 = vmatprep.subr.mxu0 0.0
  %9200 = vmatpush2.msra.mxu0 0.0
  %9201 = vmatprep.subr.mxu0 0.0
  %9202 = vmatpush2.msra.mxu0 0.0
  %9203 = vmatprep.subr.mxu0 0.0
  %9204 = vmatpush2.msra.mxu0 0.0
  %9205 = vmatprep.subr.mxu0 0.0
  %9206 = vmatpush2.msra.mxu0 0.0
  %9207 = vmatprep.mubr.f32.mxu0 0.0
  %9208 = vmatmul.mubr.f32.gmra.mxu0 %v9141
  %v9209 = vpop.f32.mrf.mxu0
  %v9210 = vadd.f32 0.0, %v9209
  %v9211 = vpop.f32.mrf.mxu0
  %9212 = vdwg.mxu0
  %v9213 = vadd.f32 %v8100, %v9210
  %v9214 = vtanh.pop %v9213
  %v9215 = vxor.u32 %v9213, 2147483648
  %v9216 = vmul.f32 %v9215, 1.442695
  %v9217 = vpow.pop %v9216
  %v9218 = vadd.f32 %v9217, 1.0
  %v9219 = vrcp.pop %v9218
  %v9220 = vmul.f32 1.0, %v9219
  %v9221 = vsel %vm1208, %v9214, %v9220
  %v9223 = vrot.slane %v9130, 6
  %v9225 = vmul.f32 %v9221, %v9223
  %9227 = vrot.lane.b32.xlu0 %v9221, 102
  %v9228 = vpop.permute.xlu0 %9227
  %v9230 = vmul.f32 %v9221, %v9228
  %9232 = vrot.lane.b32.xlu0 %v9230, 13
  %v9233 = vpop.permute.xlu0 %9232
  %v9235 = vadd.f32 %v9225, %v9233
  %v9236 = vtanh.pop %v9235
  %9238 = vrot.lane.b32.xlu0 %v9236, 26
  %v9239 = vpop.permute.xlu0 %9238
  %v9241 = vmul.f32 %v9221, %v9239
  %v9242 = vsel %vm880, %v8385, %v8492
  %v9243 = vsel %vm2195, %v9242, %v8600
  %v9244 = vsel %vm2197, %v9243, %v8708
  %v9245 = vsel %vm880, %v8813, %v8920
  %v9246 = vsel %vm2195, %v9245, %v9028
  %v9247 = vsel %vm2197, %v9246, %v9136
  %s9248 = scalar_lea.vmem %s6, 112
  %v9249 = vld [vmem:[%s9248] sm:$0xff]
  %v9250 = vld [vmem:[%s9248 + $0x8] sm:$0x1f]
  %v9252 = vsel %vm1238, %v9250, 0
  %9254 = vmatprep.subr.mxu0 0.0
  %9255 = vmatpush1.msra.mxu0 0.0
  %9256 = vmatprep.subr.mxu0 0.0
  %9257 = vmatpush1.msra.mxu0 0.0
  %9258 = vmatprep.subr.mxu0 0.0
  %9259 = vmatpush1.msra.mxu0 0.0
  %9260 = vmatprep.subr.mxu0 0.0
  %9261 = vmatpush1.msra.mxu0 0.0
  %9262 = vmatprep.subr.mxu0 0.0
  %9263 = vmatpush1.msra.mxu0 0.0
  %9264 = vmatprep.subr.mxu0 0.0
  %9265 = vmatpush1.msra.mxu0 0.0
  %9266 = vmatprep.subr.mxu0 0.0
  %9267 = vmatpush1.msra.mxu0 0.0
  %9268 = vmatprep.subr.mxu0 0.0
  %9269 = vmatpush1.msra.mxu0 0.0
  %9270 = vmatprep.subr.mxu0 0.0
  %9271 = vmatpush1.msra.mxu0 0.0
  %9272 = vmatprep.subr.mxu0 0.0
  %9273 = vmatpush1.msra.mxu0 0.0
  %9274 = vmatprep.subr.mxu0 0.0
  %9275 = vmatpush1.msra.mxu0 0.0
  %9276 = vmatprep.subr.mxu0 0.0
  %9277 = vmatpush1.msra.mxu0 0.0
  %9278 = vmatprep.subr.mxu0 0.0
  %9279 = vmatpush1.msra.mxu0 0.0
  %9280 = vmatprep.subr.mxu0 0.0
  %9281 = vmatpush1.msra.mxu0 0.0
  %9282 = vmatprep.subr.mxu0 0.0
  %9283 = vmatpush1.msra.mxu0 %v9252
  %9284 = vmatprep.subr.mxu0 0.0
  %9285 = vmatpush1.msra.mxu0 %v9249
  %9286 = vmatprep.subr.mxu0 0.0
  %9287 = vmatpush2.msra.mxu0 0.0
  %9288 = vmatprep.subr.mxu0 0.0
  %9289 = vmatpush2.msra.mxu0 0.0
  %9290 = vmatprep.subr.mxu0 0.0
  %9291 = vmatpush2.msra.mxu0 0.0
  %9292 = vmatprep.subr.mxu0 0.0
  %9293 = vmatpush2.msra.mxu0 0.0
  %9294 = vmatprep.subr.mxu0 0.0
  %9295 = vmatpush2.msra.mxu0 0.0
  %9296 = vmatprep.subr.mxu0 0.0
  %9297 = vmatpush2.msra.mxu0 0.0
  %9298 = vmatprep.subr.mxu0 0.0
  %9299 = vmatpush2.msra.mxu0 0.0
  %9300 = vmatprep.subr.mxu0 0.0
  %9301 = vmatpush2.msra.mxu0 0.0
  %9302 = vmatprep.subr.mxu0 0.0
  %9303 = vmatpush2.msra.mxu0 0.0
  %9304 = vmatprep.subr.mxu0 0.0
  %9305 = vmatpush2.msra.mxu0 0.0
  %9306 = vmatprep.subr.mxu0 0.0
  %9307 = vmatpush2.msra.mxu0 0.0
  %9308 = vmatprep.subr.mxu0 0.0
  %9309 = vmatpush2.msra.mxu0 0.0
  %9310 = vmatprep.subr.mxu0 0.0
  %9311 = vmatpush2.msra.mxu0 0.0
  %9312 = vmatprep.subr.mxu0 0.0
  %9313 = vmatpush2.msra.mxu0 0.0
  %9314 = vmatprep.subr.mxu0 0.0
  %9315 = vmatpush2.msra.mxu0 0.0
  %9316 = vmatprep.subr.mxu0 0.0
  %9317 = vmatpush2.msra.mxu0 0.0
  %9318 = vmatprep.mubr.f32.mxu0 0.0
  %9319 = vmatmul.mubr.f32.gmra.mxu0 %v1236
  %v9320 = vpop.f32.mrf.mxu0
  %v9321 = vadd.f32 0.0, %v9320
  %v9322 = vpop.f32.mrf.mxu0
  %9323 = vdwg.mxu0
  %v9324 = vadd.f32 %v8283, %v9321
  %v9325 = vtanh.pop %v9324
  %v9326 = vxor.u32 %v9324, 2147483648
  %v9327 = vmul.f32 %v9326, 1.442695
  %v9328 = vpow.pop %v9327
  %v9329 = vadd.f32 %v9328, 1.0
  %v9330 = vrcp.pop %v9329
  %v9331 = vmul.f32 1.0, %v9330
  %v9332 = vsel %vm1208, %v9325, %v9331
  %v9333 = vmul.f32 %v9332, 0.0
  %9335 = vrot.lane.b32.xlu0 %v9332, 102
  %v9336 = vpop.permute.xlu0 %9335
  %v9338 = vmul.f32 %v9332, %v9336
  %9340 = vrot.lane.b32.xlu0 %v9338, 13
  %v9341 = vpop.permute.xlu0 %9340
  %v9343 = vadd.f32 %v9333, %v9341
  %v9344 = vtanh.pop %v9343
  %9346 = vrot.lane.b32.xlu0 %v9344, 26
  %v9347 = vpop.permute.xlu0 %9346
  %v9349 = vmul.f32 %v9332, %v9347
  %9351 = vrot.lane.b32.xlu0 %v9349, 89
  %v9352 = vpop.permute.xlu0 %9351
  %v9353 = vsel %vm1234, %v9352, 0
  %9355 = vmatprep.subr.mxu0 0.0
  %9356 = vmatpush1.msra.mxu0 0.0
  %9357 = vmatprep.subr.mxu0 0.0
  %9358 = vmatpush1.msra.mxu0 0.0
  %9359 = vmatprep.subr.mxu0 0.0
  %9360 = vmatpush1.msra.mxu0 0.0
  %9361 = vmatprep.subr.mxu0 0.0
  %9362 = vmatpush1.msra.mxu0 0.0
  %9363 = vmatprep.subr.mxu0 0.0
  %9364 = vmatpush1.msra.mxu0 0.0
  %9365 = vmatprep.subr.mxu0 0.0
  %9366 = vmatpush1.msra.mxu0 0.0
  %9367 = vmatprep.subr.mxu0 0.0
  %9368 = vmatpush1.msra.mxu0 0.0
  %9369 = vmatprep.subr.mxu0 0.0
  %9370 = vmatpush1.msra.mxu0 0.0
  %9371 = vmatprep.subr.mxu0 0.0
  %9372 = vmatpush1.msra.mxu0 0.0
  %9373 = vmatprep.subr.mxu0 0.0
  %9374 = vmatpush1.msra.mxu0 0.0
  %9375 = vmatprep.subr.mxu0 0.0
  %9376 = vmatpush1.msra.mxu0 0.0
  %9377 = vmatprep.subr.mxu0 0.0
  %9378 = vmatpush1.msra.mxu0 0.0
  %9379 = vmatprep.subr.mxu0 0.0
  %9380 = vmatpush1.msra.mxu0 0.0
  %9381 = vmatprep.subr.mxu0 0.0
  %9382 = vmatpush1.msra.mxu0 0.0
  %9383 = vmatprep.subr.mxu0 0.0
  %9384 = vmatpush1.msra.mxu0 %v9252
  %9385 = vmatprep.subr.mxu0 0.0
  %9386 = vmatpush1.msra.mxu0 %v9249
  %9387 = vmatprep.subr.mxu0 0.0
  %9388 = vmatpush2.msra.mxu0 0.0
  %9389 = vmatprep.subr.mxu0 0.0
  %9390 = vmatpush2.msra.mxu0 0.0
  %9391 = vmatprep.subr.mxu0 0.0
  %9392 = vmatpush2.msra.mxu0 0.0
  %9393 = vmatprep.subr.mxu0 0.0
  %9394 = vmatpush2.msra.mxu0 0.0
  %9395 = vmatprep.subr.mxu0 0.0
  %9396 = vmatpush2.msra.mxu0 0.0
  %9397 = vmatprep.subr.mxu0 0.0
  %9398 = vmatpush2.msra.mxu0 0.0
  %9399 = vmatprep.subr.mxu0 0.0
  %9400 = vmatpush2.msra.mxu0 0.0
  %9401 = vmatprep.subr.mxu0 0.0
  %9402 = vmatpush2.msra.mxu0 0.0
  %9403 = vmatprep.subr.mxu0 0.0
  %9404 = vmatpush2.msra.mxu0 0.0
  %9405 = vmatprep.subr.mxu0 0.0
  %9406 = vmatpush2.msra.mxu0 0.0
  %9407 = vmatprep.subr.mxu0 0.0
  %9408 = vmatpush2.msra.mxu0 0.0
  %9409 = vmatprep.subr.mxu0 0.0
  %9410 = vmatpush2.msra.mxu0 0.0
  %9411 = vmatprep.subr.mxu0 0.0
  %9412 = vmatpush2.msra.mxu0 0.0
  %9413 = vmatprep.subr.mxu0 0.0
  %9414 = vmatpush2.msra.mxu0 0.0
  %9415 = vmatprep.subr.mxu0 0.0
  %9416 = vmatpush2.msra.mxu0 0.0
  %9417 = vmatprep.subr.mxu0 0.0
  %9418 = vmatpush2.msra.mxu0 0.0
  %9419 = vmatprep.mubr.f32.mxu0 0.0
  %9420 = vmatmul.mubr.f32.gmra.mxu0 %v9353
  %v9421 = vpop.f32.mrf.mxu0
  %v9422 = vadd.f32 0.0, %v9421
  %v9423 = vpop.f32.mrf.mxu0
  %9424 = vdwg.mxu0
  %v9426 = vrot.slane %v9422, 2
  %v9428 = vadd.f32 %v8282, %v9426
  %v9429 = vtanh.pop %v9428
  %v9430 = vxor.u32 %v9428, 2147483648
  %v9431 = vmul.f32 %v9430, 1.442695
  %v9432 = vpow.pop %v9431
  %v9433 = vadd.f32 %v9432, 1.0
  %v9434 = vrcp.pop %v9433
  %v9435 = vmul.f32 1.0, %v9434
  %v9436 = vsel %vm1208, %v9429, %v9435
  %v9438 = vrot.slane %v9343, 2
  %v9440 = vmul.f32 %v9436, %v9438
  %9442 = vrot.lane.b32.xlu0 %v9436, 102
  %v9443 = vpop.permute.xlu0 %9442
  %v9445 = vmul.f32 %v9436, %v9443
  %9447 = vrot.lane.b32.xlu0 %v9445, 13
  %v9448 = vpop.permute.xlu0 %9447
  %v9450 = vadd.f32 %v9440, %v9448
  %v9451 = vtanh.pop %v9450
  %9453 = vrot.lane.b32.xlu0 %v9451, 26
  %v9454 = vpop.permute.xlu0 %9453
  %v9456 = vmul.f32 %v9436, %v9454
  %v9458 = vrot.slane %v9456, 6
  %9459 = vrot.lane.b32.xlu0 %v9458, 89
  %v9460 = vpop.permute.xlu0 %9459
  %v9461 = vsel %vm1234, %v9460, 0
  %9463 = vmatprep.subr.mxu0 0.0
  %9464 = vmatpush1.msra.mxu0 0.0
  %9465 = vmatprep.subr.mxu0 0.0
  %9466 = vmatpush1.msra.mxu0 0.0
  %9467 = vmatprep.subr.mxu0 0.0
  %9468 = vmatpush1.msra.mxu0 0.0
  %9469 = vmatprep.subr.mxu0 0.0
  %9470 = vmatpush1.msra.mxu0 0.0
  %9471 = vmatprep.subr.mxu0 0.0
  %9472 = vmatpush1.msra.mxu0 0.0
  %9473 = vmatprep.subr.mxu0 0.0
  %9474 = vmatpush1.msra.mxu0 0.0
  %9475 = vmatprep.subr.mxu0 0.0
  %9476 = vmatpush1.msra.mxu0 0.0
  %9477 = vmatprep.subr.mxu0 0.0
  %9478 = vmatpush1.msra.mxu0 0.0
  %9479 = vmatprep.subr.mxu0 0.0
  %9480 = vmatpush1.msra.mxu0 0.0
  %9481 = vmatprep.subr.mxu0 0.0
  %9482 = vmatpush1.msra.mxu0 0.0
  %9483 = vmatprep.subr.mxu0 0.0
  %9484 = vmatpush1.msra.mxu0 0.0
  %9485 = vmatprep.subr.mxu0 0.0
  %9486 = vmatpush1.msra.mxu0 0.0
  %9487 = vmatprep.subr.mxu0 0.0
  %9488 = vmatpush1.msra.mxu0 0.0
  %9489 = vmatprep.subr.mxu0 0.0
  %9490 = vmatpush1.msra.mxu0 0.0
  %9491 = vmatprep.subr.mxu0 0.0
  %9492 = vmatpush1.msra.mxu0 %v9252
  %9493 = vmatprep.subr.mxu0 0.0
  %9494 = vmatpush1.msra.mxu0 %v9249
  %9495 = vmatprep.subr.mxu0 0.0
  %9496 = vmatpush2.msra.mxu0 0.0
  %9497 = vmatprep.subr.mxu0 0.0
  %9498 = vmatpush2.msra.mxu0 0.0
  %9499 = vmatprep.subr.mxu0 0.0
  %9500 = vmatpush2.msra.mxu0 0.0
  %9501 = vmatprep.subr.mxu0 0.0
  %9502 = vmatpush2.msra.mxu0 0.0
  %9503 = vmatprep.subr.mxu0 0.0
  %9504 = vmatpush2.msra.mxu0 0.0
  %9505 = vmatprep.subr.mxu0 0.0
  %9506 = vmatpush2.msra.mxu0 0.0
  %9507 = vmatprep.subr.mxu0 0.0
  %9508 = vmatpush2.msra.mxu0 0.0
  %9509 = vmatprep.subr.mxu0 0.0
  %9510 = vmatpush2.msra.mxu0 0.0
  %9511 = vmatprep.subr.mxu0 0.0
  %9512 = vmatpush2.msra.mxu0 0.0
  %9513 = vmatprep.subr.mxu0 0.0
  %9514 = vmatpush2.msra.mxu0 0.0
  %9515 = vmatprep.subr.mxu0 0.0
  %9516 = vmatpush2.msra.mxu0 0.0
  %9517 = vmatprep.subr.mxu0 0.0
  %9518 = vmatpush2.msra.mxu0 0.0
  %9519 = vmatprep.subr.mxu0 0.0
  %9520 = vmatpush2.msra.mxu0 0.0
  %9521 = vmatprep.subr.mxu0 0.0
  %9522 = vmatpush2.msra.mxu0 0.0
  %9523 = vmatprep.subr.mxu0 0.0
  %9524 = vmatpush2.msra.mxu0 0.0
  %9525 = vmatprep.subr.mxu0 0.0
  %9526 = vmatpush2.msra.mxu0 0.0
  %9527 = vmatprep.mubr.f32.mxu0 0.0
  %9528 = vmatmul.mubr.f32.gmra.mxu0 %v9461
  %v9529 = vpop.f32.mrf.mxu0
  %v9530 = vadd.f32 0.0, %v9529
  %v9531 = vpop.f32.mrf.mxu0
  %9532 = vdwg.mxu0
  %v9534 = vrot.slane %v9530, 4
  %v9536 = vadd.f32 %v8282, %v9534
  %v9537 = vtanh.pop %v9536
  %v9538 = vxor.u32 %v9536, 2147483648
  %v9539 = vmul.f32 %v9538, 1.442695
  %v9540 = vpow.pop %v9539
  %v9541 = vadd.f32 %v9540, 1.0
  %v9542 = vrcp.pop %v9541
  %v9543 = vmul.f32 1.0, %v9542
  %v9544 = vsel %vm1208, %v9537, %v9543
  %v9546 = vrot.slane %v9450, 2
  %v9548 = vmul.f32 %v9544, %v9546
  %9550 = vrot.lane.b32.xlu0 %v9544, 102
  %v9551 = vpop.permute.xlu0 %9550
  %v9553 = vmul.f32 %v9544, %v9551
  %9555 = vrot.lane.b32.xlu0 %v9553, 13
  %v9556 = vpop.permute.xlu0 %9555
  %v9558 = vadd.f32 %v9548, %v9556
  %v9559 = vtanh.pop %v9558
  %9561 = vrot.lane.b32.xlu0 %v9559, 26
  %v9562 = vpop.permute.xlu0 %9561
  %v9564 = vmul.f32 %v9544, %v9562
  %v9566 = vrot.slane %v9564, 4
  %9567 = vrot.lane.b32.xlu0 %v9566, 89
  %v9568 = vpop.permute.xlu0 %9567
  %v9569 = vsel %vm1234, %v9568, 0
  %9571 = vmatprep.subr.mxu0 0.0
  %9572 = vmatpush1.msra.mxu0 0.0
  %9573 = vmatprep.subr.mxu0 0.0
  %9574 = vmatpush1.msra.mxu0 0.0
  %9575 = vmatprep.subr.mxu0 0.0
  %9576 = vmatpush1.msra.mxu0 0.0
  %9577 = vmatprep.subr.mxu0 0.0
  %9578 = vmatpush1.msra.mxu0 0.0
  %9579 = vmatprep.subr.mxu0 0.0
  %9580 = vmatpush1.msra.mxu0 0.0
  %9581 = vmatprep.subr.mxu0 0.0
  %9582 = vmatpush1.msra.mxu0 0.0
  %9583 = vmatprep.subr.mxu0 0.0
  %9584 = vmatpush1.msra.mxu0 0.0
  %9585 = vmatprep.subr.mxu0 0.0
  %9586 = vmatpush1.msra.mxu0 0.0
  %9587 = vmatprep.subr.mxu0 0.0
  %9588 = vmatpush1.msra.mxu0 0.0
  %9589 = vmatprep.subr.mxu0 0.0
  %9590 = vmatpush1.msra.mxu0 0.0
  %9591 = vmatprep.subr.mxu0 0.0
  %9592 = vmatpush1.msra.mxu0 0.0
  %9593 = vmatprep.subr.mxu0 0.0
  %9594 = vmatpush1.msra.mxu0 0.0
  %9595 = vmatprep.subr.mxu0 0.0
  %9596 = vmatpush1.msra.mxu0 0.0
  %9597 = vmatprep.subr.mxu0 0.0
  %9598 = vmatpush1.msra.mxu0 0.0
  %9599 = vmatprep.subr.mxu0 0.0
  %9600 = vmatpush1.msra.mxu0 %v9252
  %9601 = vmatprep.subr.mxu0 0.0
  %9602 = vmatpush1.msra.mxu0 %v9249
  %9603 = vmatprep.subr.mxu0 0.0
  %9604 = vmatpush2.msra.mxu0 0.0
  %9605 = vmatprep.subr.mxu0 0.0
  %9606 = vmatpush2.msra.mxu0 0.0
  %9607 = vmatprep.subr.mxu0 0.0
  %9608 = vmatpush2.msra.mxu0 0.0
  %9609 = vmatprep.subr.mxu0 0.0
  %9610 = vmatpush2.msra.mxu0 0.0
  %9611 = vmatprep.subr.mxu0 0.0
  %9612 = vmatpush2.msra.mxu0 0.0
  %9613 = vmatprep.subr.mxu0 0.0
  %9614 = vmatpush2.msra.mxu0 0.0
  %9615 = vmatprep.subr.mxu0 0.0
  %9616 = vmatpush2.msra.mxu0 0.0
  %9617 = vmatprep.subr.mxu0 0.0
  %9618 = vmatpush2.msra.mxu0 0.0
  %9619 = vmatprep.subr.mxu0 0.0
  %9620 = vmatpush2.msra.mxu0 0.0
  %9621 = vmatprep.subr.mxu0 0.0
  %9622 = vmatpush2.msra.mxu0 0.0
  %9623 = vmatprep.subr.mxu0 0.0
  %9624 = vmatpush2.msra.mxu0 0.0
  %9625 = vmatprep.subr.mxu0 0.0
  %9626 = vmatpush2.msra.mxu0 0.0
  %9627 = vmatprep.subr.mxu0 0.0
  %9628 = vmatpush2.msra.mxu0 0.0
  %9629 = vmatprep.subr.mxu0 0.0
  %9630 = vmatpush2.msra.mxu0 0.0
  %9631 = vmatprep.subr.mxu0 0.0
  %9632 = vmatpush2.msra.mxu0 0.0
  %9633 = vmatprep.subr.mxu0 0.0
  %9634 = vmatpush2.msra.mxu0 0.0
  %9635 = vmatprep.mubr.f32.mxu0 0.0
  %9636 = vmatmul.mubr.f32.gmra.mxu0 %v9569
  %v9637 = vpop.f32.mrf.mxu0
  %v9638 = vadd.f32 0.0, %v9637
  %v9639 = vpop.f32.mrf.mxu0
  %9640 = vdwg.mxu0
  %v9642 = vrot.slane %v9638, 6
  %v9644 = vadd.f32 %v8282, %v9642
  %v9645 = vtanh.pop %v9644
  %v9646 = vxor.u32 %v9644, 2147483648
  %v9647 = vmul.f32 %v9646, 1.442695
  %v9648 = vpow.pop %v9647
  %v9649 = vadd.f32 %v9648, 1.0
  %v9650 = vrcp.pop %v9649
  %v9651 = vmul.f32 1.0, %v9650
  %v9652 = vsel %vm1208, %v9645, %v9651
  %v9654 = vrot.slane %v9558, 2
  %v9656 = vmul.f32 %v9652, %v9654
  %9658 = vrot.lane.b32.xlu0 %v9652, 102
  %v9659 = vpop.permute.xlu0 %9658
  %v9661 = vmul.f32 %v9652, %v9659
  %9663 = vrot.lane.b32.xlu0 %v9661, 13
  %v9664 = vpop.permute.xlu0 %9663
  %v9666 = vadd.f32 %v9656, %v9664
  %v9667 = vtanh.pop %v9666
  %9669 = vrot.lane.b32.xlu0 %v9667, 26
  %v9670 = vpop.permute.xlu0 %9669
  %v9672 = vmul.f32 %v9652, %v9670
  %v9674 = vrot.slane %v9672, 2
  %9675 = vrot.lane.b32.xlu0 %v9674, 89
  %v9676 = vpop.permute.xlu0 %9675
  %v9677 = vsel %vm1234, %v9676, 0
  %9679 = vmatprep.subr.mxu0 0.0
  %9680 = vmatpush1.msra.mxu0 0.0
  %9681 = vmatprep.subr.mxu0 0.0
  %9682 = vmatpush1.msra.mxu0 0.0
  %9683 = vmatprep.subr.mxu0 0.0
  %9684 = vmatpush1.msra.mxu0 0.0
  %9685 = vmatprep.subr.mxu0 0.0
  %9686 = vmatpush1.msra.mxu0 0.0
  %9687 = vmatprep.subr.mxu0 0.0
  %9688 = vmatpush1.msra.mxu0 0.0
  %9689 = vmatprep.subr.mxu0 0.0
  %9690 = vmatpush1.msra.mxu0 0.0
  %9691 = vmatprep.subr.mxu0 0.0
  %9692 = vmatpush1.msra.mxu0 0.0
  %9693 = vmatprep.subr.mxu0 0.0
  %9694 = vmatpush1.msra.mxu0 0.0
  %9695 = vmatprep.subr.mxu0 0.0
  %9696 = vmatpush1.msra.mxu0 0.0
  %9697 = vmatprep.subr.mxu0 0.0
  %9698 = vmatpush1.msra.mxu0 0.0
  %9699 = vmatprep.subr.mxu0 0.0
  %9700 = vmatpush1.msra.mxu0 0.0
  %9701 = vmatprep.subr.mxu0 0.0
  %9702 = vmatpush1.msra.mxu0 0.0
  %9703 = vmatprep.subr.mxu0 0.0
  %9704 = vmatpush1.msra.mxu0 0.0
  %9705 = vmatprep.subr.mxu0 0.0
  %9706 = vmatpush1.msra.mxu0 0.0
  %9707 = vmatprep.subr.mxu0 0.0
  %9708 = vmatpush1.msra.mxu0 %v9252
  %9709 = vmatprep.subr.mxu0 0.0
  %9710 = vmatpush1.msra.mxu0 %v9249
  %9711 = vmatprep.subr.mxu0 0.0
  %9712 = vmatpush2.msra.mxu0 0.0
  %9713 = vmatprep.subr.mxu0 0.0
  %9714 = vmatpush2.msra.mxu0 0.0
  %9715 = vmatprep.subr.mxu0 0.0
  %9716 = vmatpush2.msra.mxu0 0.0
  %9717 = vmatprep.subr.mxu0 0.0
  %9718 = vmatpush2.msra.mxu0 0.0
  %9719 = vmatprep.subr.mxu0 0.0
  %9720 = vmatpush2.msra.mxu0 0.0
  %9721 = vmatprep.subr.mxu0 0.0
  %9722 = vmatpush2.msra.mxu0 0.0
  %9723 = vmatprep.subr.mxu0 0.0
  %9724 = vmatpush2.msra.mxu0 0.0
  %9725 = vmatprep.subr.mxu0 0.0
  %9726 = vmatpush2.msra.mxu0 0.0
  %9727 = vmatprep.subr.mxu0 0.0
  %9728 = vmatpush2.msra.mxu0 0.0
  %9729 = vmatprep.subr.mxu0 0.0
  %9730 = vmatpush2.msra.mxu0 0.0
  %9731 = vmatprep.subr.mxu0 0.0
  %9732 = vmatpush2.msra.mxu0 0.0
  %9733 = vmatprep.subr.mxu0 0.0
  %9734 = vmatpush2.msra.mxu0 0.0
  %9735 = vmatprep.subr.mxu0 0.0
  %9736 = vmatpush2.msra.mxu0 0.0
  %9737 = vmatprep.subr.mxu0 0.0
  %9738 = vmatpush2.msra.mxu0 0.0
  %9739 = vmatprep.subr.mxu0 0.0
  %9740 = vmatpush2.msra.mxu0 0.0
  %9741 = vmatprep.subr.mxu0 0.0
  %9742 = vmatpush2.msra.mxu0 0.0
  %9743 = vmatprep.mubr.f32.mxu0 0.0
  %9744 = vmatmul.mubr.f32.gmra.mxu0 %v9677
  %v9745 = vpop.f32.mrf.mxu0
  %v9746 = vadd.f32 0.0, %v9745
  %v9747 = vpop.f32.mrf.mxu0
  %9748 = vdwg.mxu0
  %v9749 = vadd.f32 %v8282, %v9746
  %v9750 = vtanh.pop %v9749
  %v9751 = vxor.u32 %v9749, 2147483648
  %v9752 = vmul.f32 %v9751, 1.442695
  %v9753 = vpow.pop %v9752
  %v9754 = vadd.f32 %v9753, 1.0
  %v9755 = vrcp.pop %v9754
  %v9756 = vmul.f32 1.0, %v9755
  %v9757 = vsel %vm1208, %v9750, %v9756
  %v9759 = vrot.slane %v9666, 2
  %v9761 = vmul.f32 %v9757, %v9759
  %9763 = vrot.lane.b32.xlu0 %v9757, 102
  %v9764 = vpop.permute.xlu0 %9763
  %v9766 = vmul.f32 %v9757, %v9764
  %9768 = vrot.lane.b32.xlu0 %v9766, 13
  %v9769 = vpop.permute.xlu0 %9768
  %v9771 = vadd.f32 %v9761, %v9769
  %v9772 = vtanh.pop %v9771
  %9774 = vrot.lane.b32.xlu0 %v9772, 26
  %v9775 = vpop.permute.xlu0 %9774
  %v9777 = vmul.f32 %v9757, %v9775
  %9779 = vrot.lane.b32.xlu0 %v9777, 89
  %v9780 = vpop.permute.xlu0 %9779
  %v9781 = vsel %vm1234, %v9780, 0
  %9783 = vmatprep.subr.mxu0 0.0
  %9784 = vmatpush1.msra.mxu0 0.0
  %9785 = vmatprep.subr.mxu0 0.0
  %9786 = vmatpush1.msra.mxu0 0.0
  %9787 = vmatprep.subr.mxu0 0.0
  %9788 = vmatpush1.msra.mxu0 0.0
  %9789 = vmatprep.subr.mxu0 0.0
  %9790 = vmatpush1.msra.mxu0 0.0
  %9791 = vmatprep.subr.mxu0 0.0
  %9792 = vmatpush1.msra.mxu0 0.0
  %9793 = vmatprep.subr.mxu0 0.0
  %9794 = vmatpush1.msra.mxu0 0.0
  %9795 = vmatprep.subr.mxu0 0.0
  %9796 = vmatpush1.msra.mxu0 0.0
  %9797 = vmatprep.subr.mxu0 0.0
  %9798 = vmatpush1.msra.mxu0 0.0
  %9799 = vmatprep.subr.mxu0 0.0
  %9800 = vmatpush1.msra.mxu0 0.0
  %9801 = vmatprep.subr.mxu0 0.0
  %9802 = vmatpush1.msra.mxu0 0.0
  %9803 = vmatprep.subr.mxu0 0.0
  %9804 = vmatpush1.msra.mxu0 0.0
  %9805 = vmatprep.subr.mxu0 0.0
  %9806 = vmatpush1.msra.mxu0 0.0
  %9807 = vmatprep.subr.mxu0 0.0
  %9808 = vmatpush1.msra.mxu0 0.0
  %9809 = vmatprep.subr.mxu0 0.0
  %9810 = vmatpush1.msra.mxu0 0.0
  %9811 = vmatprep.subr.mxu0 0.0
  %9812 = vmatpush1.msra.mxu0 %v9252
  %9813 = vmatprep.subr.mxu0 0.0
  %9814 = vmatpush1.msra.mxu0 %v9249
  %9815 = vmatprep.subr.mxu0 0.0
  %9816 = vmatpush2.msra.mxu0 0.0
  %9817 = vmatprep.subr.mxu0 0.0
  %9818 = vmatpush2.msra.mxu0 0.0
  %9819 = vmatprep.subr.mxu0 0.0
  %9820 = vmatpush2.msra.mxu0 0.0
  %9821 = vmatprep.subr.mxu0 0.0
  %9822 = vmatpush2.msra.mxu0 0.0
  %9823 = vmatprep.subr.mxu0 0.0
  %9824 = vmatpush2.msra.mxu0 0.0
  %9825 = vmatprep.subr.mxu0 0.0
  %9826 = vmatpush2.msra.mxu0 0.0
  %9827 = vmatprep.subr.mxu0 0.0
  %9828 = vmatpush2.msra.mxu0 0.0
  %9829 = vmatprep.subr.mxu0 0.0
  %9830 = vmatpush2.msra.mxu0 0.0
  %9831 = vmatprep.subr.mxu0 0.0
  %9832 = vmatpush2.msra.mxu0 0.0
  %9833 = vmatprep.subr.mxu0 0.0
  %9834 = vmatpush2.msra.mxu0 0.0
  %9835 = vmatprep.subr.mxu0 0.0
  %9836 = vmatpush2.msra.mxu0 0.0
  %9837 = vmatprep.subr.mxu0 0.0
  %9838 = vmatpush2.msra.mxu0 0.0
  %9839 = vmatprep.subr.mxu0 0.0
  %9840 = vmatpush2.msra.mxu0 0.0
  %9841 = vmatprep.subr.mxu0 0.0
  %9842 = vmatpush2.msra.mxu0 0.0
  %9843 = vmatprep.subr.mxu0 0.0
  %9844 = vmatpush2.msra.mxu0 0.0
  %9845 = vmatprep.subr.mxu0 0.0
  %9846 = vmatpush2.msra.mxu0 0.0
  %9847 = vmatprep.mubr.f32.mxu0 0.0
  %9848 = vmatmul.mubr.f32.gmra.mxu0 %v9781
  %v9849 = vpop.f32.mrf.mxu0
  %v9850 = vadd.f32 0.0, %v9849
  %v9851 = vpop.f32.mrf.mxu0
  %9852 = vdwg.mxu0
  %v9854 = vrot.slane %v9850, 2
  %v9856 = vadd.f32 %v8281, %v9854
  %v9857 = vtanh.pop %v9856
  %v9858 = vxor.u32 %v9856, 2147483648
  %v9859 = vmul.f32 %v9858, 1.442695
  %v9860 = vpow.pop %v9859
  %v9861 = vadd.f32 %v9860, 1.0
  %v9862 = vrcp.pop %v9861
  %v9863 = vmul.f32 1.0, %v9862
  %v9864 = vsel %vm1208, %v9857, %v9863
  %v9866 = vrot.slane %v9771, 2
  %v9868 = vmul.f32 %v9864, %v9866
  %9870 = vrot.lane.b32.xlu0 %v9864, 102
  %v9871 = vpop.permute.xlu0 %9870
  %v9873 = vmul.f32 %v9864, %v9871
  %9875 = vrot.lane.b32.xlu0 %v9873, 13
  %v9876 = vpop.permute.xlu0 %9875
  %v9878 = vadd.f32 %v9868, %v9876
  %v9879 = vtanh.pop %v9878
  %9881 = vrot.lane.b32.xlu0 %v9879, 26
  %v9882 = vpop.permute.xlu0 %9881
  %v9884 = vmul.f32 %v9864, %v9882
  %v9886 = vrot.slane %v9884, 6
  %9887 = vrot.lane.b32.xlu0 %v9886, 89
  %v9888 = vpop.permute.xlu0 %9887
  %v9889 = vsel %vm1234, %v9888, 0
  %9891 = vmatprep.subr.mxu0 0.0
  %9892 = vmatpush1.msra.mxu0 0.0
  %9893 = vmatprep.subr.mxu0 0.0
  %9894 = vmatpush1.msra.mxu0 0.0
  %9895 = vmatprep.subr.mxu0 0.0
  %9896 = vmatpush1.msra.mxu0 0.0
  %9897 = vmatprep.subr.mxu0 0.0
  %9898 = vmatpush1.msra.mxu0 0.0
  %9899 = vmatprep.subr.mxu0 0.0
  %9900 = vmatpush1.msra.mxu0 0.0
  %9901 = vmatprep.subr.mxu0 0.0
  %9902 = vmatpush1.msra.mxu0 0.0
  %9903 = vmatprep.subr.mxu0 0.0
  %9904 = vmatpush1.msra.mxu0 0.0
  %9905 = vmatprep.subr.mxu0 0.0
  %9906 = vmatpush1.msra.mxu0 0.0
  %9907 = vmatprep.subr.mxu0 0.0
  %9908 = vmatpush1.msra.mxu0 0.0
  %9909 = vmatprep.subr.mxu0 0.0
  %9910 = vmatpush1.msra.mxu0 0.0
  %9911 = vmatprep.subr.mxu0 0.0
  %9912 = vmatpush1.msra.mxu0 0.0
  %9913 = vmatprep.subr.mxu0 0.0
  %9914 = vmatpush1.msra.mxu0 0.0
  %9915 = vmatprep.subr.mxu0 0.0
  %9916 = vmatpush1.msra.mxu0 0.0
  %9917 = vmatprep.subr.mxu0 0.0
  %9918 = vmatpush1.msra.mxu0 0.0
  %9919 = vmatprep.subr.mxu0 0.0
  %9920 = vmatpush1.msra.mxu0 %v9252
  %9921 = vmatprep.subr.mxu0 0.0
  %9922 = vmatpush1.msra.mxu0 %v9249
  %9923 = vmatprep.subr.mxu0 0.0
  %9924 = vmatpush2.msra.mxu0 0.0
  %9925 = vmatprep.subr.mxu0 0.0
  %9926 = vmatpush2.msra.mxu0 0.0
  %9927 = vmatprep.subr.mxu0 0.0
  %9928 = vmatpush2.msra.mxu0 0.0
  %9929 = vmatprep.subr.mxu0 0.0
  %9930 = vmatpush2.msra.mxu0 0.0
  %9931 = vmatprep.subr.mxu0 0.0
  %9932 = vmatpush2.msra.mxu0 0.0
  %9933 = vmatprep.subr.mxu0 0.0
  %9934 = vmatpush2.msra.mxu0 0.0
  %9935 = vmatprep.subr.mxu0 0.0
  %9936 = vmatpush2.msra.mxu0 0.0
  %9937 = vmatprep.subr.mxu0 0.0
  %9938 = vmatpush2.msra.mxu0 0.0
  %9939 = vmatprep.subr.mxu0 0.0
  %9940 = vmatpush2.msra.mxu0 0.0
  %9941 = vmatprep.subr.mxu0 0.0
  %9942 = vmatpush2.msra.mxu0 0.0
  %9943 = vmatprep.subr.mxu0 0.0
  %9944 = vmatpush2.msra.mxu0 0.0
  %9945 = vmatprep.subr.mxu0 0.0
  %9946 = vmatpush2.msra.mxu0 0.0
  %9947 = vmatprep.subr.mxu0 0.0
  %9948 = vmatpush2.msra.mxu0 0.0
  %9949 = vmatprep.subr.mxu0 0.0
  %9950 = vmatpush2.msra.mxu0 0.0
  %9951 = vmatprep.subr.mxu0 0.0
  %9952 = vmatpush2.msra.mxu0 0.0
  %9953 = vmatprep.subr.mxu0 0.0
  %9954 = vmatpush2.msra.mxu0 0.0
  %9955 = vmatprep.mubr.f32.mxu0 0.0
  %9956 = vmatmul.mubr.f32.gmra.mxu0 %v9889
  %v9957 = vpop.f32.mrf.mxu0
  %v9958 = vadd.f32 0.0, %v9957
  %v9959 = vpop.f32.mrf.mxu0
  %9960 = vdwg.mxu0
  %v9962 = vrot.slane %v9958, 4
  %v9964 = vadd.f32 %v8281, %v9962
  %v9965 = vtanh.pop %v9964
  %v9966 = vxor.u32 %v9964, 2147483648
  %v9967 = vmul.f32 %v9966, 1.442695
  %v9968 = vpow.pop %v9967
  %v9969 = vadd.f32 %v9968, 1.0
  %v9970 = vrcp.pop %v9969
  %v9971 = vmul.f32 1.0, %v9970
  %v9972 = vsel %vm1208, %v9965, %v9971
  %v9974 = vrot.slane %v9878, 2
  %v9976 = vmul.f32 %v9972, %v9974
  %9978 = vrot.lane.b32.xlu0 %v9972, 102
  %v9979 = vpop.permute.xlu0 %9978
  %v9981 = vmul.f32 %v9972, %v9979
  %9983 = vrot.lane.b32.xlu0 %v9981, 13
  %v9984 = vpop.permute.xlu0 %9983
  %v9986 = vadd.f32 %v9976, %v9984
  %v9987 = vtanh.pop %v9986
  %9989 = vrot.lane.b32.xlu0 %v9987, 26
  %v9990 = vpop.permute.xlu0 %9989
  %v9992 = vmul.f32 %v9972, %v9990
  %v9994 = vrot.slane %v9992, 4
  %9995 = vrot.lane.b32.xlu0 %v9994, 89
  %v9996 = vpop.permute.xlu0 %9995
  %v9997 = vsel %vm1234, %v9996, 0
  %9999 = vmatprep.subr.mxu0 0.0
  %10000 = vmatpush1.msra.mxu0 0.0
  %10001 = vmatprep.subr.mxu0 0.0
  %10002 = vmatpush1.msra.mxu0 0.0
  %10003 = vmatprep.subr.mxu0 0.0
  %10004 = vmatpush1.msra.mxu0 0.0
  %10005 = vmatprep.subr.mxu0 0.0
  %10006 = vmatpush1.msra.mxu0 0.0
  %10007 = vmatprep.subr.mxu0 0.0
  %10008 = vmatpush1.msra.mxu0 0.0
  %10009 = vmatprep.subr.mxu0 0.0
  %10010 = vmatpush1.msra.mxu0 0.0
  %10011 = vmatprep.subr.mxu0 0.0
  %10012 = vmatpush1.msra.mxu0 0.0
  %10013 = vmatprep.subr.mxu0 0.0
  %10014 = vmatpush1.msra.mxu0 0.0
  %10015 = vmatprep.subr.mxu0 0.0
  %10016 = vmatpush1.msra.mxu0 0.0
  %10017 = vmatprep.subr.mxu0 0.0
  %10018 = vmatpush1.msra.mxu0 0.0
  %10019 = vmatprep.subr.mxu0 0.0
  %10020 = vmatpush1.msra.mxu0 0.0
  %10021 = vmatprep.subr.mxu0 0.0
  %10022 = vmatpush1.msra.mxu0 0.0
  %10023 = vmatprep.subr.mxu0 0.0
  %10024 = vmatpush1.msra.mxu0 0.0
  %10025 = vmatprep.subr.mxu0 0.0
  %10026 = vmatpush1.msra.mxu0 0.0
  %10027 = vmatprep.subr.mxu0 0.0
  %10028 = vmatpush1.msra.mxu0 %v9252
  %10029 = vmatprep.subr.mxu0 0.0
  %10030 = vmatpush1.msra.mxu0 %v9249
  %10031 = vmatprep.subr.mxu0 0.0
  %10032 = vmatpush2.msra.mxu0 0.0
  %10033 = vmatprep.subr.mxu0 0.0
  %10034 = vmatpush2.msra.mxu0 0.0
  %10035 = vmatprep.subr.mxu0 0.0
  %10036 = vmatpush2.msra.mxu0 0.0
  %10037 = vmatprep.subr.mxu0 0.0
  %10038 = vmatpush2.msra.mxu0 0.0
  %10039 = vmatprep.subr.mxu0 0.0
  %10040 = vmatpush2.msra.mxu0 0.0
  %10041 = vmatprep.subr.mxu0 0.0
  %10042 = vmatpush2.msra.mxu0 0.0
  %10043 = vmatprep.subr.mxu0 0.0
  %10044 = vmatpush2.msra.mxu0 0.0
  %10045 = vmatprep.subr.mxu0 0.0
  %10046 = vmatpush2.msra.mxu0 0.0
  %10047 = vmatprep.subr.mxu0 0.0
  %10048 = vmatpush2.msra.mxu0 0.0
  %10049 = vmatprep.subr.mxu0 0.0
  %10050 = vmatpush2.msra.mxu0 0.0
  %10051 = vmatprep.subr.mxu0 0.0
  %10052 = vmatpush2.msra.mxu0 0.0
  %10053 = vmatprep.subr.mxu0 0.0
  %10054 = vmatpush2.msra.mxu0 0.0
  %10055 = vmatprep.subr.mxu0 0.0
  %10056 = vmatpush2.msra.mxu0 0.0
  %10057 = vmatprep.subr.mxu0 0.0
  %10058 = vmatpush2.msra.mxu0 0.0
  %10059 = vmatprep.subr.mxu0 0.0
  %10060 = vmatpush2.msra.mxu0 0.0
  %10061 = vmatprep.subr.mxu0 0.0
  %10062 = vmatpush2.msra.mxu0 0.0
  %10063 = vmatprep.mubr.f32.mxu0 0.0
  %10064 = vmatmul.mubr.f32.gmra.mxu0 %v9997
  %v10065 = vpop.f32.mrf.mxu0
  %v10066 = vadd.f32 0.0, %v10065
  %v10067 = vpop.f32.mrf.mxu0
  %10068 = vdwg.mxu0
  %v10070 = vrot.slane %v10066, 6
  %v10072 = vadd.f32 %v8281, %v10070
  %v10073 = vtanh.pop %v10072
  %v10074 = vxor.u32 %v10072, 2147483648
  %v10075 = vmul.f32 %v10074, 1.442695
  %v10076 = vpow.pop %v10075
  %v10077 = vadd.f32 %v10076, 1.0
  %v10078 = vrcp.pop %v10077
  %v10079 = vmul.f32 1.0, %v10078
  %v10080 = vsel %vm1208, %v10073, %v10079
  %v10082 = vrot.slane %v9986, 2
  %v10084 = vmul.f32 %v10080, %v10082
  %10086 = vrot.lane.b32.xlu0 %v10080, 102
  %v10087 = vpop.permute.xlu0 %10086
  %v10089 = vmul.f32 %v10080, %v10087
  %10091 = vrot.lane.b32.xlu0 %v10089, 13
  %v10092 = vpop.permute.xlu0 %10091
  %v10094 = vadd.f32 %v10084, %v10092
  %v10095 = vtanh.pop %v10094
  %10097 = vrot.lane.b32.xlu0 %v10095, 26
  %v10098 = vpop.permute.xlu0 %10097
  %v10100 = vmul.f32 %v10080, %v10098
  %v10102 = vrot.slane %v10100, 2
  %10103 = vrot.lane.b32.xlu0 %v10102, 89
  %v10104 = vpop.permute.xlu0 %10103
  %v10105 = vsel %vm1234, %v10104, 0
  %10107 = vmatprep.subr.mxu0 0.0
  %10108 = vmatpush1.msra.mxu0 0.0
  %10109 = vmatprep.subr.mxu0 0.0
  %10110 = vmatpush1.msra.mxu0 0.0
  %10111 = vmatprep.subr.mxu0 0.0
  %10112 = vmatpush1.msra.mxu0 0.0
  %10113 = vmatprep.subr.mxu0 0.0
  %10114 = vmatpush1.msra.mxu0 0.0
  %10115 = vmatprep.subr.mxu0 0.0
  %10116 = vmatpush1.msra.mxu0 0.0
  %10117 = vmatprep.subr.mxu0 0.0
  %10118 = vmatpush1.msra.mxu0 0.0
  %10119 = vmatprep.subr.mxu0 0.0
  %10120 = vmatpush1.msra.mxu0 0.0
  %10121 = vmatprep.subr.mxu0 0.0
  %10122 = vmatpush1.msra.mxu0 0.0
  %10123 = vmatprep.subr.mxu0 0.0
  %10124 = vmatpush1.msra.mxu0 0.0
  %10125 = vmatprep.subr.mxu0 0.0
  %10126 = vmatpush1.msra.mxu0 0.0
  %10127 = vmatprep.subr.mxu0 0.0
  %10128 = vmatpush1.msra.mxu0 0.0
  %10129 = vmatprep.subr.mxu0 0.0
  %10130 = vmatpush1.msra.mxu0 0.0
  %10131 = vmatprep.subr.mxu0 0.0
  %10132 = vmatpush1.msra.mxu0 0.0
  %10133 = vmatprep.subr.mxu0 0.0
  %10134 = vmatpush1.msra.mxu0 0.0
  %10135 = vmatprep.subr.mxu0 0.0
  %10136 = vmatpush1.msra.mxu0 %v9252
  %10137 = vmatprep.subr.mxu0 0.0
  %10138 = vmatpush1.msra.mxu0 %v9249
  %10139 = vmatprep.subr.mxu0 0.0
  %10140 = vmatpush2.msra.mxu0 0.0
  %10141 = vmatprep.subr.mxu0 0.0
  %10142 = vmatpush2.msra.mxu0 0.0
  %10143 = vmatprep.subr.mxu0 0.0
  %10144 = vmatpush2.msra.mxu0 0.0
  %10145 = vmatprep.subr.mxu0 0.0
  %10146 = vmatpush2.msra.mxu0 0.0
  %10147 = vmatprep.subr.mxu0 0.0
  %10148 = vmatpush2.msra.mxu0 0.0
  %10149 = vmatprep.subr.mxu0 0.0
  %10150 = vmatpush2.msra.mxu0 0.0
  %10151 = vmatprep.subr.mxu0 0.0
  %10152 = vmatpush2.msra.mxu0 0.0
  %10153 = vmatprep.subr.mxu0 0.0
  %10154 = vmatpush2.msra.mxu0 0.0
  %10155 = vmatprep.subr.mxu0 0.0
  %10156 = vmatpush2.msra.mxu0 0.0
  %10157 = vmatprep.subr.mxu0 0.0
  %10158 = vmatpush2.msra.mxu0 0.0
  %10159 = vmatprep.subr.mxu0 0.0
  %10160 = vmatpush2.msra.mxu0 0.0
  %10161 = vmatprep.subr.mxu0 0.0
  %10162 = vmatpush2.msra.mxu0 0.0
  %10163 = vmatprep.subr.mxu0 0.0
  %10164 = vmatpush2.msra.mxu0 0.0
  %10165 = vmatprep.subr.mxu0 0.0
  %10166 = vmatpush2.msra.mxu0 0.0
  %10167 = vmatprep.subr.mxu0 0.0
  %10168 = vmatpush2.msra.mxu0 0.0
  %10169 = vmatprep.subr.mxu0 0.0
  %10170 = vmatpush2.msra.mxu0 0.0
  %10171 = vmatprep.mubr.f32.mxu0 0.0
  %10172 = vmatmul.mubr.f32.gmra.mxu0 %v10105
  %v10173 = vpop.f32.mrf.mxu0
  %v10174 = vadd.f32 0.0, %v10173
  %v10175 = vpop.f32.mrf.mxu0
  %10176 = vdwg.mxu0
  %v10177 = vadd.f32 %v8281, %v10174
  %v10178 = vtanh.pop %v10177
  %v10179 = vxor.u32 %v10177, 2147483648
  %v10180 = vmul.f32 %v10179, 1.442695
  %v10181 = vpow.pop %v10180
  %v10182 = vadd.f32 %v10181, 1.0
  %v10183 = vrcp.pop %v10182
  %v10184 = vmul.f32 1.0, %v10183
  %v10185 = vsel %vm1208, %v10178, %v10184
  %v10187 = vrot.slane %v10094, 2
  %v10189 = vmul.f32 %v10185, %v10187
  %10191 = vrot.lane.b32.xlu0 %v10185, 102
  %v10192 = vpop.permute.xlu0 %10191
  %v10194 = vmul.f32 %v10185, %v10192
  %10196 = vrot.lane.b32.xlu0 %v10194, 13
  %v10197 = vpop.permute.xlu0 %10196
  %v10199 = vadd.f32 %v10189, %v10197
  %v10200 = vtanh.pop %v10199
  %10202 = vrot.lane.b32.xlu0 %v10200, 26
  %v10203 = vpop.permute.xlu0 %10202
  %v10205 = vmul.f32 %v10185, %v10203
  %v10206 = vsel %vm880, %v10205, %v10100
  %v10207 = vsel %vm2195, %v10206, %v9992
  %v10208 = vsel %vm2197, %v10207, %v9884
  %v10209 = vsel %vm880, %v9777, %v9672
  %v10210 = vsel %vm2195, %v10209, %v9564
  %v10211 = vsel %vm2197, %v10210, %v9456
  %10215 = vrot.lane.b32.xlu0 %v9244, 89
  %v10216 = vpop.permute.xlu0 %10215
  %10217 = vrot.lane.b32.xlu0 %v9247, 89
  %v10218 = vpop.permute.xlu0 %10217
  %10219 = vrot.lane.b32.xlu0 %v9241, 89
  %v10220 = vpop.permute.xlu0 %10219
  %10224 = vst.msk [vmem:[%s8] sm:$0xff] %vm1234, %v10216
  %10225 = vst.msk [vmem:[%s8 + $0x8] sm:$0xff] %vm1234, %v10218
  %vm10226 = vcmask 99328
  %10227 = vst.msk [vmem:[%s8 + $0x10] sm:$0x3] %vm10226, %v10220
  %10230 = vrot.lane.b32.xlu0 %v10208, 89
  %v10231 = vpop.permute.xlu0 %10230
  %10232 = vrot.lane.b32.xlu0 %v10211, 89
  %v10233 = vpop.permute.xlu0 %10232
  %s10237 = scalar_lea.vmem %s8, 24
  %10238 = vst.msk [vmem:[%s10237] sm:$0xff] %vm1234, %v10231
  %10239 = vst.msk [vmem:[%s10237 + $0x8] sm:$0xff] %vm1234, %v10233
  %10240 = vst.msk [vmem:[%s10237 + $0x10] sm:$0x3] %vm10226, %v9352
  // Predicated region
  $region34: #{audio_lstm_forward.1} parent=0 // pred_check
    _
  $region35: #{audio_lstm_forward.1} parent=0 // pred_check_branch
    %10242 = sbr.rel (0) target = $region37
  $region36: #{audio_lstm_forward.1} parent=0 // pred_region
    _
  $region37: #{audio_lstm_forward.1} parent=0 // pred_fallthru
    _
  // Predicated region
  $region38: #{audio_lstm_forward.1} parent=0 // pred_check
    _
  $region39: #{audio_lstm_forward.1} parent=0 // pred_check_branch
    %10244 = sbr.rel (0) target = $region41
  $region40: #{audio_lstm_forward.1} parent=0 // pred_region
    _
  $region41: #{audio_lstm_forward.1} parent=0 // pred_fallthru
    _

</llo_original>
